<compile_context>
chip_gen: v7x
topology: tpu7x:2x2x1
jax: 0.10.0
libtpu: 0.0.40
codegen_flags: <defaults>
</compile_context>

<pallas_src>
import functools
import math
from typing import NamedTuple

import jax
import jax.numpy as jnp
from jax.experimental import pallas as pl
from jax.experimental.pallas import tpu as pltpu

LANE = 128
SUB = 8


def _round_up(x, m=LANE):
    return ((x + m - 1) // m) * m


class DecoderConfig(NamedTuple):
    output_dim: int
    emb_dim: int
    dec_hid_dim: int
    dim_feedfwd: int
    nheads: int
    n_layers: int
    max_len: int


# ---------------------------------------------------------------------------
# Fused per-batch decoder kernel (one grid step == one batch element)
# ---------------------------------------------------------------------------

def _decoder_kernel(
    # scalar prefetch
    trg_ref,                                   # SMEM (S, B) int32 token ids
    # tables / activations
    emb_ref, pe_ref, mem_ref,
    # input / output projections
    mod_w_ref, mod_b_ref, fin_w_ref, fin_b_ref,
    # stacked per-layer weights (leading axis = layer)
    sa_wqkv_ref, sa_bqkv_ref, sa_wo_ref, sa_bo_ref,
    ca_wq_ref, ca_bq_ref, ca_wkv_ref, ca_bkv_ref, ca_wo_ref, ca_bo_ref,
    ff_w1_ref, ff_b1_ref, ff_w2_ref, ff_b2_ref,
    ln1_g_ref, ln1_b_ref, ln2_g_ref, ln2_b_ref, ln3_g_ref, ln3_b_ref,
    # output
    out_ref,
    *, n_layers, nheads, Dh, H, S, Sm,
):
    f32, bf16 = jnp.float32, jnp.bfloat16
    HQ = nheads * Dh                     # real q/k/v width (== H)
    Hp = mod_b_ref.shape[1]              # padded hidden width (lane multiple)
    Sm_p = mem_ref.shape[1]              # padded memory length
    b = pl.program_id(0)

    def mm(a, w, bias=None):
        # bf16 MXU path, f32 accumulation; bias add in f32.
        out = jnp.dot(a.astype(bf16), w, preferred_element_type=f32)
        return out if bias is None else out + bias

    # --- embedding gather (sqrt(E) pre-folded) + positional encoding --------
    rows = [emb_ref[pl.ds(trg_ref[s, b], 1), :] for s in range(S)]
    x0 = jnp.concatenate(rows, axis=0) + pe_ref[0:S, :]          # (S, Ep) f32

    # --- in-kernel masks (no HBM traffic) ------------------------------------
    r_i = jax.lax.broadcasted_iota(jnp.int32, (S, S), 0)
    c_i = jax.lax.broadcasted_iota(jnp.int32, (S, S), 1)
    causal = jnp.where(c_i > r_i, -1e30, 0.0).astype(f32)        # (S, S)
    k_i = jax.lax.broadcasted_iota(jnp.int32, (S, Sm_p), 1)
    kmask = jnp.where(k_i >= Sm, -1e30, 0.0).astype(f32)         # (S, Sm_p)
    hmask = (jax.lax.broadcasted_iota(jnp.int32, (1, Hp), 1) < H).astype(f32)
    inv_h = 1.0 / float(H)

    def layer_norm(xv, g, beta):
        mean = jnp.sum(xv, axis=-1, keepdims=True) * inv_h
        xc = (xv - mean) * hmask                 # padded lanes forced to zero
        var = jnp.sum(xc * xc, axis=-1, keepdims=True) * inv_h
        return xc * jax.lax.rsqrt(var + 1e-5) * g + beta

    def attention(q, k, v, mask, wo, bo):
        # q: (Sq, HQ), k/v: (Sk, HQ); heads packed at Dh lanes each.
        head_outs = []
        for h in range(nheads):
            qh = q[:, h * Dh:(h + 1) * Dh].astype(bf16)
            kh = k[:, h * Dh:(h + 1) * Dh].astype(bf16)
            vh = v[:, h * Dh:(h + 1) * Dh].astype(bf16)
            sc = jax.lax.dot_general(qh, kh, (((1,), (1,)), ((), ())),
                                     preferred_element_type=f32) + mask
            sc = sc - jnp.max(sc, axis=-1, keepdims=True)
            p = jnp.exp(sc)
            p = p * pl.reciprocal(jnp.sum(p, axis=-1, keepdims=True),
                                  approx=True)
            head_outs.append(jnp.dot(p.astype(bf16), vh,
                                     preferred_element_type=f32))
        ho = jnp.concatenate(head_outs, axis=-1)                 # (Sq, HQ)
        return mm(ho, wo, bo)                    # single W_o contraction, (Sq, Hp)

    x = mm(x0, mod_w_ref[...], mod_b_ref[...])                   # (S, Hp)
    mem = mem_ref[0]                                             # (Sm_p, H)

    for li in range(n_layers):
        # ---- self attention (causal) ------------------------------------
        qkv = mm(x, sa_wqkv_ref[li], sa_bqkv_ref[li])            # (S, >=3*HQ)
        sa = attention(qkv[:, 0:HQ], qkv[:, HQ:2 * HQ], qkv[:, 2 * HQ:3 * HQ],
                       causal, sa_wo_ref[li], sa_bo_ref[li])
        x = layer_norm(x + sa, ln1_g_ref[li], ln1_b_ref[li])

        # ---- cross attention (padded keys masked) ------------------------
        qc = mm(x, ca_wq_ref[li], ca_bq_ref[li])                 # (S, >=HQ)
        kvm = mm(mem, ca_wkv_ref[li], ca_bkv_ref[li])            # (Sm_p, >=2*HQ)
        ca = attention(qc[:, 0:HQ], kvm[:, 0:HQ], kvm[:, HQ:2 * HQ],
                       kmask, ca_wo_ref[li], ca_bo_ref[li])
        x = layer_norm(x + ca, ln2_g_ref[li], ln2_b_ref[li])

        # ---- feed forward (relu) -----------------------------------------
        hid = jnp.maximum(mm(x, ff_w1_ref[li], ff_b1_ref[li]), 0.0)
        ff = mm(hid, ff_w2_ref[li], ff_b2_ref[li])
        x = layer_norm(x + ff, ln3_g_ref[li], ln3_b_ref[li])

    out_ref[...] = mm(x, fin_w_ref[...], fin_b_ref[...])         # (S, Vp) lane-dense


# ---------------------------------------------------------------------------
# Wrapper: single fused pallas_call with grid=(B,), scalar-prefetched trg
# ---------------------------------------------------------------------------

_WEIGHT_KEYS = ("mod_w", "mod_b", "fin_w", "fin_b",
                "sa_wqkv", "sa_bqkv", "sa_wo", "sa_bo",
                "ca_wq", "ca_bq", "ca_wkv", "ca_bkv", "ca_wo", "ca_bo",
                "ff_w1", "ff_b1", "ff_w2", "ff_b2",
                "ln1_g", "ln1_b", "ln2_g", "ln2_b", "ln3_g", "ln3_b")


@functools.partial(jax.jit, static_argnames=("cfg",))
def transformer_decoder_forward(packed, trg, memory, cfg):
    S, B = trg.shape
    Sm = memory.shape[0]
    H, V = cfg.dec_hid_dim, cfg.output_dim
    Dh = H // cfg.nheads
    Vp = _round_up(V)
    Sm_p = _round_up(Sm, SUB)

    # Batch-major memory with key rows padded to a sublane multiple (padded
    # keys masked in-kernel); lane dim stays at the real H (K=H contraction).
    mem = jnp.transpose(memory, (1, 0, 2))                 # (B, Sm, H)
    mem = jnp.pad(mem, ((0, 0), (0, Sm_p - Sm), (0, 0)))   # (B, Sm_p, H)

    kernel = functools.partial(
        _decoder_kernel, n_layers=cfg.n_layers, nheads=cfg.nheads,
        Dh=Dh, H=H, S=S, Sm=Sm)

    def full_spec(arr):
        nd = arr.ndim
        return pl.BlockSpec(arr.shape, lambda b, t, _n=nd: (0,) * _n)

    in_specs = [full_spec(packed["embed"]),
                full_spec(packed["pe"]),
                pl.BlockSpec((1, Sm_p, H), lambda b, t: (b, 0, 0))]
    in_specs += [full_spec(packed[k]) for k in _WEIGHT_KEYS]
    inputs = [packed["embed"], packed["pe"], mem] + [packed[k] for k in _WEIGHT_KEYS]

    out_p = pl.pallas_call(
        kernel,
        out_shape=jax.ShapeDtypeStruct((S, B * Vp), jnp.float32),
        grid_spec=pltpu.PrefetchScalarGridSpec(
            num_scalar_prefetch=1,
            grid=(B,),
            in_specs=in_specs,
            out_specs=pl.BlockSpec((S, Vp), lambda b, t: (0, b)),
        ),
        compiler_params=pltpu.CompilerParams(
            dimension_semantics=("parallel",)),
    )(trg.astype(jnp.int32), *inputs)

    # (S, B*Vp) -> (S, B, output_dim): free reshape + one tiny lane slice.
    return out_p.reshape(S, B, Vp)[:, :, :V]


# ---------------------------------------------------------------------------
# Parameter init (natural module shapes) + packing (de-padded / bf16 / fused)
# ---------------------------------------------------------------------------

def _uniform(key, shape, scale=0.1):
    return jax.random.uniform(key, shape, jnp.float32, -scale, scale)


def _mha_params(key, H):
    ks = jax.random.split(key, 4)
    return {
        "w_q": _uniform(ks[0], (H, H)), "b_q": jnp.zeros((H,), jnp.float32),
        "w_k": _uniform(ks[1], (H, H)), "b_k": jnp.zeros((H,), jnp.float32),
        "w_v": _uniform(ks[2], (H, H)), "b_v": jnp.zeros((H,), jnp.float32),
        "w_o": _uniform(ks[3], (H, H)), "b_o": jnp.zeros((H,), jnp.float32),
    }


def init_params(key, cfg):
    E, H, F, V = cfg.emb_dim, cfg.dec_hid_dim, cfg.dim_feedfwd, cfg.output_dim
    keys = jax.random.split(key, 4 + cfg.n_layers)
    params = {
        "embed": _uniform(keys[0], (V, E)),
        "mod_w": _uniform(keys[1], (E, H)),
        "mod_b": jnp.zeros((H,), jnp.float32),
        "final_w": _uniform(keys[2], (H, V)),
        "final_b": jnp.zeros((V,), jnp.float32),
    }
    # sinusoidal positional encoding, (max_len, 1, emb_dim)
    position = jnp.arange(cfg.max_len, dtype=jnp.float32)[:, None]
    div_term = jnp.exp(jnp.arange(0, E, 2, dtype=jnp.float32)
                       * (-math.log(10000.0) / E))
    pe = jnp.zeros((cfg.max_len, E), jnp.float32)
    pe = pe.at[:, 0::2].set(jnp.sin(position * div_term))
    pe = pe.at[:, 1::2].set(jnp.cos(position * div_term))
    params["pe"] = pe[:, None, :]

    layers = []
    for li in range(cfg.n_layers):
        lks = jax.random.split(keys[4 + li], 4)
        layers.append({
            "self_attn": _mha_params(lks[0], H),
            "cross_attn": _mha_params(lks[1], H),
            "ff_w1": _uniform(lks[2], (H, F)),
            "ff_b1": jnp.zeros((F,), jnp.float32),
            "ff_w2": _uniform(lks[3], (F, H)),
            "ff_b2": jnp.zeros((H,), jnp.float32),
            "ln1_g": jnp.ones((H,), jnp.float32), "ln1_b": jnp.zeros((H,), jnp.float32),
            "ln2_g": jnp.ones((H,), jnp.float32), "ln2_b": jnp.zeros((H,), jnp.float32),
            "ln3_g": jnp.ones((H,), jnp.float32), "ln3_b": jnp.zeros((H,), jnp.float32),
        })
    params["layers"] = layers
    return params


def pack_params(params, cfg):
    """De-padded bf16 weight packing:
      * heads packed at Dh lanes each (no 128-lane-per-head slots),
      * q/k/v (self) and k/v (cross) fused column-wise, 1/sqrt(Dh) folded
        into W_q/b_q, sqrt(emb_dim) folded into the embedding table,
      * 2-D weights -> bf16 padded to 128-lane multiples with zero columns,
        biases / LayerNorm params stay f32,
      * per-layer tensors stacked along a leading layer axis."""
    E, H, F, V = cfg.emb_dim, cfg.dec_hid_dim, cfg.dim_feedfwd, cfg.output_dim
    nh = cfg.nheads
    Dh = H // nh
    HQ = nh * Dh
    Ep, Hp, Fp, Vp = (_round_up(d) for d in (E, H, F, V))
    qkv_cols = _round_up(3 * HQ)
    kv_cols = _round_up(2 * HQ)
    q_cols = _round_up(HQ)
    scale = 1.0 / math.sqrt(Dh)

    def pad_w(w, rows, cols):                           # weights -> bf16
        out = jnp.zeros((rows, cols), jnp.float32)
        out = out.at[:w.shape[0], :w.shape[1]].set(w)
        return out.astype(jnp.bfloat16)

    def pad_b(bias, cols):                              # biases / LN -> f32
        return jnp.zeros((1, cols), jnp.float32).at[0, :bias.shape[0]].set(bias)

    packed = {
        "embed": jnp.zeros((_round_up(V, SUB), Ep), jnp.float32)
                    .at[:V, :E].set(params["embed"] * math.sqrt(E)),
        "pe": jnp.zeros((_round_up(cfg.max_len, SUB), Ep), jnp.float32)
                 .at[:cfg.max_len, :E].set(params["pe"][:, 0, :]),
        "mod_w": pad_w(params["mod_w"], Ep, Hp),
        "mod_b": pad_b(params["mod_b"], Hp),
        "fin_w": pad_w(params["final_w"], Hp, Vp),
        "fin_b": pad_b(params["final_b"], Vp),
    }

    def stack(fn):
        return jnp.stack([fn(lp) for lp in params["layers"]], axis=0)

    packed["sa_wqkv"] = stack(lambda lp: pad_w(jnp.concatenate(
        [lp["self_attn"]["w_q"] * scale, lp["self_attn"]["w_k"],
         lp["self_attn"]["w_v"]], axis=1), Hp, qkv_cols))
    packed["sa_bqkv"] = stack(lambda lp: pad_b(jnp.concatenate(
        [lp["self_attn"]["b_q"] * scale, lp["self_attn"]["b_k"],
         lp["self_attn"]["b_v"]]), qkv_cols))
    packed["sa_wo"] = stack(lambda lp: pad_w(lp["self_attn"]["w_o"], HQ, Hp))
    packed["sa_bo"] = stack(lambda lp: pad_b(lp["self_attn"]["b_o"], Hp))

    packed["ca_wq"] = stack(lambda lp: pad_w(lp["cross_attn"]["w_q"] * scale, Hp, q_cols))
    packed["ca_bq"] = stack(lambda lp: pad_b(lp["cross_attn"]["b_q"] * scale, q_cols))
    packed["ca_wkv"] = stack(lambda lp: pad_w(jnp.concatenate(
        [lp["cross_attn"]["w_k"], lp["cross_attn"]["w_v"]], axis=1), H, kv_cols))
    packed["ca_bkv"] = stack(lambda lp: pad_b(jnp.concatenate(
        [lp["cross_attn"]["b_k"], lp["cross_attn"]["b_v"]]), kv_cols))
    packed["ca_wo"] = stack(lambda lp: pad_w(lp["cross_attn"]["w_o"], HQ, Hp))
    packed["ca_bo"] = stack(lambda lp: pad_b(lp["cross_attn"]["b_o"], Hp))

    packed["ff_w1"] = stack(lambda lp: pad_w(lp["ff_w1"], Hp, Fp))
    packed["ff_b1"] = stack(lambda lp: pad_b(lp["ff_b1"], Fp))
    packed["ff_w2"] = stack(lambda lp: pad_w(lp["ff_w2"], Fp, Hp))
    packed["ff_b2"] = stack(lambda lp: pad_b(lp["ff_b2"], Hp))

    for n in ("ln1", "ln2", "ln3"):
        packed[f"{n}_g"] = stack(lambda lp, n=n: pad_b(lp[f"{n}_g"], Hp))
        packed[f"{n}_b"] = stack(lambda lp, n=n: pad_b(lp[f"{n}_b"], Hp))
    return packed


# ---------------------------------------------------------------------------

if __name__ == "__main__":
    cfg = DecoderConfig(output_dim=20, emb_dim=24, dec_hid_dim=32,
                        dim_feedfwd=64, nheads=4, n_layers=2, max_len=32)
    S, B, S_mem = 8, 2, 10

    key = jax.random.PRNGKey(0)
    kp, kt, km = jax.random.split(key, 3)

    params = init_params(kp, cfg)
    packed = pack_params(params, cfg)

    # trg: (S, B) token ids; encoder memory: (S_mem, B, dec_hid_dim)
    trg = jax.random.randint(kt, (S, B), 0, cfg.output_dim, dtype=jnp.int32)
    xfmer_enc_output = jax.random.normal(km, (S_mem, B, cfg.dec_hid_dim),
                                         jnp.float32)

    # TODO(synk): dropout layers are identity (inference semantics); sos_idx /
    # pad_idx are unused by the reference forward and therefore omitted.
    out = transformer_decoder_forward(packed, trg, xfmer_enc_output, cfg=cfg)
    out = jax.block_until_ready(out)

    assert out.shape == (S, B, cfg.output_dim)
    assert bool(jnp.all(jnp.isfinite(out)))
    print("KERNEL_OK")
</pallas_src>

<mosaic_0001>
module attributes {stable_mosaic.version = 11 : i64} {
  func.func @_decoder_kernel(%arg0: i32, %arg1: memref<8x2xi32, #tpu.memory_space<smem>>, %arg2: memref<24x128xf32, #tpu.memory_space<vmem>>, %arg3: memref<32x128xf32, #tpu.memory_space<vmem>>, %arg4: memref<1x16x32xf32, #tpu.memory_space<vmem>>, %arg5: memref<128x128xbf16, #tpu.memory_space<vmem>>, %arg6: memref<1x128xf32, #tpu.memory_space<vmem>>, %arg7: memref<128x128xbf16, #tpu.memory_space<vmem>>, %arg8: memref<1x128xf32, #tpu.memory_space<vmem>>, %arg9: memref<2x128x128xbf16, #tpu.memory_space<vmem>>, %arg10: memref<2x1x128xf32, #tpu.memory_space<vmem>>, %arg11: memref<2x32x128xbf16, #tpu.memory_space<vmem>>, %arg12: memref<2x1x128xf32, #tpu.memory_space<vmem>>, %arg13: memref<2x128x128xbf16, #tpu.memory_space<vmem>>, %arg14: memref<2x1x128xf32, #tpu.memory_space<vmem>>, %arg15: memref<2x32x128xbf16, #tpu.memory_space<vmem>>, %arg16: memref<2x1x128xf32, #tpu.memory_space<vmem>>, %arg17: memref<2x32x128xbf16, #tpu.memory_space<vmem>>, %arg18: memref<2x1x128xf32, #tpu.memory_space<vmem>>, %arg19: memref<2x128x128xbf16, #tpu.memory_space<vmem>>, %arg20: memref<2x1x128xf32, #tpu.memory_space<vmem>>, %arg21: memref<2x128x128xbf16, #tpu.memory_space<vmem>>, %arg22: memref<2x1x128xf32, #tpu.memory_space<vmem>>, %arg23: memref<2x1x128xf32, #tpu.memory_space<vmem>>, %arg24: memref<2x1x128xf32, #tpu.memory_space<vmem>>, %arg25: memref<2x1x128xf32, #tpu.memory_space<vmem>>, %arg26: memref<2x1x128xf32, #tpu.memory_space<vmem>>, %arg27: memref<2x1x128xf32, #tpu.memory_space<vmem>>, %arg28: memref<2x1x128xf32, #tpu.memory_space<vmem>>, %arg29: memref<8x128xf32, #tpu.memory_space<vmem>>) attributes {dimension_semantics = [#tpu.dimension_semantics<parallel>], iteration_bounds = array<i64: 2>, scalar_prefetch = 1 : i64, scratch_operands = 0 : i64, tpu.core_type = #tpu.core_type<tc>, window_params = [{pipeline_mode = #tpu.pipeline_mode<synchronous>, transform_indices = @transform_0, window_bounds = array<i64: 24, 128>}, {pipeline_mode = #tpu.pipeline_mode<synchronous>, transform_indices = @transform_1, window_bounds = array<i64: 32, 128>}, {transform_indices = @transform_2, window_bounds = array<i64: 1, 16, 32>}, {pipeline_mode = #tpu.pipeline_mode<synchronous>, transform_indices = @transform_3, window_bounds = array<i64: 128, 128>}, {pipeline_mode = #tpu.pipeline_mode<synchronous>, transform_indices = @transform_4, window_bounds = array<i64: 1, 128>}, {pipeline_mode = #tpu.pipeline_mode<synchronous>, transform_indices = @transform_5, window_bounds = array<i64: 128, 128>}, {pipeline_mode = #tpu.pipeline_mode<synchronous>, transform_indices = @transform_6, window_bounds = array<i64: 1, 128>}, {pipeline_mode = #tpu.pipeline_mode<synchronous>, transform_indices = @transform_7, window_bounds = array<i64: 2, 128, 128>}, {pipeline_mode = #tpu.pipeline_mode<synchronous>, transform_indices = @transform_8, window_bounds = array<i64: 2, 1, 128>}, {pipeline_mode = #tpu.pipeline_mode<synchronous>, transform_indices = @transform_9, window_bounds = array<i64: 2, 32, 128>}, {pipeline_mode = #tpu.pipeline_mode<synchronous>, transform_indices = @transform_10, window_bounds = array<i64: 2, 1, 128>}, {pipeline_mode = #tpu.pipeline_mode<synchronous>, transform_indices = @transform_11, window_bounds = array<i64: 2, 128, 128>}, {pipeline_mode = #tpu.pipeline_mode<synchronous>, transform_indices = @transform_12, window_bounds = array<i64: 2, 1, 128>}, {pipeline_mode = #tpu.pipeline_mode<synchronous>, transform_indices = @transform_13, window_bounds = array<i64: 2, 32, 128>}, {pipeline_mode = #tpu.pipeline_mode<synchronous>, transform_indices = @transform_14, window_bounds = array<i64: 2, 1, 128>}, {pipeline_mode = #tpu.pipeline_mode<synchronous>, transform_indices = @transform_15, window_bounds = array<i64: 2, 32, 128>}, {pipeline_mode = #tpu.pipeline_mode<synchronous>, transform_indices = @transform_16, window_bounds = array<i64: 2, 1, 128>}, {pipeline_mode = #tpu.pipeline_mode<synchronous>, transform_indices = @transform_17, window_bounds = array<i64: 2, 128, 128>}, {pipeline_mode = #tpu.pipeline_mode<synchronous>, transform_indices = @transform_18, window_bounds = array<i64: 2, 1, 128>}, {pipeline_mode = #tpu.pipeline_mode<synchronous>, transform_indices = @transform_19, window_bounds = array<i64: 2, 128, 128>}, {pipeline_mode = #tpu.pipeline_mode<synchronous>, transform_indices = @transform_20, window_bounds = array<i64: 2, 1, 128>}, {pipeline_mode = #tpu.pipeline_mode<synchronous>, transform_indices = @transform_21, window_bounds = array<i64: 2, 1, 128>}, {pipeline_mode = #tpu.pipeline_mode<synchronous>, transform_indices = @transform_22, window_bounds = array<i64: 2, 1, 128>}, {pipeline_mode = #tpu.pipeline_mode<synchronous>, transform_indices = @transform_23, window_bounds = array<i64: 2, 1, 128>}, {pipeline_mode = #tpu.pipeline_mode<synchronous>, transform_indices = @transform_24, window_bounds = array<i64: 2, 1, 128>}, {pipeline_mode = #tpu.pipeline_mode<synchronous>, transform_indices = @transform_25, window_bounds = array<i64: 2, 1, 128>}, {pipeline_mode = #tpu.pipeline_mode<synchronous>, transform_indices = @transform_26, window_bounds = array<i64: 2, 1, 128>}, {transform_indices = @transform_27, window_bounds = array<i64: 8, 128>}]} {
    %c0 = arith.constant 0 : index
    %0 = arith.index_cast %arg0 : i32 to index
    %1 = memref.load %arg1[%c0, %0] : memref<8x2xi32, #tpu.memory_space<smem>>
    %2 = arith.index_cast %1 : i32 to index
    %c0_0 = arith.constant 0 : index
    %3 = vector.load %arg2[%2, %c0_0] : memref<24x128xf32, #tpu.memory_space<vmem>>, vector<1x128xf32>
    %c1 = arith.constant 1 : index
    %4 = arith.index_cast %arg0 : i32 to index
    %5 = memref.load %arg1[%c1, %4] : memref<8x2xi32, #tpu.memory_space<smem>>
    %6 = arith.index_cast %5 : i32 to index
    %c0_1 = arith.constant 0 : index
    %7 = vector.load %arg2[%6, %c0_1] : memref<24x128xf32, #tpu.memory_space<vmem>>, vector<1x128xf32>
    %c2 = arith.constant 2 : index
    %8 = arith.index_cast %arg0 : i32 to index
    %9 = memref.load %arg1[%c2, %8] : memref<8x2xi32, #tpu.memory_space<smem>>
    %10 = arith.index_cast %9 : i32 to index
    %c0_2 = arith.constant 0 : index
    %11 = vector.load %arg2[%10, %c0_2] : memref<24x128xf32, #tpu.memory_space<vmem>>, vector<1x128xf32>
    %c3 = arith.constant 3 : index
    %12 = arith.index_cast %arg0 : i32 to index
    %13 = memref.load %arg1[%c3, %12] : memref<8x2xi32, #tpu.memory_space<smem>>
    %14 = arith.index_cast %13 : i32 to index
    %c0_3 = arith.constant 0 : index
    %15 = vector.load %arg2[%14, %c0_3] : memref<24x128xf32, #tpu.memory_space<vmem>>, vector<1x128xf32>
    %c4 = arith.constant 4 : index
    %16 = arith.index_cast %arg0 : i32 to index
    %17 = memref.load %arg1[%c4, %16] : memref<8x2xi32, #tpu.memory_space<smem>>
    %18 = arith.index_cast %17 : i32 to index
    %c0_4 = arith.constant 0 : index
    %19 = vector.load %arg2[%18, %c0_4] : memref<24x128xf32, #tpu.memory_space<vmem>>, vector<1x128xf32>
    %c5 = arith.constant 5 : index
    %20 = arith.index_cast %arg0 : i32 to index
    %21 = memref.load %arg1[%c5, %20] : memref<8x2xi32, #tpu.memory_space<smem>>
    %22 = arith.index_cast %21 : i32 to index
    %c0_5 = arith.constant 0 : index
    %23 = vector.load %arg2[%22, %c0_5] : memref<24x128xf32, #tpu.memory_space<vmem>>, vector<1x128xf32>
    %c6 = arith.constant 6 : index
    %24 = arith.index_cast %arg0 : i32 to index
    %25 = memref.load %arg1[%c6, %24] : memref<8x2xi32, #tpu.memory_space<smem>>
    %26 = arith.index_cast %25 : i32 to index
    %c0_6 = arith.constant 0 : index
    %27 = vector.load %arg2[%26, %c0_6] : memref<24x128xf32, #tpu.memory_space<vmem>>, vector<1x128xf32>
    %c7 = arith.constant 7 : index
    %28 = arith.index_cast %arg0 : i32 to index
    %29 = memref.load %arg1[%c7, %28] : memref<8x2xi32, #tpu.memory_space<smem>>
    %30 = arith.index_cast %29 : i32 to index
    %c0_7 = arith.constant 0 : index
    %31 = vector.load %arg2[%30, %c0_7] : memref<24x128xf32, #tpu.memory_space<vmem>>, vector<1x128xf32>
    %32 = tpu.concatenate %3, %7, %11, %15, %19, %23, %27, %31 in 0 : vector<1x128xf32>, vector<1x128xf32>, vector<1x128xf32>, vector<1x128xf32>, vector<1x128xf32>, vector<1x128xf32>, vector<1x128xf32>, vector<1x128xf32> -> vector<8x128xf32>
    %c0_8 = arith.constant 0 : index
    %c0_9 = arith.constant 0 : index
    %33 = vector.load %arg3[%c0_8, %c0_9] : memref<32x128xf32, #tpu.memory_space<vmem>>, vector<8x128xf32>
    %34 = arith.addf %32, %33 : vector<8x128xf32>
    %35 = tpu.iota {dimensions = array<i32: 0>} : vector<8x8xi32>
    %36 = tpu.iota {dimensions = array<i32: 1>} : vector<8x8xi32>
    %37 = arith.cmpi sgt, %36, %35 : vector<8x8xi32>
    %cst = arith.constant -1.000000e+30 : f32
    %cst_10 = arith.constant 0.000000e+00 : f32
    %38 = vector.broadcast %cst : f32 to vector<8x8xf32>
    %39 = vector.broadcast %cst_10 : f32 to vector<8x8xf32>
    %40 = arith.select %37, %38, %39 : vector<8x8xi1>, vector<8x8xf32>
    %41 = tpu.iota {dimensions = array<i32: 1>} : vector<8x16xi32>
    %c10_i32 = arith.constant 10 : i32
    %42 = vector.broadcast %c10_i32 : i32 to vector<8x16xi32>
    %43 = arith.cmpi sge, %41, %42 : vector<8x16xi32>
    %cst_11 = arith.constant -1.000000e+30 : f32
    %cst_12 = arith.constant 0.000000e+00 : f32
    %44 = vector.broadcast %cst_11 : f32 to vector<8x16xf32>
    %45 = vector.broadcast %cst_12 : f32 to vector<8x16xf32>
    %46 = arith.select %43, %44, %45 : vector<8x16xi1>, vector<8x16xf32>
    %47 = tpu.iota {dimensions = array<i32: 1>} : vector<1x128xi32>
    %c32_i32 = arith.constant 32 : i32
    %48 = vector.broadcast %c32_i32 : i32 to vector<1x128xi32>
    %49 = arith.cmpi slt, %47, %48 : vector<1x128xi32>
    %50 = arith.extui %49 : vector<1x128xi1> to vector<1x128xi32>
    %51 = arith.sitofp %50 : vector<1x128xi32> to vector<1x128xf32>
    %c0_13 = arith.constant 0 : index
    %c0_14 = arith.constant 0 : index
    %52 = vector.load %arg5[%c0_13, %c0_14] : memref<128x128xbf16, #tpu.memory_space<vmem>>, vector<128x128xbf16>
    %c0_15 = arith.constant 0 : index
    %c0_16 = arith.constant 0 : index
    %53 = vector.load %arg6[%c0_15, %c0_16] : memref<1x128xf32, #tpu.memory_space<vmem>>, vector<1x128xf32>
    %54 = arith.truncf %34 : vector<8x128xf32> to vector<8x128xbf16>
    %cst_17 = arith.constant dense<0.000000e+00> : vector<8x128xf32>
    %55 = tpu.matmul %54, %52, %cst_17 {dimension_numbers = #tpu.dot_dimension_numbers<[1], [0], [0], [1], [0, 0, 1, 1], [], []>} : vector<8x128xbf16>, vector<128x128xbf16>, vector<8x128xf32> -> vector<8x128xf32>
    %56 = vector.broadcast %53 : vector<1x128xf32> to vector<8x128xf32>
    %57 = arith.addf %55, %56 : vector<8x128xf32>
    %c0_18 = arith.constant 0 : index
    %c0_19 = arith.constant 0 : index
    %c0_20 = arith.constant 0 : index
    %58 = vector.load %arg4[%c0_18, %c0_19, %c0_20] : memref<1x16x32xf32, #tpu.memory_space<vmem>>, vector<1x16x32xf32>
    %59 = vector.shape_cast %58 : vector<1x16x32xf32> to vector<16x32xf32>
    %c0_21 = arith.constant 0 : index
    %c0_22 = arith.constant 0 : index
    %c0_23 = arith.constant 0 : index
    %60 = vector.load %arg9[%c0_21, %c0_22, %c0_23] : memref<2x128x128xbf16, #tpu.memory_space<vmem>>, vector<1x128x128xbf16>
    %61 = vector.shape_cast %60 : vector<1x128x128xbf16> to vector<128x128xbf16>
    %c0_24 = arith.constant 0 : index
    %c0_25 = arith.constant 0 : index
    %c0_26 = arith.constant 0 : index
    %62 = vector.load %arg10[%c0_24, %c0_25, %c0_26] : memref<2x1x128xf32, #tpu.memory_space<vmem>>, vector<1x1x128xf32>
    %63 = vector.shape_cast %62 : vector<1x1x128xf32> to vector<1x128xf32>
    %64 = arith.truncf %57 : vector<8x128xf32> to vector<8x128xbf16>
    %cst_27 = arith.constant dense<0.000000e+00> : vector<8x128xf32>
    %65 = tpu.matmul %64, %61, %cst_27 {dimension_numbers = #tpu.dot_dimension_numbers<[1], [0], [0], [1], [0, 0, 1, 1], [], []>} : vector<8x128xbf16>, vector<128x128xbf16>, vector<8x128xf32> -> vector<8x128xf32>
    %66 = vector.broadcast %63 : vector<1x128xf32> to vector<8x128xf32>
    %67 = arith.addf %65, %66 : vector<8x128xf32>
    %68 = vector.extract_strided_slice %67 {offsets = [0, 0], sizes = [8, 32], strides = [1, 1]} : vector<8x128xf32> to vector<8x32xf32>
    %69 = vector.extract_strided_slice %67 {offsets = [0, 32], sizes = [8, 32], strides = [1, 1]} : vector<8x128xf32> to vector<8x32xf32>
    %70 = vector.extract_strided_slice %67 {offsets = [0, 64], sizes = [8, 32], strides = [1, 1]} : vector<8x128xf32> to vector<8x32xf32>
    %c0_28 = arith.constant 0 : index
    %c0_29 = arith.constant 0 : index
    %c0_30 = arith.constant 0 : index
    %71 = vector.load %arg11[%c0_28, %c0_29, %c0_30] : memref<2x32x128xbf16, #tpu.memory_space<vmem>>, vector<1x32x128xbf16>
    %72 = vector.shape_cast %71 : vector<1x32x128xbf16> to vector<32x128xbf16>
    %c0_31 = arith.constant 0 : index
    %c0_32 = arith.constant 0 : index
    %c0_33 = arith.constant 0 : index
    %73 = vector.load %arg12[%c0_31, %c0_32, %c0_33] : memref<2x1x128xf32, #tpu.memory_space<vmem>>, vector<1x1x128xf32>
    %74 = vector.shape_cast %73 : vector<1x1x128xf32> to vector<1x128xf32>
    %75 = vector.extract_strided_slice %68 {offsets = [0, 0], sizes = [8, 8], strides = [1, 1]} : vector<8x32xf32> to vector<8x8xf32>
    %76 = arith.truncf %75 : vector<8x8xf32> to vector<8x8xbf16>
    %77 = vector.extract_strided_slice %69 {offsets = [0, 0], sizes = [8, 8], strides = [1, 1]} : vector<8x32xf32> to vector<8x8xf32>
    %78 = arith.truncf %77 : vector<8x8xf32> to vector<8x8xbf16>
    %79 = vector.extract_strided_slice %70 {offsets = [0, 0], sizes = [8, 8], strides = [1, 1]} : vector<8x32xf32> to vector<8x8xf32>
    %80 = arith.truncf %79 : vector<8x8xf32> to vector<8x8xbf16>
    %cst_34 = arith.constant dense<0.000000e+00> : vector<8x8xf32>
    %81 = tpu.matmul %76, %78, %cst_34 {dimension_numbers = #tpu.dot_dimension_numbers<[1], [1], [0], [0], [0, 0, 1, 0], [], []>} : vector<8x8xbf16>, vector<8x8xbf16>, vector<8x8xf32> -> vector<8x8xf32>
    %82 = arith.addf %81, %40 : vector<8x8xf32>
    %cst_35 = arith.constant dense<0xFF800000> : vector<8xf32>
    %83 = vector.multi_reduction <maximumf>, %82, %cst_35 [1] : vector<8x8xf32> to vector<8xf32>
    %84 = vector.shape_cast %83 : vector<8xf32> to vector<8x1xf32>
    %85 = vector.broadcast %84 : vector<8x1xf32> to vector<8x8xf32>
    %86 = arith.subf %82, %85 : vector<8x8xf32>
    %87 = math.exp %86 : vector<8x8xf32>
    %cst_36 = arith.constant dense<0.000000e+00> : vector<8xf32>
    %88 = vector.multi_reduction <add>, %87, %cst_36 [1] : vector<8x8xf32> to vector<8xf32>
    %89 = vector.shape_cast %88 : vector<8xf32> to vector<8x1xf32>
    %90 = tpu.reciprocal %89 {approx = true} : vector<8x1xf32> -> vector<8x1xf32>
    %91 = vector.broadcast %90 : vector<8x1xf32> to vector<8x8xf32>
    %92 = arith.mulf %87, %91 : vector<8x8xf32>
    %93 = arith.truncf %92 : vector<8x8xf32> to vector<8x8xbf16>
    %cst_37 = arith.constant dense<0.000000e+00> : vector<8x8xf32>
    %94 = tpu.matmul %93, %80, %cst_37 {dimension_numbers = #tpu.dot_dimension_numbers<[1], [0], [0], [1], [0, 0, 1, 1], [], []>} : vector<8x8xbf16>, vector<8x8xbf16>, vector<8x8xf32> -> vector<8x8xf32>
    %95 = vector.extract_strided_slice %68 {offsets = [0, 8], sizes = [8, 8], strides = [1, 1]} : vector<8x32xf32> to vector<8x8xf32>
    %96 = arith.truncf %95 : vector<8x8xf32> to vector<8x8xbf16>
    %97 = vector.extract_strided_slice %69 {offsets = [0, 8], sizes = [8, 8], strides = [1, 1]} : vector<8x32xf32> to vector<8x8xf32>
    %98 = arith.truncf %97 : vector<8x8xf32> to vector<8x8xbf16>
    %99 = vector.extract_strided_slice %70 {offsets = [0, 8], sizes = [8, 8], strides = [1, 1]} : vector<8x32xf32> to vector<8x8xf32>
    %100 = arith.truncf %99 : vector<8x8xf32> to vector<8x8xbf16>
    %cst_38 = arith.constant dense<0.000000e+00> : vector<8x8xf32>
    %101 = tpu.matmul %96, %98, %cst_38 {dimension_numbers = #tpu.dot_dimension_numbers<[1], [1], [0], [0], [0, 0, 1, 0], [], []>} : vector<8x8xbf16>, vector<8x8xbf16>, vector<8x8xf32> -> vector<8x8xf32>
    %102 = arith.addf %101, %40 : vector<8x8xf32>
    %cst_39 = arith.constant dense<0xFF800000> : vector<8xf32>
    %103 = vector.multi_reduction <maximumf>, %102, %cst_39 [1] : vector<8x8xf32> to vector<8xf32>
    %104 = vector.shape_cast %103 : vector<8xf32> to vector<8x1xf32>
    %105 = vector.broadcast %104 : vector<8x1xf32> to vector<8x8xf32>
    %106 = arith.subf %102, %105 : vector<8x8xf32>
    %107 = math.exp %106 : vector<8x8xf32>
    %cst_40 = arith.constant dense<0.000000e+00> : vector<8xf32>
    %108 = vector.multi_reduction <add>, %107, %cst_40 [1] : vector<8x8xf32> to vector<8xf32>
    %109 = vector.shape_cast %108 : vector<8xf32> to vector<8x1xf32>
    %110 = tpu.reciprocal %109 {approx = true} : vector<8x1xf32> -> vector<8x1xf32>
    %111 = vector.broadcast %110 : vector<8x1xf32> to vector<8x8xf32>
    %112 = arith.mulf %107, %111 : vector<8x8xf32>
    %113 = arith.truncf %112 : vector<8x8xf32> to vector<8x8xbf16>
    %cst_41 = arith.constant dense<0.000000e+00> : vector<8x8xf32>
    %114 = tpu.matmul %113, %100, %cst_41 {dimension_numbers = #tpu.dot_dimension_numbers<[1], [0], [0], [1], [0, 0, 1, 1], [], []>} : vector<8x8xbf16>, vector<8x8xbf16>, vector<8x8xf32> -> vector<8x8xf32>
    %115 = vector.extract_strided_slice %68 {offsets = [0, 16], sizes = [8, 8], strides = [1, 1]} : vector<8x32xf32> to vector<8x8xf32>
    %116 = arith.truncf %115 : vector<8x8xf32> to vector<8x8xbf16>
    %117 = vector.extract_strided_slice %69 {offsets = [0, 16], sizes = [8, 8], strides = [1, 1]} : vector<8x32xf32> to vector<8x8xf32>
    %118 = arith.truncf %117 : vector<8x8xf32> to vector<8x8xbf16>
    %119 = vector.extract_strided_slice %70 {offsets = [0, 16], sizes = [8, 8], strides = [1, 1]} : vector<8x32xf32> to vector<8x8xf32>
    %120 = arith.truncf %119 : vector<8x8xf32> to vector<8x8xbf16>
    %cst_42 = arith.constant dense<0.000000e+00> : vector<8x8xf32>
    %121 = tpu.matmul %116, %118, %cst_42 {dimension_numbers = #tpu.dot_dimension_numbers<[1], [1], [0], [0], [0, 0, 1, 0], [], []>} : vector<8x8xbf16>, vector<8x8xbf16>, vector<8x8xf32> -> vector<8x8xf32>
    %122 = arith.addf %121, %40 : vector<8x8xf32>
    %cst_43 = arith.constant dense<0xFF800000> : vector<8xf32>
    %123 = vector.multi_reduction <maximumf>, %122, %cst_43 [1] : vector<8x8xf32> to vector<8xf32>
    %124 = vector.shape_cast %123 : vector<8xf32> to vector<8x1xf32>
    %125 = vector.broadcast %124 : vector<8x1xf32> to vector<8x8xf32>
    %126 = arith.subf %122, %125 : vector<8x8xf32>
    %127 = math.exp %126 : vector<8x8xf32>
    %cst_44 = arith.constant dense<0.000000e+00> : vector<8xf32>
    %128 = vector.multi_reduction <add>, %127, %cst_44 [1] : vector<8x8xf32> to vector<8xf32>
    %129 = vector.shape_cast %128 : vector<8xf32> to vector<8x1xf32>
    %130 = tpu.reciprocal %129 {approx = true} : vector<8x1xf32> -> vector<8x1xf32>
    %131 = vector.broadcast %130 : vector<8x1xf32> to vector<8x8xf32>
    %132 = arith.mulf %127, %131 : vector<8x8xf32>
    %133 = arith.truncf %132 : vector<8x8xf32> to vector<8x8xbf16>
    %cst_45 = arith.constant dense<0.000000e+00> : vector<8x8xf32>
    %134 = tpu.matmul %133, %120, %cst_45 {dimension_numbers = #tpu.dot_dimension_numbers<[1], [0], [0], [1], [0, 0, 1, 1], [], []>} : vector<8x8xbf16>, vector<8x8xbf16>, vector<8x8xf32> -> vector<8x8xf32>
    %135 = vector.extract_strided_slice %68 {offsets = [0, 24], sizes = [8, 8], strides = [1, 1]} : vector<8x32xf32> to vector<8x8xf32>
    %136 = arith.truncf %135 : vector<8x8xf32> to vector<8x8xbf16>
    %137 = vector.extract_strided_slice %69 {offsets = [0, 24], sizes = [8, 8], strides = [1, 1]} : vector<8x32xf32> to vector<8x8xf32>
    %138 = arith.truncf %137 : vector<8x8xf32> to vector<8x8xbf16>
    %139 = vector.extract_strided_slice %70 {offsets = [0, 24], sizes = [8, 8], strides = [1, 1]} : vector<8x32xf32> to vector<8x8xf32>
    %140 = arith.truncf %139 : vector<8x8xf32> to vector<8x8xbf16>
    %cst_46 = arith.constant dense<0.000000e+00> : vector<8x8xf32>
    %141 = tpu.matmul %136, %138, %cst_46 {dimension_numbers = #tpu.dot_dimension_numbers<[1], [1], [0], [0], [0, 0, 1, 0], [], []>} : vector<8x8xbf16>, vector<8x8xbf16>, vector<8x8xf32> -> vector<8x8xf32>
    %142 = arith.addf %141, %40 : vector<8x8xf32>
    %cst_47 = arith.constant dense<0xFF800000> : vector<8xf32>
    %143 = vector.multi_reduction <maximumf>, %142, %cst_47 [1] : vector<8x8xf32> to vector<8xf32>
    %144 = vector.shape_cast %143 : vector<8xf32> to vector<8x1xf32>
    %145 = vector.broadcast %144 : vector<8x1xf32> to vector<8x8xf32>
    %146 = arith.subf %142, %145 : vector<8x8xf32>
    %147 = math.exp %146 : vector<8x8xf32>
    %cst_48 = arith.constant dense<0.000000e+00> : vector<8xf32>
    %148 = vector.multi_reduction <add>, %147, %cst_48 [1] : vector<8x8xf32> to vector<8xf32>
    %149 = vector.shape_cast %148 : vector<8xf32> to vector<8x1xf32>
    %150 = tpu.reciprocal %149 {approx = true} : vector<8x1xf32> -> vector<8x1xf32>
    %151 = vector.broadcast %150 : vector<8x1xf32> to vector<8x8xf32>
    %152 = arith.mulf %147, %151 : vector<8x8xf32>
    %153 = arith.truncf %152 : vector<8x8xf32> to vector<8x8xbf16>
    %cst_49 = arith.constant dense<0.000000e+00> : vector<8x8xf32>
    %154 = tpu.matmul %153, %140, %cst_49 {dimension_numbers = #tpu.dot_dimension_numbers<[1], [0], [0], [1], [0, 0, 1, 1], [], []>} : vector<8x8xbf16>, vector<8x8xbf16>, vector<8x8xf32> -> vector<8x8xf32>
    %155 = tpu.concatenate %94, %114, %134, %154 in 1 : vector<8x8xf32>, vector<8x8xf32>, vector<8x8xf32>, vector<8x8xf32> -> vector<8x32xf32>
    %156 = arith.truncf %155 : vector<8x32xf32> to vector<8x32xbf16>
    %cst_50 = arith.constant dense<0.000000e+00> : vector<8x128xf32>
    %157 = tpu.matmul %156, %72, %cst_50 {dimension_numbers = #tpu.dot_dimension_numbers<[1], [0], [0], [1], [0, 0, 1, 1], [], []>} : vector<8x32xbf16>, vector<32x128xbf16>, vector<8x128xf32> -> vector<8x128xf32>
    %158 = vector.broadcast %74 : vector<1x128xf32> to vector<8x128xf32>
    %159 = arith.addf %157, %158 : vector<8x128xf32>
    %160 = arith.addf %57, %159 : vector<8x128xf32>
    %c0_51 = arith.constant 0 : index
    %c0_52 = arith.constant 0 : index
    %c0_53 = arith.constant 0 : index
    %161 = vector.load %arg23[%c0_51, %c0_52, %c0_53] : memref<2x1x128xf32, #tpu.memory_space<vmem>>, vector<1x1x128xf32>
    %162 = vector.shape_cast %161 : vector<1x1x128xf32> to vector<1x128xf32>
    %c0_54 = arith.constant 0 : index
    %c0_55 = arith.constant 0 : index
    %c0_56 = arith.constant 0 : index
    %163 = vector.load %arg24[%c0_54, %c0_55, %c0_56] : memref<2x1x128xf32, #tpu.memory_space<vmem>>, vector<1x1x128xf32>
    %164 = vector.shape_cast %163 : vector<1x1x128xf32> to vector<1x128xf32>
    %cst_57 = arith.constant dense<0.000000e+00> : vector<8xf32>
    %165 = vector.multi_reduction <add>, %160, %cst_57 [1] : vector<8x128xf32> to vector<8xf32>
    %166 = vector.shape_cast %165 : vector<8xf32> to vector<8x1xf32>
    %cst_58 = arith.constant 3.125000e-02 : f32
    %167 = vector.broadcast %cst_58 : f32 to vector<8x1xf32>
    %168 = arith.mulf %166, %167 : vector<8x1xf32>
    %169 = vector.broadcast %168 : vector<8x1xf32> to vector<8x128xf32>
    %170 = arith.subf %160, %169 : vector<8x128xf32>
    %171 = vector.broadcast %51 : vector<1x128xf32> to vector<8x128xf32>
    %172 = arith.mulf %170, %171 : vector<8x128xf32>
    %173 = arith.mulf %172, %172 : vector<8x128xf32>
    %cst_59 = arith.constant dense<0.000000e+00> : vector<8xf32>
    %174 = vector.multi_reduction <add>, %173, %cst_59 [1] : vector<8x128xf32> to vector<8xf32>
    %175 = vector.shape_cast %174 : vector<8xf32> to vector<8x1xf32>
    %cst_60 = arith.constant 3.125000e-02 : f32
    %176 = vector.broadcast %cst_60 : f32 to vector<8x1xf32>
    %177 = arith.mulf %175, %176 : vector<8x1xf32>
    %cst_61 = arith.constant 9.99999974E-6 : f32
    %178 = vector.broadcast %cst_61 : f32 to vector<8x1xf32>
    %179 = arith.addf %177, %178 : vector<8x1xf32>
    %180 = math.rsqrt %179 : vector<8x1xf32>
    %181 = vector.broadcast %180 : vector<8x1xf32> to vector<8x128xf32>
    %182 = arith.mulf %172, %181 : vector<8x128xf32>
    %183 = vector.broadcast %162 : vector<1x128xf32> to vector<8x128xf32>
    %184 = arith.mulf %182, %183 : vector<8x128xf32>
    %185 = vector.broadcast %164 : vector<1x128xf32> to vector<8x128xf32>
    %186 = arith.addf %184, %185 : vector<8x128xf32>
    %c0_62 = arith.constant 0 : index
    %c0_63 = arith.constant 0 : index
    %c0_64 = arith.constant 0 : index
    %187 = vector.load %arg13[%c0_62, %c0_63, %c0_64] : memref<2x128x128xbf16, #tpu.memory_space<vmem>>, vector<1x128x128xbf16>
    %188 = vector.shape_cast %187 : vector<1x128x128xbf16> to vector<128x128xbf16>
    %c0_65 = arith.constant 0 : index
    %c0_66 = arith.constant 0 : index
    %c0_67 = arith.constant 0 : index
    %189 = vector.load %arg14[%c0_65, %c0_66, %c0_67] : memref<2x1x128xf32, #tpu.memory_space<vmem>>, vector<1x1x128xf32>
    %190 = vector.shape_cast %189 : vector<1x1x128xf32> to vector<1x128xf32>
    %191 = arith.truncf %186 : vector<8x128xf32> to vector<8x128xbf16>
    %cst_68 = arith.constant dense<0.000000e+00> : vector<8x128xf32>
    %192 = tpu.matmul %191, %188, %cst_68 {dimension_numbers = #tpu.dot_dimension_numbers<[1], [0], [0], [1], [0, 0, 1, 1], [], []>} : vector<8x128xbf16>, vector<128x128xbf16>, vector<8x128xf32> -> vector<8x128xf32>
    %193 = vector.broadcast %190 : vector<1x128xf32> to vector<8x128xf32>
    %194 = arith.addf %192, %193 : vector<8x128xf32>
    %c0_69 = arith.constant 0 : index
    %c0_70 = arith.constant 0 : index
    %c0_71 = arith.constant 0 : index
    %195 = vector.load %arg15[%c0_69, %c0_70, %c0_71] : memref<2x32x128xbf16, #tpu.memory_space<vmem>>, vector<1x32x128xbf16>
    %196 = vector.shape_cast %195 : vector<1x32x128xbf16> to vector<32x128xbf16>
    %c0_72 = arith.constant 0 : index
    %c0_73 = arith.constant 0 : index
    %c0_74 = arith.constant 0 : index
    %197 = vector.load %arg16[%c0_72, %c0_73, %c0_74] : memref<2x1x128xf32, #tpu.memory_space<vmem>>, vector<1x1x128xf32>
    %198 = vector.shape_cast %197 : vector<1x1x128xf32> to vector<1x128xf32>
    %199 = arith.truncf %59 : vector<16x32xf32> to vector<16x32xbf16>
    %cst_75 = arith.constant dense<0.000000e+00> : vector<16x128xf32>
    %200 = tpu.matmul %199, %196, %cst_75 {dimension_numbers = #tpu.dot_dimension_numbers<[1], [0], [0], [1], [0, 0, 1, 1], [], []>} : vector<16x32xbf16>, vector<32x128xbf16>, vector<16x128xf32> -> vector<16x128xf32>
    %201 = vector.broadcast %198 : vector<1x128xf32> to vector<16x128xf32>
    %202 = arith.addf %200, %201 : vector<16x128xf32>
    %203 = vector.extract_strided_slice %194 {offsets = [0, 0], sizes = [8, 32], strides = [1, 1]} : vector<8x128xf32> to vector<8x32xf32>
    %204 = vector.extract_strided_slice %202 {offsets = [0, 0], sizes = [16, 32], strides = [1, 1]} : vector<16x128xf32> to vector<16x32xf32>
    %205 = vector.extract_strided_slice %202 {offsets = [0, 32], sizes = [16, 32], strides = [1, 1]} : vector<16x128xf32> to vector<16x32xf32>
    %c0_76 = arith.constant 0 : index
    %c0_77 = arith.constant 0 : index
    %c0_78 = arith.constant 0 : index
    %206 = vector.load %arg17[%c0_76, %c0_77, %c0_78] : memref<2x32x128xbf16, #tpu.memory_space<vmem>>, vector<1x32x128xbf16>
    %207 = vector.shape_cast %206 : vector<1x32x128xbf16> to vector<32x128xbf16>
    %c0_79 = arith.constant 0 : index
    %c0_80 = arith.constant 0 : index
    %c0_81 = arith.constant 0 : index
    %208 = vector.load %arg18[%c0_79, %c0_80, %c0_81] : memref<2x1x128xf32, #tpu.memory_space<vmem>>, vector<1x1x128xf32>
    %209 = vector.shape_cast %208 : vector<1x1x128xf32> to vector<1x128xf32>
    %210 = vector.extract_strided_slice %203 {offsets = [0, 0], sizes = [8, 8], strides = [1, 1]} : vector<8x32xf32> to vector<8x8xf32>
    %211 = arith.truncf %210 : vector<8x8xf32> to vector<8x8xbf16>
    %212 = vector.extract_strided_slice %204 {offsets = [0, 0], sizes = [16, 8], strides = [1, 1]} : vector<16x32xf32> to vector<16x8xf32>
    %213 = arith.truncf %212 : vector<16x8xf32> to vector<16x8xbf16>
    %214 = vector.extract_strided_slice %205 {offsets = [0, 0], sizes = [16, 8], strides = [1, 1]} : vector<16x32xf32> to vector<16x8xf32>
    %215 = arith.truncf %214 : vector<16x8xf32> to vector<16x8xbf16>
    %cst_82 = arith.constant dense<0.000000e+00> : vector<8x16xf32>
    %216 = tpu.matmul %211, %213, %cst_82 {dimension_numbers = #tpu.dot_dimension_numbers<[1], [1], [0], [0], [0, 0, 1, 0], [], []>} : vector<8x8xbf16>, vector<16x8xbf16>, vector<8x16xf32> -> vector<8x16xf32>
    %217 = arith.addf %216, %46 : vector<8x16xf32>
    %cst_83 = arith.constant dense<0xFF800000> : vector<8xf32>
    %218 = vector.multi_reduction <maximumf>, %217, %cst_83 [1] : vector<8x16xf32> to vector<8xf32>
    %219 = vector.shape_cast %218 : vector<8xf32> to vector<8x1xf32>
    %220 = vector.broadcast %219 : vector<8x1xf32> to vector<8x16xf32>
    %221 = arith.subf %217, %220 : vector<8x16xf32>
    %222 = math.exp %221 : vector<8x16xf32>
    %cst_84 = arith.constant dense<0.000000e+00> : vector<8xf32>
    %223 = vector.multi_reduction <add>, %222, %cst_84 [1] : vector<8x16xf32> to vector<8xf32>
    %224 = vector.shape_cast %223 : vector<8xf32> to vector<8x1xf32>
    %225 = tpu.reciprocal %224 {approx = true} : vector<8x1xf32> -> vector<8x1xf32>
    %226 = vector.broadcast %225 : vector<8x1xf32> to vector<8x16xf32>
    %227 = arith.mulf %222, %226 : vector<8x16xf32>
    %228 = arith.truncf %227 : vector<8x16xf32> to vector<8x16xbf16>
    %cst_85 = arith.constant dense<0.000000e+00> : vector<8x8xf32>
    %229 = tpu.matmul %228, %215, %cst_85 {dimension_numbers = #tpu.dot_dimension_numbers<[1], [0], [0], [1], [0, 0, 1, 1], [], []>} : vector<8x16xbf16>, vector<16x8xbf16>, vector<8x8xf32> -> vector<8x8xf32>
    %230 = vector.extract_strided_slice %203 {offsets = [0, 8], sizes = [8, 8], strides = [1, 1]} : vector<8x32xf32> to vector<8x8xf32>
    %231 = arith.truncf %230 : vector<8x8xf32> to vector<8x8xbf16>
    %232 = vector.extract_strided_slice %204 {offsets = [0, 8], sizes = [16, 8], strides = [1, 1]} : vector<16x32xf32> to vector<16x8xf32>
    %233 = arith.truncf %232 : vector<16x8xf32> to vector<16x8xbf16>
    %234 = vector.extract_strided_slice %205 {offsets = [0, 8], sizes = [16, 8], strides = [1, 1]} : vector<16x32xf32> to vector<16x8xf32>
    %235 = arith.truncf %234 : vector<16x8xf32> to vector<16x8xbf16>
    %cst_86 = arith.constant dense<0.000000e+00> : vector<8x16xf32>
    %236 = tpu.matmul %231, %233, %cst_86 {dimension_numbers = #tpu.dot_dimension_numbers<[1], [1], [0], [0], [0, 0, 1, 0], [], []>} : vector<8x8xbf16>, vector<16x8xbf16>, vector<8x16xf32> -> vector<8x16xf32>
    %237 = arith.addf %236, %46 : vector<8x16xf32>
    %cst_87 = arith.constant dense<0xFF800000> : vector<8xf32>
    %238 = vector.multi_reduction <maximumf>, %237, %cst_87 [1] : vector<8x16xf32> to vector<8xf32>
    %239 = vector.shape_cast %238 : vector<8xf32> to vector<8x1xf32>
    %240 = vector.broadcast %239 : vector<8x1xf32> to vector<8x16xf32>
    %241 = arith.subf %237, %240 : vector<8x16xf32>
    %242 = math.exp %241 : vector<8x16xf32>
    %cst_88 = arith.constant dense<0.000000e+00> : vector<8xf32>
    %243 = vector.multi_reduction <add>, %242, %cst_88 [1] : vector<8x16xf32> to vector<8xf32>
    %244 = vector.shape_cast %243 : vector<8xf32> to vector<8x1xf32>
    %245 = tpu.reciprocal %244 {approx = true} : vector<8x1xf32> -> vector<8x1xf32>
    %246 = vector.broadcast %245 : vector<8x1xf32> to vector<8x16xf32>
    %247 = arith.mulf %242, %246 : vector<8x16xf32>
    %248 = arith.truncf %247 : vector<8x16xf32> to vector<8x16xbf16>
    %cst_89 = arith.constant dense<0.000000e+00> : vector<8x8xf32>
    %249 = tpu.matmul %248, %235, %cst_89 {dimension_numbers = #tpu.dot_dimension_numbers<[1], [0], [0], [1], [0, 0, 1, 1], [], []>} : vector<8x16xbf16>, vector<16x8xbf16>, vector<8x8xf32> -> vector<8x8xf32>
    %250 = vector.extract_strided_slice %203 {offsets = [0, 16], sizes = [8, 8], strides = [1, 1]} : vector<8x32xf32> to vector<8x8xf32>
    %251 = arith.truncf %250 : vector<8x8xf32> to vector<8x8xbf16>
    %252 = vector.extract_strided_slice %204 {offsets = [0, 16], sizes = [16, 8], strides = [1, 1]} : vector<16x32xf32> to vector<16x8xf32>
    %253 = arith.truncf %252 : vector<16x8xf32> to vector<16x8xbf16>
    %254 = vector.extract_strided_slice %205 {offsets = [0, 16], sizes = [16, 8], strides = [1, 1]} : vector<16x32xf32> to vector<16x8xf32>
    %255 = arith.truncf %254 : vector<16x8xf32> to vector<16x8xbf16>
    %cst_90 = arith.constant dense<0.000000e+00> : vector<8x16xf32>
    %256 = tpu.matmul %251, %253, %cst_90 {dimension_numbers = #tpu.dot_dimension_numbers<[1], [1], [0], [0], [0, 0, 1, 0], [], []>} : vector<8x8xbf16>, vector<16x8xbf16>, vector<8x16xf32> -> vector<8x16xf32>
    %257 = arith.addf %256, %46 : vector<8x16xf32>
    %cst_91 = arith.constant dense<0xFF800000> : vector<8xf32>
    %258 = vector.multi_reduction <maximumf>, %257, %cst_91 [1] : vector<8x16xf32> to vector<8xf32>
    %259 = vector.shape_cast %258 : vector<8xf32> to vector<8x1xf32>
    %260 = vector.broadcast %259 : vector<8x1xf32> to vector<8x16xf32>
    %261 = arith.subf %257, %260 : vector<8x16xf32>
    %262 = math.exp %261 : vector<8x16xf32>
    %cst_92 = arith.constant dense<0.000000e+00> : vector<8xf32>
    %263 = vector.multi_reduction <add>, %262, %cst_92 [1] : vector<8x16xf32> to vector<8xf32>
    %264 = vector.shape_cast %263 : vector<8xf32> to vector<8x1xf32>
    %265 = tpu.reciprocal %264 {approx = true} : vector<8x1xf32> -> vector<8x1xf32>
    %266 = vector.broadcast %265 : vector<8x1xf32> to vector<8x16xf32>
    %267 = arith.mulf %262, %266 : vector<8x16xf32>
    %268 = arith.truncf %267 : vector<8x16xf32> to vector<8x16xbf16>
    %cst_93 = arith.constant dense<0.000000e+00> : vector<8x8xf32>
    %269 = tpu.matmul %268, %255, %cst_93 {dimension_numbers = #tpu.dot_dimension_numbers<[1], [0], [0], [1], [0, 0, 1, 1], [], []>} : vector<8x16xbf16>, vector<16x8xbf16>, vector<8x8xf32> -> vector<8x8xf32>
    %270 = vector.extract_strided_slice %203 {offsets = [0, 24], sizes = [8, 8], strides = [1, 1]} : vector<8x32xf32> to vector<8x8xf32>
    %271 = arith.truncf %270 : vector<8x8xf32> to vector<8x8xbf16>
    %272 = vector.extract_strided_slice %204 {offsets = [0, 24], sizes = [16, 8], strides = [1, 1]} : vector<16x32xf32> to vector<16x8xf32>
    %273 = arith.truncf %272 : vector<16x8xf32> to vector<16x8xbf16>
    %274 = vector.extract_strided_slice %205 {offsets = [0, 24], sizes = [16, 8], strides = [1, 1]} : vector<16x32xf32> to vector<16x8xf32>
    %275 = arith.truncf %274 : vector<16x8xf32> to vector<16x8xbf16>
    %cst_94 = arith.constant dense<0.000000e+00> : vector<8x16xf32>
    %276 = tpu.matmul %271, %273, %cst_94 {dimension_numbers = #tpu.dot_dimension_numbers<[1], [1], [0], [0], [0, 0, 1, 0], [], []>} : vector<8x8xbf16>, vector<16x8xbf16>, vector<8x16xf32> -> vector<8x16xf32>
    %277 = arith.addf %276, %46 : vector<8x16xf32>
    %cst_95 = arith.constant dense<0xFF800000> : vector<8xf32>
    %278 = vector.multi_reduction <maximumf>, %277, %cst_95 [1] : vector<8x16xf32> to vector<8xf32>
    %279 = vector.shape_cast %278 : vector<8xf32> to vector<8x1xf32>
    %280 = vector.broadcast %279 : vector<8x1xf32> to vector<8x16xf32>
    %281 = arith.subf %277, %280 : vector<8x16xf32>
    %282 = math.exp %281 : vector<8x16xf32>
    %cst_96 = arith.constant dense<0.000000e+00> : vector<8xf32>
    %283 = vector.multi_reduction <add>, %282, %cst_96 [1] : vector<8x16xf32> to vector<8xf32>
    %284 = vector.shape_cast %283 : vector<8xf32> to vector<8x1xf32>
    %285 = tpu.reciprocal %284 {approx = true} : vector<8x1xf32> -> vector<8x1xf32>
    %286 = vector.broadcast %285 : vector<8x1xf32> to vector<8x16xf32>
    %287 = arith.mulf %282, %286 : vector<8x16xf32>
    %288 = arith.truncf %287 : vector<8x16xf32> to vector<8x16xbf16>
    %cst_97 = arith.constant dense<0.000000e+00> : vector<8x8xf32>
    %289 = tpu.matmul %288, %275, %cst_97 {dimension_numbers = #tpu.dot_dimension_numbers<[1], [0], [0], [1], [0, 0, 1, 1], [], []>} : vector<8x16xbf16>, vector<16x8xbf16>, vector<8x8xf32> -> vector<8x8xf32>
    %290 = tpu.concatenate %229, %249, %269, %289 in 1 : vector<8x8xf32>, vector<8x8xf32>, vector<8x8xf32>, vector<8x8xf32> -> vector<8x32xf32>
    %291 = arith.truncf %290 : vector<8x32xf32> to vector<8x32xbf16>
    %cst_98 = arith.constant dense<0.000000e+00> : vector<8x128xf32>
    %292 = tpu.matmul %291, %207, %cst_98 {dimension_numbers = #tpu.dot_dimension_numbers<[1], [0], [0], [1], [0, 0, 1, 1], [], []>} : vector<8x32xbf16>, vector<32x128xbf16>, vector<8x128xf32> -> vector<8x128xf32>
    %293 = vector.broadcast %209 : vector<1x128xf32> to vector<8x128xf32>
    %294 = arith.addf %292, %293 : vector<8x128xf32>
    %295 = arith.addf %186, %294 : vector<8x128xf32>
    %c0_99 = arith.constant 0 : index
    %c0_100 = arith.constant 0 : index
    %c0_101 = arith.constant 0 : index
    %296 = vector.load %arg25[%c0_99, %c0_100, %c0_101] : memref<2x1x128xf32, #tpu.memory_space<vmem>>, vector<1x1x128xf32>
    %297 = vector.shape_cast %296 : vector<1x1x128xf32> to vector<1x128xf32>
    %c0_102 = arith.constant 0 : index
    %c0_103 = arith.constant 0 : index
    %c0_104 = arith.constant 0 : index
    %298 = vector.load %arg26[%c0_102, %c0_103, %c0_104] : memref<2x1x128xf32, #tpu.memory_space<vmem>>, vector<1x1x128xf32>
    %299 = vector.shape_cast %298 : vector<1x1x128xf32> to vector<1x128xf32>
    %cst_105 = arith.constant dense<0.000000e+00> : vector<8xf32>
    %300 = vector.multi_reduction <add>, %295, %cst_105 [1] : vector<8x128xf32> to vector<8xf32>
    %301 = vector.shape_cast %300 : vector<8xf32> to vector<8x1xf32>
    %cst_106 = arith.constant 3.125000e-02 : f32
    %302 = vector.broadcast %cst_106 : f32 to vector<8x1xf32>
    %303 = arith.mulf %301, %302 : vector<8x1xf32>
    %304 = vector.broadcast %303 : vector<8x1xf32> to vector<8x128xf32>
    %305 = arith.subf %295, %304 : vector<8x128xf32>
    %306 = vector.broadcast %51 : vector<1x128xf32> to vector<8x128xf32>
    %307 = arith.mulf %305, %306 : vector<8x128xf32>
    %308 = arith.mulf %307, %307 : vector<8x128xf32>
    %cst_107 = arith.constant dense<0.000000e+00> : vector<8xf32>
    %309 = vector.multi_reduction <add>, %308, %cst_107 [1] : vector<8x128xf32> to vector<8xf32>
    %310 = vector.shape_cast %309 : vector<8xf32> to vector<8x1xf32>
    %cst_108 = arith.constant 3.125000e-02 : f32
    %311 = vector.broadcast %cst_108 : f32 to vector<8x1xf32>
    %312 = arith.mulf %310, %311 : vector<8x1xf32>
    %cst_109 = arith.constant 9.99999974E-6 : f32
    %313 = vector.broadcast %cst_109 : f32 to vector<8x1xf32>
    %314 = arith.addf %312, %313 : vector<8x1xf32>
    %315 = math.rsqrt %314 : vector<8x1xf32>
    %316 = vector.broadcast %315 : vector<8x1xf32> to vector<8x128xf32>
    %317 = arith.mulf %307, %316 : vector<8x128xf32>
    %318 = vector.broadcast %297 : vector<1x128xf32> to vector<8x128xf32>
    %319 = arith.mulf %317, %318 : vector<8x128xf32>
    %320 = vector.broadcast %299 : vector<1x128xf32> to vector<8x128xf32>
    %321 = arith.addf %319, %320 : vector<8x128xf32>
    %c0_110 = arith.constant 0 : index
    %c0_111 = arith.constant 0 : index
    %c0_112 = arith.constant 0 : index
    %322 = vector.load %arg19[%c0_110, %c0_111, %c0_112] : memref<2x128x128xbf16, #tpu.memory_space<vmem>>, vector<1x128x128xbf16>
    %323 = vector.shape_cast %322 : vector<1x128x128xbf16> to vector<128x128xbf16>
    %c0_113 = arith.constant 0 : index
    %c0_114 = arith.constant 0 : index
    %c0_115 = arith.constant 0 : index
    %324 = vector.load %arg20[%c0_113, %c0_114, %c0_115] : memref<2x1x128xf32, #tpu.memory_space<vmem>>, vector<1x1x128xf32>
    %325 = vector.shape_cast %324 : vector<1x1x128xf32> to vector<1x128xf32>
    %326 = arith.truncf %321 : vector<8x128xf32> to vector<8x128xbf16>
    %cst_116 = arith.constant dense<0.000000e+00> : vector<8x128xf32>
    %327 = tpu.matmul %326, %323, %cst_116 {dimension_numbers = #tpu.dot_dimension_numbers<[1], [0], [0], [1], [0, 0, 1, 1], [], []>} : vector<8x128xbf16>, vector<128x128xbf16>, vector<8x128xf32> -> vector<8x128xf32>
    %328 = vector.broadcast %325 : vector<1x128xf32> to vector<8x128xf32>
    %329 = arith.addf %327, %328 : vector<8x128xf32>
    %cst_117 = arith.constant 0.000000e+00 : f32
    %330 = vector.broadcast %cst_117 : f32 to vector<8x128xf32>
    %331 = arith.maximumf %329, %330 : vector<8x128xf32>
    %c0_118 = arith.constant 0 : index
    %c0_119 = arith.constant 0 : index
    %c0_120 = arith.constant 0 : index
    %332 = vector.load %arg21[%c0_118, %c0_119, %c0_120] : memref<2x128x128xbf16, #tpu.memory_space<vmem>>, vector<1x128x128xbf16>
    %333 = vector.shape_cast %332 : vector<1x128x128xbf16> to vector<128x128xbf16>
    %c0_121 = arith.constant 0 : index
    %c0_122 = arith.constant 0 : index
    %c0_123 = arith.constant 0 : index
    %334 = vector.load %arg22[%c0_121, %c0_122, %c0_123] : memref<2x1x128xf32, #tpu.memory_space<vmem>>, vector<1x1x128xf32>
    %335 = vector.shape_cast %334 : vector<1x1x128xf32> to vector<1x128xf32>
    %336 = arith.truncf %331 : vector<8x128xf32> to vector<8x128xbf16>
    %cst_124 = arith.constant dense<0.000000e+00> : vector<8x128xf32>
    %337 = tpu.matmul %336, %333, %cst_124 {dimension_numbers = #tpu.dot_dimension_numbers<[1], [0], [0], [1], [0, 0, 1, 1], [], []>} : vector<8x128xbf16>, vector<128x128xbf16>, vector<8x128xf32> -> vector<8x128xf32>
    %338 = vector.broadcast %335 : vector<1x128xf32> to vector<8x128xf32>
    %339 = arith.addf %337, %338 : vector<8x128xf32>
    %340 = arith.addf %321, %339 : vector<8x128xf32>
    %c0_125 = arith.constant 0 : index
    %c0_126 = arith.constant 0 : index
    %c0_127 = arith.constant 0 : index
    %341 = vector.load %arg27[%c0_125, %c0_126, %c0_127] : memref<2x1x128xf32, #tpu.memory_space<vmem>>, vector<1x1x128xf32>
    %342 = vector.shape_cast %341 : vector<1x1x128xf32> to vector<1x128xf32>
    %c0_128 = arith.constant 0 : index
    %c0_129 = arith.constant 0 : index
    %c0_130 = arith.constant 0 : index
    %343 = vector.load %arg28[%c0_128, %c0_129, %c0_130] : memref<2x1x128xf32, #tpu.memory_space<vmem>>, vector<1x1x128xf32>
    %344 = vector.shape_cast %343 : vector<1x1x128xf32> to vector<1x128xf32>
    %cst_131 = arith.constant dense<0.000000e+00> : vector<8xf32>
    %345 = vector.multi_reduction <add>, %340, %cst_131 [1] : vector<8x128xf32> to vector<8xf32>
    %346 = vector.shape_cast %345 : vector<8xf32> to vector<8x1xf32>
    %cst_132 = arith.constant 3.125000e-02 : f32
    %347 = vector.broadcast %cst_132 : f32 to vector<8x1xf32>
    %348 = arith.mulf %346, %347 : vector<8x1xf32>
    %349 = vector.broadcast %348 : vector<8x1xf32> to vector<8x128xf32>
    %350 = arith.subf %340, %349 : vector<8x128xf32>
    %351 = vector.broadcast %51 : vector<1x128xf32> to vector<8x128xf32>
    %352 = arith.mulf %350, %351 : vector<8x128xf32>
    %353 = arith.mulf %352, %352 : vector<8x128xf32>
    %cst_133 = arith.constant dense<0.000000e+00> : vector<8xf32>
    %354 = vector.multi_reduction <add>, %353, %cst_133 [1] : vector<8x128xf32> to vector<8xf32>
    %355 = vector.shape_cast %354 : vector<8xf32> to vector<8x1xf32>
    %cst_134 = arith.constant 3.125000e-02 : f32
    %356 = vector.broadcast %cst_134 : f32 to vector<8x1xf32>
    %357 = arith.mulf %355, %356 : vector<8x1xf32>
    %cst_135 = arith.constant 9.99999974E-6 : f32
    %358 = vector.broadcast %cst_135 : f32 to vector<8x1xf32>
    %359 = arith.addf %357, %358 : vector<8x1xf32>
    %360 = math.rsqrt %359 : vector<8x1xf32>
    %361 = vector.broadcast %360 : vector<8x1xf32> to vector<8x128xf32>
    %362 = arith.mulf %352, %361 : vector<8x128xf32>
    %363 = vector.broadcast %342 : vector<1x128xf32> to vector<8x128xf32>
    %364 = arith.mulf %362, %363 : vector<8x128xf32>
    %365 = vector.broadcast %344 : vector<1x128xf32> to vector<8x128xf32>
    %366 = arith.addf %364, %365 : vector<8x128xf32>
    %c1_136 = arith.constant 1 : index
    %c0_137 = arith.constant 0 : index
    %c0_138 = arith.constant 0 : index
    %367 = vector.load %arg9[%c1_136, %c0_137, %c0_138] : memref<2x128x128xbf16, #tpu.memory_space<vmem>>, vector<1x128x128xbf16>
    %368 = vector.shape_cast %367 : vector<1x128x128xbf16> to vector<128x128xbf16>
    %c1_139 = arith.constant 1 : index
    %c0_140 = arith.constant 0 : index
    %c0_141 = arith.constant 0 : index
    %369 = vector.load %arg10[%c1_139, %c0_140, %c0_141] : memref<2x1x128xf32, #tpu.memory_space<vmem>>, vector<1x1x128xf32>
    %370 = vector.shape_cast %369 : vector<1x1x128xf32> to vector<1x128xf32>
    %371 = arith.truncf %366 : vector<8x128xf32> to vector<8x128xbf16>
    %cst_142 = arith.constant dense<0.000000e+00> : vector<8x128xf32>
    %372 = tpu.matmul %371, %368, %cst_142 {dimension_numbers = #tpu.dot_dimension_numbers<[1], [0], [0], [1], [0, 0, 1, 1], [], []>} : vector<8x128xbf16>, vector<128x128xbf16>, vector<8x128xf32> -> vector<8x128xf32>
    %373 = vector.broadcast %370 : vector<1x128xf32> to vector<8x128xf32>
    %374 = arith.addf %372, %373 : vector<8x128xf32>
    %375 = vector.extract_strided_slice %374 {offsets = [0, 0], sizes = [8, 32], strides = [1, 1]} : vector<8x128xf32> to vector<8x32xf32>
    %376 = vector.extract_strided_slice %374 {offsets = [0, 32], sizes = [8, 32], strides = [1, 1]} : vector<8x128xf32> to vector<8x32xf32>
    %377 = vector.extract_strided_slice %374 {offsets = [0, 64], sizes = [8, 32], strides = [1, 1]} : vector<8x128xf32> to vector<8x32xf32>
    %c1_143 = arith.constant 1 : index
    %c0_144 = arith.constant 0 : index
    %c0_145 = arith.constant 0 : index
    %378 = vector.load %arg11[%c1_143, %c0_144, %c0_145] : memref<2x32x128xbf16, #tpu.memory_space<vmem>>, vector<1x32x128xbf16>
    %379 = vector.shape_cast %378 : vector<1x32x128xbf16> to vector<32x128xbf16>
    %c1_146 = arith.constant 1 : index
    %c0_147 = arith.constant 0 : index
    %c0_148 = arith.constant 0 : index
    %380 = vector.load %arg12[%c1_146, %c0_147, %c0_148] : memref<2x1x128xf32, #tpu.memory_space<vmem>>, vector<1x1x128xf32>
    %381 = vector.shape_cast %380 : vector<1x1x128xf32> to vector<1x128xf32>
    %382 = vector.extract_strided_slice %375 {offsets = [0, 0], sizes = [8, 8], strides = [1, 1]} : vector<8x32xf32> to vector<8x8xf32>
    %383 = arith.truncf %382 : vector<8x8xf32> to vector<8x8xbf16>
    %384 = vector.extract_strided_slice %376 {offsets = [0, 0], sizes = [8, 8], strides = [1, 1]} : vector<8x32xf32> to vector<8x8xf32>
    %385 = arith.truncf %384 : vector<8x8xf32> to vector<8x8xbf16>
    %386 = vector.extract_strided_slice %377 {offsets = [0, 0], sizes = [8, 8], strides = [1, 1]} : vector<8x32xf32> to vector<8x8xf32>
    %387 = arith.truncf %386 : vector<8x8xf32> to vector<8x8xbf16>
    %cst_149 = arith.constant dense<0.000000e+00> : vector<8x8xf32>
    %388 = tpu.matmul %383, %385, %cst_149 {dimension_numbers = #tpu.dot_dimension_numbers<[1], [1], [0], [0], [0, 0, 1, 0], [], []>} : vector<8x8xbf16>, vector<8x8xbf16>, vector<8x8xf32> -> vector<8x8xf32>
    %389 = arith.addf %388, %40 : vector<8x8xf32>
    %cst_150 = arith.constant dense<0xFF800000> : vector<8xf32>
    %390 = vector.multi_reduction <maximumf>, %389, %cst_150 [1] : vector<8x8xf32> to vector<8xf32>
    %391 = vector.shape_cast %390 : vector<8xf32> to vector<8x1xf32>
    %392 = vector.broadcast %391 : vector<8x1xf32> to vector<8x8xf32>
    %393 = arith.subf %389, %392 : vector<8x8xf32>
    %394 = math.exp %393 : vector<8x8xf32>
    %cst_151 = arith.constant dense<0.000000e+00> : vector<8xf32>
    %395 = vector.multi_reduction <add>, %394, %cst_151 [1] : vector<8x8xf32> to vector<8xf32>
    %396 = vector.shape_cast %395 : vector<8xf32> to vector<8x1xf32>
    %397 = tpu.reciprocal %396 {approx = true} : vector<8x1xf32> -> vector<8x1xf32>
    %398 = vector.broadcast %397 : vector<8x1xf32> to vector<8x8xf32>
    %399 = arith.mulf %394, %398 : vector<8x8xf32>
    %400 = arith.truncf %399 : vector<8x8xf32> to vector<8x8xbf16>
    %cst_152 = arith.constant dense<0.000000e+00> : vector<8x8xf32>
    %401 = tpu.matmul %400, %387, %cst_152 {dimension_numbers = #tpu.dot_dimension_numbers<[1], [0], [0], [1], [0, 0, 1, 1], [], []>} : vector<8x8xbf16>, vector<8x8xbf16>, vector<8x8xf32> -> vector<8x8xf32>
    %402 = vector.extract_strided_slice %375 {offsets = [0, 8], sizes = [8, 8], strides = [1, 1]} : vector<8x32xf32> to vector<8x8xf32>
    %403 = arith.truncf %402 : vector<8x8xf32> to vector<8x8xbf16>
    %404 = vector.extract_strided_slice %376 {offsets = [0, 8], sizes = [8, 8], strides = [1, 1]} : vector<8x32xf32> to vector<8x8xf32>
    %405 = arith.truncf %404 : vector<8x8xf32> to vector<8x8xbf16>
    %406 = vector.extract_strided_slice %377 {offsets = [0, 8], sizes = [8, 8], strides = [1, 1]} : vector<8x32xf32> to vector<8x8xf32>
    %407 = arith.truncf %406 : vector<8x8xf32> to vector<8x8xbf16>
    %cst_153 = arith.constant dense<0.000000e+00> : vector<8x8xf32>
    %408 = tpu.matmul %403, %405, %cst_153 {dimension_numbers = #tpu.dot_dimension_numbers<[1], [1], [0], [0], [0, 0, 1, 0], [], []>} : vector<8x8xbf16>, vector<8x8xbf16>, vector<8x8xf32> -> vector<8x8xf32>
    %409 = arith.addf %408, %40 : vector<8x8xf32>
    %cst_154 = arith.constant dense<0xFF800000> : vector<8xf32>
    %410 = vector.multi_reduction <maximumf>, %409, %cst_154 [1] : vector<8x8xf32> to vector<8xf32>
    %411 = vector.shape_cast %410 : vector<8xf32> to vector<8x1xf32>
    %412 = vector.broadcast %411 : vector<8x1xf32> to vector<8x8xf32>
    %413 = arith.subf %409, %412 : vector<8x8xf32>
    %414 = math.exp %413 : vector<8x8xf32>
    %cst_155 = arith.constant dense<0.000000e+00> : vector<8xf32>
    %415 = vector.multi_reduction <add>, %414, %cst_155 [1] : vector<8x8xf32> to vector<8xf32>
    %416 = vector.shape_cast %415 : vector<8xf32> to vector<8x1xf32>
    %417 = tpu.reciprocal %416 {approx = true} : vector<8x1xf32> -> vector<8x1xf32>
    %418 = vector.broadcast %417 : vector<8x1xf32> to vector<8x8xf32>
    %419 = arith.mulf %414, %418 : vector<8x8xf32>
    %420 = arith.truncf %419 : vector<8x8xf32> to vector<8x8xbf16>
    %cst_156 = arith.constant dense<0.000000e+00> : vector<8x8xf32>
    %421 = tpu.matmul %420, %407, %cst_156 {dimension_numbers = #tpu.dot_dimension_numbers<[1], [0], [0], [1], [0, 0, 1, 1], [], []>} : vector<8x8xbf16>, vector<8x8xbf16>, vector<8x8xf32> -> vector<8x8xf32>
    %422 = vector.extract_strided_slice %375 {offsets = [0, 16], sizes = [8, 8], strides = [1, 1]} : vector<8x32xf32> to vector<8x8xf32>
    %423 = arith.truncf %422 : vector<8x8xf32> to vector<8x8xbf16>
    %424 = vector.extract_strided_slice %376 {offsets = [0, 16], sizes = [8, 8], strides = [1, 1]} : vector<8x32xf32> to vector<8x8xf32>
    %425 = arith.truncf %424 : vector<8x8xf32> to vector<8x8xbf16>
    %426 = vector.extract_strided_slice %377 {offsets = [0, 16], sizes = [8, 8], strides = [1, 1]} : vector<8x32xf32> to vector<8x8xf32>
    %427 = arith.truncf %426 : vector<8x8xf32> to vector<8x8xbf16>
    %cst_157 = arith.constant dense<0.000000e+00> : vector<8x8xf32>
    %428 = tpu.matmul %423, %425, %cst_157 {dimension_numbers = #tpu.dot_dimension_numbers<[1], [1], [0], [0], [0, 0, 1, 0], [], []>} : vector<8x8xbf16>, vector<8x8xbf16>, vector<8x8xf32> -> vector<8x8xf32>
    %429 = arith.addf %428, %40 : vector<8x8xf32>
    %cst_158 = arith.constant dense<0xFF800000> : vector<8xf32>
    %430 = vector.multi_reduction <maximumf>, %429, %cst_158 [1] : vector<8x8xf32> to vector<8xf32>
    %431 = vector.shape_cast %430 : vector<8xf32> to vector<8x1xf32>
    %432 = vector.broadcast %431 : vector<8x1xf32> to vector<8x8xf32>
    %433 = arith.subf %429, %432 : vector<8x8xf32>
    %434 = math.exp %433 : vector<8x8xf32>
    %cst_159 = arith.constant dense<0.000000e+00> : vector<8xf32>
    %435 = vector.multi_reduction <add>, %434, %cst_159 [1] : vector<8x8xf32> to vector<8xf32>
    %436 = vector.shape_cast %435 : vector<8xf32> to vector<8x1xf32>
    %437 = tpu.reciprocal %436 {approx = true} : vector<8x1xf32> -> vector<8x1xf32>
    %438 = vector.broadcast %437 : vector<8x1xf32> to vector<8x8xf32>
    %439 = arith.mulf %434, %438 : vector<8x8xf32>
    %440 = arith.truncf %439 : vector<8x8xf32> to vector<8x8xbf16>
    %cst_160 = arith.constant dense<0.000000e+00> : vector<8x8xf32>
    %441 = tpu.matmul %440, %427, %cst_160 {dimension_numbers = #tpu.dot_dimension_numbers<[1], [0], [0], [1], [0, 0, 1, 1], [], []>} : vector<8x8xbf16>, vector<8x8xbf16>, vector<8x8xf32> -> vector<8x8xf32>
    %442 = vector.extract_strided_slice %375 {offsets = [0, 24], sizes = [8, 8], strides = [1, 1]} : vector<8x32xf32> to vector<8x8xf32>
    %443 = arith.truncf %442 : vector<8x8xf32> to vector<8x8xbf16>
    %444 = vector.extract_strided_slice %376 {offsets = [0, 24], sizes = [8, 8], strides = [1, 1]} : vector<8x32xf32> to vector<8x8xf32>
    %445 = arith.truncf %444 : vector<8x8xf32> to vector<8x8xbf16>
    %446 = vector.extract_strided_slice %377 {offsets = [0, 24], sizes = [8, 8], strides = [1, 1]} : vector<8x32xf32> to vector<8x8xf32>
    %447 = arith.truncf %446 : vector<8x8xf32> to vector<8x8xbf16>
    %cst_161 = arith.constant dense<0.000000e+00> : vector<8x8xf32>
    %448 = tpu.matmul %443, %445, %cst_161 {dimension_numbers = #tpu.dot_dimension_numbers<[1], [1], [0], [0], [0, 0, 1, 0], [], []>} : vector<8x8xbf16>, vector<8x8xbf16>, vector<8x8xf32> -> vector<8x8xf32>
    %449 = arith.addf %448, %40 : vector<8x8xf32>
    %cst_162 = arith.constant dense<0xFF800000> : vector<8xf32>
    %450 = vector.multi_reduction <maximumf>, %449, %cst_162 [1] : vector<8x8xf32> to vector<8xf32>
    %451 = vector.shape_cast %450 : vector<8xf32> to vector<8x1xf32>
    %452 = vector.broadcast %451 : vector<8x1xf32> to vector<8x8xf32>
    %453 = arith.subf %449, %452 : vector<8x8xf32>
    %454 = math.exp %453 : vector<8x8xf32>
    %cst_163 = arith.constant dense<0.000000e+00> : vector<8xf32>
    %455 = vector.multi_reduction <add>, %454, %cst_163 [1] : vector<8x8xf32> to vector<8xf32>
    %456 = vector.shape_cast %455 : vector<8xf32> to vector<8x1xf32>
    %457 = tpu.reciprocal %456 {approx = true} : vector<8x1xf32> -> vector<8x1xf32>
    %458 = vector.broadcast %457 : vector<8x1xf32> to vector<8x8xf32>
    %459 = arith.mulf %454, %458 : vector<8x8xf32>
    %460 = arith.truncf %459 : vector<8x8xf32> to vector<8x8xbf16>
    %cst_164 = arith.constant dense<0.000000e+00> : vector<8x8xf32>
    %461 = tpu.matmul %460, %447, %cst_164 {dimension_numbers = #tpu.dot_dimension_numbers<[1], [0], [0], [1], [0, 0, 1, 1], [], []>} : vector<8x8xbf16>, vector<8x8xbf16>, vector<8x8xf32> -> vector<8x8xf32>
    %462 = tpu.concatenate %401, %421, %441, %461 in 1 : vector<8x8xf32>, vector<8x8xf32>, vector<8x8xf32>, vector<8x8xf32> -> vector<8x32xf32>
    %463 = arith.truncf %462 : vector<8x32xf32> to vector<8x32xbf16>
    %cst_165 = arith.constant dense<0.000000e+00> : vector<8x128xf32>
    %464 = tpu.matmul %463, %379, %cst_165 {dimension_numbers = #tpu.dot_dimension_numbers<[1], [0], [0], [1], [0, 0, 1, 1], [], []>} : vector<8x32xbf16>, vector<32x128xbf16>, vector<8x128xf32> -> vector<8x128xf32>
    %465 = vector.broadcast %381 : vector<1x128xf32> to vector<8x128xf32>
    %466 = arith.addf %464, %465 : vector<8x128xf32>
    %467 = arith.addf %366, %466 : vector<8x128xf32>
    %c1_166 = arith.constant 1 : index
    %c0_167 = arith.constant 0 : index
    %c0_168 = arith.constant 0 : index
    %468 = vector.load %arg23[%c1_166, %c0_167, %c0_168] : memref<2x1x128xf32, #tpu.memory_space<vmem>>, vector<1x1x128xf32>
    %469 = vector.shape_cast %468 : vector<1x1x128xf32> to vector<1x128xf32>
    %c1_169 = arith.constant 1 : index
    %c0_170 = arith.constant 0 : index
    %c0_171 = arith.constant 0 : index
    %470 = vector.load %arg24[%c1_169, %c0_170, %c0_171] : memref<2x1x128xf32, #tpu.memory_space<vmem>>, vector<1x1x128xf32>
    %471 = vector.shape_cast %470 : vector<1x1x128xf32> to vector<1x128xf32>
    %cst_172 = arith.constant dense<0.000000e+00> : vector<8xf32>
    %472 = vector.multi_reduction <add>, %467, %cst_172 [1] : vector<8x128xf32> to vector<8xf32>
    %473 = vector.shape_cast %472 : vector<8xf32> to vector<8x1xf32>
    %cst_173 = arith.constant 3.125000e-02 : f32
    %474 = vector.broadcast %cst_173 : f32 to vector<8x1xf32>
    %475 = arith.mulf %473, %474 : vector<8x1xf32>
    %476 = vector.broadcast %475 : vector<8x1xf32> to vector<8x128xf32>
    %477 = arith.subf %467, %476 : vector<8x128xf32>
    %478 = vector.broadcast %51 : vector<1x128xf32> to vector<8x128xf32>
    %479 = arith.mulf %477, %478 : vector<8x128xf32>
    %480 = arith.mulf %479, %479 : vector<8x128xf32>
    %cst_174 = arith.constant dense<0.000000e+00> : vector<8xf32>
    %481 = vector.multi_reduction <add>, %480, %cst_174 [1] : vector<8x128xf32> to vector<8xf32>
    %482 = vector.shape_cast %481 : vector<8xf32> to vector<8x1xf32>
    %cst_175 = arith.constant 3.125000e-02 : f32
    %483 = vector.broadcast %cst_175 : f32 to vector<8x1xf32>
    %484 = arith.mulf %482, %483 : vector<8x1xf32>
    %cst_176 = arith.constant 9.99999974E-6 : f32
    %485 = vector.broadcast %cst_176 : f32 to vector<8x1xf32>
    %486 = arith.addf %484, %485 : vector<8x1xf32>
    %487 = math.rsqrt %486 : vector<8x1xf32>
    %488 = vector.broadcast %487 : vector<8x1xf32> to vector<8x128xf32>
    %489 = arith.mulf %479, %488 : vector<8x128xf32>
    %490 = vector.broadcast %469 : vector<1x128xf32> to vector<8x128xf32>
    %491 = arith.mulf %489, %490 : vector<8x128xf32>
    %492 = vector.broadcast %471 : vector<1x128xf32> to vector<8x128xf32>
    %493 = arith.addf %491, %492 : vector<8x128xf32>
    %c1_177 = arith.constant 1 : index
    %c0_178 = arith.constant 0 : index
    %c0_179 = arith.constant 0 : index
    %494 = vector.load %arg13[%c1_177, %c0_178, %c0_179] : memref<2x128x128xbf16, #tpu.memory_space<vmem>>, vector<1x128x128xbf16>
    %495 = vector.shape_cast %494 : vector<1x128x128xbf16> to vector<128x128xbf16>
    %c1_180 = arith.constant 1 : index
    %c0_181 = arith.constant 0 : index
    %c0_182 = arith.constant 0 : index
    %496 = vector.load %arg14[%c1_180, %c0_181, %c0_182] : memref<2x1x128xf32, #tpu.memory_space<vmem>>, vector<1x1x128xf32>
    %497 = vector.shape_cast %496 : vector<1x1x128xf32> to vector<1x128xf32>
    %498 = arith.truncf %493 : vector<8x128xf32> to vector<8x128xbf16>
    %cst_183 = arith.constant dense<0.000000e+00> : vector<8x128xf32>
    %499 = tpu.matmul %498, %495, %cst_183 {dimension_numbers = #tpu.dot_dimension_numbers<[1], [0], [0], [1], [0, 0, 1, 1], [], []>} : vector<8x128xbf16>, vector<128x128xbf16>, vector<8x128xf32> -> vector<8x128xf32>
    %500 = vector.broadcast %497 : vector<1x128xf32> to vector<8x128xf32>
    %501 = arith.addf %499, %500 : vector<8x128xf32>
    %c1_184 = arith.constant 1 : index
    %c0_185 = arith.constant 0 : index
    %c0_186 = arith.constant 0 : index
    %502 = vector.load %arg15[%c1_184, %c0_185, %c0_186] : memref<2x32x128xbf16, #tpu.memory_space<vmem>>, vector<1x32x128xbf16>
    %503 = vector.shape_cast %502 : vector<1x32x128xbf16> to vector<32x128xbf16>
    %c1_187 = arith.constant 1 : index
    %c0_188 = arith.constant 0 : index
    %c0_189 = arith.constant 0 : index
    %504 = vector.load %arg16[%c1_187, %c0_188, %c0_189] : memref<2x1x128xf32, #tpu.memory_space<vmem>>, vector<1x1x128xf32>
    %505 = vector.shape_cast %504 : vector<1x1x128xf32> to vector<1x128xf32>
    %506 = arith.truncf %59 : vector<16x32xf32> to vector<16x32xbf16>
    %cst_190 = arith.constant dense<0.000000e+00> : vector<16x128xf32>
    %507 = tpu.matmul %506, %503, %cst_190 {dimension_numbers = #tpu.dot_dimension_numbers<[1], [0], [0], [1], [0, 0, 1, 1], [], []>} : vector<16x32xbf16>, vector<32x128xbf16>, vector<16x128xf32> -> vector<16x128xf32>
    %508 = vector.broadcast %505 : vector<1x128xf32> to vector<16x128xf32>
    %509 = arith.addf %507, %508 : vector<16x128xf32>
    %510 = vector.extract_strided_slice %501 {offsets = [0, 0], sizes = [8, 32], strides = [1, 1]} : vector<8x128xf32> to vector<8x32xf32>
    %511 = vector.extract_strided_slice %509 {offsets = [0, 0], sizes = [16, 32], strides = [1, 1]} : vector<16x128xf32> to vector<16x32xf32>
    %512 = vector.extract_strided_slice %509 {offsets = [0, 32], sizes = [16, 32], strides = [1, 1]} : vector<16x128xf32> to vector<16x32xf32>
    %c1_191 = arith.constant 1 : index
    %c0_192 = arith.constant 0 : index
    %c0_193 = arith.constant 0 : index
    %513 = vector.load %arg17[%c1_191, %c0_192, %c0_193] : memref<2x32x128xbf16, #tpu.memory_space<vmem>>, vector<1x32x128xbf16>
    %514 = vector.shape_cast %513 : vector<1x32x128xbf16> to vector<32x128xbf16>
    %c1_194 = arith.constant 1 : index
    %c0_195 = arith.constant 0 : index
    %c0_196 = arith.constant 0 : index
    %515 = vector.load %arg18[%c1_194, %c0_195, %c0_196] : memref<2x1x128xf32, #tpu.memory_space<vmem>>, vector<1x1x128xf32>
    %516 = vector.shape_cast %515 : vector<1x1x128xf32> to vector<1x128xf32>
    %517 = vector.extract_strided_slice %510 {offsets = [0, 0], sizes = [8, 8], strides = [1, 1]} : vector<8x32xf32> to vector<8x8xf32>
    %518 = arith.truncf %517 : vector<8x8xf32> to vector<8x8xbf16>
    %519 = vector.extract_strided_slice %511 {offsets = [0, 0], sizes = [16, 8], strides = [1, 1]} : vector<16x32xf32> to vector<16x8xf32>
    %520 = arith.truncf %519 : vector<16x8xf32> to vector<16x8xbf16>
    %521 = vector.extract_strided_slice %512 {offsets = [0, 0], sizes = [16, 8], strides = [1, 1]} : vector<16x32xf32> to vector<16x8xf32>
    %522 = arith.truncf %521 : vector<16x8xf32> to vector<16x8xbf16>
    %cst_197 = arith.constant dense<0.000000e+00> : vector<8x16xf32>
    %523 = tpu.matmul %518, %520, %cst_197 {dimension_numbers = #tpu.dot_dimension_numbers<[1], [1], [0], [0], [0, 0, 1, 0], [], []>} : vector<8x8xbf16>, vector<16x8xbf16>, vector<8x16xf32> -> vector<8x16xf32>
    %524 = arith.addf %523, %46 : vector<8x16xf32>
    %cst_198 = arith.constant dense<0xFF800000> : vector<8xf32>
    %525 = vector.multi_reduction <maximumf>, %524, %cst_198 [1] : vector<8x16xf32> to vector<8xf32>
    %526 = vector.shape_cast %525 : vector<8xf32> to vector<8x1xf32>
    %527 = vector.broadcast %526 : vector<8x1xf32> to vector<8x16xf32>
    %528 = arith.subf %524, %527 : vector<8x16xf32>
    %529 = math.exp %528 : vector<8x16xf32>
    %cst_199 = arith.constant dense<0.000000e+00> : vector<8xf32>
    %530 = vector.multi_reduction <add>, %529, %cst_199 [1] : vector<8x16xf32> to vector<8xf32>
    %531 = vector.shape_cast %530 : vector<8xf32> to vector<8x1xf32>
    %532 = tpu.reciprocal %531 {approx = true} : vector<8x1xf32> -> vector<8x1xf32>
    %533 = vector.broadcast %532 : vector<8x1xf32> to vector<8x16xf32>
    %534 = arith.mulf %529, %533 : vector<8x16xf32>
    %535 = arith.truncf %534 : vector<8x16xf32> to vector<8x16xbf16>
    %cst_200 = arith.constant dense<0.000000e+00> : vector<8x8xf32>
    %536 = tpu.matmul %535, %522, %cst_200 {dimension_numbers = #tpu.dot_dimension_numbers<[1], [0], [0], [1], [0, 0, 1, 1], [], []>} : vector<8x16xbf16>, vector<16x8xbf16>, vector<8x8xf32> -> vector<8x8xf32>
    %537 = vector.extract_strided_slice %510 {offsets = [0, 8], sizes = [8, 8], strides = [1, 1]} : vector<8x32xf32> to vector<8x8xf32>
    %538 = arith.truncf %537 : vector<8x8xf32> to vector<8x8xbf16>
    %539 = vector.extract_strided_slice %511 {offsets = [0, 8], sizes = [16, 8], strides = [1, 1]} : vector<16x32xf32> to vector<16x8xf32>
    %540 = arith.truncf %539 : vector<16x8xf32> to vector<16x8xbf16>
    %541 = vector.extract_strided_slice %512 {offsets = [0, 8], sizes = [16, 8], strides = [1, 1]} : vector<16x32xf32> to vector<16x8xf32>
    %542 = arith.truncf %541 : vector<16x8xf32> to vector<16x8xbf16>
    %cst_201 = arith.constant dense<0.000000e+00> : vector<8x16xf32>
    %543 = tpu.matmul %538, %540, %cst_201 {dimension_numbers = #tpu.dot_dimension_numbers<[1], [1], [0], [0], [0, 0, 1, 0], [], []>} : vector<8x8xbf16>, vector<16x8xbf16>, vector<8x16xf32> -> vector<8x16xf32>
    %544 = arith.addf %543, %46 : vector<8x16xf32>
    %cst_202 = arith.constant dense<0xFF800000> : vector<8xf32>
    %545 = vector.multi_reduction <maximumf>, %544, %cst_202 [1] : vector<8x16xf32> to vector<8xf32>
    %546 = vector.shape_cast %545 : vector<8xf32> to vector<8x1xf32>
    %547 = vector.broadcast %546 : vector<8x1xf32> to vector<8x16xf32>
    %548 = arith.subf %544, %547 : vector<8x16xf32>
    %549 = math.exp %548 : vector<8x16xf32>
    %cst_203 = arith.constant dense<0.000000e+00> : vector<8xf32>
    %550 = vector.multi_reduction <add>, %549, %cst_203 [1] : vector<8x16xf32> to vector<8xf32>
    %551 = vector.shape_cast %550 : vector<8xf32> to vector<8x1xf32>
    %552 = tpu.reciprocal %551 {approx = true} : vector<8x1xf32> -> vector<8x1xf32>
    %553 = vector.broadcast %552 : vector<8x1xf32> to vector<8x16xf32>
    %554 = arith.mulf %549, %553 : vector<8x16xf32>
    %555 = arith.truncf %554 : vector<8x16xf32> to vector<8x16xbf16>
    %cst_204 = arith.constant dense<0.000000e+00> : vector<8x8xf32>
    %556 = tpu.matmul %555, %542, %cst_204 {dimension_numbers = #tpu.dot_dimension_numbers<[1], [0], [0], [1], [0, 0, 1, 1], [], []>} : vector<8x16xbf16>, vector<16x8xbf16>, vector<8x8xf32> -> vector<8x8xf32>
    %557 = vector.extract_strided_slice %510 {offsets = [0, 16], sizes = [8, 8], strides = [1, 1]} : vector<8x32xf32> to vector<8x8xf32>
    %558 = arith.truncf %557 : vector<8x8xf32> to vector<8x8xbf16>
    %559 = vector.extract_strided_slice %511 {offsets = [0, 16], sizes = [16, 8], strides = [1, 1]} : vector<16x32xf32> to vector<16x8xf32>
    %560 = arith.truncf %559 : vector<16x8xf32> to vector<16x8xbf16>
    %561 = vector.extract_strided_slice %512 {offsets = [0, 16], sizes = [16, 8], strides = [1, 1]} : vector<16x32xf32> to vector<16x8xf32>
    %562 = arith.truncf %561 : vector<16x8xf32> to vector<16x8xbf16>
    %cst_205 = arith.constant dense<0.000000e+00> : vector<8x16xf32>
    %563 = tpu.matmul %558, %560, %cst_205 {dimension_numbers = #tpu.dot_dimension_numbers<[1], [1], [0], [0], [0, 0, 1, 0], [], []>} : vector<8x8xbf16>, vector<16x8xbf16>, vector<8x16xf32> -> vector<8x16xf32>
    %564 = arith.addf %563, %46 : vector<8x16xf32>
    %cst_206 = arith.constant dense<0xFF800000> : vector<8xf32>
    %565 = vector.multi_reduction <maximumf>, %564, %cst_206 [1] : vector<8x16xf32> to vector<8xf32>
    %566 = vector.shape_cast %565 : vector<8xf32> to vector<8x1xf32>
    %567 = vector.broadcast %566 : vector<8x1xf32> to vector<8x16xf32>
    %568 = arith.subf %564, %567 : vector<8x16xf32>
    %569 = math.exp %568 : vector<8x16xf32>
    %cst_207 = arith.constant dense<0.000000e+00> : vector<8xf32>
    %570 = vector.multi_reduction <add>, %569, %cst_207 [1] : vector<8x16xf32> to vector<8xf32>
    %571 = vector.shape_cast %570 : vector<8xf32> to vector<8x1xf32>
    %572 = tpu.reciprocal %571 {approx = true} : vector<8x1xf32> -> vector<8x1xf32>
    %573 = vector.broadcast %572 : vector<8x1xf32> to vector<8x16xf32>
    %574 = arith.mulf %569, %573 : vector<8x16xf32>
    %575 = arith.truncf %574 : vector<8x16xf32> to vector<8x16xbf16>
    %cst_208 = arith.constant dense<0.000000e+00> : vector<8x8xf32>
    %576 = tpu.matmul %575, %562, %cst_208 {dimension_numbers = #tpu.dot_dimension_numbers<[1], [0], [0], [1], [0, 0, 1, 1], [], []>} : vector<8x16xbf16>, vector<16x8xbf16>, vector<8x8xf32> -> vector<8x8xf32>
    %577 = vector.extract_strided_slice %510 {offsets = [0, 24], sizes = [8, 8], strides = [1, 1]} : vector<8x32xf32> to vector<8x8xf32>
    %578 = arith.truncf %577 : vector<8x8xf32> to vector<8x8xbf16>
    %579 = vector.extract_strided_slice %511 {offsets = [0, 24], sizes = [16, 8], strides = [1, 1]} : vector<16x32xf32> to vector<16x8xf32>
    %580 = arith.truncf %579 : vector<16x8xf32> to vector<16x8xbf16>
    %581 = vector.extract_strided_slice %512 {offsets = [0, 24], sizes = [16, 8], strides = [1, 1]} : vector<16x32xf32> to vector<16x8xf32>
    %582 = arith.truncf %581 : vector<16x8xf32> to vector<16x8xbf16>
    %cst_209 = arith.constant dense<0.000000e+00> : vector<8x16xf32>
    %583 = tpu.matmul %578, %580, %cst_209 {dimension_numbers = #tpu.dot_dimension_numbers<[1], [1], [0], [0], [0, 0, 1, 0], [], []>} : vector<8x8xbf16>, vector<16x8xbf16>, vector<8x16xf32> -> vector<8x16xf32>
    %584 = arith.addf %583, %46 : vector<8x16xf32>
    %cst_210 = arith.constant dense<0xFF800000> : vector<8xf32>
    %585 = vector.multi_reduction <maximumf>, %584, %cst_210 [1] : vector<8x16xf32> to vector<8xf32>
    %586 = vector.shape_cast %585 : vector<8xf32> to vector<8x1xf32>
    %587 = vector.broadcast %586 : vector<8x1xf32> to vector<8x16xf32>
    %588 = arith.subf %584, %587 : vector<8x16xf32>
    %589 = math.exp %588 : vector<8x16xf32>
    %cst_211 = arith.constant dense<0.000000e+00> : vector<8xf32>
    %590 = vector.multi_reduction <add>, %589, %cst_211 [1] : vector<8x16xf32> to vector<8xf32>
    %591 = vector.shape_cast %590 : vector<8xf32> to vector<8x1xf32>
    %592 = tpu.reciprocal %591 {approx = true} : vector<8x1xf32> -> vector<8x1xf32>
    %593 = vector.broadcast %592 : vector<8x1xf32> to vector<8x16xf32>
    %594 = arith.mulf %589, %593 : vector<8x16xf32>
    %595 = arith.truncf %594 : vector<8x16xf32> to vector<8x16xbf16>
    %cst_212 = arith.constant dense<0.000000e+00> : vector<8x8xf32>
    %596 = tpu.matmul %595, %582, %cst_212 {dimension_numbers = #tpu.dot_dimension_numbers<[1], [0], [0], [1], [0, 0, 1, 1], [], []>} : vector<8x16xbf16>, vector<16x8xbf16>, vector<8x8xf32> -> vector<8x8xf32>
    %597 = tpu.concatenate %536, %556, %576, %596 in 1 : vector<8x8xf32>, vector<8x8xf32>, vector<8x8xf32>, vector<8x8xf32> -> vector<8x32xf32>
    %598 = arith.truncf %597 : vector<8x32xf32> to vector<8x32xbf16>
    %cst_213 = arith.constant dense<0.000000e+00> : vector<8x128xf32>
    %599 = tpu.matmul %598, %514, %cst_213 {dimension_numbers = #tpu.dot_dimension_numbers<[1], [0], [0], [1], [0, 0, 1, 1], [], []>} : vector<8x32xbf16>, vector<32x128xbf16>, vector<8x128xf32> -> vector<8x128xf32>
    %600 = vector.broadcast %516 : vector<1x128xf32> to vector<8x128xf32>
    %601 = arith.addf %599, %600 : vector<8x128xf32>
    %602 = arith.addf %493, %601 : vector<8x128xf32>
    %c1_214 = arith.constant 1 : index
    %c0_215 = arith.constant 0 : index
    %c0_216 = arith.constant 0 : index
    %603 = vector.load %arg25[%c1_214, %c0_215, %c0_216] : memref<2x1x128xf32, #tpu.memory_space<vmem>>, vector<1x1x128xf32>
    %604 = vector.shape_cast %603 : vector<1x1x128xf32> to vector<1x128xf32>
    %c1_217 = arith.constant 1 : index
    %c0_218 = arith.constant 0 : index
    %c0_219 = arith.constant 0 : index
    %605 = vector.load %arg26[%c1_217, %c0_218, %c0_219] : memref<2x1x128xf32, #tpu.memory_space<vmem>>, vector<1x1x128xf32>
    %606 = vector.shape_cast %605 : vector<1x1x128xf32> to vector<1x128xf32>
    %cst_220 = arith.constant dense<0.000000e+00> : vector<8xf32>
    %607 = vector.multi_reduction <add>, %602, %cst_220 [1] : vector<8x128xf32> to vector<8xf32>
    %608 = vector.shape_cast %607 : vector<8xf32> to vector<8x1xf32>
    %cst_221 = arith.constant 3.125000e-02 : f32
    %609 = vector.broadcast %cst_221 : f32 to vector<8x1xf32>
    %610 = arith.mulf %608, %609 : vector<8x1xf32>
    %611 = vector.broadcast %610 : vector<8x1xf32> to vector<8x128xf32>
    %612 = arith.subf %602, %611 : vector<8x128xf32>
    %613 = vector.broadcast %51 : vector<1x128xf32> to vector<8x128xf32>
    %614 = arith.mulf %612, %613 : vector<8x128xf32>
    %615 = arith.mulf %614, %614 : vector<8x128xf32>
    %cst_222 = arith.constant dense<0.000000e+00> : vector<8xf32>
    %616 = vector.multi_reduction <add>, %615, %cst_222 [1] : vector<8x128xf32> to vector<8xf32>
    %617 = vector.shape_cast %616 : vector<8xf32> to vector<8x1xf32>
    %cst_223 = arith.constant 3.125000e-02 : f32
    %618 = vector.broadcast %cst_223 : f32 to vector<8x1xf32>
    %619 = arith.mulf %617, %618 : vector<8x1xf32>
    %cst_224 = arith.constant 9.99999974E-6 : f32
    %620 = vector.broadcast %cst_224 : f32 to vector<8x1xf32>
    %621 = arith.addf %619, %620 : vector<8x1xf32>
    %622 = math.rsqrt %621 : vector<8x1xf32>
    %623 = vector.broadcast %622 : vector<8x1xf32> to vector<8x128xf32>
    %624 = arith.mulf %614, %623 : vector<8x128xf32>
    %625 = vector.broadcast %604 : vector<1x128xf32> to vector<8x128xf32>
    %626 = arith.mulf %624, %625 : vector<8x128xf32>
    %627 = vector.broadcast %606 : vector<1x128xf32> to vector<8x128xf32>
    %628 = arith.addf %626, %627 : vector<8x128xf32>
    %c1_225 = arith.constant 1 : index
    %c0_226 = arith.constant 0 : index
    %c0_227 = arith.constant 0 : index
    %629 = vector.load %arg19[%c1_225, %c0_226, %c0_227] : memref<2x128x128xbf16, #tpu.memory_space<vmem>>, vector<1x128x128xbf16>
    %630 = vector.shape_cast %629 : vector<1x128x128xbf16> to vector<128x128xbf16>
    %c1_228 = arith.constant 1 : index
    %c0_229 = arith.constant 0 : index
    %c0_230 = arith.constant 0 : index
    %631 = vector.load %arg20[%c1_228, %c0_229, %c0_230] : memref<2x1x128xf32, #tpu.memory_space<vmem>>, vector<1x1x128xf32>
    %632 = vector.shape_cast %631 : vector<1x1x128xf32> to vector<1x128xf32>
    %633 = arith.truncf %628 : vector<8x128xf32> to vector<8x128xbf16>
    %cst_231 = arith.constant dense<0.000000e+00> : vector<8x128xf32>
    %634 = tpu.matmul %633, %630, %cst_231 {dimension_numbers = #tpu.dot_dimension_numbers<[1], [0], [0], [1], [0, 0, 1, 1], [], []>} : vector<8x128xbf16>, vector<128x128xbf16>, vector<8x128xf32> -> vector<8x128xf32>
    %635 = vector.broadcast %632 : vector<1x128xf32> to vector<8x128xf32>
    %636 = arith.addf %634, %635 : vector<8x128xf32>
    %cst_232 = arith.constant 0.000000e+00 : f32
    %637 = vector.broadcast %cst_232 : f32 to vector<8x128xf32>
    %638 = arith.maximumf %636, %637 : vector<8x128xf32>
    %c1_233 = arith.constant 1 : index
    %c0_234 = arith.constant 0 : index
    %c0_235 = arith.constant 0 : index
    %639 = vector.load %arg21[%c1_233, %c0_234, %c0_235] : memref<2x128x128xbf16, #tpu.memory_space<vmem>>, vector<1x128x128xbf16>
    %640 = vector.shape_cast %639 : vector<1x128x128xbf16> to vector<128x128xbf16>
    %c1_236 = arith.constant 1 : index
    %c0_237 = arith.constant 0 : index
    %c0_238 = arith.constant 0 : index
    %641 = vector.load %arg22[%c1_236, %c0_237, %c0_238] : memref<2x1x128xf32, #tpu.memory_space<vmem>>, vector<1x1x128xf32>
    %642 = vector.shape_cast %641 : vector<1x1x128xf32> to vector<1x128xf32>
    %643 = arith.truncf %638 : vector<8x128xf32> to vector<8x128xbf16>
    %cst_239 = arith.constant dense<0.000000e+00> : vector<8x128xf32>
    %644 = tpu.matmul %643, %640, %cst_239 {dimension_numbers = #tpu.dot_dimension_numbers<[1], [0], [0], [1], [0, 0, 1, 1], [], []>} : vector<8x128xbf16>, vector<128x128xbf16>, vector<8x128xf32> -> vector<8x128xf32>
    %645 = vector.broadcast %642 : vector<1x128xf32> to vector<8x128xf32>
    %646 = arith.addf %644, %645 : vector<8x128xf32>
    %647 = arith.addf %628, %646 : vector<8x128xf32>
    %c1_240 = arith.constant 1 : index
    %c0_241 = arith.constant 0 : index
    %c0_242 = arith.constant 0 : index
    %648 = vector.load %arg27[%c1_240, %c0_241, %c0_242] : memref<2x1x128xf32, #tpu.memory_space<vmem>>, vector<1x1x128xf32>
    %649 = vector.shape_cast %648 : vector<1x1x128xf32> to vector<1x128xf32>
    %c1_243 = arith.constant 1 : index
    %c0_244 = arith.constant 0 : index
    %c0_245 = arith.constant 0 : index
    %650 = vector.load %arg28[%c1_243, %c0_244, %c0_245] : memref<2x1x128xf32, #tpu.memory_space<vmem>>, vector<1x1x128xf32>
    %651 = vector.shape_cast %650 : vector<1x1x128xf32> to vector<1x128xf32>
    %cst_246 = arith.constant dense<0.000000e+00> : vector<8xf32>
    %652 = vector.multi_reduction <add>, %647, %cst_246 [1] : vector<8x128xf32> to vector<8xf32>
    %653 = vector.shape_cast %652 : vector<8xf32> to vector<8x1xf32>
    %cst_247 = arith.constant 3.125000e-02 : f32
    %654 = vector.broadcast %cst_247 : f32 to vector<8x1xf32>
    %655 = arith.mulf %653, %654 : vector<8x1xf32>
    %656 = vector.broadcast %655 : vector<8x1xf32> to vector<8x128xf32>
    %657 = arith.subf %647, %656 : vector<8x128xf32>
    %658 = vector.broadcast %51 : vector<1x128xf32> to vector<8x128xf32>
    %659 = arith.mulf %657, %658 : vector<8x128xf32>
    %660 = arith.mulf %659, %659 : vector<8x128xf32>
    %cst_248 = arith.constant dense<0.000000e+00> : vector<8xf32>
    %661 = vector.multi_reduction <add>, %660, %cst_248 [1] : vector<8x128xf32> to vector<8xf32>
    %662 = vector.shape_cast %661 : vector<8xf32> to vector<8x1xf32>
    %cst_249 = arith.constant 3.125000e-02 : f32
    %663 = vector.broadcast %cst_249 : f32 to vector<8x1xf32>
    %664 = arith.mulf %662, %663 : vector<8x1xf32>
    %cst_250 = arith.constant 9.99999974E-6 : f32
    %665 = vector.broadcast %cst_250 : f32 to vector<8x1xf32>
    %666 = arith.addf %664, %665 : vector<8x1xf32>
    %667 = math.rsqrt %666 : vector<8x1xf32>
    %668 = vector.broadcast %667 : vector<8x1xf32> to vector<8x128xf32>
    %669 = arith.mulf %659, %668 : vector<8x128xf32>
    %670 = vector.broadcast %649 : vector<1x128xf32> to vector<8x128xf32>
    %671 = arith.mulf %669, %670 : vector<8x128xf32>
    %672 = vector.broadcast %651 : vector<1x128xf32> to vector<8x128xf32>
    %673 = arith.addf %671, %672 : vector<8x128xf32>
    %c0_251 = arith.constant 0 : index
    %c0_252 = arith.constant 0 : index
    %674 = vector.load %arg7[%c0_251, %c0_252] : memref<128x128xbf16, #tpu.memory_space<vmem>>, vector<128x128xbf16>
    %c0_253 = arith.constant 0 : index
    %c0_254 = arith.constant 0 : index
    %675 = vector.load %arg8[%c0_253, %c0_254] : memref<1x128xf32, #tpu.memory_space<vmem>>, vector<1x128xf32>
    %676 = arith.truncf %673 : vector<8x128xf32> to vector<8x128xbf16>
    %cst_255 = arith.constant dense<0.000000e+00> : vector<8x128xf32>
    %677 = tpu.matmul %676, %674, %cst_255 {dimension_numbers = #tpu.dot_dimension_numbers<[1], [0], [0], [1], [0, 0, 1, 1], [], []>} : vector<8x128xbf16>, vector<128x128xbf16>, vector<8x128xf32> -> vector<8x128xf32>
    %678 = vector.broadcast %675 : vector<1x128xf32> to vector<8x128xf32>
    %679 = arith.addf %677, %678 : vector<8x128xf32>
    %c0_256 = arith.constant 0 : index
    %c0_257 = arith.constant 0 : index
    %680 = vector.load %arg29[%c0_256, %c0_257] : memref<8x128xf32, #tpu.memory_space<vmem>>, vector<8x128xf32>
    tpu.vector_store %arg29[%c0_256, %c0_257], %679 {strides = array<i32>} : memref<8x128xf32, #tpu.memory_space<vmem>>, vector<8x128xf32>,
    return
  }
  func.func @transform_0(%arg0: i32, %arg1: memref<8x2xi32, #tpu.memory_space<smem>>) -> (i32, i32) {
    %c0_i32 = arith.constant 0 : i32
    %c0_i32_0 = arith.constant 0 : i32
    %c0_i32_1 = arith.constant 0 : i32
    return %c0_i32, %c0_i32_0 : i32, i32
  }
  func.func @transform_1(%arg0: i32, %arg1: memref<8x2xi32, #tpu.memory_space<smem>>) -> (i32, i32) {
    %c0_i32 = arith.constant 0 : i32
    %c0_i32_0 = arith.constant 0 : i32
    %c0_i32_1 = arith.constant 0 : i32
    return %c0_i32, %c0_i32_0 : i32, i32
  }
  func.func @transform_2(%arg0: i32, %arg1: memref<8x2xi32, #tpu.memory_space<smem>>) -> (i32, i32, i32) {
    %c0_i32 = arith.constant 0 : i32
    %c0_i32_0 = arith.constant 0 : i32
    %c0_i32_1 = arith.constant 0 : i32
    return %arg0, %c0_i32, %c0_i32_0 : i32, i32, i32
  }
  func.func @transform_3(%arg0: i32, %arg1: memref<8x2xi32, #tpu.memory_space<smem>>) -> (i32, i32) {
    %c0_i32 = arith.constant 0 : i32
    %c0_i32_0 = arith.constant 0 : i32
    %c0_i32_1 = arith.constant 0 : i32
    return %c0_i32, %c0_i32_0 : i32, i32
  }
  func.func @transform_4(%arg0: i32, %arg1: memref<8x2xi32, #tpu.memory_space<smem>>) -> (i32, i32) {
    %c0_i32 = arith.constant 0 : i32
    %c0_i32_0 = arith.constant 0 : i32
    %c0_i32_1 = arith.constant 0 : i32
    return %c0_i32, %c0_i32_0 : i32, i32
  }
  func.func @transform_5(%arg0: i32, %arg1: memref<8x2xi32, #tpu.memory_space<smem>>) -> (i32, i32) {
    %c0_i32 = arith.constant 0 : i32
    %c0_i32_0 = arith.constant 0 : i32
    %c0_i32_1 = arith.constant 0 : i32
    return %c0_i32, %c0_i32_0 : i32, i32
  }
  func.func @transform_6(%arg0: i32, %arg1: memref<8x2xi32, #tpu.memory_space<smem>>) -> (i32, i32) {
    %c0_i32 = arith.constant 0 : i32
    %c0_i32_0 = arith.constant 0 : i32
    %c0_i32_1 = arith.constant 0 : i32
    return %c0_i32, %c0_i32_0 : i32, i32
  }
  func.func @transform_7(%arg0: i32, %arg1: memref<8x2xi32, #tpu.memory_space<smem>>) -> (i32, i32, i32) {
    %c0_i32 = arith.constant 0 : i32
    %c0_i32_0 = arith.constant 0 : i32
    %c0_i32_1 = arith.constant 0 : i32
    %c0_i32_2 = arith.constant 0 : i32
    return %c0_i32, %c0_i32_0, %c0_i32_1 : i32, i32, i32
  }
  func.func @transform_8(%arg0: i32, %arg1: memref<8x2xi32, #tpu.memory_space<smem>>) -> (i32, i32, i32) {
    %c0_i32 = arith.constant 0 : i32
    %c0_i32_0 = arith.constant 0 : i32
    %c0_i32_1 = arith.constant 0 : i32
    %c0_i32_2 = arith.constant 0 : i32
    return %c0_i32, %c0_i32_0, %c0_i32_1 : i32, i32, i32
  }
  func.func @transform_9(%arg0: i32, %arg1: memref<8x2xi32, #tpu.memory_space<smem>>) -> (i32, i32, i32) {
    %c0_i32 = arith.constant 0 : i32
    %c0_i32_0 = arith.constant 0 : i32
    %c0_i32_1 = arith.constant 0 : i32
    %c0_i32_2 = arith.constant 0 : i32
    return %c0_i32, %c0_i32_0, %c0_i32_1 : i32, i32, i32
  }
  func.func @transform_10(%arg0: i32, %arg1: memref<8x2xi32, #tpu.memory_space<smem>>) -> (i32, i32, i32) {
    %c0_i32 = arith.constant 0 : i32
    %c0_i32_0 = arith.constant 0 : i32
    %c0_i32_1 = arith.constant 0 : i32
    %c0_i32_2 = arith.constant 0 : i32
    return %c0_i32, %c0_i32_0, %c0_i32_1 : i32, i32, i32
  }
  func.func @transform_11(%arg0: i32, %arg1: memref<8x2xi32, #tpu.memory_space<smem>>) -> (i32, i32, i32) {
    %c0_i32 = arith.constant 0 : i32
    %c0_i32_0 = arith.constant 0 : i32
    %c0_i32_1 = arith.constant 0 : i32
    %c0_i32_2 = arith.constant 0 : i32
    return %c0_i32, %c0_i32_0, %c0_i32_1 : i32, i32, i32
  }
  func.func @transform_12(%arg0: i32, %arg1: memref<8x2xi32, #tpu.memory_space<smem>>) -> (i32, i32, i32) {
    %c0_i32 = arith.constant 0 : i32
    %c0_i32_0 = arith.constant 0 : i32
    %c0_i32_1 = arith.constant 0 : i32
    %c0_i32_2 = arith.constant 0 : i32
    return %c0_i32, %c0_i32_0, %c0_i32_1 : i32, i32, i32
  }
  func.func @transform_13(%arg0: i32, %arg1: memref<8x2xi32, #tpu.memory_space<smem>>) -> (i32, i32, i32) {
    %c0_i32 = arith.constant 0 : i32
    %c0_i32_0 = arith.constant 0 : i32
    %c0_i32_1 = arith.constant 0 : i32
    %c0_i32_2 = arith.constant 0 : i32
    return %c0_i32, %c0_i32_0, %c0_i32_1 : i32, i32, i32
  }
  func.func @transform_14(%arg0: i32, %arg1: memref<8x2xi32, #tpu.memory_space<smem>>) -> (i32, i32, i32) {
    %c0_i32 = arith.constant 0 : i32
    %c0_i32_0 = arith.constant 0 : i32
    %c0_i32_1 = arith.constant 0 : i32
    %c0_i32_2 = arith.constant 0 : i32
    return %c0_i32, %c0_i32_0, %c0_i32_1 : i32, i32, i32
  }
  func.func @transform_15(%arg0: i32, %arg1: memref<8x2xi32, #tpu.memory_space<smem>>) -> (i32, i32, i32) {
    %c0_i32 = arith.constant 0 : i32
    %c0_i32_0 = arith.constant 0 : i32
    %c0_i32_1 = arith.constant 0 : i32
    %c0_i32_2 = arith.constant 0 : i32
    return %c0_i32, %c0_i32_0, %c0_i32_1 : i32, i32, i32
  }
  func.func @transform_16(%arg0: i32, %arg1: memref<8x2xi32, #tpu.memory_space<smem>>) -> (i32, i32, i32) {
    %c0_i32 = arith.constant 0 : i32
    %c0_i32_0 = arith.constant 0 : i32
    %c0_i32_1 = arith.constant 0 : i32
    %c0_i32_2 = arith.constant 0 : i32
    return %c0_i32, %c0_i32_0, %c0_i32_1 : i32, i32, i32
  }
  func.func @transform_17(%arg0: i32, %arg1: memref<8x2xi32, #tpu.memory_space<smem>>) -> (i32, i32, i32) {
    %c0_i32 = arith.constant 0 : i32
    %c0_i32_0 = arith.constant 0 : i32
    %c0_i32_1 = arith.constant 0 : i32
    %c0_i32_2 = arith.constant 0 : i32
    return %c0_i32, %c0_i32_0, %c0_i32_1 : i32, i32, i32
  }
  func.func @transform_18(%arg0: i32, %arg1: memref<8x2xi32, #tpu.memory_space<smem>>) -> (i32, i32, i32) {
    %c0_i32 = arith.constant 0 : i32
    %c0_i32_0 = arith.constant 0 : i32
    %c0_i32_1 = arith.constant 0 : i32
    %c0_i32_2 = arith.constant 0 : i32
    return %c0_i32, %c0_i32_0, %c0_i32_1 : i32, i32, i32
  }
  func.func @transform_19(%arg0: i32, %arg1: memref<8x2xi32, #tpu.memory_space<smem>>) -> (i32, i32, i32) {
    %c0_i32 = arith.constant 0 : i32
    %c0_i32_0 = arith.constant 0 : i32
    %c0_i32_1 = arith.constant 0 : i32
    %c0_i32_2 = arith.constant 0 : i32
    return %c0_i32, %c0_i32_0, %c0_i32_1 : i32, i32, i32
  }
  func.func @transform_20(%arg0: i32, %arg1: memref<8x2xi32, #tpu.memory_space<smem>>) -> (i32, i32, i32) {
    %c0_i32 = arith.constant 0 : i32
    %c0_i32_0 = arith.constant 0 : i32
    %c0_i32_1 = arith.constant 0 : i32
    %c0_i32_2 = arith.constant 0 : i32
    return %c0_i32, %c0_i32_0, %c0_i32_1 : i32, i32, i32
  }
  func.func @transform_21(%arg0: i32, %arg1: memref<8x2xi32, #tpu.memory_space<smem>>) -> (i32, i32, i32) {
    %c0_i32 = arith.constant 0 : i32
    %c0_i32_0 = arith.constant 0 : i32
    %c0_i32_1 = arith.constant 0 : i32
    %c0_i32_2 = arith.constant 0 : i32
    return %c0_i32, %c0_i32_0, %c0_i32_1 : i32, i32, i32
  }
  func.func @transform_22(%arg0: i32, %arg1: memref<8x2xi32, #tpu.memory_space<smem>>) -> (i32, i32, i32) {
    %c0_i32 = arith.constant 0 : i32
    %c0_i32_0 = arith.constant 0 : i32
    %c0_i32_1 = arith.constant 0 : i32
    %c0_i32_2 = arith.constant 0 : i32
    return %c0_i32, %c0_i32_0, %c0_i32_1 : i32, i32, i32
  }
  func.func @transform_23(%arg0: i32, %arg1: memref<8x2xi32, #tpu.memory_space<smem>>) -> (i32, i32, i32) {
    %c0_i32 = arith.constant 0 : i32
    %c0_i32_0 = arith.constant 0 : i32
    %c0_i32_1 = arith.constant 0 : i32
    %c0_i32_2 = arith.constant 0 : i32
    return %c0_i32, %c0_i32_0, %c0_i32_1 : i32, i32, i32
  }
  func.func @transform_24(%arg0: i32, %arg1: memref<8x2xi32, #tpu.memory_space<smem>>) -> (i32, i32, i32) {
    %c0_i32 = arith.constant 0 : i32
    %c0_i32_0 = arith.constant 0 : i32
    %c0_i32_1 = arith.constant 0 : i32
    %c0_i32_2 = arith.constant 0 : i32
    return %c0_i32, %c0_i32_0, %c0_i32_1 : i32, i32, i32
  }
  func.func @transform_25(%arg0: i32, %arg1: memref<8x2xi32, #tpu.memory_space<smem>>) -> (i32, i32, i32) {
    %c0_i32 = arith.constant 0 : i32
    %c0_i32_0 = arith.constant 0 : i32
    %c0_i32_1 = arith.constant 0 : i32
    %c0_i32_2 = arith.constant 0 : i32
    return %c0_i32, %c0_i32_0, %c0_i32_1 : i32, i32, i32
  }
  func.func @transform_26(%arg0: i32, %arg1: memref<8x2xi32, #tpu.memory_space<smem>>) -> (i32, i32, i32) {
    %c0_i32 = arith.constant 0 : i32
    %c0_i32_0 = arith.constant 0 : i32
    %c0_i32_1 = arith.constant 0 : i32
    %c0_i32_2 = arith.constant 0 : i32
    return %c0_i32, %c0_i32_0, %c0_i32_1 : i32, i32, i32
  }
  func.func @transform_27(%arg0: i32, %arg1: memref<8x2xi32, #tpu.memory_space<smem>>) -> (i32, i32) {
    %c0_i32 = arith.constant 0 : i32
    %c0_i32_0 = arith.constant 0 : i32
    return %c0_i32, %arg0 : i32, i32
  }
}

</mosaic_0001>

<llo_original>
// kernel: transformer_decoder_forward.1
$region0: #{transformer_decoder_forward.1}
  #allocation0 [shape = 'u32[]', space=smem, size = 0x4, offset = 0x4, fixed_abs, tag = 'smem constant byte address 0x4 - core index']
  #allocation1 [shape = 'u32[144,128]{1,0:T(1,128)}', space=vmem, size = 0x12000, scoped, tag = 'internal scratch']
  #allocation2 [shape = 's32[1]{0}', space=sflag, size = 0x4, scoped, tag = 'scoped memory for transformer_decoder_forward.1']
  #allocation3 [shape = 'u8[4096]{0}', space=smem, size = 0x1000, scoped, tag = 'prefetched SMEM operand 0']
  %s0 = inlined_call_operand.vmem [shape: s32[8,2], index: 0, kind: input, shape index: {}]
  %s1 = inlined_call_operand.hbm [shape: f32[24,128], index: 1, kind: input, shape index: {}]
  %s2 = inlined_call_operand.hbm [shape: f32[32,128], index: 2, kind: input, shape index: {}]
  %s3 = inlined_call_operand.vmem [shape: f32[2,16,32], index: 3, kind: input, shape index: {}]
  %s4 = inlined_call_operand.vmem [shape: bf16[128,128], index: 4, kind: input, shape index: {}]
  %s5 = inlined_call_operand.hbm [shape: f32[1,128], index: 5, kind: input, shape index: {}]
  %s6 = inlined_call_operand.hbm [shape: bf16[128,128], index: 6, kind: input, shape index: {}]
  %s7 = inlined_call_operand.hbm [shape: f32[1,128], index: 7, kind: input, shape index: {}]
  %s8 = inlined_call_operand.hbm [shape: bf16[2,128,128], index: 8, kind: input, shape index: {}]
  %s9 = inlined_call_operand.vmem [shape: f32[2,1,128], index: 9, kind: input, shape index: {}]
  %s10 = inlined_call_operand.hbm [shape: bf16[2,32,128], index: 10, kind: input, shape index: {}]
  %s11 = inlined_call_operand.hbm [shape: f32[2,1,128], index: 11, kind: input, shape index: {}]
  %s12 = inlined_call_operand.vmem [shape: bf16[2,128,128], index: 12, kind: input, shape index: {}]
  %s13 = inlined_call_operand.hbm [shape: f32[2,1,128], index: 13, kind: input, shape index: {}]
  %s14 = inlined_call_operand.hbm [shape: bf16[2,32,128], index: 14, kind: input, shape index: {}]
  %s15 = inlined_call_operand.vmem [shape: f32[2,1,128], index: 15, kind: input, shape index: {}]
  %s16 = inlined_call_operand.hbm [shape: bf16[2,32,128], index: 16, kind: input, shape index: {}]
  %s17 = inlined_call_operand.hbm [shape: f32[2,1,128], index: 17, kind: input, shape index: {}]
  %s18 = inlined_call_operand.hbm [shape: bf16[2,128,128], index: 18, kind: input, shape index: {}]
  %s19 = inlined_call_operand.hbm [shape: f32[2,1,128], index: 19, kind: input, shape index: {}]
  %s20 = inlined_call_operand.hbm [shape: bf16[2,128,128], index: 20, kind: input, shape index: {}]
  %s21 = inlined_call_operand.hbm [shape: f32[2,1,128], index: 21, kind: input, shape index: {}]
  %s22 = inlined_call_operand.hbm [shape: f32[2,1,128], index: 22, kind: input, shape index: {}]
  %s23 = inlined_call_operand.hbm [shape: f32[2,1,128], index: 23, kind: input, shape index: {}]
  %s24 = inlined_call_operand.hbm [shape: f32[2,1,128], index: 24, kind: input, shape index: {}]
  %s25 = inlined_call_operand.hbm [shape: f32[2,1,128], index: 25, kind: input, shape index: {}]
  %s26 = inlined_call_operand.hbm [shape: f32[2,1,128], index: 26, kind: input, shape index: {}]
  %s27 = inlined_call_operand.hbm [shape: f32[2,1,128], index: 27, kind: input, shape index: {}]
  %s28 = inlined_call_operand.vmem [shape: f32[8,256], index: 28, kind: output, shape index: {}]
  %s29 = sld [smem:[#allocation0]]
  $region229: #{transformer_decoder_forward.1} parent=0
    _
  %s31 = ssub.s32 1, %s29
  %s32 = scalar_select 0, %s31, %s29
  %s33 = sshll.u32 %s0, 4
  %s34 = int_to_ptr.vmem [resolvable:$true] %s33
  %36 = dma.vmem_to_smem %s34, 128, [#allocation3], [#allocation2]
  %37 = dma.done [#allocation2], 128
  %38 = sfence
  $region1: #{transformer_decoder_forward.1} parent=0
    #allocation4 [shape = 'u8[12288]{0}', space=vmem, size = 0x3000, scoped, tag = 'input window, operand 1, single buffered']
    #allocation5 [shape = 's32[2]{0}', space=sflag, size = 0x8, scoped, tag = 'scoped memory for transformer_decoder_forward.1']
    #allocation6 [shape = 'u8[16384]{0}', space=vmem, size = 0x4000, scoped, tag = 'input window, operand 2, single buffered']
    #allocation7 [shape = 's32[1]{0}', space=sflag, size = 0x4, scoped, tag = 'scoped memory for transformer_decoder_forward.1']
    #allocation8 [shape = 'u8[512]{0}', space=vmem, size = 0x400, scoped, tag = 'input window, operand 5, single buffered']
    #allocation9 [shape = 'u8[32768]{0}', space=vmem, size = 0x8000, scoped, tag = 'input window, operand 6, single buffered']
    #allocation10 [shape = 's32[1]{0}', space=sflag, size = 0x4, scoped, tag = 'scoped memory for transformer_decoder_forward.1']
    #allocation11 [shape = 'u8[512]{0}', space=vmem, size = 0x400, scoped, tag = 'input window, operand 7, single buffered']
    #allocation12 [shape = 'u8[65536]{0}', space=vmem, size = 0x10000, scoped, tag = 'input window, operand 8, single buffered']
    #allocation13 [shape = 's32[1]{0}', space=sflag, size = 0x4, scoped, tag = 'scoped memory for transformer_decoder_forward.1']
    #allocation14 [shape = 'u8[16384]{0}', space=vmem, size = 0x4000, scoped, tag = 'input window, operand 10, single buffered']
    #allocation15 [shape = 'u8[1024]{0}', space=vmem, size = 0x400, scoped, tag = 'input window, operand 11, single buffered']
    #allocation16 [shape = 's32[1]{0}', space=sflag, size = 0x4, scoped, tag = 'scoped memory for transformer_decoder_forward.1']
    #allocation17 [shape = 'u8[1024]{0}', space=vmem, size = 0x400, scoped, tag = 'input window, operand 13, single buffered']
    #allocation18 [shape = 'u8[16384]{0}', space=vmem, size = 0x4000, scoped, tag = 'input window, operand 14, single buffered']
    #allocation19 [shape = 's32[1]{0}', space=sflag, size = 0x4, scoped, tag = 'scoped memory for transformer_decoder_forward.1']
    #allocation20 [shape = 'u8[16384]{0}', space=vmem, size = 0x4000, scoped, tag = 'input window, operand 16, single buffered']
    #allocation21 [shape = 'u8[1024]{0}', space=vmem, size = 0x400, scoped, tag = 'input window, operand 17, single buffered']
    #allocation22 [shape = 's32[1]{0}', space=sflag, size = 0x4, scoped, tag = 'scoped memory for transformer_decoder_forward.1']
    #allocation23 [shape = 'u8[65536]{0}', space=vmem, size = 0x10000, scoped, tag = 'input window, operand 18, single buffered']
    #allocation24 [shape = 'u8[1024]{0}', space=vmem, size = 0x400, scoped, tag = 'input window, operand 19, single buffered']
    #allocation25 [shape = 's32[1]{0}', space=sflag, size = 0x4, scoped, tag = 'scoped memory for transformer_decoder_forward.1']
    #allocation26 [shape = 'u8[65536]{0}', space=vmem, size = 0x10000, scoped, tag = 'input window, operand 20, single buffered']
    #allocation27 [shape = 'u8[1024]{0}', space=vmem, size = 0x400, scoped, tag = 'input window, operand 21, single buffered']
    #allocation28 [shape = 's32[1]{0}', space=sflag, size = 0x4, scoped, tag = 'scoped memory for transformer_decoder_forward.1']
    #allocation29 [shape = 'u8[1024]{0}', space=vmem, size = 0x400, scoped, tag = 'input window, operand 22, single buffered']
    #allocation30 [shape = 'u8[1024]{0}', space=vmem, size = 0x400, scoped, tag = 'input window, operand 23, single buffered']
    #allocation31 [shape = 's32[1]{0}', space=sflag, size = 0x4, scoped, tag = 'scoped memory for transformer_decoder_forward.1']
    #allocation32 [shape = 'u8[1024]{0}', space=vmem, size = 0x400, scoped, tag = 'input window, operand 24, single buffered']
    #allocation33 [shape = 'u8[1024]{0}', space=vmem, size = 0x400, scoped, tag = 'input window, operand 25, single buffered']
    #allocation34 [shape = 's32[1]{0}', space=sflag, size = 0x4, scoped, tag = 'scoped memory for transformer_decoder_forward.1']
    #allocation35 [shape = 'u8[1024]{0}', space=vmem, size = 0x400, scoped, tag = 'input window, operand 26, single buffered']
    #allocation36 [shape = 'u8[1024]{0}', space=vmem, size = 0x400, scoped, tag = 'input window, operand 27, single buffered']
    #allocation37 [shape = 's32[1]{0}', space=sflag, size = 0x4, scoped, tag = 'scoped memory for transformer_decoder_forward.1']
    %39 = vsyncpa [#allocation5], 0
    %40 = vsyncpa [#allocation7], 0
    %41 = vsyncpa [#allocation10], 0
    %42 = vsyncpa [#allocation13], 0
    %43 = vsyncpa [#allocation16], 0
    %44 = vsyncpa [#allocation19], 0
    %45 = vsyncpa [#allocation22], 0
    %46 = vsyncpa [#allocation25], 0
    %47 = vsyncpa [#allocation28], 0
    %48 = vsyncpa [#allocation31], 0
    %49 = vsyncpa [#allocation34], 0
    %50 = vsyncpa [#allocation37], 0
    loop: start=0, step=1, limit=4
    $region2: #{transformer_decoder_forward.1} parent=1 // loop_pre_header
      _
    $region3: #{transformer_decoder_forward.1} parent=1 // loop_header
      %s52 = sphi 0, %s56
      %p53 = scmp.ge.s32.totalorder %s52, 4
      %s60 = sphi 0, %s60
      %s62 = sphi 0, %s60
      %s63 = sphi 0, %s62
      %s77 = sphi 0, %s63
      %s81 = sphi 0, %s81
      %s83 = sphi 0, %s81
      %s84 = sphi 0, %s83
      %s98 = sphi 0, %s84
      %s104 = sphi 0, %s106
      %s107 = sphi 0, %s104
      %s108 = sphi 0, %s107
      %s124 = sphi 0, %s108
      %s128 = sphi 0, %s128
      %s130 = sphi 0, %s128
      %s131 = sphi 0, %s130
      %s145 = sphi 0, %s131
      %s149 = sphi 0, %s149
      %s151 = sphi 0, %s149
      %s152 = sphi 0, %s151
      %s166 = sphi 0, %s152
      %s170 = sphi 0, %s170
      %s172 = sphi 0, %s170
      %s173 = sphi 0, %s172
      %s187 = sphi 0, %s173
      %s191 = sphi 0, %s191
      %s193 = sphi 0, %s191
      %s194 = sphi 0, %s193
      %s208 = sphi 0, %s194
      %s212 = sphi 0, %s212
      %s214 = sphi 0, %s212
      %s215 = sphi 0, %s214
      %s229 = sphi 0, %s215
      %s233 = sphi 0, %s233
      %s235 = sphi 0, %s233
      %s236 = sphi 0, %s235
      %s250 = sphi 0, %s236
      %s254 = sphi 0, %s254
      %s256 = sphi 0, %s254
      %s257 = sphi 0, %s256
      %s271 = sphi 0, %s257
      %s275 = sphi 0, %s275
      %s277 = sphi 0, %s275
      %s278 = sphi 0, %s277
      %s292 = sphi 0, %s278
      %s296 = sphi 0, %s296
      %s298 = sphi 0, %s296
      %s299 = sphi 0, %s298
      %s313 = sphi 0, %s299
      %s317 = sphi 0, %s317
      %s319 = sphi 0, %s317
      %s320 = sphi 0, %s319
      %s334 = sphi 0, %s320
      %s338 = sphi 0, %s338
      %s340 = sphi 0, %s338
      %s341 = sphi 0, %s340
      %s355 = sphi 0, %s341
      %s359 = sphi 0, %s359
      %s361 = sphi 0, %s359
      %s362 = sphi 0, %s361
      %s376 = sphi 0, %s362
      %s380 = sphi 0, %s380
      %s382 = sphi 0, %s380
      %s383 = sphi 0, %s382
      %s397 = sphi 0, %s383
      %s401 = sphi 0, %s401
      %s403 = sphi 0, %s401
      %s404 = sphi 0, %s403
      %s418 = sphi 0, %s404
      %s422 = sphi 0, %s422
      %s424 = sphi 0, %s422
      %s425 = sphi 0, %s424
      %s439 = sphi 0, %s425
      %s443 = sphi 0, %s443
      %s445 = sphi 0, %s443
      %s446 = sphi 0, %s445
      %s460 = sphi 0, %s446
      %s464 = sphi 0, %s464
      %s466 = sphi 0, %s464
      %s467 = sphi 0, %s466
      %s481 = sphi 0, %s467
      %s485 = sphi 0, %s485
      %s487 = sphi 0, %s485
      %s488 = sphi 0, %s487
      %s502 = sphi 0, %s488
      %s506 = sphi 0, %s506
      %s508 = sphi 0, %s506
      %s509 = sphi 0, %s508
      %s523 = sphi 0, %s509
      %s527 = sphi 0, %s527
      %s529 = sphi 0, %s527
      %s530 = sphi 0, %s529
      %s544 = sphi 0, %s530
      %s548 = sphi 0, %s548
      %s550 = sphi 0, %s548
      %s551 = sphi 0, %s550
      %s565 = sphi 0, %s551
      %s569 = sphi 0, %s569
      %s571 = sphi 0, %s569
      %s572 = sphi 0, %s571
      %s586 = sphi 0, %s572
      %s590 = sphi 0, %s590
      %s592 = sphi 0, %s590
      %s593 = sphi 0, %s592
      %s607 = sphi 0, %s593
      %s611 = sphi 0, %s611
      %s613 = sphi 0, %s611
      %s614 = sphi 0, %s613
      %s628 = sphi 0, %s614
      %s634 = sphi 0, %s636
      %s637 = sphi 0, %s634
      %s638 = sphi 0, %s637
      %s654 = sphi 0, %s638
    $region4: #{transformer_decoder_forward.1} parent=1 // loop_header_branch
      %55 = sbr.rel (%p53) target = $region8
    $region5: #{transformer_decoder_forward.1} parent=1 // loop_body
      %s57 = ssub.s32 %s52, 1
      %s58 = ssub.s32 %s52, 2
      %s59 = sadd.s32 %s52, 1
      %s61 = sadd.s32 %s60, 1
      %p64 = scmp.eq.s32.totalorder %s52, 1
      %p65 = scmp.ne.s32.totalorder %s60, %s62
      %p66 = scmp.eq.s32.totalorder %s52, 0
      %p67 = por %p65, %p66
      %p68 = scmp.ne.s32.totalorder %s60, %s62
      %p69 = scmp.eq.s32.totalorder %s57, 1
      %p70 = por %p68, %p69
      %p71 = scmp.ne.s32.totalorder %s62, %s63
      %p72 = scmp.eq.s32.totalorder %s57, 0
      %p73 = por %p71, %p72
      %p74 = scmp.ne.s32.totalorder %s62, %s63
      %p75 = scmp.eq.s32.totalorder %s58, 1
      %p76 = por %p74, %p75
      %p78 = scmp.ne.s32.totalorder %s63, %s77
      %p79 = scmp.eq.s32.totalorder %s58, 0
      %p80 = por %p78, %p79
      %s82 = sadd.s32 %s81, 1
      %p85 = scmp.eq.s32.totalorder %s52, 1
      %p86 = scmp.ne.s32.totalorder %s81, %s83
      %p87 = scmp.eq.s32.totalorder %s52, 0
      %p88 = por %p86, %p87
      %p89 = scmp.ne.s32.totalorder %s81, %s83
      %p90 = scmp.eq.s32.totalorder %s57, 1
      %p91 = por %p89, %p90
      %p92 = scmp.ne.s32.totalorder %s83, %s84
      %p93 = scmp.eq.s32.totalorder %s57, 0
      %p94 = por %p92, %p93
      %p95 = scmp.ne.s32.totalorder %s83, %s84
      %p96 = scmp.eq.s32.totalorder %s58, 1
      %p97 = por %p95, %p96
      %p99 = scmp.ne.s32.totalorder %s84, %s98
      %p100 = scmp.eq.s32.totalorder %s58, 0
      %p101 = por %p99, %p100
      %s102 = ssub.s32 %s52, %s59
      %p103 = scmp.eq.s32.totalorder %s102, 0
      %s105 = sadd.s32 %s104, 1
      %s106 = scalar_select %p103, %s104, %s105
      %p109 = pneg %p103
      %p110 = scmp.eq.s32.totalorder %s52, 1
      %p111 = por %p109, %p110
      %p112 = scmp.ne.s32.totalorder %s104, %s107
      %p113 = scmp.eq.s32.totalorder %s52, 0
      %p114 = por %p112, %p113
      %p115 = scmp.ne.s32.totalorder %s104, %s107
      %p116 = scmp.eq.s32.totalorder %s57, 1
      %p117 = por %p115, %p116
      %p118 = scmp.ne.s32.totalorder %s107, %s108
      %p119 = scmp.eq.s32.totalorder %s57, 0
      %p120 = por %p118, %p119
      %p121 = scmp.ne.s32.totalorder %s107, %s108
      %p122 = scmp.eq.s32.totalorder %s58, 1
      %p123 = por %p121, %p122
      %p125 = scmp.ne.s32.totalorder %s108, %s124
      %p126 = scmp.eq.s32.totalorder %s58, 0
      %p127 = por %p125, %p126
      %s129 = sadd.s32 %s128, 1
      %p132 = scmp.eq.s32.totalorder %s52, 1
      %p133 = scmp.ne.s32.totalorder %s128, %s130
      %p134 = scmp.eq.s32.totalorder %s52, 0
      %p135 = por %p133, %p134
      %p136 = scmp.ne.s32.totalorder %s128, %s130
      %p137 = scmp.eq.s32.totalorder %s57, 1
      %p138 = por %p136, %p137
      %p139 = scmp.ne.s32.totalorder %s130, %s131
      %p140 = scmp.eq.s32.totalorder %s57, 0
      %p141 = por %p139, %p140
      %p142 = scmp.ne.s32.totalorder %s130, %s131
      %p143 = scmp.eq.s32.totalorder %s58, 1
      %p144 = por %p142, %p143
      %p146 = scmp.ne.s32.totalorder %s131, %s145
      %p147 = scmp.eq.s32.totalorder %s58, 0
      %p148 = por %p146, %p147
      %s150 = sadd.s32 %s149, 1
      %p153 = scmp.eq.s32.totalorder %s52, 1
      %p154 = scmp.ne.s32.totalorder %s149, %s151
      %p155 = scmp.eq.s32.totalorder %s52, 0
      %p156 = por %p154, %p155
      %p157 = scmp.ne.s32.totalorder %s149, %s151
      %p158 = scmp.eq.s32.totalorder %s57, 1
      %p159 = por %p157, %p158
      %p160 = scmp.ne.s32.totalorder %s151, %s152
      %p161 = scmp.eq.s32.totalorder %s57, 0
      %p162 = por %p160, %p161
      %p163 = scmp.ne.s32.totalorder %s151, %s152
      %p164 = scmp.eq.s32.totalorder %s58, 1
      %p165 = por %p163, %p164
      %p167 = scmp.ne.s32.totalorder %s152, %s166
      %p168 = scmp.eq.s32.totalorder %s58, 0
      %p169 = por %p167, %p168
      %s171 = sadd.s32 %s170, 1
      %p174 = scmp.eq.s32.totalorder %s52, 1
      %p175 = scmp.ne.s32.totalorder %s170, %s172
      %p176 = scmp.eq.s32.totalorder %s52, 0
      %p177 = por %p175, %p176
      %p178 = scmp.ne.s32.totalorder %s170, %s172
      %p179 = scmp.eq.s32.totalorder %s57, 1
      %p180 = por %p178, %p179
      %p181 = scmp.ne.s32.totalorder %s172, %s173
      %p182 = scmp.eq.s32.totalorder %s57, 0
      %p183 = por %p181, %p182
      %p184 = scmp.ne.s32.totalorder %s172, %s173
      %p185 = scmp.eq.s32.totalorder %s58, 1
      %p186 = por %p184, %p185
      %p188 = scmp.ne.s32.totalorder %s173, %s187
      %p189 = scmp.eq.s32.totalorder %s58, 0
      %p190 = por %p188, %p189
      %s192 = sadd.s32 %s191, 1
      %p195 = scmp.eq.s32.totalorder %s52, 1
      %p196 = scmp.ne.s32.totalorder %s191, %s193
      %p197 = scmp.eq.s32.totalorder %s52, 0
      %p198 = por %p196, %p197
      %p199 = scmp.ne.s32.totalorder %s191, %s193
      %p200 = scmp.eq.s32.totalorder %s57, 1
      %p201 = por %p199, %p200
      %p202 = scmp.ne.s32.totalorder %s193, %s194
      %p203 = scmp.eq.s32.totalorder %s57, 0
      %p204 = por %p202, %p203
      %p205 = scmp.ne.s32.totalorder %s193, %s194
      %p206 = scmp.eq.s32.totalorder %s58, 1
      %p207 = por %p205, %p206
      %p209 = scmp.ne.s32.totalorder %s194, %s208
      %p210 = scmp.eq.s32.totalorder %s58, 0
      %p211 = por %p209, %p210
      %s213 = sadd.s32 %s212, 1
      %p216 = scmp.eq.s32.totalorder %s52, 1
      %p217 = scmp.ne.s32.totalorder %s212, %s214
      %p218 = scmp.eq.s32.totalorder %s52, 0
      %p219 = por %p217, %p218
      %p220 = scmp.ne.s32.totalorder %s212, %s214
      %p221 = scmp.eq.s32.totalorder %s57, 1
      %p222 = por %p220, %p221
      %p223 = scmp.ne.s32.totalorder %s214, %s215
      %p224 = scmp.eq.s32.totalorder %s57, 0
      %p225 = por %p223, %p224
      %p226 = scmp.ne.s32.totalorder %s214, %s215
      %p227 = scmp.eq.s32.totalorder %s58, 1
      %p228 = por %p226, %p227
      %p230 = scmp.ne.s32.totalorder %s215, %s229
      %p231 = scmp.eq.s32.totalorder %s58, 0
      %p232 = por %p230, %p231
      %s234 = sadd.s32 %s233, 1
      %p237 = scmp.eq.s32.totalorder %s52, 1
      %p238 = scmp.ne.s32.totalorder %s233, %s235
      %p239 = scmp.eq.s32.totalorder %s52, 0
      %p240 = por %p238, %p239
      %p241 = scmp.ne.s32.totalorder %s233, %s235
      %p242 = scmp.eq.s32.totalorder %s57, 1
      %p243 = por %p241, %p242
      %p244 = scmp.ne.s32.totalorder %s235, %s236
      %p245 = scmp.eq.s32.totalorder %s57, 0
      %p246 = por %p244, %p245
      %p247 = scmp.ne.s32.totalorder %s235, %s236
      %p248 = scmp.eq.s32.totalorder %s58, 1
      %p249 = por %p247, %p248
      %p251 = scmp.ne.s32.totalorder %s236, %s250
      %p252 = scmp.eq.s32.totalorder %s58, 0
      %p253 = por %p251, %p252
      %s255 = sadd.s32 %s254, 1
      %p258 = scmp.eq.s32.totalorder %s52, 1
      %p259 = scmp.ne.s32.totalorder %s254, %s256
      %p260 = scmp.eq.s32.totalorder %s52, 0
      %p261 = por %p259, %p260
      %p262 = scmp.ne.s32.totalorder %s254, %s256
      %p263 = scmp.eq.s32.totalorder %s57, 1
      %p264 = por %p262, %p263
      %p265 = scmp.ne.s32.totalorder %s256, %s257
      %p266 = scmp.eq.s32.totalorder %s57, 0
      %p267 = por %p265, %p266
      %p268 = scmp.ne.s32.totalorder %s256, %s257
      %p269 = scmp.eq.s32.totalorder %s58, 1
      %p270 = por %p268, %p269
      %p272 = scmp.ne.s32.totalorder %s257, %s271
      %p273 = scmp.eq.s32.totalorder %s58, 0
      %p274 = por %p272, %p273
      %s276 = sadd.s32 %s275, 1
      %p279 = scmp.eq.s32.totalorder %s52, 1
      %p280 = scmp.ne.s32.totalorder %s275, %s277
      %p281 = scmp.eq.s32.totalorder %s52, 0
      %p282 = por %p280, %p281
      %p283 = scmp.ne.s32.totalorder %s275, %s277
      %p284 = scmp.eq.s32.totalorder %s57, 1
      %p285 = por %p283, %p284
      %p286 = scmp.ne.s32.totalorder %s277, %s278
      %p287 = scmp.eq.s32.totalorder %s57, 0
      %p288 = por %p286, %p287
      %p289 = scmp.ne.s32.totalorder %s277, %s278
      %p290 = scmp.eq.s32.totalorder %s58, 1
      %p291 = por %p289, %p290
      %p293 = scmp.ne.s32.totalorder %s278, %s292
      %p294 = scmp.eq.s32.totalorder %s58, 0
      %p295 = por %p293, %p294
      %s297 = sadd.s32 %s296, 1
      %p300 = scmp.eq.s32.totalorder %s52, 1
      %p301 = scmp.ne.s32.totalorder %s296, %s298
      %p302 = scmp.eq.s32.totalorder %s52, 0
      %p303 = por %p301, %p302
      %p304 = scmp.ne.s32.totalorder %s296, %s298
      %p305 = scmp.eq.s32.totalorder %s57, 1
      %p306 = por %p304, %p305
      %p307 = scmp.ne.s32.totalorder %s298, %s299
      %p308 = scmp.eq.s32.totalorder %s57, 0
      %p309 = por %p307, %p308
      %p310 = scmp.ne.s32.totalorder %s298, %s299
      %p311 = scmp.eq.s32.totalorder %s58, 1
      %p312 = por %p310, %p311
      %p314 = scmp.ne.s32.totalorder %s299, %s313
      %p315 = scmp.eq.s32.totalorder %s58, 0
      %p316 = por %p314, %p315
      %s318 = sadd.s32 %s317, 1
      %p321 = scmp.eq.s32.totalorder %s52, 1
      %p322 = scmp.ne.s32.totalorder %s317, %s319
      %p323 = scmp.eq.s32.totalorder %s52, 0
      %p324 = por %p322, %p323
      %p325 = scmp.ne.s32.totalorder %s317, %s319
      %p326 = scmp.eq.s32.totalorder %s57, 1
      %p327 = por %p325, %p326
      %p328 = scmp.ne.s32.totalorder %s319, %s320
      %p329 = scmp.eq.s32.totalorder %s57, 0
      %p330 = por %p328, %p329
      %p331 = scmp.ne.s32.totalorder %s319, %s320
      %p332 = scmp.eq.s32.totalorder %s58, 1
      %p333 = por %p331, %p332
      %p335 = scmp.ne.s32.totalorder %s320, %s334
      %p336 = scmp.eq.s32.totalorder %s58, 0
      %p337 = por %p335, %p336
      %s339 = sadd.s32 %s338, 1
      %p342 = scmp.eq.s32.totalorder %s52, 1
      %p343 = scmp.ne.s32.totalorder %s338, %s340
      %p344 = scmp.eq.s32.totalorder %s52, 0
      %p345 = por %p343, %p344
      %p346 = scmp.ne.s32.totalorder %s338, %s340
      %p347 = scmp.eq.s32.totalorder %s57, 1
      %p348 = por %p346, %p347
      %p349 = scmp.ne.s32.totalorder %s340, %s341
      %p350 = scmp.eq.s32.totalorder %s57, 0
      %p351 = por %p349, %p350
      %p352 = scmp.ne.s32.totalorder %s340, %s341
      %p353 = scmp.eq.s32.totalorder %s58, 1
      %p354 = por %p352, %p353
      %p356 = scmp.ne.s32.totalorder %s341, %s355
      %p357 = scmp.eq.s32.totalorder %s58, 0
      %p358 = por %p356, %p357
      %s360 = sadd.s32 %s359, 1
      %p363 = scmp.eq.s32.totalorder %s52, 1
      %p364 = scmp.ne.s32.totalorder %s359, %s361
      %p365 = scmp.eq.s32.totalorder %s52, 0
      %p366 = por %p364, %p365
      %p367 = scmp.ne.s32.totalorder %s359, %s361
      %p368 = scmp.eq.s32.totalorder %s57, 1
      %p369 = por %p367, %p368
      %p370 = scmp.ne.s32.totalorder %s361, %s362
      %p371 = scmp.eq.s32.totalorder %s57, 0
      %p372 = por %p370, %p371
      %p373 = scmp.ne.s32.totalorder %s361, %s362
      %p374 = scmp.eq.s32.totalorder %s58, 1
      %p375 = por %p373, %p374
      %p377 = scmp.ne.s32.totalorder %s362, %s376
      %p378 = scmp.eq.s32.totalorder %s58, 0
      %p379 = por %p377, %p378
      %s381 = sadd.s32 %s380, 1
      %p384 = scmp.eq.s32.totalorder %s52, 1
      %p385 = scmp.ne.s32.totalorder %s380, %s382
      %p386 = scmp.eq.s32.totalorder %s52, 0
      %p387 = por %p385, %p386
      %p388 = scmp.ne.s32.totalorder %s380, %s382
      %p389 = scmp.eq.s32.totalorder %s57, 1
      %p390 = por %p388, %p389
      %p391 = scmp.ne.s32.totalorder %s382, %s383
      %p392 = scmp.eq.s32.totalorder %s57, 0
      %p393 = por %p391, %p392
      %p394 = scmp.ne.s32.totalorder %s382, %s383
      %p395 = scmp.eq.s32.totalorder %s58, 1
      %p396 = por %p394, %p395
      %p398 = scmp.ne.s32.totalorder %s383, %s397
      %p399 = scmp.eq.s32.totalorder %s58, 0
      %p400 = por %p398, %p399
      %s402 = sadd.s32 %s401, 1
      %p405 = scmp.eq.s32.totalorder %s52, 1
      %p406 = scmp.ne.s32.totalorder %s401, %s403
      %p407 = scmp.eq.s32.totalorder %s52, 0
      %p408 = por %p406, %p407
      %p409 = scmp.ne.s32.totalorder %s401, %s403
      %p410 = scmp.eq.s32.totalorder %s57, 1
      %p411 = por %p409, %p410
      %p412 = scmp.ne.s32.totalorder %s403, %s404
      %p413 = scmp.eq.s32.totalorder %s57, 0
      %p414 = por %p412, %p413
      %p415 = scmp.ne.s32.totalorder %s403, %s404
      %p416 = scmp.eq.s32.totalorder %s58, 1
      %p417 = por %p415, %p416
      %p419 = scmp.ne.s32.totalorder %s404, %s418
      %p420 = scmp.eq.s32.totalorder %s58, 0
      %p421 = por %p419, %p420
      %s423 = sadd.s32 %s422, 1
      %p426 = scmp.eq.s32.totalorder %s52, 1
      %p427 = scmp.ne.s32.totalorder %s422, %s424
      %p428 = scmp.eq.s32.totalorder %s52, 0
      %p429 = por %p427, %p428
      %p430 = scmp.ne.s32.totalorder %s422, %s424
      %p431 = scmp.eq.s32.totalorder %s57, 1
      %p432 = por %p430, %p431
      %p433 = scmp.ne.s32.totalorder %s424, %s425
      %p434 = scmp.eq.s32.totalorder %s57, 0
      %p435 = por %p433, %p434
      %p436 = scmp.ne.s32.totalorder %s424, %s425
      %p437 = scmp.eq.s32.totalorder %s58, 1
      %p438 = por %p436, %p437
      %p440 = scmp.ne.s32.totalorder %s425, %s439
      %p441 = scmp.eq.s32.totalorder %s58, 0
      %p442 = por %p440, %p441
      %s444 = sadd.s32 %s443, 1
      %p447 = scmp.eq.s32.totalorder %s52, 1
      %p448 = scmp.ne.s32.totalorder %s443, %s445
      %p449 = scmp.eq.s32.totalorder %s52, 0
      %p450 = por %p448, %p449
      %p451 = scmp.ne.s32.totalorder %s443, %s445
      %p452 = scmp.eq.s32.totalorder %s57, 1
      %p453 = por %p451, %p452
      %p454 = scmp.ne.s32.totalorder %s445, %s446
      %p455 = scmp.eq.s32.totalorder %s57, 0
      %p456 = por %p454, %p455
      %p457 = scmp.ne.s32.totalorder %s445, %s446
      %p458 = scmp.eq.s32.totalorder %s58, 1
      %p459 = por %p457, %p458
      %p461 = scmp.ne.s32.totalorder %s446, %s460
      %p462 = scmp.eq.s32.totalorder %s58, 0
      %p463 = por %p461, %p462
      %s465 = sadd.s32 %s464, 1
      %p468 = scmp.eq.s32.totalorder %s52, 1
      %p469 = scmp.ne.s32.totalorder %s464, %s466
      %p470 = scmp.eq.s32.totalorder %s52, 0
      %p471 = por %p469, %p470
      %p472 = scmp.ne.s32.totalorder %s464, %s466
      %p473 = scmp.eq.s32.totalorder %s57, 1
      %p474 = por %p472, %p473
      %p475 = scmp.ne.s32.totalorder %s466, %s467
      %p476 = scmp.eq.s32.totalorder %s57, 0
      %p477 = por %p475, %p476
      %p478 = scmp.ne.s32.totalorder %s466, %s467
      %p479 = scmp.eq.s32.totalorder %s58, 1
      %p480 = por %p478, %p479
      %p482 = scmp.ne.s32.totalorder %s467, %s481
      %p483 = scmp.eq.s32.totalorder %s58, 0
      %p484 = por %p482, %p483
      %s486 = sadd.s32 %s485, 1
      %p489 = scmp.eq.s32.totalorder %s52, 1
      %p490 = scmp.ne.s32.totalorder %s485, %s487
      %p491 = scmp.eq.s32.totalorder %s52, 0
      %p492 = por %p490, %p491
      %p493 = scmp.ne.s32.totalorder %s485, %s487
      %p494 = scmp.eq.s32.totalorder %s57, 1
      %p495 = por %p493, %p494
      %p496 = scmp.ne.s32.totalorder %s487, %s488
      %p497 = scmp.eq.s32.totalorder %s57, 0
      %p498 = por %p496, %p497
      %p499 = scmp.ne.s32.totalorder %s487, %s488
      %p500 = scmp.eq.s32.totalorder %s58, 1
      %p501 = por %p499, %p500
      %p503 = scmp.ne.s32.totalorder %s488, %s502
      %p504 = scmp.eq.s32.totalorder %s58, 0
      %p505 = por %p503, %p504
      %s507 = sadd.s32 %s506, 1
      %p510 = scmp.eq.s32.totalorder %s52, 1
      %p511 = scmp.ne.s32.totalorder %s506, %s508
      %p512 = scmp.eq.s32.totalorder %s52, 0
      %p513 = por %p511, %p512
      %p514 = scmp.ne.s32.totalorder %s506, %s508
      %p515 = scmp.eq.s32.totalorder %s57, 1
      %p516 = por %p514, %p515
      %p517 = scmp.ne.s32.totalorder %s508, %s509
      %p518 = scmp.eq.s32.totalorder %s57, 0
      %p519 = por %p517, %p518
      %p520 = scmp.ne.s32.totalorder %s508, %s509
      %p521 = scmp.eq.s32.totalorder %s58, 1
      %p522 = por %p520, %p521
      %p524 = scmp.ne.s32.totalorder %s509, %s523
      %p525 = scmp.eq.s32.totalorder %s58, 0
      %p526 = por %p524, %p525
      %s528 = sadd.s32 %s527, 1
      %p531 = scmp.eq.s32.totalorder %s52, 1
      %p532 = scmp.ne.s32.totalorder %s527, %s529
      %p533 = scmp.eq.s32.totalorder %s52, 0
      %p534 = por %p532, %p533
      %p535 = scmp.ne.s32.totalorder %s527, %s529
      %p536 = scmp.eq.s32.totalorder %s57, 1
      %p537 = por %p535, %p536
      %p538 = scmp.ne.s32.totalorder %s529, %s530
      %p539 = scmp.eq.s32.totalorder %s57, 0
      %p540 = por %p538, %p539
      %p541 = scmp.ne.s32.totalorder %s529, %s530
      %p542 = scmp.eq.s32.totalorder %s58, 1
      %p543 = por %p541, %p542
      %p545 = scmp.ne.s32.totalorder %s530, %s544
      %p546 = scmp.eq.s32.totalorder %s58, 0
      %p547 = por %p545, %p546
      %s549 = sadd.s32 %s548, 1
      %p552 = scmp.eq.s32.totalorder %s52, 1
      %p553 = scmp.ne.s32.totalorder %s548, %s550
      %p554 = scmp.eq.s32.totalorder %s52, 0
      %p555 = por %p553, %p554
      %p556 = scmp.ne.s32.totalorder %s548, %s550
      %p557 = scmp.eq.s32.totalorder %s57, 1
      %p558 = por %p556, %p557
      %p559 = scmp.ne.s32.totalorder %s550, %s551
      %p560 = scmp.eq.s32.totalorder %s57, 0
      %p561 = por %p559, %p560
      %p562 = scmp.ne.s32.totalorder %s550, %s551
      %p563 = scmp.eq.s32.totalorder %s58, 1
      %p564 = por %p562, %p563
      %p566 = scmp.ne.s32.totalorder %s551, %s565
      %p567 = scmp.eq.s32.totalorder %s58, 0
      %p568 = por %p566, %p567
      %s570 = sadd.s32 %s569, 1
      %p573 = scmp.eq.s32.totalorder %s52, 1
      %p574 = scmp.ne.s32.totalorder %s569, %s571
      %p575 = scmp.eq.s32.totalorder %s52, 0
      %p576 = por %p574, %p575
      %p577 = scmp.ne.s32.totalorder %s569, %s571
      %p578 = scmp.eq.s32.totalorder %s57, 1
      %p579 = por %p577, %p578
      %p580 = scmp.ne.s32.totalorder %s571, %s572
      %p581 = scmp.eq.s32.totalorder %s57, 0
      %p582 = por %p580, %p581
      %p583 = scmp.ne.s32.totalorder %s571, %s572
      %p584 = scmp.eq.s32.totalorder %s58, 1
      %p585 = por %p583, %p584
      %p587 = scmp.ne.s32.totalorder %s572, %s586
      %p588 = scmp.eq.s32.totalorder %s58, 0
      %p589 = por %p587, %p588
      %s591 = sadd.s32 %s590, 1
      %p594 = scmp.eq.s32.totalorder %s52, 1
      %p595 = scmp.ne.s32.totalorder %s590, %s592
      %p596 = scmp.eq.s32.totalorder %s52, 0
      %p597 = por %p595, %p596
      %p598 = scmp.ne.s32.totalorder %s590, %s592
      %p599 = scmp.eq.s32.totalorder %s57, 1
      %p600 = por %p598, %p599
      %p601 = scmp.ne.s32.totalorder %s592, %s593
      %p602 = scmp.eq.s32.totalorder %s57, 0
      %p603 = por %p601, %p602
      %p604 = scmp.ne.s32.totalorder %s592, %s593
      %p605 = scmp.eq.s32.totalorder %s58, 1
      %p606 = por %p604, %p605
      %p608 = scmp.ne.s32.totalorder %s593, %s607
      %p609 = scmp.eq.s32.totalorder %s58, 0
      %p610 = por %p608, %p609
      %s612 = sadd.s32 %s611, 1
      %p615 = scmp.eq.s32.totalorder %s52, 1
      %p616 = scmp.ne.s32.totalorder %s611, %s613
      %p617 = scmp.eq.s32.totalorder %s52, 0
      %p618 = por %p616, %p617
      %p619 = scmp.ne.s32.totalorder %s611, %s613
      %p620 = scmp.eq.s32.totalorder %s57, 1
      %p621 = por %p619, %p620
      %p622 = scmp.ne.s32.totalorder %s613, %s614
      %p623 = scmp.eq.s32.totalorder %s57, 0
      %p624 = por %p622, %p623
      %p625 = scmp.ne.s32.totalorder %s613, %s614
      %p626 = scmp.eq.s32.totalorder %s58, 1
      %p627 = por %p625, %p626
      %p629 = scmp.ne.s32.totalorder %s614, %s628
      %p630 = scmp.eq.s32.totalorder %s58, 0
      %p631 = por %p629, %p630
      %s632 = ssub.s32 %s52, %s59
      %p633 = scmp.eq.s32.totalorder %s632, 0
      %s635 = sadd.s32 %s634, 1
      %s636 = scalar_select %p633, %s634, %s635
      %p639 = pneg %p633
      %p640 = scmp.eq.s32.totalorder %s52, 1
      %p641 = por %p639, %p640
      %p642 = scmp.ne.s32.totalorder %s634, %s637
      %p643 = scmp.eq.s32.totalorder %s52, 0
      %p644 = por %p642, %p643
      %p645 = scmp.ne.s32.totalorder %s634, %s637
      %p646 = scmp.eq.s32.totalorder %s57, 1
      %p647 = por %p645, %p646
      %p648 = scmp.ne.s32.totalorder %s637, %s638
      %p649 = scmp.eq.s32.totalorder %s57, 0
      %p650 = por %p648, %p649
      %p651 = scmp.ne.s32.totalorder %s637, %s638
      %p652 = scmp.eq.s32.totalorder %s58, 1
      %p653 = por %p651, %p652
      %p655 = scmp.ne.s32.totalorder %s638, %s654
      %p656 = scmp.eq.s32.totalorder %s58, 0
      %p657 = por %p655, %p656
      %p658 = scmp.le.s32.totalorder 1, %s52
      %p659 = scmp.lt.s32.totalorder %s52, 3
      %p660 = pnand %p658, %p659
      %p661 = pneg %p660
      // Predicated region
      $region9: #{transformer_decoder_forward.1} parent=5 // pred_check
        _
      $region10: #{transformer_decoder_forward.1} parent=5 // pred_check_branch
        %663 = sbr.rel (%p660) target = $region12
      $region11: #{transformer_decoder_forward.1} parent=5 // pred_region
        %s664 = ssub.s32 %s52, 1
        // Predicated region
        $region13: #{transformer_decoder_forward.1} parent=11 // pred_check
          %p665 = pneg %p73
        $region14: #{transformer_decoder_forward.1} parent=11 // pred_check_branch
          %667 = sbr.rel (%p665) target = $region16
        $region15: #{transformer_decoder_forward.1} parent=11 // pred_region
          %s669 = ssub.s32 384, 384
          %670 = vsyncadd [#allocation5], %s669
          %s671 = sshll.u32 [#allocation4], 4
          %s672 = int_to_ptr.vmem [resolvable:$true] %s671
          %677 = dma.hbm_to_vmem [thread:$0]  %s1, 384, %s672, [#allocation5], 128, 128, 8
        $region16: #{transformer_decoder_forward.1} parent=11 // pred_fallthru
          _
        // Predicated region
        $region17: #{transformer_decoder_forward.1} parent=11 // pred_check
          %p678 = pneg %p94
        $region18: #{transformer_decoder_forward.1} parent=11 // pred_check_branch
          %680 = sbr.rel (%p678) target = $region20
        $region19: #{transformer_decoder_forward.1} parent=11 // pred_region
          %s682 = ssub.s32 512, 512
          %683 = vsyncadd [#allocation7], %s682
          %s684 = sshll.u32 [#allocation6], 4
          %s685 = int_to_ptr.vmem [resolvable:$true] %s684
          %690 = dma.hbm_to_vmem [thread:$0]  %s2, 512, %s685, [#allocation7], 128, 128, 8
        $region20: #{transformer_decoder_forward.1} parent=11 // pred_fallthru
          _
        // Predicated region
        $region21: #{transformer_decoder_forward.1} parent=11 // pred_check
          %p691 = pneg %p141
        $region22: #{transformer_decoder_forward.1} parent=11 // pred_check_branch
          %693 = sbr.rel (%p691) target = $region24
        $region23: #{transformer_decoder_forward.1} parent=11 // pred_region
          _
        $region24: #{transformer_decoder_forward.1} parent=11 // pred_fallthru
          _
        // Predicated region
        $region25: #{transformer_decoder_forward.1} parent=11 // pred_check
          %p694 = pneg %p162
        $region26: #{transformer_decoder_forward.1} parent=11 // pred_check_branch
          %696 = sbr.rel (%p694) target = $region28
        $region27: #{transformer_decoder_forward.1} parent=11 // pred_region
          %s698 = ssub.s32 16, 16
          %699 = vsyncadd [#allocation7], %s698
          %s701 = sshll.u32 [#allocation8], 4
          %s702 = int_to_ptr.vmem [resolvable:$true] %s701
          %704 = dma.hbm_to_vmem [thread:$0]  %s5, 16, %s702, [#allocation7]
        $region28: #{transformer_decoder_forward.1} parent=11 // pred_fallthru
          _
        // Predicated region
        $region29: #{transformer_decoder_forward.1} parent=11 // pred_check
          %p705 = pneg %p183
        $region30: #{transformer_decoder_forward.1} parent=11 // pred_check_branch
          %707 = sbr.rel (%p705) target = $region32
        $region31: #{transformer_decoder_forward.1} parent=11 // pred_region
          %s709 = ssub.s32 1024, 1024
          %710 = vsyncadd [#allocation10], %s709
          %s711 = sshll.u32 [#allocation9], 4
          %s712 = int_to_ptr.vmem [resolvable:$true] %s711
          %717 = dma.hbm_to_vmem [thread:$0]  %s6, 1024, %s712, [#allocation10], 64, 64, 4
        $region32: #{transformer_decoder_forward.1} parent=11 // pred_fallthru
          _
        // Predicated region
        $region33: #{transformer_decoder_forward.1} parent=11 // pred_check
          %p718 = pneg %p204
        $region34: #{transformer_decoder_forward.1} parent=11 // pred_check_branch
          %720 = sbr.rel (%p718) target = $region36
        $region35: #{transformer_decoder_forward.1} parent=11 // pred_region
          %s722 = ssub.s32 16, 16
          %723 = vsyncadd [#allocation10], %s722
          %s725 = sshll.u32 [#allocation11], 4
          %s726 = int_to_ptr.vmem [resolvable:$true] %s725
          %728 = dma.hbm_to_vmem [thread:$0]  %s7, 16, %s726, [#allocation10]
        $region36: #{transformer_decoder_forward.1} parent=11 // pred_fallthru
          _
        // Predicated region
        $region37: #{transformer_decoder_forward.1} parent=11 // pred_check
          %p729 = pneg %p225
        $region38: #{transformer_decoder_forward.1} parent=11 // pred_check_branch
          %731 = sbr.rel (%p729) target = $region40
        $region39: #{transformer_decoder_forward.1} parent=11 // pred_region
          %s733 = ssub.s32 2048, 2048
          %734 = vsyncadd [#allocation13], %s733
          %s735 = sshll.u32 [#allocation12], 4
          %s736 = int_to_ptr.vmem [resolvable:$true] %s735
          %741 = dma.hbm_to_vmem [thread:$0]  %s8, 2048, %s736, [#allocation13], 64, 64, 4
        $region40: #{transformer_decoder_forward.1} parent=11 // pred_fallthru
          _
        // Predicated region
        $region41: #{transformer_decoder_forward.1} parent=11 // pred_check
          %p742 = pneg %p246
        $region42: #{transformer_decoder_forward.1} parent=11 // pred_check_branch
          %744 = sbr.rel (%p742) target = $region44
        $region43: #{transformer_decoder_forward.1} parent=11 // pred_region
          _
        $region44: #{transformer_decoder_forward.1} parent=11 // pred_fallthru
          _
        // Predicated region
        $region45: #{transformer_decoder_forward.1} parent=11 // pred_check
          %p745 = pneg %p267
        $region46: #{transformer_decoder_forward.1} parent=11 // pred_check_branch
          %747 = sbr.rel (%p745) target = $region48
        $region47: #{transformer_decoder_forward.1} parent=11 // pred_region
          %s749 = ssub.s32 512, 512
          %750 = vsyncadd [#allocation13], %s749
          %s751 = sshll.u32 [#allocation14], 4
          %s752 = int_to_ptr.vmem [resolvable:$true] %s751
          %757 = dma.hbm_to_vmem [thread:$0]  %s10, 512, %s752, [#allocation13], 64, 64, 4
        $region48: #{transformer_decoder_forward.1} parent=11 // pred_fallthru
          _
        // Predicated region
        $region49: #{transformer_decoder_forward.1} parent=11 // pred_check
          %p758 = pneg %p288
        $region50: #{transformer_decoder_forward.1} parent=11 // pred_check_branch
          %760 = sbr.rel (%p758) target = $region52
        $region51: #{transformer_decoder_forward.1} parent=11 // pred_region
          %s762 = ssub.s32 32, 32
          %763 = vsyncadd [#allocation16], %s762
          %s764 = sshll.u32 [#allocation15], 4
          %s765 = int_to_ptr.vmem [resolvable:$true] %s764
          %770 = dma.hbm_to_vmem [thread:$0]  %s11, 32, %s765, [#allocation16], 16, 16, 1
        $region52: #{transformer_decoder_forward.1} parent=11 // pred_fallthru
          _
        // Predicated region
        $region53: #{transformer_decoder_forward.1} parent=11 // pred_check
          %p771 = pneg %p309
        $region54: #{transformer_decoder_forward.1} parent=11 // pred_check_branch
          %773 = sbr.rel (%p771) target = $region56
        $region55: #{transformer_decoder_forward.1} parent=11 // pred_region
          _
        $region56: #{transformer_decoder_forward.1} parent=11 // pred_fallthru
          _
        // Predicated region
        $region57: #{transformer_decoder_forward.1} parent=11 // pred_check
          %p774 = pneg %p330
        $region58: #{transformer_decoder_forward.1} parent=11 // pred_check_branch
          %776 = sbr.rel (%p774) target = $region60
        $region59: #{transformer_decoder_forward.1} parent=11 // pred_region
          %s778 = ssub.s32 32, 32
          %779 = vsyncadd [#allocation16], %s778
          %s780 = sshll.u32 [#allocation17], 4
          %s781 = int_to_ptr.vmem [resolvable:$true] %s780
          %786 = dma.hbm_to_vmem [thread:$0]  %s13, 32, %s781, [#allocation16], 16, 16, 1
        $region60: #{transformer_decoder_forward.1} parent=11 // pred_fallthru
          _
        // Predicated region
        $region61: #{transformer_decoder_forward.1} parent=11 // pred_check
          %p787 = pneg %p351
        $region62: #{transformer_decoder_forward.1} parent=11 // pred_check_branch
          %789 = sbr.rel (%p787) target = $region64
        $region63: #{transformer_decoder_forward.1} parent=11 // pred_region
          %s791 = ssub.s32 512, 512
          %792 = vsyncadd [#allocation19], %s791
          %s793 = sshll.u32 [#allocation18], 4
          %s794 = int_to_ptr.vmem [resolvable:$true] %s793
          %799 = dma.hbm_to_vmem [thread:$0]  %s14, 512, %s794, [#allocation19], 64, 64, 4
        $region64: #{transformer_decoder_forward.1} parent=11 // pred_fallthru
          _
        // Predicated region
        $region65: #{transformer_decoder_forward.1} parent=11 // pred_check
          %p800 = pneg %p372
        $region66: #{transformer_decoder_forward.1} parent=11 // pred_check_branch
          %802 = sbr.rel (%p800) target = $region68
        $region67: #{transformer_decoder_forward.1} parent=11 // pred_region
          _
        $region68: #{transformer_decoder_forward.1} parent=11 // pred_fallthru
          _
        // Predicated region
        $region69: #{transformer_decoder_forward.1} parent=11 // pred_check
          %p803 = pneg %p393
        $region70: #{transformer_decoder_forward.1} parent=11 // pred_check_branch
          %805 = sbr.rel (%p803) target = $region72
        $region71: #{transformer_decoder_forward.1} parent=11 // pred_region
          %s807 = ssub.s32 512, 512
          %808 = vsyncadd [#allocation19], %s807
          %s809 = sshll.u32 [#allocation20], 4
          %s810 = int_to_ptr.vmem [resolvable:$true] %s809
          %815 = dma.hbm_to_vmem [thread:$0]  %s16, 512, %s810, [#allocation19], 64, 64, 4
        $region72: #{transformer_decoder_forward.1} parent=11 // pred_fallthru
          _
        // Predicated region
        $region73: #{transformer_decoder_forward.1} parent=11 // pred_check
          %p816 = pneg %p414
        $region74: #{transformer_decoder_forward.1} parent=11 // pred_check_branch
          %818 = sbr.rel (%p816) target = $region76
        $region75: #{transformer_decoder_forward.1} parent=11 // pred_region
          %s820 = ssub.s32 32, 32
          %821 = vsyncadd [#allocation22], %s820
          %s822 = sshll.u32 [#allocation21], 4
          %s823 = int_to_ptr.vmem [resolvable:$true] %s822
          %828 = dma.hbm_to_vmem [thread:$0]  %s17, 32, %s823, [#allocation22], 16, 16, 1
        $region76: #{transformer_decoder_forward.1} parent=11 // pred_fallthru
          _
        // Predicated region
        $region77: #{transformer_decoder_forward.1} parent=11 // pred_check
          %p829 = pneg %p435
        $region78: #{transformer_decoder_forward.1} parent=11 // pred_check_branch
          %831 = sbr.rel (%p829) target = $region80
        $region79: #{transformer_decoder_forward.1} parent=11 // pred_region
          %s833 = ssub.s32 2048, 2048
          %834 = vsyncadd [#allocation22], %s833
          %s835 = sshll.u32 [#allocation23], 4
          %s836 = int_to_ptr.vmem [resolvable:$true] %s835
          %841 = dma.hbm_to_vmem [thread:$0]  %s18, 2048, %s836, [#allocation22], 64, 64, 4
        $region80: #{transformer_decoder_forward.1} parent=11 // pred_fallthru
          _
        // Predicated region
        $region81: #{transformer_decoder_forward.1} parent=11 // pred_check
          %p842 = pneg %p456
        $region82: #{transformer_decoder_forward.1} parent=11 // pred_check_branch
          %844 = sbr.rel (%p842) target = $region84
        $region83: #{transformer_decoder_forward.1} parent=11 // pred_region
          %s846 = ssub.s32 32, 32
          %847 = vsyncadd [#allocation25], %s846
          %s848 = sshll.u32 [#allocation24], 4
          %s849 = int_to_ptr.vmem [resolvable:$true] %s848
          %854 = dma.hbm_to_vmem [thread:$0]  %s19, 32, %s849, [#allocation25], 16, 16, 1
        $region84: #{transformer_decoder_forward.1} parent=11 // pred_fallthru
          _
        // Predicated region
        $region85: #{transformer_decoder_forward.1} parent=11 // pred_check
          %p855 = pneg %p477
        $region86: #{transformer_decoder_forward.1} parent=11 // pred_check_branch
          %857 = sbr.rel (%p855) target = $region88
        $region87: #{transformer_decoder_forward.1} parent=11 // pred_region
          %s859 = ssub.s32 2048, 2048
          %860 = vsyncadd [#allocation25], %s859
          %s861 = sshll.u32 [#allocation26], 4
          %s862 = int_to_ptr.vmem [resolvable:$true] %s861
          %867 = dma.hbm_to_vmem [thread:$0]  %s20, 2048, %s862, [#allocation25], 64, 64, 4
        $region88: #{transformer_decoder_forward.1} parent=11 // pred_fallthru
          _
        // Predicated region
        $region89: #{transformer_decoder_forward.1} parent=11 // pred_check
          %p868 = pneg %p498
        $region90: #{transformer_decoder_forward.1} parent=11 // pred_check_branch
          %870 = sbr.rel (%p868) target = $region92
        $region91: #{transformer_decoder_forward.1} parent=11 // pred_region
          %s872 = ssub.s32 32, 32
          %873 = vsyncadd [#allocation28], %s872
          %s874 = sshll.u32 [#allocation27], 4
          %s875 = int_to_ptr.vmem [resolvable:$true] %s874
          %880 = dma.hbm_to_vmem [thread:$0]  %s21, 32, %s875, [#allocation28], 16, 16, 1
        $region92: #{transformer_decoder_forward.1} parent=11 // pred_fallthru
          _
        // Predicated region
        $region93: #{transformer_decoder_forward.1} parent=11 // pred_check
          %p881 = pneg %p519
        $region94: #{transformer_decoder_forward.1} parent=11 // pred_check_branch
          %883 = sbr.rel (%p881) target = $region96
        $region95: #{transformer_decoder_forward.1} parent=11 // pred_region
          %s885 = ssub.s32 32, 32
          %886 = vsyncadd [#allocation28], %s885
          %s887 = sshll.u32 [#allocation29], 4
          %s888 = int_to_ptr.vmem [resolvable:$true] %s887
          %893 = dma.hbm_to_vmem [thread:$0]  %s22, 32, %s888, [#allocation28], 16, 16, 1
        $region96: #{transformer_decoder_forward.1} parent=11 // pred_fallthru
          _
        // Predicated region
        $region97: #{transformer_decoder_forward.1} parent=11 // pred_check
          %p894 = pneg %p540
        $region98: #{transformer_decoder_forward.1} parent=11 // pred_check_branch
          %896 = sbr.rel (%p894) target = $region100
        $region99: #{transformer_decoder_forward.1} parent=11 // pred_region
          %s898 = ssub.s32 32, 32
          %899 = vsyncadd [#allocation31], %s898
          %s900 = sshll.u32 [#allocation30], 4
          %s901 = int_to_ptr.vmem [resolvable:$true] %s900
          %906 = dma.hbm_to_vmem [thread:$0]  %s23, 32, %s901, [#allocation31], 16, 16, 1
        $region100: #{transformer_decoder_forward.1} parent=11 // pred_fallthru
          _
        // Predicated region
        $region101: #{transformer_decoder_forward.1} parent=11 // pred_check
          %p907 = pneg %p561
        $region102: #{transformer_decoder_forward.1} parent=11 // pred_check_branch
          %909 = sbr.rel (%p907) target = $region104
        $region103: #{transformer_decoder_forward.1} parent=11 // pred_region
          %s911 = ssub.s32 32, 32
          %912 = vsyncadd [#allocation31], %s911
          %s913 = sshll.u32 [#allocation32], 4
          %s914 = int_to_ptr.vmem [resolvable:$true] %s913
          %919 = dma.hbm_to_vmem [thread:$0]  %s24, 32, %s914, [#allocation31], 16, 16, 1
        $region104: #{transformer_decoder_forward.1} parent=11 // pred_fallthru
          _
        // Predicated region
        $region105: #{transformer_decoder_forward.1} parent=11 // pred_check
          %p920 = pneg %p582
        $region106: #{transformer_decoder_forward.1} parent=11 // pred_check_branch
          %922 = sbr.rel (%p920) target = $region108
        $region107: #{transformer_decoder_forward.1} parent=11 // pred_region
          %s924 = ssub.s32 32, 32
          %925 = vsyncadd [#allocation34], %s924
          %s926 = sshll.u32 [#allocation33], 4
          %s927 = int_to_ptr.vmem [resolvable:$true] %s926
          %932 = dma.hbm_to_vmem [thread:$0]  %s25, 32, %s927, [#allocation34], 16, 16, 1
        $region108: #{transformer_decoder_forward.1} parent=11 // pred_fallthru
          _
        // Predicated region
        $region109: #{transformer_decoder_forward.1} parent=11 // pred_check
          %p933 = pneg %p603
        $region110: #{transformer_decoder_forward.1} parent=11 // pred_check_branch
          %935 = sbr.rel (%p933) target = $region112
        $region111: #{transformer_decoder_forward.1} parent=11 // pred_region
          %s937 = ssub.s32 32, 32
          %938 = vsyncadd [#allocation34], %s937
          %s939 = sshll.u32 [#allocation35], 4
          %s940 = int_to_ptr.vmem [resolvable:$true] %s939
          %945 = dma.hbm_to_vmem [thread:$0]  %s26, 32, %s940, [#allocation34], 16, 16, 1
        $region112: #{transformer_decoder_forward.1} parent=11 // pred_fallthru
          _
        // Predicated region
        $region113: #{transformer_decoder_forward.1} parent=11 // pred_check
          %p946 = pneg %p624
        $region114: #{transformer_decoder_forward.1} parent=11 // pred_check_branch
          %948 = sbr.rel (%p946) target = $region116
        $region115: #{transformer_decoder_forward.1} parent=11 // pred_region
          %s950 = ssub.s32 32, 32
          %951 = vsyncadd [#allocation37], %s950
          %s952 = sshll.u32 [#allocation36], 4
          %s953 = int_to_ptr.vmem [resolvable:$true] %s952
          %958 = dma.hbm_to_vmem [thread:$0]  %s27, 32, %s953, [#allocation37], 16, 16, 1
        $region116: #{transformer_decoder_forward.1} parent=11 // pred_fallthru
          _
      $region12: #{transformer_decoder_forward.1} parent=5 // pred_fallthru
        _
      %p959 = scmp.lt.s32.totalorder %s52, 2
      // Predicated region
      $region117: #{transformer_decoder_forward.1} parent=5 // pred_check
        %p960 = pneg %p959
      $region118: #{transformer_decoder_forward.1} parent=5 // pred_check_branch
        %962 = sbr.rel (%p960) target = $region120
      $region119: #{transformer_decoder_forward.1} parent=5 // pred_region
        // Predicated region
        $region121: #{transformer_decoder_forward.1} parent=119 // pred_check
          %p963 = pneg %p114
        $region122: #{transformer_decoder_forward.1} parent=119 // pred_check_branch
          %965 = sbr.rel (%p963) target = $region124
        $region123: #{transformer_decoder_forward.1} parent=119 // pred_region
          %p966 = scmp.lt.s32.totalorder %s52, 1
          %s967 = scalar_select %p966, %s52, 1
          %s968 = smul.addr %s967, 2
          %s969 = smul.addr %s968, 8
          %s970 = scalar_lea.vmem %s3, %s969
        $region124: #{transformer_decoder_forward.1} parent=119 // pred_fallthru
          _
      $region120: #{transformer_decoder_forward.1} parent=5 // pred_fallthru
        _
      %p971 = scmp.le.s32.totalorder 1, %s52
      %p972 = scmp.lt.s32.totalorder %s52, 3
      %p973 = pnand %p971, %p972
      %p974 = pneg %p973
      // Predicated region
      $region125: #{transformer_decoder_forward.1} parent=5 // pred_check
        _
      $region126: #{transformer_decoder_forward.1} parent=5 // pred_check_branch
        %976 = sbr.rel (%p973) target = $region128
      $region127: #{transformer_decoder_forward.1} parent=5 // pred_region
        %s977 = ssub.s32 %s52, 1
        // Predicated region
        $region129: #{transformer_decoder_forward.1} parent=127 // pred_check
          %p978 = pneg %p73
        $region130: #{transformer_decoder_forward.1} parent=127 // pred_check_branch
          %980 = sbr.rel (%p978) target = $region132
        $region131: #{transformer_decoder_forward.1} parent=127 // pred_region
          %981 = dma.done [#allocation5], 384
        $region132: #{transformer_decoder_forward.1} parent=127 // pred_fallthru
          _
        // Predicated region
        $region133: #{transformer_decoder_forward.1} parent=127 // pred_check
          %p982 = pneg %p94
        $region134: #{transformer_decoder_forward.1} parent=127 // pred_check_branch
          %984 = sbr.rel (%p982) target = $region136
        $region135: #{transformer_decoder_forward.1} parent=127 // pred_region
          %985 = dma.done [#allocation7], 512
        $region136: #{transformer_decoder_forward.1} parent=127 // pred_fallthru
          _
        // Predicated region
        $region137: #{transformer_decoder_forward.1} parent=127 // pred_check
          %p986 = pneg %p162
        $region138: #{transformer_decoder_forward.1} parent=127 // pred_check_branch
          %988 = sbr.rel (%p986) target = $region140
        $region139: #{transformer_decoder_forward.1} parent=127 // pred_region
          %989 = dma.done [#allocation7], 16
        $region140: #{transformer_decoder_forward.1} parent=127 // pred_fallthru
          _
        // Predicated region
        $region141: #{transformer_decoder_forward.1} parent=127 // pred_check
          %p990 = pneg %p183
        $region142: #{transformer_decoder_forward.1} parent=127 // pred_check_branch
          %992 = sbr.rel (%p990) target = $region144
        $region143: #{transformer_decoder_forward.1} parent=127 // pred_region
          %993 = dma.done [#allocation10], 1024
        $region144: #{transformer_decoder_forward.1} parent=127 // pred_fallthru
          _
        // Predicated region
        $region145: #{transformer_decoder_forward.1} parent=127 // pred_check
          %p994 = pneg %p204
        $region146: #{transformer_decoder_forward.1} parent=127 // pred_check_branch
          %996 = sbr.rel (%p994) target = $region148
        $region147: #{transformer_decoder_forward.1} parent=127 // pred_region
          %997 = dma.done [#allocation10], 16
        $region148: #{transformer_decoder_forward.1} parent=127 // pred_fallthru
          _
        // Predicated region
        $region149: #{transformer_decoder_forward.1} parent=127 // pred_check
          %p998 = pneg %p225
        $region150: #{transformer_decoder_forward.1} parent=127 // pred_check_branch
          %1000 = sbr.rel (%p998) target = $region152
        $region151: #{transformer_decoder_forward.1} parent=127 // pred_region
          %1001 = dma.done [#allocation13], 2048
        $region152: #{transformer_decoder_forward.1} parent=127 // pred_fallthru
          _
        // Predicated region
        $region153: #{transformer_decoder_forward.1} parent=127 // pred_check
          %p1002 = pneg %p267
        $region154: #{transformer_decoder_forward.1} parent=127 // pred_check_branch
          %1004 = sbr.rel (%p1002) target = $region156
        $region155: #{transformer_decoder_forward.1} parent=127 // pred_region
          %1005 = dma.done [#allocation13], 512
        $region156: #{transformer_decoder_forward.1} parent=127 // pred_fallthru
          _
        // Predicated region
        $region157: #{transformer_decoder_forward.1} parent=127 // pred_check
          %p1006 = pneg %p288
        $region158: #{transformer_decoder_forward.1} parent=127 // pred_check_branch
          %1008 = sbr.rel (%p1006) target = $region160
        $region159: #{transformer_decoder_forward.1} parent=127 // pred_region
          %1009 = dma.done [#allocation16], 32
        $region160: #{transformer_decoder_forward.1} parent=127 // pred_fallthru
          _
        // Predicated region
        $region161: #{transformer_decoder_forward.1} parent=127 // pred_check
          %p1010 = pneg %p330
        $region162: #{transformer_decoder_forward.1} parent=127 // pred_check_branch
          %1012 = sbr.rel (%p1010) target = $region164
        $region163: #{transformer_decoder_forward.1} parent=127 // pred_region
          %1013 = dma.done [#allocation16], 32
        $region164: #{transformer_decoder_forward.1} parent=127 // pred_fallthru
          _
        // Predicated region
        $region165: #{transformer_decoder_forward.1} parent=127 // pred_check
          %p1014 = pneg %p351
        $region166: #{transformer_decoder_forward.1} parent=127 // pred_check_branch
          %1016 = sbr.rel (%p1014) target = $region168
        $region167: #{transformer_decoder_forward.1} parent=127 // pred_region
          %1017 = dma.done [#allocation19], 512
        $region168: #{transformer_decoder_forward.1} parent=127 // pred_fallthru
          _
        // Predicated region
        $region169: #{transformer_decoder_forward.1} parent=127 // pred_check
          %p1018 = pneg %p393
        $region170: #{transformer_decoder_forward.1} parent=127 // pred_check_branch
          %1020 = sbr.rel (%p1018) target = $region172
        $region171: #{transformer_decoder_forward.1} parent=127 // pred_region
          %1021 = dma.done [#allocation19], 512
        $region172: #{transformer_decoder_forward.1} parent=127 // pred_fallthru
          _
        // Predicated region
        $region173: #{transformer_decoder_forward.1} parent=127 // pred_check
          %p1022 = pneg %p414
        $region174: #{transformer_decoder_forward.1} parent=127 // pred_check_branch
          %1024 = sbr.rel (%p1022) target = $region176
        $region175: #{transformer_decoder_forward.1} parent=127 // pred_region
          %1025 = dma.done [#allocation22], 32
        $region176: #{transformer_decoder_forward.1} parent=127 // pred_fallthru
          _
        // Predicated region
        $region177: #{transformer_decoder_forward.1} parent=127 // pred_check
          %p1026 = pneg %p435
        $region178: #{transformer_decoder_forward.1} parent=127 // pred_check_branch
          %1028 = sbr.rel (%p1026) target = $region180
        $region179: #{transformer_decoder_forward.1} parent=127 // pred_region
          %1029 = dma.done [#allocation22], 2048
        $region180: #{transformer_decoder_forward.1} parent=127 // pred_fallthru
          _
        // Predicated region
        $region181: #{transformer_decoder_forward.1} parent=127 // pred_check
          %p1030 = pneg %p456
        $region182: #{transformer_decoder_forward.1} parent=127 // pred_check_branch
          %1032 = sbr.rel (%p1030) target = $region184
        $region183: #{transformer_decoder_forward.1} parent=127 // pred_region
          %1033 = dma.done [#allocation25], 32
        $region184: #{transformer_decoder_forward.1} parent=127 // pred_fallthru
          _
        // Predicated region
        $region185: #{transformer_decoder_forward.1} parent=127 // pred_check
          %p1034 = pneg %p477
        $region186: #{transformer_decoder_forward.1} parent=127 // pred_check_branch
          %1036 = sbr.rel (%p1034) target = $region188
        $region187: #{transformer_decoder_forward.1} parent=127 // pred_region
          %1037 = dma.done [#allocation25], 2048
        $region188: #{transformer_decoder_forward.1} parent=127 // pred_fallthru
          _
        // Predicated region
        $region189: #{transformer_decoder_forward.1} parent=127 // pred_check
          %p1038 = pneg %p498
        $region190: #{transformer_decoder_forward.1} parent=127 // pred_check_branch
          %1040 = sbr.rel (%p1038) target = $region192
        $region191: #{transformer_decoder_forward.1} parent=127 // pred_region
          %1041 = dma.done [#allocation28], 32
        $region192: #{transformer_decoder_forward.1} parent=127 // pred_fallthru
          _
        // Predicated region
        $region193: #{transformer_decoder_forward.1} parent=127 // pred_check
          %p1042 = pneg %p519
        $region194: #{transformer_decoder_forward.1} parent=127 // pred_check_branch
          %1044 = sbr.rel (%p1042) target = $region196
        $region195: #{transformer_decoder_forward.1} parent=127 // pred_region
          %1045 = dma.done [#allocation28], 32
        $region196: #{transformer_decoder_forward.1} parent=127 // pred_fallthru
          _
        // Predicated region
        $region197: #{transformer_decoder_forward.1} parent=127 // pred_check
          %p1046 = pneg %p540
        $region198: #{transformer_decoder_forward.1} parent=127 // pred_check_branch
          %1048 = sbr.rel (%p1046) target = $region200
        $region199: #{transformer_decoder_forward.1} parent=127 // pred_region
          %1049 = dma.done [#allocation31], 32
        $region200: #{transformer_decoder_forward.1} parent=127 // pred_fallthru
          _
        // Predicated region
        $region201: #{transformer_decoder_forward.1} parent=127 // pred_check
          %p1050 = pneg %p561
        $region202: #{transformer_decoder_forward.1} parent=127 // pred_check_branch
          %1052 = sbr.rel (%p1050) target = $region204
        $region203: #{transformer_decoder_forward.1} parent=127 // pred_region
          %1053 = dma.done [#allocation31], 32
        $region204: #{transformer_decoder_forward.1} parent=127 // pred_fallthru
          _
        // Predicated region
        $region205: #{transformer_decoder_forward.1} parent=127 // pred_check
          %p1054 = pneg %p582
        $region206: #{transformer_decoder_forward.1} parent=127 // pred_check_branch
          %1056 = sbr.rel (%p1054) target = $region208
        $region207: #{transformer_decoder_forward.1} parent=127 // pred_region
          %1057 = dma.done [#allocation34], 32
        $region208: #{transformer_decoder_forward.1} parent=127 // pred_fallthru
          _
        // Predicated region
        $region209: #{transformer_decoder_forward.1} parent=127 // pred_check
          %p1058 = pneg %p603
        $region210: #{transformer_decoder_forward.1} parent=127 // pred_check_branch
          %1060 = sbr.rel (%p1058) target = $region212
        $region211: #{transformer_decoder_forward.1} parent=127 // pred_region
          %1061 = dma.done [#allocation34], 32
        $region212: #{transformer_decoder_forward.1} parent=127 // pred_fallthru
          _
        // Predicated region
        $region213: #{transformer_decoder_forward.1} parent=127 // pred_check
          %p1062 = pneg %p624
        $region214: #{transformer_decoder_forward.1} parent=127 // pred_check_branch
          %1064 = sbr.rel (%p1062) target = $region216
        $region215: #{transformer_decoder_forward.1} parent=127 // pred_region
          %1065 = dma.done [#allocation37], 32
        $region216: #{transformer_decoder_forward.1} parent=127 // pred_fallthru
          _
        %p1066 = pneg %p73
        %p1067 = pneg %p70
        %p1068 = pneg %p94
        %p1069 = pneg %p91
        %p1070 = scmp.lt.s32.totalorder %s57, 1
        %s1071 = scalar_select %p1070, %s57, 1
        %s1072 = smul.addr %s1071, 2
        %s1073 = smul.addr %s1072, 8
        %s1074 = scalar_lea.vmem %s3, %s1073
        %p1075 = pneg %p120
        %p1076 = pneg %p117
        %p1077 = pneg %p141
        %p1078 = pneg %p138
        %p1079 = pneg %p162
        %p1080 = pneg %p159
        %p1081 = pneg %p183
        %p1082 = pneg %p180
        %p1083 = pneg %p204
        %p1084 = pneg %p201
        %p1085 = pneg %p225
        %p1086 = pneg %p222
        %p1087 = pneg %p246
        %p1088 = pneg %p243
        %p1089 = pneg %p267
        %p1090 = pneg %p264
        %p1091 = pneg %p288
        %p1092 = pneg %p285
        %p1093 = pneg %p309
        %p1094 = pneg %p306
        %p1095 = pneg %p330
        %p1096 = pneg %p327
        %p1097 = pneg %p351
        %p1098 = pneg %p348
        %p1099 = pneg %p372
        %p1100 = pneg %p369
        %p1101 = pneg %p393
        %p1102 = pneg %p390
        %p1103 = pneg %p414
        %p1104 = pneg %p411
        %p1105 = pneg %p435
        %p1106 = pneg %p432
        %p1107 = pneg %p456
        %p1108 = pneg %p453
        %p1109 = pneg %p477
        %p1110 = pneg %p474
        %p1111 = pneg %p498
        %p1112 = pneg %p495
        %p1113 = pneg %p519
        %p1114 = pneg %p516
        %p1115 = pneg %p540
        %p1116 = pneg %p537
        %p1117 = pneg %p561
        %p1118 = pneg %p558
        %p1119 = pneg %p582
        %p1120 = pneg %p579
        %p1121 = pneg %p603
        %p1122 = pneg %p600
        %p1123 = pneg %p624
        %p1124 = pneg %p621
        %p1125 = pneg %p650
        %p1126 = pneg %p647
        %p1127 = scmp.lt.s32.totalorder %s57, 1
        %s1128 = scalar_select %p1127, %s57, 1
        %s1129 = smul.addr %s1128, 8
        %s1130 = scalar_lea.vmem %s28, %s1129
        %p1131 = scmp.lt.s32.totalorder %s57, 1
        %s1132 = scalar_select %p1131, %s57, 1
        %s1133 = smul.addr %s1132, 2
        %s1134 = smul.addr %s1133, 8
        %s1135 = scalar_lea.vmem %s3, %s1134
        %p1136 = scmp.lt.s32.totalorder %s57, 1
        %s1137 = scalar_select %p1136, %s57, 1
        %s1138 = smul.addr %s1137, 8
        %s1139 = scalar_lea.vmem %s28, %s1138
        %s1141 = sld [smem:[#allocation3 + %s57]]
        %s1142 = scalar_lea.vmem [#allocation4], %s1141
        %v1143 = vld [vmem:[%s1142] sm:$0x1]
        %s1144 = sshra.s32 %s57, 7
        %s1145 = sand.u32 %s57, 127
        %s1146 = sadd.s32 %s1144, 1
        %s1147 = smul.u32 %s1146, 128
        %s1148 = sshra.s32 %s57, 7
        %s1149 = sand.u32 %s57, 127
        %s1150 = sadd.s32 %s1147, %s1149
        %s1151 = sld [smem:[#allocation3 + %s1150]]
        %s1152 = scalar_lea.vmem [#allocation4], %s1151
        %v1153 = vld [vmem:[%s1152] sm:$0x1]
        %s1154 = sadd.s32 %s1144, 2
        %s1155 = smul.u32 %s1154, 128
        %s1156 = sadd.s32 %s1155, %s1149
        %s1157 = sld [smem:[#allocation3 + %s1156]]
        %s1158 = scalar_lea.vmem [#allocation4], %s1157
        %v1159 = vld [vmem:[%s1158] sm:$0x1]
        %s1160 = sadd.s32 %s1144, 3
        %s1161 = smul.u32 %s1160, 128
        %s1162 = sadd.s32 %s1161, %s1149
        %s1163 = sld [smem:[#allocation3 + %s1162]]
        %s1164 = scalar_lea.vmem [#allocation4], %s1163
        %v1165 = vld [vmem:[%s1164] sm:$0x1]
        %s1166 = sadd.s32 %s1144, 4
        %s1167 = smul.u32 %s1166, 128
        %s1168 = sadd.s32 %s1167, %s1149
        %s1169 = sld [smem:[#allocation3 + %s1168]]
        %s1170 = scalar_lea.vmem [#allocation4], %s1169
        %v1171 = vld [vmem:[%s1170] sm:$0x1]
        %s1172 = sadd.s32 %s1144, 5
        %s1173 = smul.u32 %s1172, 128
        %s1174 = sadd.s32 %s1173, %s1149
        %s1175 = sld [smem:[#allocation3 + %s1174]]
        %s1176 = scalar_lea.vmem [#allocation4], %s1175
        %v1177 = vld [vmem:[%s1176] sm:$0x1]
        %s1178 = sadd.s32 %s1144, 6
        %s1179 = smul.u32 %s1178, 128
        %s1180 = sadd.s32 %s1179, %s1149
        %s1181 = sld [smem:[#allocation3 + %s1180]]
        %s1182 = scalar_lea.vmem [#allocation4], %s1181
        %v1183 = vld [vmem:[%s1182] sm:$0x1]
        %s1184 = sadd.s32 %s1144, 7
        %s1185 = smul.u32 %s1184, 128
        %s1186 = sadd.s32 %s1185, %s1149
        %s1187 = sld [smem:[#allocation3 + %s1186]]
        %s1188 = scalar_lea.vmem [#allocation4], %s1187
        %v1189 = vld [vmem:[%s1188] sm:$0x1]
        %v1191 = vrot.slane %v1153, 7
        %v1194 = vrot.slane %v1159, 6
        %v1197 = vrot.slane %v1165, 5
        %v1200 = vrot.slane %v1171, 4
        %v1203 = vrot.slane %v1177, 3
        %v1206 = vrot.slane %v1183, 2
        %v1209 = vrot.slane %v1189, 1
        %vm1211 = vcmask 1040384
        %v1212 = vsel %vm1211, %v1143, %v1191
        %vm1213 = vcmask 1041408
        %v1214 = vsel %vm1213, %v1212, %v1194
        %vm1215 = vcmask 1042432
        %v1216 = vsel %vm1215, %v1214, %v1197
        %vm1217 = vcmask 1043456
        %v1218 = vsel %vm1217, %v1216, %v1200
        %vm1219 = vcmask 1044480
        %v1220 = vsel %vm1219, %v1218, %v1203
        %vm1221 = vcmask 1045504
        %v1222 = vsel %vm1221, %v1220, %v1206
        %vm1223 = vcmask 1046528
        %v1224 = vsel %vm1223, %v1222, %v1209
        %v1225 = vld [vmem:[#allocation6] sm:$0xff]
        %v1226 = vadd.f32 %v1224, %v1225
        %v1227 = vlaneseq
        %v1228 = vshrl.u32 %v1227, 7
        %v1229 = vlaneseq
        %v1230 = vand.u32 %v1229, 127
        %vm1231 = vcmp.gt.s32.totalorder %v1230, %v1228
        %v1232 = vsel %vm1231, -1e+30, 0.0
        %vm1233 = vcmp.ge.s32.totalorder %v1230, 10
        %v1234 = vsel %vm1233, -1e+30, 0.0
        %vm1235 = vcmp.lt.s32.totalorder %v1230, 32
        %v1236 = vsel %vm1235, 1, 0
        %v1237 = vcvt.s32.f32 %v1236
        %v1238 = vld [vmem:[%s4] sm:$0xf]
        %v1239 = vld [vmem:[%s4 + $0x4] sm:$0xf]
        %v1240 = vld [vmem:[%s4 + $0x8] sm:$0xf]
        %v1241 = vld [vmem:[%s4 + $0xc] sm:$0xf]
        %v1242 = vld [vmem:[%s4 + $0x10] sm:$0xf]
        %v1243 = vld [vmem:[%s4 + $0x14] sm:$0xf]
        %v1244 = vld [vmem:[%s4 + $0x18] sm:$0xf]
        %v1245 = vld [vmem:[%s4 + $0x1c] sm:$0xf]
        %v1246 = vld [vmem:[%s4 + $0x20] sm:$0xf]
        %v1247 = vld [vmem:[%s4 + $0x24] sm:$0xf]
        %v1248 = vld [vmem:[%s4 + $0x28] sm:$0xf]
        %v1249 = vld [vmem:[%s4 + $0x2c] sm:$0xf]
        %v1250 = vld [vmem:[%s4 + $0x30] sm:$0xf]
        %v1251 = vld [vmem:[%s4 + $0x34] sm:$0xf]
        %v1252 = vld [vmem:[%s4 + $0x38] sm:$0xf]
        %v1253 = vld [vmem:[%s4 + $0x3c] sm:$0xf]
        %v1254 = vld [vmem:[#allocation8] sm:$0x1]
        %v1255 = vpack.c.bf16 %v1226, %v1226
        %v1257 = vlaneseq
        %v1258 = vshrl.u32 %v1257, 7
        %v1259 = vsub.s32 0, %v1258
        %v1260 = vrot.slane %v1254, %v1259
        %v1278 = vunpack.c.l.b16 %v1238
        %v1279 = vunpack.c.l.b16 %v1239
        %v1280 = vunpack.c.l.b16 %v1240
        %v1281 = vunpack.c.l.b16 %v1241
        %v1282 = vunpack.c.l.b16 %v1242
        %v1283 = vunpack.c.l.b16 %v1243
        %v1284 = vunpack.c.l.b16 %v1244
        %v1285 = vunpack.c.l.b16 %v1245
        %v1286 = vunpack.c.l.b16 %v1246
        %v1287 = vunpack.c.l.b16 %v1247
        %v1288 = vunpack.c.l.b16 %v1248
        %v1289 = vunpack.c.l.b16 %v1249
        %v1290 = vunpack.c.l.b16 %v1250
        %v1291 = vunpack.c.l.b16 %v1251
        %v1292 = vunpack.c.l.b16 %v1252
        %v1293 = vunpack.c.l.b16 %v1253
        %v1294 = vpack.c.b16 %v1279, %v1278
        %v1295 = vpack.c.b16 %v1281, %v1280
        %v1296 = vpack.c.b16 %v1283, %v1282
        %v1297 = vpack.c.b16 %v1285, %v1284
        %v1298 = vpack.c.b16 %v1287, %v1286
        %v1299 = vpack.c.b16 %v1289, %v1288
        %v1300 = vpack.c.b16 %v1291, %v1290
        %v1301 = vpack.c.b16 %v1293, %v1292
        %1310 = vmatprep.subr.bf16.mxu0 0
        %1311 = vmatpush1.bf16.msra.mxu0 %v1294
        %1312 = vmatprep.subr.bf16.mxu0 0
        %1313 = vmatpush1.bf16.msra.mxu0 %v1295
        %1314 = vmatprep.subr.bf16.mxu0 0
        %1315 = vmatpush1.bf16.msra.mxu0 %v1296
        %1316 = vmatprep.subr.bf16.mxu0 0
        %1317 = vmatpush1.bf16.msra.mxu0 %v1297
        %1318 = vmatprep.subr.bf16.mxu0 0
        %1319 = vmatpush1.bf16.msra.mxu0 %v1298
        %1320 = vmatprep.subr.bf16.mxu0 0
        %1321 = vmatpush1.bf16.msra.mxu0 %v1299
        %1322 = vmatprep.subr.bf16.mxu0 0
        %1323 = vmatpush1.bf16.msra.mxu0 %v1300
        %1324 = vmatprep.subr.bf16.mxu0 0
        %1325 = vmatpush1.bf16.msra.mxu0 %v1301
        %1326 = vmatprep.subr.bf16.mxu0 0
        %1327 = vmatpush1.bf16.msra.mxu0 0
        %1328 = vmatprep.subr.bf16.mxu0 0
        %1329 = vmatpush1.bf16.msra.mxu0 0
        %1330 = vmatprep.subr.bf16.mxu0 0
        %1331 = vmatpush1.bf16.msra.mxu0 0
        %1332 = vmatprep.subr.bf16.mxu0 0
        %1333 = vmatpush1.bf16.msra.mxu0 0
        %1334 = vmatprep.subr.bf16.mxu0 0
        %1335 = vmatpush1.bf16.msra.mxu0 0
        %1336 = vmatprep.subr.bf16.mxu0 0
        %1337 = vmatpush1.bf16.msra.mxu0 0
        %1338 = vmatprep.subr.bf16.mxu0 0
        %1339 = vmatpush1.bf16.msra.mxu0 0
        %1340 = vmatprep.subr.bf16.mxu0 0
        %1341 = vmatpush1.bf16.msra.mxu0 0
        %1342 = vmatprep.mubr.bf16.mxu0 0
        %1343 = vmatmul.mubr.bf16.gmra.mrb[0].mxu0 %v1255
        %v1344 = vpop.f32.mrb[0].mxu0
        %v1345 = vadd.f32 %v1260, %v1344
        %v1346 = vpop.f32.mrb[0].mxu0
        %v1347 = vpop.f32.mrb[0].mxu0
        %v1348 = vpop.f32.mrb[0].mxu0
        %1349 = vdwg.mxu0
        %v1350 = vld [vmem:[%s1135] sm:$0xff]
        %v1351 = vld [vmem:[%s1135 + $0x8] sm:$0xff]
        %v1352 = vld [vmem:[#allocation12] sm:$0xf]
        %v1353 = vld [vmem:[#allocation12 + $0x4] sm:$0xf]
        %v1354 = vld [vmem:[#allocation12 + $0x8] sm:$0xf]
        %v1355 = vld [vmem:[#allocation12 + $0xc] sm:$0xf]
        %v1356 = vld [vmem:[#allocation12 + $0x10] sm:$0xf]
        %v1357 = vld [vmem:[#allocation12 + $0x14] sm:$0xf]
        %v1358 = vld [vmem:[#allocation12 + $0x18] sm:$0xf]
        %v1359 = vld [vmem:[#allocation12 + $0x1c] sm:$0xf]
        %v1360 = vld [vmem:[#allocation12 + $0x20] sm:$0xf]
        %v1361 = vld [vmem:[#allocation12 + $0x24] sm:$0xf]
        %v1362 = vld [vmem:[#allocation12 + $0x28] sm:$0xf]
        %v1363 = vld [vmem:[#allocation12 + $0x2c] sm:$0xf]
        %v1364 = vld [vmem:[#allocation12 + $0x30] sm:$0xf]
        %v1365 = vld [vmem:[#allocation12 + $0x34] sm:$0xf]
        %v1366 = vld [vmem:[#allocation12 + $0x38] sm:$0xf]
        %v1367 = vld [vmem:[#allocation12 + $0x3c] sm:$0xf]
        %v1368 = vld [vmem:[%s9] sm:$0x1]
        %v1369 = vpack.c.bf16 %v1345, %v1345
        %v1371 = vlaneseq
        %v1372 = vshrl.u32 %v1371, 7
        %v1373 = vsub.s32 0, %v1372
        %v1374 = vrot.slane %v1368, %v1373
        %v1392 = vunpack.c.l.b16 %v1352
        %v1393 = vunpack.c.l.b16 %v1353
        %v1394 = vunpack.c.l.b16 %v1354
        %v1395 = vunpack.c.l.b16 %v1355
        %v1396 = vunpack.c.l.b16 %v1356
        %v1397 = vunpack.c.l.b16 %v1357
        %v1398 = vunpack.c.l.b16 %v1358
        %v1399 = vunpack.c.l.b16 %v1359
        %v1400 = vunpack.c.l.b16 %v1360
        %v1401 = vunpack.c.l.b16 %v1361
        %v1402 = vunpack.c.l.b16 %v1362
        %v1403 = vunpack.c.l.b16 %v1363
        %v1404 = vunpack.c.l.b16 %v1364
        %v1405 = vunpack.c.l.b16 %v1365
        %v1406 = vunpack.c.l.b16 %v1366
        %v1407 = vunpack.c.l.b16 %v1367
        %v1408 = vpack.c.b16 %v1393, %v1392
        %v1409 = vpack.c.b16 %v1395, %v1394
        %v1410 = vpack.c.b16 %v1397, %v1396
        %v1411 = vpack.c.b16 %v1399, %v1398
        %v1412 = vpack.c.b16 %v1401, %v1400
        %v1413 = vpack.c.b16 %v1403, %v1402
        %v1414 = vpack.c.b16 %v1405, %v1404
        %v1415 = vpack.c.b16 %v1407, %v1406
        %1424 = vmatprep.subr.bf16.mxu0 0
        %1425 = vmatpush1.bf16.msra.mxu0 %v1408
        %1426 = vmatprep.subr.bf16.mxu0 0
        %1427 = vmatpush1.bf16.msra.mxu0 %v1409
        %1428 = vmatprep.subr.bf16.mxu0 0
        %1429 = vmatpush1.bf16.msra.mxu0 %v1410
        %1430 = vmatprep.subr.bf16.mxu0 0
        %1431 = vmatpush1.bf16.msra.mxu0 %v1411
        %1432 = vmatprep.subr.bf16.mxu0 0
        %1433 = vmatpush1.bf16.msra.mxu0 %v1412
        %1434 = vmatprep.subr.bf16.mxu0 0
        %1435 = vmatpush1.bf16.msra.mxu0 %v1413
        %1436 = vmatprep.subr.bf16.mxu0 0
        %1437 = vmatpush1.bf16.msra.mxu0 %v1414
        %1438 = vmatprep.subr.bf16.mxu0 0
        %1439 = vmatpush1.bf16.msra.mxu0 %v1415
        %1440 = vmatprep.subr.bf16.mxu0 0
        %1441 = vmatpush1.bf16.msra.mxu0 0
        %1442 = vmatprep.subr.bf16.mxu0 0
        %1443 = vmatpush1.bf16.msra.mxu0 0
        %1444 = vmatprep.subr.bf16.mxu0 0
        %1445 = vmatpush1.bf16.msra.mxu0 0
        %1446 = vmatprep.subr.bf16.mxu0 0
        %1447 = vmatpush1.bf16.msra.mxu0 0
        %1448 = vmatprep.subr.bf16.mxu0 0
        %1449 = vmatpush1.bf16.msra.mxu0 0
        %1450 = vmatprep.subr.bf16.mxu0 0
        %1451 = vmatpush1.bf16.msra.mxu0 0
        %1452 = vmatprep.subr.bf16.mxu0 0
        %1453 = vmatpush1.bf16.msra.mxu0 0
        %1454 = vmatprep.subr.bf16.mxu0 0
        %1455 = vmatpush1.bf16.msra.mxu0 0
        %1456 = vmatprep.mubr.bf16.mxu0 0
        %1457 = vmatmul.mubr.bf16.gmra.mrb[0].mxu0 %v1369
        %v1458 = vpop.f32.mrb[0].mxu0
        %v1459 = vadd.f32 %v1374, %v1458
        %v1460 = vpop.f32.mrb[0].mxu0
        %v1461 = vpop.f32.mrb[0].mxu0
        %v1462 = vpop.f32.mrb[0].mxu0
        %1463 = vdwg.mxu0
        %v1464 = vld [vmem:[#allocation14] sm:$0xf]
        %v1465 = vld [vmem:[#allocation14 + $0x4] sm:$0xf]
        %v1466 = vld [vmem:[#allocation14 + $0x8] sm:$0xf]
        %v1467 = vld [vmem:[#allocation14 + $0xc] sm:$0xf]
        %v1468 = vld [vmem:[#allocation15] sm:$0x1]
        %v1469 = vpack.c.bf16 %v1459, %v1459
        %1471 = vrot.lane.b32.xlu0 %v1469, 96
        %v1472 = vpop.permute.xlu0 %1471
        %vm1473 = vcmask 64512
        %v1475 = vsel %vm1473, %v1469, 0
        %v1478 = vsel %vm1473, %v1472, 0
        %1480 = vmatprep.subr.bf16.mxu0 0
        %1481 = vmatpush1.bf16.xpose.msra.mxu0 %v1478
        %1482 = vmatprep.subr.bf16.mxu0 0
        %1483 = vmatpush1.bf16.xpose.msra.mxu0 0
        %1484 = vmatprep.subr.bf16.mxu0 0
        %1485 = vmatpush1.bf16.xpose.msra.mxu0 0
        %1486 = vmatprep.subr.bf16.mxu0 0
        %1487 = vmatpush1.bf16.xpose.msra.mxu0 0
        %1488 = vmatprep.subr.bf16.mxu0 0
        %1489 = vmatpush1.bf16.xpose.msra.mxu0 0
        %1490 = vmatprep.subr.bf16.mxu0 0
        %1491 = vmatpush1.bf16.xpose.msra.mxu0 0
        %1492 = vmatprep.subr.bf16.mxu0 0
        %1493 = vmatpush1.bf16.xpose.msra.mxu0 0
        %1494 = vmatprep.subr.bf16.mxu0 0
        %1495 = vmatpush1.bf16.xpose.msra.mxu0 0
        %1496 = vmatprep.subr.bf16.mxu0 0
        %1497 = vmatpush1.bf16.xpose.msra.mxu0 0
        %1498 = vmatprep.subr.bf16.mxu0 0
        %1499 = vmatpush1.bf16.xpose.msra.mxu0 0
        %1500 = vmatprep.subr.bf16.mxu0 0
        %1501 = vmatpush1.bf16.xpose.msra.mxu0 0
        %1502 = vmatprep.subr.bf16.mxu0 0
        %1503 = vmatpush1.bf16.xpose.msra.mxu0 0
        %1504 = vmatprep.subr.bf16.mxu0 0
        %1505 = vmatpush1.bf16.xpose.msra.mxu0 0
        %1506 = vmatprep.subr.bf16.mxu0 0
        %1507 = vmatpush1.bf16.xpose.msra.mxu0 0
        %1508 = vmatprep.subr.bf16.mxu0 0
        %1509 = vmatpush1.bf16.xpose.msra.mxu0 0
        %1510 = vmatprep.subr.bf16.mxu0 0
        %1511 = vmatpush1.bf16.xpose.msra.mxu0 0
        %1512 = vmatprep.mubr.bf16.mxu0 0
        %1513 = vmatmul.mubr.bf16.gmra.mrb[0].mxu0 %v1475
        %v1514 = vpop.f32.mrb[0].mxu0
        %v1515 = vadd.f32 %v1232, %v1514
        %v1516 = vpop.f32.mrb[0].mxu0
        %v1517 = vpop.f32.mrb[0].mxu0
        %v1518 = vpop.f32.mrb[0].mxu0
        %1519 = vdwg.mxu0
        %v1520 = vsel %vm1473, %v1515, -inf
        %1521 = vmax.xlane.f32.xlu0 %v1520
        %v1522 = vpop.xlane.xlu0 %1521
        %v1523 = vsub.f32 %v1515, %v1522
        %v1524 = vmul.f32 %v1523, 1.442695
        %v1525 = vpow.pop %v1524
        %v1526 = vsel %vm1473, %v1525, 0.0
        %1527 = vadd.xlane.f32.xlu0 %v1526
        %v1528 = vpop.xlane.xlu0 %1527
        %v1529 = vrcp.pop %v1528
        %v1530 = vmul.f32 %v1525, %v1529
        %v1531 = vpack.c.bf16 %v1530, %v1530
        %1532 = vrot.lane.b32.xlu0 %v1469, 64
        %v1533 = vpop.permute.xlu0 %1532
        %v1535 = vsel %vm1473, %v1531, 0
        %v1538 = vsel %vm1217, %v1533, 0
        %1540 = vmatprep.subr.bf16.mxu0 0
        %1541 = vmatpush1.bf16.msra.mxu0 %v1538
        %1542 = vmatprep.subr.bf16.mxu0 0
        %1543 = vmatpush1.bf16.msra.mxu0 0
        %1544 = vmatprep.subr.bf16.mxu0 0
        %1545 = vmatpush1.bf16.msra.mxu0 0
        %1546 = vmatprep.subr.bf16.mxu0 0
        %1547 = vmatpush1.bf16.msra.mxu0 0
        %1548 = vmatprep.subr.bf16.mxu0 0
        %1549 = vmatpush1.bf16.msra.mxu0 0
        %1550 = vmatprep.subr.bf16.mxu0 0
        %1551 = vmatpush1.bf16.msra.mxu0 0
        %1552 = vmatprep.subr.bf16.mxu0 0
        %1553 = vmatpush1.bf16.msra.mxu0 0
        %1554 = vmatprep.subr.bf16.mxu0 0
        %1555 = vmatpush1.bf16.msra.mxu0 0
        %1556 = vmatprep.subr.bf16.mxu0 0
        %1557 = vmatpush1.bf16.msra.mxu0 0
        %1558 = vmatprep.subr.bf16.mxu0 0
        %1559 = vmatpush1.bf16.msra.mxu0 0
        %1560 = vmatprep.subr.bf16.mxu0 0
        %1561 = vmatpush1.bf16.msra.mxu0 0
        %1562 = vmatprep.subr.bf16.mxu0 0
        %1563 = vmatpush1.bf16.msra.mxu0 0
        %1564 = vmatprep.subr.bf16.mxu0 0
        %1565 = vmatpush1.bf16.msra.mxu0 0
        %1566 = vmatprep.subr.bf16.mxu0 0
        %1567 = vmatpush1.bf16.msra.mxu0 0
        %1568 = vmatprep.subr.bf16.mxu0 0
        %1569 = vmatpush1.bf16.msra.mxu0 0
        %1570 = vmatprep.subr.bf16.mxu0 0
        %1571 = vmatpush1.bf16.msra.mxu0 0
        %1572 = vmatprep.mubr.bf16.mxu0 0
        %1573 = vmatmul.mubr.bf16.gmra.mrb[0].mxu0 %v1535
        %v1574 = vpop.f32.mrb[0].mxu0
        %v1575 = vadd.f32 0.0, %v1574
        %v1576 = vpop.f32.mrb[0].mxu0
        %v1577 = vpop.f32.mrb[0].mxu0
        %v1578 = vpop.f32.mrb[0].mxu0
        %1579 = vdwg.mxu0
        %1580 = vrot.lane.b32.xlu0 %v1469, 120
        %v1581 = vpop.permute.xlu0 %1580
        %1582 = vrot.lane.b32.xlu0 %v1469, 88
        %v1583 = vpop.permute.xlu0 %1582
        %v1585 = vsel %vm1473, %v1581, 0
        %v1588 = vsel %vm1473, %v1583, 0
        %1590 = vmatprep.subr.bf16.mxu0 0
        %1591 = vmatpush1.bf16.xpose.msra.mxu0 %v1588
        %1592 = vmatprep.subr.bf16.mxu0 0
        %1593 = vmatpush1.bf16.xpose.msra.mxu0 0
        %1594 = vmatprep.subr.bf16.mxu0 0
        %1595 = vmatpush1.bf16.xpose.msra.mxu0 0
        %1596 = vmatprep.subr.bf16.mxu0 0
        %1597 = vmatpush1.bf16.xpose.msra.mxu0 0
        %1598 = vmatprep.subr.bf16.mxu0 0
        %1599 = vmatpush1.bf16.xpose.msra.mxu0 0
        %1600 = vmatprep.subr.bf16.mxu0 0
        %1601 = vmatpush1.bf16.xpose.msra.mxu0 0
        %1602 = vmatprep.subr.bf16.mxu0 0
        %1603 = vmatpush1.bf16.xpose.msra.mxu0 0
        %1604 = vmatprep.subr.bf16.mxu0 0
        %1605 = vmatpush1.bf16.xpose.msra.mxu0 0
        %1606 = vmatprep.subr.bf16.mxu0 0
        %1607 = vmatpush1.bf16.xpose.msra.mxu0 0
        %1608 = vmatprep.subr.bf16.mxu0 0
        %1609 = vmatpush1.bf16.xpose.msra.mxu0 0
        %1610 = vmatprep.subr.bf16.mxu0 0
        %1611 = vmatpush1.bf16.xpose.msra.mxu0 0
        %1612 = vmatprep.subr.bf16.mxu0 0
        %1613 = vmatpush1.bf16.xpose.msra.mxu0 0
        %1614 = vmatprep.subr.bf16.mxu0 0
        %1615 = vmatpush1.bf16.xpose.msra.mxu0 0
        %1616 = vmatprep.subr.bf16.mxu0 0
        %1617 = vmatpush1.bf16.xpose.msra.mxu0 0
        %1618 = vmatprep.subr.bf16.mxu0 0
        %1619 = vmatpush1.bf16.xpose.msra.mxu0 0
        %1620 = vmatprep.subr.bf16.mxu0 0
        %1621 = vmatpush1.bf16.xpose.msra.mxu0 0
        %1622 = vmatprep.mubr.bf16.mxu0 0
        %1623 = vmatmul.mubr.bf16.gmra.mrb[0].mxu0 %v1585
        %v1624 = vpop.f32.mrb[0].mxu0
        %v1625 = vadd.f32 %v1232, %v1624
        %v1626 = vpop.f32.mrb[0].mxu0
        %v1627 = vpop.f32.mrb[0].mxu0
        %v1628 = vpop.f32.mrb[0].mxu0
        %1629 = vdwg.mxu0
        %v1630 = vsel %vm1473, %v1625, -inf
        %1631 = vmax.xlane.f32.xlu0 %v1630
        %v1632 = vpop.xlane.xlu0 %1631
        %v1633 = vsub.f32 %v1625, %v1632
        %v1634 = vmul.f32 %v1633, 1.442695
        %v1635 = vpow.pop %v1634
        %v1636 = vsel %vm1473, %v1635, 0.0
        %1637 = vadd.xlane.f32.xlu0 %v1636
        %v1638 = vpop.xlane.xlu0 %1637
        %v1639 = vrcp.pop %v1638
        %v1640 = vmul.f32 %v1635, %v1639
        %v1641 = vpack.c.bf16 %v1640, %v1640
        %1642 = vrot.lane.b32.xlu0 %v1469, 56
        %v1643 = vpop.permute.xlu0 %1642
        %v1645 = vsel %vm1473, %v1641, 0
        %v1648 = vsel %vm1217, %v1643, 0
        %1650 = vmatprep.subr.bf16.mxu0 0
        %1651 = vmatpush1.bf16.msra.mxu0 %v1648
        %1652 = vmatprep.subr.bf16.mxu0 0
        %1653 = vmatpush1.bf16.msra.mxu0 0
        %1654 = vmatprep.subr.bf16.mxu0 0
        %1655 = vmatpush1.bf16.msra.mxu0 0
        %1656 = vmatprep.subr.bf16.mxu0 0
        %1657 = vmatpush1.bf16.msra.mxu0 0
        %1658 = vmatprep.subr.bf16.mxu0 0
        %1659 = vmatpush1.bf16.msra.mxu0 0
        %1660 = vmatprep.subr.bf16.mxu0 0
        %1661 = vmatpush1.bf16.msra.mxu0 0
        %1662 = vmatprep.subr.bf16.mxu0 0
        %1663 = vmatpush1.bf16.msra.mxu0 0
        %1664 = vmatprep.subr.bf16.mxu0 0
        %1665 = vmatpush1.bf16.msra.mxu0 0
        %1666 = vmatprep.subr.bf16.mxu0 0
        %1667 = vmatpush1.bf16.msra.mxu0 0
        %1668 = vmatprep.subr.bf16.mxu0 0
        %1669 = vmatpush1.bf16.msra.mxu0 0
        %1670 = vmatprep.subr.bf16.mxu0 0
        %1671 = vmatpush1.bf16.msra.mxu0 0
        %1672 = vmatprep.subr.bf16.mxu0 0
        %1673 = vmatpush1.bf16.msra.mxu0 0
        %1674 = vmatprep.subr.bf16.mxu0 0
        %1675 = vmatpush1.bf16.msra.mxu0 0
        %1676 = vmatprep.subr.bf16.mxu0 0
        %1677 = vmatpush1.bf16.msra.mxu0 0
        %1678 = vmatprep.subr.bf16.mxu0 0
        %1679 = vmatpush1.bf16.msra.mxu0 0
        %1680 = vmatprep.subr.bf16.mxu0 0
        %1681 = vmatpush1.bf16.msra.mxu0 0
        %1682 = vmatprep.mubr.bf16.mxu0 0
        %1683 = vmatmul.mubr.bf16.gmra.mrb[0].mxu0 %v1645
        %v1684 = vpop.f32.mrb[0].mxu0
        %v1685 = vadd.f32 0.0, %v1684
        %v1686 = vpop.f32.mrb[0].mxu0
        %v1687 = vpop.f32.mrb[0].mxu0
        %v1688 = vpop.f32.mrb[0].mxu0
        %1689 = vdwg.mxu0
        %1690 = vrot.lane.b32.xlu0 %v1469, 112
        %v1691 = vpop.permute.xlu0 %1690
        %1692 = vrot.lane.b32.xlu0 %v1469, 80
        %v1693 = vpop.permute.xlu0 %1692
        %v1695 = vsel %vm1473, %v1691, 0
        %v1698 = vsel %vm1473, %v1693, 0
        %1700 = vmatprep.subr.bf16.mxu0 0
        %1701 = vmatpush1.bf16.xpose.msra.mxu0 %v1698
        %1702 = vmatprep.subr.bf16.mxu0 0
        %1703 = vmatpush1.bf16.xpose.msra.mxu0 0
        %1704 = vmatprep.subr.bf16.mxu0 0
        %1705 = vmatpush1.bf16.xpose.msra.mxu0 0
        %1706 = vmatprep.subr.bf16.mxu0 0
        %1707 = vmatpush1.bf16.xpose.msra.mxu0 0
        %1708 = vmatprep.subr.bf16.mxu0 0
        %1709 = vmatpush1.bf16.xpose.msra.mxu0 0
        %1710 = vmatprep.subr.bf16.mxu0 0
        %1711 = vmatpush1.bf16.xpose.msra.mxu0 0
        %1712 = vmatprep.subr.bf16.mxu0 0
        %1713 = vmatpush1.bf16.xpose.msra.mxu0 0
        %1714 = vmatprep.subr.bf16.mxu0 0
        %1715 = vmatpush1.bf16.xpose.msra.mxu0 0
        %1716 = vmatprep.subr.bf16.mxu0 0
        %1717 = vmatpush1.bf16.xpose.msra.mxu0 0
        %1718 = vmatprep.subr.bf16.mxu0 0
        %1719 = vmatpush1.bf16.xpose.msra.mxu0 0
        %1720 = vmatprep.subr.bf16.mxu0 0
        %1721 = vmatpush1.bf16.xpose.msra.mxu0 0
        %1722 = vmatprep.subr.bf16.mxu0 0
        %1723 = vmatpush1.bf16.xpose.msra.mxu0 0
        %1724 = vmatprep.subr.bf16.mxu0 0
        %1725 = vmatpush1.bf16.xpose.msra.mxu0 0
        %1726 = vmatprep.subr.bf16.mxu0 0
        %1727 = vmatpush1.bf16.xpose.msra.mxu0 0
        %1728 = vmatprep.subr.bf16.mxu0 0
        %1729 = vmatpush1.bf16.xpose.msra.mxu0 0
        %1730 = vmatprep.subr.bf16.mxu0 0
        %1731 = vmatpush1.bf16.xpose.msra.mxu0 0
        %1732 = vmatprep.mubr.bf16.mxu0 0
        %1733 = vmatmul.mubr.bf16.gmra.mrb[0].mxu0 %v1695
        %v1734 = vpop.f32.mrb[0].mxu0
        %v1735 = vadd.f32 %v1232, %v1734
        %v1736 = vpop.f32.mrb[0].mxu0
        %v1737 = vpop.f32.mrb[0].mxu0
        %v1738 = vpop.f32.mrb[0].mxu0
        %1739 = vdwg.mxu0
        %v1740 = vsel %vm1473, %v1735, -inf
        %1741 = vmax.xlane.f32.xlu0 %v1740
        %v1742 = vpop.xlane.xlu0 %1741
        %v1743 = vsub.f32 %v1735, %v1742
        %v1744 = vmul.f32 %v1743, 1.442695
        %v1745 = vpow.pop %v1744
        %v1746 = vsel %vm1473, %v1745, 0.0
        %1747 = vadd.xlane.f32.xlu0 %v1746
        %v1748 = vpop.xlane.xlu0 %1747
        %v1749 = vrcp.pop %v1748
        %v1750 = vmul.f32 %v1745, %v1749
        %v1751 = vpack.c.bf16 %v1750, %v1750
        %1752 = vrot.lane.b32.xlu0 %v1469, 48
        %v1753 = vpop.permute.xlu0 %1752
        %v1755 = vsel %vm1473, %v1751, 0
        %v1758 = vsel %vm1217, %v1753, 0
        %1760 = vmatprep.subr.bf16.mxu0 0
        %1761 = vmatpush1.bf16.msra.mxu0 %v1758
        %1762 = vmatprep.subr.bf16.mxu0 0
        %1763 = vmatpush1.bf16.msra.mxu0 0
        %1764 = vmatprep.subr.bf16.mxu0 0
        %1765 = vmatpush1.bf16.msra.mxu0 0
        %1766 = vmatprep.subr.bf16.mxu0 0
        %1767 = vmatpush1.bf16.msra.mxu0 0
        %1768 = vmatprep.subr.bf16.mxu0 0
        %1769 = vmatpush1.bf16.msra.mxu0 0
        %1770 = vmatprep.subr.bf16.mxu0 0
        %1771 = vmatpush1.bf16.msra.mxu0 0
        %1772 = vmatprep.subr.bf16.mxu0 0
        %1773 = vmatpush1.bf16.msra.mxu0 0
        %1774 = vmatprep.subr.bf16.mxu0 0
        %1775 = vmatpush1.bf16.msra.mxu0 0
        %1776 = vmatprep.subr.bf16.mxu0 0
        %1777 = vmatpush1.bf16.msra.mxu0 0
        %1778 = vmatprep.subr.bf16.mxu0 0
        %1779 = vmatpush1.bf16.msra.mxu0 0
        %1780 = vmatprep.subr.bf16.mxu0 0
        %1781 = vmatpush1.bf16.msra.mxu0 0
        %1782 = vmatprep.subr.bf16.mxu0 0
        %1783 = vmatpush1.bf16.msra.mxu0 0
        %1784 = vmatprep.subr.bf16.mxu0 0
        %1785 = vmatpush1.bf16.msra.mxu0 0
        %1786 = vmatprep.subr.bf16.mxu0 0
        %1787 = vmatpush1.bf16.msra.mxu0 0
        %1788 = vmatprep.subr.bf16.mxu0 0
        %1789 = vmatpush1.bf16.msra.mxu0 0
        %1790 = vmatprep.subr.bf16.mxu0 0
        %1791 = vmatpush1.bf16.msra.mxu0 0
        %1792 = vmatprep.mubr.bf16.mxu0 0
        %1793 = vmatmul.mubr.bf16.gmra.mrb[0].mxu0 %v1755
        %v1794 = vpop.f32.mrb[0].mxu0
        %v1795 = vadd.f32 0.0, %v1794
        %v1796 = vpop.f32.mrb[0].mxu0
        %v1797 = vpop.f32.mrb[0].mxu0
        %v1798 = vpop.f32.mrb[0].mxu0
        %1799 = vdwg.mxu0
        %1800 = vrot.lane.b32.xlu0 %v1469, 104
        %v1801 = vpop.permute.xlu0 %1800
        %1802 = vrot.lane.b32.xlu0 %v1469, 72
        %v1803 = vpop.permute.xlu0 %1802
        %v1805 = vsel %vm1473, %v1801, 0
        %v1808 = vsel %vm1473, %v1803, 0
        %1810 = vmatprep.subr.bf16.mxu0 0
        %1811 = vmatpush1.bf16.xpose.msra.mxu0 %v1808
        %1812 = vmatprep.subr.bf16.mxu0 0
        %1813 = vmatpush1.bf16.xpose.msra.mxu0 0
        %1814 = vmatprep.subr.bf16.mxu0 0
        %1815 = vmatpush1.bf16.xpose.msra.mxu0 0
        %1816 = vmatprep.subr.bf16.mxu0 0
        %1817 = vmatpush1.bf16.xpose.msra.mxu0 0
        %1818 = vmatprep.subr.bf16.mxu0 0
        %1819 = vmatpush1.bf16.xpose.msra.mxu0 0
        %1820 = vmatprep.subr.bf16.mxu0 0
        %1821 = vmatpush1.bf16.xpose.msra.mxu0 0
        %1822 = vmatprep.subr.bf16.mxu0 0
        %1823 = vmatpush1.bf16.xpose.msra.mxu0 0
        %1824 = vmatprep.subr.bf16.mxu0 0
        %1825 = vmatpush1.bf16.xpose.msra.mxu0 0
        %1826 = vmatprep.subr.bf16.mxu0 0
        %1827 = vmatpush1.bf16.xpose.msra.mxu0 0
        %1828 = vmatprep.subr.bf16.mxu0 0
        %1829 = vmatpush1.bf16.xpose.msra.mxu0 0
        %1830 = vmatprep.subr.bf16.mxu0 0
        %1831 = vmatpush1.bf16.xpose.msra.mxu0 0
        %1832 = vmatprep.subr.bf16.mxu0 0
        %1833 = vmatpush1.bf16.xpose.msra.mxu0 0
        %1834 = vmatprep.subr.bf16.mxu0 0
        %1835 = vmatpush1.bf16.xpose.msra.mxu0 0
        %1836 = vmatprep.subr.bf16.mxu0 0
        %1837 = vmatpush1.bf16.xpose.msra.mxu0 0
        %1838 = vmatprep.subr.bf16.mxu0 0
        %1839 = vmatpush1.bf16.xpose.msra.mxu0 0
        %1840 = vmatprep.subr.bf16.mxu0 0
        %1841 = vmatpush1.bf16.xpose.msra.mxu0 0
        %1842 = vmatprep.mubr.bf16.mxu0 0
        %1843 = vmatmul.mubr.bf16.gmra.mrb[0].mxu0 %v1805
        %v1844 = vpop.f32.mrb[0].mxu0
        %v1845 = vadd.f32 %v1232, %v1844
        %v1846 = vpop.f32.mrb[0].mxu0
        %v1847 = vpop.f32.mrb[0].mxu0
        %v1848 = vpop.f32.mrb[0].mxu0
        %1849 = vdwg.mxu0
        %v1850 = vsel %vm1473, %v1845, -inf
        %1851 = vmax.xlane.f32.xlu0 %v1850
        %v1852 = vpop.xlane.xlu0 %1851
        %v1853 = vsub.f32 %v1845, %v1852
        %v1854 = vmul.f32 %v1853, 1.442695
        %v1855 = vpow.pop %v1854
        %v1856 = vsel %vm1473, %v1855, 0.0
        %1857 = vadd.xlane.f32.xlu0 %v1856
        %v1858 = vpop.xlane.xlu0 %1857
        %v1859 = vrcp.pop %v1858
        %v1860 = vmul.f32 %v1855, %v1859
        %v1861 = vpack.c.bf16 %v1860, %v1860
        %1862 = vrot.lane.b32.xlu0 %v1469, 40
        %v1863 = vpop.permute.xlu0 %1862
        %v1865 = vsel %vm1473, %v1861, 0
        %v1868 = vsel %vm1217, %v1863, 0
        %1870 = vmatprep.subr.bf16.mxu0 0
        %1871 = vmatpush1.bf16.msra.mxu0 %v1868
        %1872 = vmatprep.subr.bf16.mxu0 0
        %1873 = vmatpush1.bf16.msra.mxu0 0
        %1874 = vmatprep.subr.bf16.mxu0 0
        %1875 = vmatpush1.bf16.msra.mxu0 0
        %1876 = vmatprep.subr.bf16.mxu0 0
        %1877 = vmatpush1.bf16.msra.mxu0 0
        %1878 = vmatprep.subr.bf16.mxu0 0
        %1879 = vmatpush1.bf16.msra.mxu0 0
        %1880 = vmatprep.subr.bf16.mxu0 0
        %1881 = vmatpush1.bf16.msra.mxu0 0
        %1882 = vmatprep.subr.bf16.mxu0 0
        %1883 = vmatpush1.bf16.msra.mxu0 0
        %1884 = vmatprep.subr.bf16.mxu0 0
        %1885 = vmatpush1.bf16.msra.mxu0 0
        %1886 = vmatprep.subr.bf16.mxu0 0
        %1887 = vmatpush1.bf16.msra.mxu0 0
        %1888 = vmatprep.subr.bf16.mxu0 0
        %1889 = vmatpush1.bf16.msra.mxu0 0
        %1890 = vmatprep.subr.bf16.mxu0 0
        %1891 = vmatpush1.bf16.msra.mxu0 0
        %1892 = vmatprep.subr.bf16.mxu0 0
        %1893 = vmatpush1.bf16.msra.mxu0 0
        %1894 = vmatprep.subr.bf16.mxu0 0
        %1895 = vmatpush1.bf16.msra.mxu0 0
        %1896 = vmatprep.subr.bf16.mxu0 0
        %1897 = vmatpush1.bf16.msra.mxu0 0
        %1898 = vmatprep.subr.bf16.mxu0 0
        %1899 = vmatpush1.bf16.msra.mxu0 0
        %1900 = vmatprep.subr.bf16.mxu0 0
        %1901 = vmatpush1.bf16.msra.mxu0 0
        %1902 = vmatprep.mubr.bf16.mxu0 0
        %1903 = vmatmul.mubr.bf16.gmra.mrb[0].mxu0 %v1865
        %v1904 = vpop.f32.mrb[0].mxu0
        %v1905 = vadd.f32 0.0, %v1904
        %v1906 = vpop.f32.mrb[0].mxu0
        %v1907 = vpop.f32.mrb[0].mxu0
        %v1908 = vpop.f32.mrb[0].mxu0
        %1909 = vdwg.mxu0
        %1911 = vrot.lane.b32.xlu0 %v1685, 8
        %v1912 = vpop.permute.xlu0 %1911
        %1915 = vrot.lane.b32.xlu0 %v1795, 16
        %v1916 = vpop.permute.xlu0 %1915
        %1919 = vrot.lane.b32.xlu0 %v1905, 24
        %v1920 = vpop.permute.xlu0 %1919
        %v1922 = vsel %vm1473, %v1575, %v1912
        %vm1923 = vcmask 130048
        %v1924 = vsel %vm1923, %v1922, %v1916
        %vm1925 = vcmask 195584
        %v1926 = vsel %vm1925, %v1924, %v1920
        %v1927 = vpack.c.bf16 %v1926, %v1926
        %v1929 = vlaneseq
        %v1930 = vshrl.u32 %v1929, 7
        %v1931 = vsub.s32 0, %v1930
        %v1932 = vrot.slane %v1468, %v1931
        %v1938 = vunpack.c.l.b16 %v1464
        %v1939 = vunpack.c.l.b16 %v1465
        %v1940 = vunpack.c.l.b16 %v1466
        %v1941 = vunpack.c.l.b16 %v1467
        %v1942 = vpack.c.b16 %v1939, %v1938
        %v1943 = vpack.c.b16 %v1941, %v1940
        %vm1946 = vcmask 261120
        %v1948 = vsel %vm1946, %v1927, 0
        %1950 = vmatprep.subr.bf16.mxu0 0
        %1951 = vmatpush1.bf16.msra.mxu0 %v1942
        %1952 = vmatprep.subr.bf16.mxu0 0
        %1953 = vmatpush1.bf16.msra.mxu0 %v1943
        %1954 = vmatprep.subr.bf16.mxu0 0
        %1955 = vmatpush1.bf16.msra.mxu0 0
        %1956 = vmatprep.subr.bf16.mxu0 0
        %1957 = vmatpush1.bf16.msra.mxu0 0
        %1958 = vmatprep.subr.bf16.mxu0 0
        %1959 = vmatpush1.bf16.msra.mxu0 0
        %1960 = vmatprep.subr.bf16.mxu0 0
        %1961 = vmatpush1.bf16.msra.mxu0 0
        %1962 = vmatprep.subr.bf16.mxu0 0
        %1963 = vmatpush1.bf16.msra.mxu0 0
        %1964 = vmatprep.subr.bf16.mxu0 0
        %1965 = vmatpush1.bf16.msra.mxu0 0
        %1966 = vmatprep.subr.bf16.mxu0 0
        %1967 = vmatpush1.bf16.msra.mxu0 0
        %1968 = vmatprep.subr.bf16.mxu0 0
        %1969 = vmatpush1.bf16.msra.mxu0 0
        %1970 = vmatprep.subr.bf16.mxu0 0
        %1971 = vmatpush1.bf16.msra.mxu0 0
        %1972 = vmatprep.subr.bf16.mxu0 0
        %1973 = vmatpush1.bf16.msra.mxu0 0
        %1974 = vmatprep.subr.bf16.mxu0 0
        %1975 = vmatpush1.bf16.msra.mxu0 0
        %1976 = vmatprep.subr.bf16.mxu0 0
        %1977 = vmatpush1.bf16.msra.mxu0 0
        %1978 = vmatprep.subr.bf16.mxu0 0
        %1979 = vmatpush1.bf16.msra.mxu0 0
        %1980 = vmatprep.subr.bf16.mxu0 0
        %1981 = vmatpush1.bf16.msra.mxu0 0
        %1982 = vmatprep.mubr.bf16.mxu0 0
        %1983 = vmatmul.mubr.bf16.gmra.mrb[0].mxu0 %v1948
        %v1984 = vpop.f32.mrb[0].mxu0
        %v1985 = vadd.f32 %v1932, %v1984
        %v1986 = vpop.f32.mrb[0].mxu0
        %v1987 = vpop.f32.mrb[0].mxu0
        %v1988 = vpop.f32.mrb[0].mxu0
        %1989 = vdwg.mxu0
        %v1990 = vadd.f32 %v1345, %v1985
        %v1991 = vld [vmem:[#allocation29] sm:$0x1]
        %v1992 = vld [vmem:[#allocation30] sm:$0x1]
        %1993 = vadd.xlane.f32.xlu0 %v1990
        %v1994 = vpop.xlane.xlu0 %1993
        %v1995 = vmul.f32 %v1994, 0.03125
        %v1996 = vsub.f32 %v1990, %v1995
        %v1997 = vmul.f32 %v1996, %v1237
        %v1998 = vmul.f32 %v1997, %v1997
        %1999 = vadd.xlane.f32.xlu0 %v1998
        %v2000 = vpop.xlane.xlu0 %1999
        %v2001 = vmul.f32 %v2000, 0.03125
        %v2002 = vadd.f32 %v2001, 1e-05
        %v2003 = vrsqrt.pop %v2002
        %v2004 = vmul.f32 %v1997, %v2003
        %v2006 = vlaneseq
        %v2007 = vshrl.u32 %v2006, 7
        %v2008 = vsub.s32 0, %v2007
        %v2009 = vrot.slane %v1991, %v2008
        %v2011 = vmul.f32 %v2004, %v2009
        %v2013 = vlaneseq
        %v2014 = vshrl.u32 %v2013, 7
        %v2015 = vsub.s32 0, %v2014
        %v2016 = vrot.slane %v1992, %v2015
        %v2018 = vadd.f32 %v2011, %v2016
        %v2019 = vld [vmem:[%s12] sm:$0xf]
        %v2020 = vld [vmem:[%s12 + $0x4] sm:$0xf]
        %v2021 = vld [vmem:[%s12 + $0x8] sm:$0xf]
        %v2022 = vld [vmem:[%s12 + $0xc] sm:$0xf]
        %v2023 = vld [vmem:[%s12 + $0x10] sm:$0xf]
        %v2024 = vld [vmem:[%s12 + $0x14] sm:$0xf]
        %v2025 = vld [vmem:[%s12 + $0x18] sm:$0xf]
        %v2026 = vld [vmem:[%s12 + $0x1c] sm:$0xf]
        %v2027 = vld [vmem:[%s12 + $0x20] sm:$0xf]
        %v2028 = vld [vmem:[%s12 + $0x24] sm:$0xf]
        %v2029 = vld [vmem:[%s12 + $0x28] sm:$0xf]
        %v2030 = vld [vmem:[%s12 + $0x2c] sm:$0xf]
        %v2031 = vld [vmem:[%s12 + $0x30] sm:$0xf]
        %v2032 = vld [vmem:[%s12 + $0x34] sm:$0xf]
        %v2033 = vld [vmem:[%s12 + $0x38] sm:$0xf]
        %v2034 = vld [vmem:[%s12 + $0x3c] sm:$0xf]
        %v2035 = vld [vmem:[#allocation17] sm:$0x1]
        %v2036 = vpack.c.bf16 %v2018, %v2018
        %v2038 = vlaneseq
        %v2039 = vshrl.u32 %v2038, 7
        %v2040 = vsub.s32 0, %v2039
        %v2041 = vrot.slane %v2035, %v2040
        %v2059 = vunpack.c.l.b16 %v2019
        %v2060 = vunpack.c.l.b16 %v2020
        %v2061 = vunpack.c.l.b16 %v2021
        %v2062 = vunpack.c.l.b16 %v2022
        %v2063 = vunpack.c.l.b16 %v2023
        %v2064 = vunpack.c.l.b16 %v2024
        %v2065 = vunpack.c.l.b16 %v2025
        %v2066 = vunpack.c.l.b16 %v2026
        %v2067 = vunpack.c.l.b16 %v2027
        %v2068 = vunpack.c.l.b16 %v2028
        %v2069 = vunpack.c.l.b16 %v2029
        %v2070 = vunpack.c.l.b16 %v2030
        %v2071 = vunpack.c.l.b16 %v2031
        %v2072 = vunpack.c.l.b16 %v2032
        %v2073 = vunpack.c.l.b16 %v2033
        %v2074 = vunpack.c.l.b16 %v2034
        %v2075 = vpack.c.b16 %v2060, %v2059
        %v2076 = vpack.c.b16 %v2062, %v2061
        %v2077 = vpack.c.b16 %v2064, %v2063
        %v2078 = vpack.c.b16 %v2066, %v2065
        %v2079 = vpack.c.b16 %v2068, %v2067
        %v2080 = vpack.c.b16 %v2070, %v2069
        %v2081 = vpack.c.b16 %v2072, %v2071
        %v2082 = vpack.c.b16 %v2074, %v2073
        %2091 = vmatprep.subr.bf16.mxu0 0
        %2092 = vmatpush1.bf16.msra.mxu0 %v2075
        %2093 = vmatprep.subr.bf16.mxu0 0
        %2094 = vmatpush1.bf16.msra.mxu0 %v2076
        %2095 = vmatprep.subr.bf16.mxu0 0
        %2096 = vmatpush1.bf16.msra.mxu0 %v2077
        %2097 = vmatprep.subr.bf16.mxu0 0
        %2098 = vmatpush1.bf16.msra.mxu0 %v2078
        %2099 = vmatprep.subr.bf16.mxu0 0
        %2100 = vmatpush1.bf16.msra.mxu0 %v2079
        %2101 = vmatprep.subr.bf16.mxu0 0
        %2102 = vmatpush1.bf16.msra.mxu0 %v2080
        %2103 = vmatprep.subr.bf16.mxu0 0
        %2104 = vmatpush1.bf16.msra.mxu0 %v2081
        %2105 = vmatprep.subr.bf16.mxu0 0
        %2106 = vmatpush1.bf16.msra.mxu0 %v2082
        %2107 = vmatprep.subr.bf16.mxu0 0
        %2108 = vmatpush1.bf16.msra.mxu0 0
        %2109 = vmatprep.subr.bf16.mxu0 0
        %2110 = vmatpush1.bf16.msra.mxu0 0
        %2111 = vmatprep.subr.bf16.mxu0 0
        %2112 = vmatpush1.bf16.msra.mxu0 0
        %2113 = vmatprep.subr.bf16.mxu0 0
        %2114 = vmatpush1.bf16.msra.mxu0 0
        %2115 = vmatprep.subr.bf16.mxu0 0
        %2116 = vmatpush1.bf16.msra.mxu0 0
        %2117 = vmatprep.subr.bf16.mxu0 0
        %2118 = vmatpush1.bf16.msra.mxu0 0
        %2119 = vmatprep.subr.bf16.mxu0 0
        %2120 = vmatpush1.bf16.msra.mxu0 0
        %2121 = vmatprep.subr.bf16.mxu0 0
        %2122 = vmatpush1.bf16.msra.mxu0 0
        %2123 = vmatprep.mubr.bf16.mxu0 0
        %2124 = vmatmul.mubr.bf16.gmra.mrb[0].mxu0 %v2036
        %v2125 = vpop.f32.mrb[0].mxu0
        %v2126 = vadd.f32 %v2041, %v2125
        %v2127 = vpop.f32.mrb[0].mxu0
        %v2128 = vpop.f32.mrb[0].mxu0
        %v2129 = vpop.f32.mrb[0].mxu0
        %2130 = vdwg.mxu0
        %v2131 = vld [vmem:[#allocation18] sm:$0xf]
        %v2132 = vld [vmem:[#allocation18 + $0x4] sm:$0xf]
        %v2133 = vld [vmem:[#allocation18 + $0x8] sm:$0xf]
        %v2134 = vld [vmem:[#allocation18 + $0xc] sm:$0xf]
        %v2135 = vld [vmem:[%s15] sm:$0x1]
        %v2136 = vpack.c.bf16 %v1351, %v1350
        %v2138 = vlaneseq
        %v2139 = vshrl.u32 %v2138, 7
        %v2140 = vsub.s32 0, %v2139
        %v2141 = vrot.slane %v2135, %v2140
        %v2147 = vunpack.c.l.b16 %v2131
        %v2148 = vunpack.c.l.b16 %v2132
        %v2149 = vunpack.c.l.b16 %v2133
        %v2150 = vunpack.c.l.b16 %v2134
        %v2151 = vpack.c.b16 %v2148, %v2147
        %v2152 = vpack.c.b16 %v2150, %v2149
        %v2156 = vsel %vm1946, %v2136, 0
        %2158 = vmatprep.subr.bf16.mxu0 0
        %2159 = vmatpush1.bf16.msra.mxu0 %v2151
        %2160 = vmatprep.subr.bf16.mxu0 0
        %2161 = vmatpush1.bf16.msra.mxu0 %v2152
        %2162 = vmatprep.subr.bf16.mxu0 0
        %2163 = vmatpush1.bf16.msra.mxu0 0
        %2164 = vmatprep.subr.bf16.mxu0 0
        %2165 = vmatpush1.bf16.msra.mxu0 0
        %2166 = vmatprep.subr.bf16.mxu0 0
        %2167 = vmatpush1.bf16.msra.mxu0 0
        %2168 = vmatprep.subr.bf16.mxu0 0
        %2169 = vmatpush1.bf16.msra.mxu0 0
        %2170 = vmatprep.subr.bf16.mxu0 0
        %2171 = vmatpush1.bf16.msra.mxu0 0
        %2172 = vmatprep.subr.bf16.mxu0 0
        %2173 = vmatpush1.bf16.msra.mxu0 0
        %2174 = vmatprep.subr.bf16.mxu0 0
        %2175 = vmatpush1.bf16.msra.mxu0 0
        %2176 = vmatprep.subr.bf16.mxu0 0
        %2177 = vmatpush1.bf16.msra.mxu0 0
        %2178 = vmatprep.subr.bf16.mxu0 0
        %2179 = vmatpush1.bf16.msra.mxu0 0
        %2180 = vmatprep.subr.bf16.mxu0 0
        %2181 = vmatpush1.bf16.msra.mxu0 0
        %2182 = vmatprep.subr.bf16.mxu0 0
        %2183 = vmatpush1.bf16.msra.mxu0 0
        %2184 = vmatprep.subr.bf16.mxu0 0
        %2185 = vmatpush1.bf16.msra.mxu0 0
        %2186 = vmatprep.subr.bf16.mxu0 0
        %2187 = vmatpush1.bf16.msra.mxu0 0
        %2188 = vmatprep.subr.bf16.mxu0 0
        %2189 = vmatpush1.bf16.msra.mxu0 0
        %2190 = vmatprep.mubr.bf16.mxu0 0
        %2191 = vmatmul.mubr.bf16.gmra.mrb[0].mxu0 %v2156
        %v2192 = vpop.f32.mrb[0].mxu0
        %v2193 = vadd.f32 %v2141, %v2192
        %v2194 = vpop.f32.mrb[0].mxu0
        %v2195 = vpop.f32.mrb[0].mxu0
        %v2196 = vadd.f32 %v2141, %v2195
        %v2197 = vpop.f32.mrb[0].mxu0
        %2198 = vdwg.mxu0
        %v2199 = vld [vmem:[#allocation20] sm:$0xf]
        %v2200 = vld [vmem:[#allocation20 + $0x4] sm:$0xf]
        %v2201 = vld [vmem:[#allocation20 + $0x8] sm:$0xf]
        %v2202 = vld [vmem:[#allocation20 + $0xc] sm:$0xf]
        %v2203 = vld [vmem:[#allocation21] sm:$0x1]
        %v2204 = vpack.c.bf16 %v2126, %v2126
        %v2205 = vpack.c.bf16 %v2196, %v2193
        %v2207 = vsel %vm1473, %v2204, 0
        %v2210 = vsel %vm1473, %v2205, 0
        %2212 = vmatprep.subr.bf16.mxu0 0
        %2213 = vmatpush1.bf16.xpose.msra.mxu0 %v2210
        %2214 = vmatprep.subr.bf16.mxu0 0
        %2215 = vmatpush1.bf16.xpose.msra.mxu0 0
        %2216 = vmatprep.subr.bf16.mxu0 0
        %2217 = vmatpush1.bf16.xpose.msra.mxu0 0
        %2218 = vmatprep.subr.bf16.mxu0 0
        %2219 = vmatpush1.bf16.xpose.msra.mxu0 0
        %2220 = vmatprep.subr.bf16.mxu0 0
        %2221 = vmatpush1.bf16.xpose.msra.mxu0 0
        %2222 = vmatprep.subr.bf16.mxu0 0
        %2223 = vmatpush1.bf16.xpose.msra.mxu0 0
        %2224 = vmatprep.subr.bf16.mxu0 0
        %2225 = vmatpush1.bf16.xpose.msra.mxu0 0
        %2226 = vmatprep.subr.bf16.mxu0 0
        %2227 = vmatpush1.bf16.xpose.msra.mxu0 0
        %2228 = vmatprep.subr.bf16.mxu0 0
        %2229 = vmatpush1.bf16.xpose.msra.mxu0 0
        %2230 = vmatprep.subr.bf16.mxu0 0
        %2231 = vmatpush1.bf16.xpose.msra.mxu0 0
        %2232 = vmatprep.subr.bf16.mxu0 0
        %2233 = vmatpush1.bf16.xpose.msra.mxu0 0
        %2234 = vmatprep.subr.bf16.mxu0 0
        %2235 = vmatpush1.bf16.xpose.msra.mxu0 0
        %2236 = vmatprep.subr.bf16.mxu0 0
        %2237 = vmatpush1.bf16.xpose.msra.mxu0 0
        %2238 = vmatprep.subr.bf16.mxu0 0
        %2239 = vmatpush1.bf16.xpose.msra.mxu0 0
        %2240 = vmatprep.subr.bf16.mxu0 0
        %2241 = vmatpush1.bf16.xpose.msra.mxu0 0
        %2242 = vmatprep.subr.bf16.mxu0 0
        %2243 = vmatpush1.bf16.xpose.msra.mxu0 0
        %2244 = vmatprep.mubr.bf16.mxu0 0
        %2245 = vmatmul.mubr.bf16.gmra.mrb[0].mxu0 %v2207
        %v2246 = vpop.f32.mrb[0].mxu0
        %v2247 = vadd.f32 %v1234, %v2246
        %v2248 = vpop.f32.mrb[0].mxu0
        %v2249 = vpop.f32.mrb[0].mxu0
        %v2250 = vpop.f32.mrb[0].mxu0
        %2251 = vdwg.mxu0
        %v2252 = vsel %vm1923, %v2247, -inf
        %2253 = vmax.xlane.f32.xlu0 %v2252
        %v2254 = vpop.xlane.xlu0 %2253
        %v2255 = vsub.f32 %v2247, %v2254
        %v2256 = vmul.f32 %v2255, 1.442695
        %v2257 = vpow.pop %v2256
        %v2258 = vsel %vm1923, %v2257, 0.0
        %2259 = vadd.xlane.f32.xlu0 %v2258
        %v2260 = vpop.xlane.xlu0 %2259
        %v2261 = vrcp.pop %v2260
        %v2262 = vmul.f32 %v2257, %v2261
        %v2263 = vpack.c.bf16 %v2262, %v2262
        %2265 = vrot.lane.b32.xlu0 %v2205, 96
        %v2266 = vpop.permute.xlu0 %2265
        %v2269 = vsel %vm1923, %v2263, 0
        %2271 = vmatprep.subr.bf16.mxu0 0
        %2272 = vmatpush1.bf16.msra.mxu0 %v2266
        %2273 = vmatprep.subr.bf16.mxu0 0
        %2274 = vmatpush1.bf16.msra.mxu0 0
        %2275 = vmatprep.subr.bf16.mxu0 0
        %2276 = vmatpush1.bf16.msra.mxu0 0
        %2277 = vmatprep.subr.bf16.mxu0 0
        %2278 = vmatpush1.bf16.msra.mxu0 0
        %2279 = vmatprep.subr.bf16.mxu0 0
        %2280 = vmatpush1.bf16.msra.mxu0 0
        %2281 = vmatprep.subr.bf16.mxu0 0
        %2282 = vmatpush1.bf16.msra.mxu0 0
        %2283 = vmatprep.subr.bf16.mxu0 0
        %2284 = vmatpush1.bf16.msra.mxu0 0
        %2285 = vmatprep.subr.bf16.mxu0 0
        %2286 = vmatpush1.bf16.msra.mxu0 0
        %2287 = vmatprep.subr.bf16.mxu0 0
        %2288 = vmatpush1.bf16.msra.mxu0 0
        %2289 = vmatprep.subr.bf16.mxu0 0
        %2290 = vmatpush1.bf16.msra.mxu0 0
        %2291 = vmatprep.subr.bf16.mxu0 0
        %2292 = vmatpush1.bf16.msra.mxu0 0
        %2293 = vmatprep.subr.bf16.mxu0 0
        %2294 = vmatpush1.bf16.msra.mxu0 0
        %2295 = vmatprep.subr.bf16.mxu0 0
        %2296 = vmatpush1.bf16.msra.mxu0 0
        %2297 = vmatprep.subr.bf16.mxu0 0
        %2298 = vmatpush1.bf16.msra.mxu0 0
        %2299 = vmatprep.subr.bf16.mxu0 0
        %2300 = vmatpush1.bf16.msra.mxu0 0
        %2301 = vmatprep.subr.bf16.mxu0 0
        %2302 = vmatpush1.bf16.msra.mxu0 0
        %2303 = vmatprep.mubr.bf16.mxu0 0
        %2304 = vmatmul.mubr.bf16.gmra.mrb[0].mxu0 %v2269
        %v2305 = vpop.f32.mrb[0].mxu0
        %v2306 = vadd.f32 0.0, %v2305
        %v2307 = vpop.f32.mrb[0].mxu0
        %v2308 = vpop.f32.mrb[0].mxu0
        %v2309 = vpop.f32.mrb[0].mxu0
        %2310 = vdwg.mxu0
        %2312 = vrot.lane.b32.xlu0 %v2204, 120
        %v2313 = vpop.permute.xlu0 %2312
        %2314 = vrot.lane.b32.xlu0 %v2205, 120
        %v2315 = vpop.permute.xlu0 %2314
        %v2317 = vsel %vm1473, %v2313, 0
        %v2320 = vsel %vm1473, %v2315, 0
        %2322 = vmatprep.subr.bf16.mxu0 0
        %2323 = vmatpush1.bf16.xpose.msra.mxu0 %v2320
        %2324 = vmatprep.subr.bf16.mxu0 0
        %2325 = vmatpush1.bf16.xpose.msra.mxu0 0
        %2326 = vmatprep.subr.bf16.mxu0 0
        %2327 = vmatpush1.bf16.xpose.msra.mxu0 0
        %2328 = vmatprep.subr.bf16.mxu0 0
        %2329 = vmatpush1.bf16.xpose.msra.mxu0 0
        %2330 = vmatprep.subr.bf16.mxu0 0
        %2331 = vmatpush1.bf16.xpose.msra.mxu0 0
        %2332 = vmatprep.subr.bf16.mxu0 0
        %2333 = vmatpush1.bf16.xpose.msra.mxu0 0
        %2334 = vmatprep.subr.bf16.mxu0 0
        %2335 = vmatpush1.bf16.xpose.msra.mxu0 0
        %2336 = vmatprep.subr.bf16.mxu0 0
        %2337 = vmatpush1.bf16.xpose.msra.mxu0 0
        %2338 = vmatprep.subr.bf16.mxu0 0
        %2339 = vmatpush1.bf16.xpose.msra.mxu0 0
        %2340 = vmatprep.subr.bf16.mxu0 0
        %2341 = vmatpush1.bf16.xpose.msra.mxu0 0
        %2342 = vmatprep.subr.bf16.mxu0 0
        %2343 = vmatpush1.bf16.xpose.msra.mxu0 0
        %2344 = vmatprep.subr.bf16.mxu0 0
        %2345 = vmatpush1.bf16.xpose.msra.mxu0 0
        %2346 = vmatprep.subr.bf16.mxu0 0
        %2347 = vmatpush1.bf16.xpose.msra.mxu0 0
        %2348 = vmatprep.subr.bf16.mxu0 0
        %2349 = vmatpush1.bf16.xpose.msra.mxu0 0
        %2350 = vmatprep.subr.bf16.mxu0 0
        %2351 = vmatpush1.bf16.xpose.msra.mxu0 0
        %2352 = vmatprep.subr.bf16.mxu0 0
        %2353 = vmatpush1.bf16.xpose.msra.mxu0 0
        %2354 = vmatprep.mubr.bf16.mxu0 0
        %2355 = vmatmul.mubr.bf16.gmra.mrb[0].mxu0 %v2317
        %v2356 = vpop.f32.mrb[0].mxu0
        %v2357 = vadd.f32 %v1234, %v2356
        %v2358 = vpop.f32.mrb[0].mxu0
        %v2359 = vpop.f32.mrb[0].mxu0
        %v2360 = vpop.f32.mrb[0].mxu0
        %2361 = vdwg.mxu0
        %v2362 = vsel %vm1923, %v2357, -inf
        %2363 = vmax.xlane.f32.xlu0 %v2362
        %v2364 = vpop.xlane.xlu0 %2363
        %v2365 = vsub.f32 %v2357, %v2364
        %v2366 = vmul.f32 %v2365, 1.442695
        %v2367 = vpow.pop %v2366
        %v2368 = vsel %vm1923, %v2367, 0.0
        %2369 = vadd.xlane.f32.xlu0 %v2368
        %v2370 = vpop.xlane.xlu0 %2369
        %v2371 = vrcp.pop %v2370
        %v2372 = vmul.f32 %v2367, %v2371
        %v2373 = vpack.c.bf16 %v2372, %v2372
        %2374 = vrot.lane.b32.xlu0 %v2205, 88
        %v2375 = vpop.permute.xlu0 %2374
        %v2378 = vsel %vm1923, %v2373, 0
        %2380 = vmatprep.subr.bf16.mxu0 0
        %2381 = vmatpush1.bf16.msra.mxu0 %v2375
        %2382 = vmatprep.subr.bf16.mxu0 0
        %2383 = vmatpush1.bf16.msra.mxu0 0
        %2384 = vmatprep.subr.bf16.mxu0 0
        %2385 = vmatpush1.bf16.msra.mxu0 0
        %2386 = vmatprep.subr.bf16.mxu0 0
        %2387 = vmatpush1.bf16.msra.mxu0 0
        %2388 = vmatprep.subr.bf16.mxu0 0
        %2389 = vmatpush1.bf16.msra.mxu0 0
        %2390 = vmatprep.subr.bf16.mxu0 0
        %2391 = vmatpush1.bf16.msra.mxu0 0
        %2392 = vmatprep.subr.bf16.mxu0 0
        %2393 = vmatpush1.bf16.msra.mxu0 0
        %2394 = vmatprep.subr.bf16.mxu0 0
        %2395 = vmatpush1.bf16.msra.mxu0 0
        %2396 = vmatprep.subr.bf16.mxu0 0
        %2397 = vmatpush1.bf16.msra.mxu0 0
        %2398 = vmatprep.subr.bf16.mxu0 0
        %2399 = vmatpush1.bf16.msra.mxu0 0
        %2400 = vmatprep.subr.bf16.mxu0 0
        %2401 = vmatpush1.bf16.msra.mxu0 0
        %2402 = vmatprep.subr.bf16.mxu0 0
        %2403 = vmatpush1.bf16.msra.mxu0 0
        %2404 = vmatprep.subr.bf16.mxu0 0
        %2405 = vmatpush1.bf16.msra.mxu0 0
        %2406 = vmatprep.subr.bf16.mxu0 0
        %2407 = vmatpush1.bf16.msra.mxu0 0
        %2408 = vmatprep.subr.bf16.mxu0 0
        %2409 = vmatpush1.bf16.msra.mxu0 0
        %2410 = vmatprep.subr.bf16.mxu0 0
        %2411 = vmatpush1.bf16.msra.mxu0 0
        %2412 = vmatprep.mubr.bf16.mxu0 0
        %2413 = vmatmul.mubr.bf16.gmra.mrb[0].mxu0 %v2378
        %v2414 = vpop.f32.mrb[0].mxu0
        %v2415 = vadd.f32 0.0, %v2414
        %v2416 = vpop.f32.mrb[0].mxu0
        %v2417 = vpop.f32.mrb[0].mxu0
        %v2418 = vpop.f32.mrb[0].mxu0
        %2419 = vdwg.mxu0
        %2420 = vrot.lane.b32.xlu0 %v2204, 112
        %v2421 = vpop.permute.xlu0 %2420
        %2422 = vrot.lane.b32.xlu0 %v2205, 112
        %v2423 = vpop.permute.xlu0 %2422
        %v2425 = vsel %vm1473, %v2421, 0
        %v2428 = vsel %vm1473, %v2423, 0
        %2430 = vmatprep.subr.bf16.mxu0 0
        %2431 = vmatpush1.bf16.xpose.msra.mxu0 %v2428
        %2432 = vmatprep.subr.bf16.mxu0 0
        %2433 = vmatpush1.bf16.xpose.msra.mxu0 0
        %2434 = vmatprep.subr.bf16.mxu0 0
        %2435 = vmatpush1.bf16.xpose.msra.mxu0 0
        %2436 = vmatprep.subr.bf16.mxu0 0
        %2437 = vmatpush1.bf16.xpose.msra.mxu0 0
        %2438 = vmatprep.subr.bf16.mxu0 0
        %2439 = vmatpush1.bf16.xpose.msra.mxu0 0
        %2440 = vmatprep.subr.bf16.mxu0 0
        %2441 = vmatpush1.bf16.xpose.msra.mxu0 0
        %2442 = vmatprep.subr.bf16.mxu0 0
        %2443 = vmatpush1.bf16.xpose.msra.mxu0 0
        %2444 = vmatprep.subr.bf16.mxu0 0
        %2445 = vmatpush1.bf16.xpose.msra.mxu0 0
        %2446 = vmatprep.subr.bf16.mxu0 0
        %2447 = vmatpush1.bf16.xpose.msra.mxu0 0
        %2448 = vmatprep.subr.bf16.mxu0 0
        %2449 = vmatpush1.bf16.xpose.msra.mxu0 0
        %2450 = vmatprep.subr.bf16.mxu0 0
        %2451 = vmatpush1.bf16.xpose.msra.mxu0 0
        %2452 = vmatprep.subr.bf16.mxu0 0
        %2453 = vmatpush1.bf16.xpose.msra.mxu0 0
        %2454 = vmatprep.subr.bf16.mxu0 0
        %2455 = vmatpush1.bf16.xpose.msra.mxu0 0
        %2456 = vmatprep.subr.bf16.mxu0 0
        %2457 = vmatpush1.bf16.xpose.msra.mxu0 0
        %2458 = vmatprep.subr.bf16.mxu0 0
        %2459 = vmatpush1.bf16.xpose.msra.mxu0 0
        %2460 = vmatprep.subr.bf16.mxu0 0
        %2461 = vmatpush1.bf16.xpose.msra.mxu0 0
        %2462 = vmatprep.mubr.bf16.mxu0 0
        %2463 = vmatmul.mubr.bf16.gmra.mrb[0].mxu0 %v2425
        %v2464 = vpop.f32.mrb[0].mxu0
        %v2465 = vadd.f32 %v1234, %v2464
        %v2466 = vpop.f32.mrb[0].mxu0
        %v2467 = vpop.f32.mrb[0].mxu0
        %v2468 = vpop.f32.mrb[0].mxu0
        %2469 = vdwg.mxu0
        %v2470 = vsel %vm1923, %v2465, -inf
        %2471 = vmax.xlane.f32.xlu0 %v2470
        %v2472 = vpop.xlane.xlu0 %2471
        %v2473 = vsub.f32 %v2465, %v2472
        %v2474 = vmul.f32 %v2473, 1.442695
        %v2475 = vpow.pop %v2474
        %v2476 = vsel %vm1923, %v2475, 0.0
        %2477 = vadd.xlane.f32.xlu0 %v2476
        %v2478 = vpop.xlane.xlu0 %2477
        %v2479 = vrcp.pop %v2478
        %v2480 = vmul.f32 %v2475, %v2479
        %v2481 = vpack.c.bf16 %v2480, %v2480
        %2482 = vrot.lane.b32.xlu0 %v2205, 80
        %v2483 = vpop.permute.xlu0 %2482
        %v2486 = vsel %vm1923, %v2481, 0
        %2488 = vmatprep.subr.bf16.mxu0 0
        %2489 = vmatpush1.bf16.msra.mxu0 %v2483
        %2490 = vmatprep.subr.bf16.mxu0 0
        %2491 = vmatpush1.bf16.msra.mxu0 0
        %2492 = vmatprep.subr.bf16.mxu0 0
        %2493 = vmatpush1.bf16.msra.mxu0 0
        %2494 = vmatprep.subr.bf16.mxu0 0
        %2495 = vmatpush1.bf16.msra.mxu0 0
        %2496 = vmatprep.subr.bf16.mxu0 0
        %2497 = vmatpush1.bf16.msra.mxu0 0
        %2498 = vmatprep.subr.bf16.mxu0 0
        %2499 = vmatpush1.bf16.msra.mxu0 0
        %2500 = vmatprep.subr.bf16.mxu0 0
        %2501 = vmatpush1.bf16.msra.mxu0 0
        %2502 = vmatprep.subr.bf16.mxu0 0
        %2503 = vmatpush1.bf16.msra.mxu0 0
        %2504 = vmatprep.subr.bf16.mxu0 0
        %2505 = vmatpush1.bf16.msra.mxu0 0
        %2506 = vmatprep.subr.bf16.mxu0 0
        %2507 = vmatpush1.bf16.msra.mxu0 0
        %2508 = vmatprep.subr.bf16.mxu0 0
        %2509 = vmatpush1.bf16.msra.mxu0 0
        %2510 = vmatprep.subr.bf16.mxu0 0
        %2511 = vmatpush1.bf16.msra.mxu0 0
        %2512 = vmatprep.subr.bf16.mxu0 0
        %2513 = vmatpush1.bf16.msra.mxu0 0
        %2514 = vmatprep.subr.bf16.mxu0 0
        %2515 = vmatpush1.bf16.msra.mxu0 0
        %2516 = vmatprep.subr.bf16.mxu0 0
        %2517 = vmatpush1.bf16.msra.mxu0 0
        %2518 = vmatprep.subr.bf16.mxu0 0
        %2519 = vmatpush1.bf16.msra.mxu0 0
        %2520 = vmatprep.mubr.bf16.mxu0 0
        %2521 = vmatmul.mubr.bf16.gmra.mrb[0].mxu0 %v2486
        %v2522 = vpop.f32.mrb[0].mxu0
        %v2523 = vadd.f32 0.0, %v2522
        %v2524 = vpop.f32.mrb[0].mxu0
        %v2525 = vpop.f32.mrb[0].mxu0
        %v2526 = vpop.f32.mrb[0].mxu0
        %2527 = vdwg.mxu0
        %2528 = vrot.lane.b32.xlu0 %v2204, 104
        %v2529 = vpop.permute.xlu0 %2528
        %2530 = vrot.lane.b32.xlu0 %v2205, 104
        %v2531 = vpop.permute.xlu0 %2530
        %v2533 = vsel %vm1473, %v2529, 0
        %v2536 = vsel %vm1473, %v2531, 0
        %2538 = vmatprep.subr.bf16.mxu0 0
        %2539 = vmatpush1.bf16.xpose.msra.mxu0 %v2536
        %2540 = vmatprep.subr.bf16.mxu0 0
        %2541 = vmatpush1.bf16.xpose.msra.mxu0 0
        %2542 = vmatprep.subr.bf16.mxu0 0
        %2543 = vmatpush1.bf16.xpose.msra.mxu0 0
        %2544 = vmatprep.subr.bf16.mxu0 0
        %2545 = vmatpush1.bf16.xpose.msra.mxu0 0
        %2546 = vmatprep.subr.bf16.mxu0 0
        %2547 = vmatpush1.bf16.xpose.msra.mxu0 0
        %2548 = vmatprep.subr.bf16.mxu0 0
        %2549 = vmatpush1.bf16.xpose.msra.mxu0 0
        %2550 = vmatprep.subr.bf16.mxu0 0
        %2551 = vmatpush1.bf16.xpose.msra.mxu0 0
        %2552 = vmatprep.subr.bf16.mxu0 0
        %2553 = vmatpush1.bf16.xpose.msra.mxu0 0
        %2554 = vmatprep.subr.bf16.mxu0 0
        %2555 = vmatpush1.bf16.xpose.msra.mxu0 0
        %2556 = vmatprep.subr.bf16.mxu0 0
        %2557 = vmatpush1.bf16.xpose.msra.mxu0 0
        %2558 = vmatprep.subr.bf16.mxu0 0
        %2559 = vmatpush1.bf16.xpose.msra.mxu0 0
        %2560 = vmatprep.subr.bf16.mxu0 0
        %2561 = vmatpush1.bf16.xpose.msra.mxu0 0
        %2562 = vmatprep.subr.bf16.mxu0 0
        %2563 = vmatpush1.bf16.xpose.msra.mxu0 0
        %2564 = vmatprep.subr.bf16.mxu0 0
        %2565 = vmatpush1.bf16.xpose.msra.mxu0 0
        %2566 = vmatprep.subr.bf16.mxu0 0
        %2567 = vmatpush1.bf16.xpose.msra.mxu0 0
        %2568 = vmatprep.subr.bf16.mxu0 0
        %2569 = vmatpush1.bf16.xpose.msra.mxu0 0
        %2570 = vmatprep.mubr.bf16.mxu0 0
        %2571 = vmatmul.mubr.bf16.gmra.mrb[0].mxu0 %v2533
        %v2572 = vpop.f32.mrb[0].mxu0
        %v2573 = vadd.f32 %v1234, %v2572
        %v2574 = vpop.f32.mrb[0].mxu0
        %v2575 = vpop.f32.mrb[0].mxu0
        %v2576 = vpop.f32.mrb[0].mxu0
        %2577 = vdwg.mxu0
        %v2578 = vsel %vm1923, %v2573, -inf
        %2579 = vmax.xlane.f32.xlu0 %v2578
        %v2580 = vpop.xlane.xlu0 %2579
        %v2581 = vsub.f32 %v2573, %v2580
        %v2582 = vmul.f32 %v2581, 1.442695
        %v2583 = vpow.pop %v2582
        %v2584 = vsel %vm1923, %v2583, 0.0
        %2585 = vadd.xlane.f32.xlu0 %v2584
        %v2586 = vpop.xlane.xlu0 %2585
        %v2587 = vrcp.pop %v2586
        %v2588 = vmul.f32 %v2583, %v2587
        %v2589 = vpack.c.bf16 %v2588, %v2588
        %2590 = vrot.lane.b32.xlu0 %v2205, 72
        %v2591 = vpop.permute.xlu0 %2590
        %v2594 = vsel %vm1923, %v2589, 0
        %2596 = vmatprep.subr.bf16.mxu0 0
        %2597 = vmatpush1.bf16.msra.mxu0 %v2591
        %2598 = vmatprep.subr.bf16.mxu0 0
        %2599 = vmatpush1.bf16.msra.mxu0 0
        %2600 = vmatprep.subr.bf16.mxu0 0
        %2601 = vmatpush1.bf16.msra.mxu0 0
        %2602 = vmatprep.subr.bf16.mxu0 0
        %2603 = vmatpush1.bf16.msra.mxu0 0
        %2604 = vmatprep.subr.bf16.mxu0 0
        %2605 = vmatpush1.bf16.msra.mxu0 0
        %2606 = vmatprep.subr.bf16.mxu0 0
        %2607 = vmatpush1.bf16.msra.mxu0 0
        %2608 = vmatprep.subr.bf16.mxu0 0
        %2609 = vmatpush1.bf16.msra.mxu0 0
        %2610 = vmatprep.subr.bf16.mxu0 0
        %2611 = vmatpush1.bf16.msra.mxu0 0
        %2612 = vmatprep.subr.bf16.mxu0 0
        %2613 = vmatpush1.bf16.msra.mxu0 0
        %2614 = vmatprep.subr.bf16.mxu0 0
        %2615 = vmatpush1.bf16.msra.mxu0 0
        %2616 = vmatprep.subr.bf16.mxu0 0
        %2617 = vmatpush1.bf16.msra.mxu0 0
        %2618 = vmatprep.subr.bf16.mxu0 0
        %2619 = vmatpush1.bf16.msra.mxu0 0
        %2620 = vmatprep.subr.bf16.mxu0 0
        %2621 = vmatpush1.bf16.msra.mxu0 0
        %2622 = vmatprep.subr.bf16.mxu0 0
        %2623 = vmatpush1.bf16.msra.mxu0 0
        %2624 = vmatprep.subr.bf16.mxu0 0
        %2625 = vmatpush1.bf16.msra.mxu0 0
        %2626 = vmatprep.subr.bf16.mxu0 0
        %2627 = vmatpush1.bf16.msra.mxu0 0
        %2628 = vmatprep.mubr.bf16.mxu0 0
        %2629 = vmatmul.mubr.bf16.gmra.mrb[0].mxu0 %v2594
        %v2630 = vpop.f32.mrb[0].mxu0
        %v2631 = vadd.f32 0.0, %v2630
        %v2632 = vpop.f32.mrb[0].mxu0
        %v2633 = vpop.f32.mrb[0].mxu0
        %v2634 = vpop.f32.mrb[0].mxu0
        %2635 = vdwg.mxu0
        %2637 = vrot.lane.b32.xlu0 %v2415, 8
        %v2638 = vpop.permute.xlu0 %2637
        %2641 = vrot.lane.b32.xlu0 %v2523, 16
        %v2642 = vpop.permute.xlu0 %2641
        %2645 = vrot.lane.b32.xlu0 %v2631, 24
        %v2646 = vpop.permute.xlu0 %2645
        %v2648 = vsel %vm1473, %v2306, %v2638
        %v2649 = vsel %vm1923, %v2648, %v2642
        %v2650 = vsel %vm1925, %v2649, %v2646
        %v2651 = vpack.c.bf16 %v2650, %v2650
        %v2653 = vlaneseq
        %v2654 = vshrl.u32 %v2653, 7
        %v2655 = vsub.s32 0, %v2654
        %v2656 = vrot.slane %v2203, %v2655
        %v2662 = vunpack.c.l.b16 %v2199
        %v2663 = vunpack.c.l.b16 %v2200
        %v2664 = vunpack.c.l.b16 %v2201
        %v2665 = vunpack.c.l.b16 %v2202
        %v2666 = vpack.c.b16 %v2663, %v2662
        %v2667 = vpack.c.b16 %v2665, %v2664
        %v2671 = vsel %vm1946, %v2651, 0
        %2673 = vmatprep.subr.bf16.mxu0 0
        %2674 = vmatpush1.bf16.msra.mxu0 %v2666
        %2675 = vmatprep.subr.bf16.mxu0 0
        %2676 = vmatpush1.bf16.msra.mxu0 %v2667
        %2677 = vmatprep.subr.bf16.mxu0 0
        %2678 = vmatpush1.bf16.msra.mxu0 0
        %2679 = vmatprep.subr.bf16.mxu0 0
        %2680 = vmatpush1.bf16.msra.mxu0 0
        %2681 = vmatprep.subr.bf16.mxu0 0
        %2682 = vmatpush1.bf16.msra.mxu0 0
        %2683 = vmatprep.subr.bf16.mxu0 0
        %2684 = vmatpush1.bf16.msra.mxu0 0
        %2685 = vmatprep.subr.bf16.mxu0 0
        %2686 = vmatpush1.bf16.msra.mxu0 0
        %2687 = vmatprep.subr.bf16.mxu0 0
        %2688 = vmatpush1.bf16.msra.mxu0 0
        %2689 = vmatprep.subr.bf16.mxu0 0
        %2690 = vmatpush1.bf16.msra.mxu0 0
        %2691 = vmatprep.subr.bf16.mxu0 0
        %2692 = vmatpush1.bf16.msra.mxu0 0
        %2693 = vmatprep.subr.bf16.mxu0 0
        %2694 = vmatpush1.bf16.msra.mxu0 0
        %2695 = vmatprep.subr.bf16.mxu0 0
        %2696 = vmatpush1.bf16.msra.mxu0 0
        %2697 = vmatprep.subr.bf16.mxu0 0
        %2698 = vmatpush1.bf16.msra.mxu0 0
        %2699 = vmatprep.subr.bf16.mxu0 0
        %2700 = vmatpush1.bf16.msra.mxu0 0
        %2701 = vmatprep.subr.bf16.mxu0 0
        %2702 = vmatpush1.bf16.msra.mxu0 0
        %2703 = vmatprep.subr.bf16.mxu0 0
        %2704 = vmatpush1.bf16.msra.mxu0 0
        %2705 = vmatprep.mubr.bf16.mxu0 0
        %2706 = vmatmul.mubr.bf16.gmra.mrb[0].mxu0 %v2671
        %v2707 = vpop.f32.mrb[0].mxu0
        %v2708 = vadd.f32 %v2656, %v2707
        %v2709 = vpop.f32.mrb[0].mxu0
        %v2710 = vpop.f32.mrb[0].mxu0
        %v2711 = vpop.f32.mrb[0].mxu0
        %2712 = vdwg.mxu0
        %v2713 = vadd.f32 %v2018, %v2708
        %v2714 = vld [vmem:[#allocation32] sm:$0x1]
        %v2715 = vld [vmem:[#allocation33] sm:$0x1]
        %2716 = vadd.xlane.f32.xlu0 %v2713
        %v2717 = vpop.xlane.xlu0 %2716
        %v2718 = vmul.f32 %v2717, 0.03125
        %v2719 = vsub.f32 %v2713, %v2718
        %v2720 = vmul.f32 %v2719, %v1237
        %v2721 = vmul.f32 %v2720, %v2720
        %2722 = vadd.xlane.f32.xlu0 %v2721
        %v2723 = vpop.xlane.xlu0 %2722
        %v2724 = vmul.f32 %v2723, 0.03125
        %v2725 = vadd.f32 %v2724, 1e-05
        %v2726 = vrsqrt.pop %v2725
        %v2727 = vmul.f32 %v2720, %v2726
        %v2729 = vlaneseq
        %v2730 = vshrl.u32 %v2729, 7
        %v2731 = vsub.s32 0, %v2730
        %v2732 = vrot.slane %v2714, %v2731
        %v2734 = vmul.f32 %v2727, %v2732
        %v2736 = vlaneseq
        %v2737 = vshrl.u32 %v2736, 7
        %v2738 = vsub.s32 0, %v2737
        %v2739 = vrot.slane %v2715, %v2738
        %v2741 = vadd.f32 %v2734, %v2739
        %v2742 = vld [vmem:[#allocation23] sm:$0xf]
        %v2743 = vld [vmem:[#allocation23 + $0x4] sm:$0xf]
        %v2744 = vld [vmem:[#allocation23 + $0x8] sm:$0xf]
        %v2745 = vld [vmem:[#allocation23 + $0xc] sm:$0xf]
        %v2746 = vld [vmem:[#allocation23 + $0x10] sm:$0xf]
        %v2747 = vld [vmem:[#allocation23 + $0x14] sm:$0xf]
        %v2748 = vld [vmem:[#allocation23 + $0x18] sm:$0xf]
        %v2749 = vld [vmem:[#allocation23 + $0x1c] sm:$0xf]
        %v2750 = vld [vmem:[#allocation23 + $0x20] sm:$0xf]
        %v2751 = vld [vmem:[#allocation23 + $0x24] sm:$0xf]
        %v2752 = vld [vmem:[#allocation23 + $0x28] sm:$0xf]
        %v2753 = vld [vmem:[#allocation23 + $0x2c] sm:$0xf]
        %v2754 = vld [vmem:[#allocation23 + $0x30] sm:$0xf]
        %v2755 = vld [vmem:[#allocation23 + $0x34] sm:$0xf]
        %v2756 = vld [vmem:[#allocation23 + $0x38] sm:$0xf]
        %v2757 = vld [vmem:[#allocation23 + $0x3c] sm:$0xf]
        %v2758 = vld [vmem:[#allocation24] sm:$0x1]
        %v2759 = vpack.c.bf16 %v2741, %v2741
        %v2761 = vlaneseq
        %v2762 = vshrl.u32 %v2761, 7
        %v2763 = vsub.s32 0, %v2762
        %v2764 = vrot.slane %v2758, %v2763
        %v2782 = vunpack.c.l.b16 %v2742
        %v2783 = vunpack.c.l.b16 %v2743
        %v2784 = vunpack.c.l.b16 %v2744
        %v2785 = vunpack.c.l.b16 %v2745
        %v2786 = vunpack.c.l.b16 %v2746
        %v2787 = vunpack.c.l.b16 %v2747
        %v2788 = vunpack.c.l.b16 %v2748
        %v2789 = vunpack.c.l.b16 %v2749
        %v2790 = vunpack.c.l.b16 %v2750
        %v2791 = vunpack.c.l.b16 %v2751
        %v2792 = vunpack.c.l.b16 %v2752
        %v2793 = vunpack.c.l.b16 %v2753
        %v2794 = vunpack.c.l.b16 %v2754
        %v2795 = vunpack.c.l.b16 %v2755
        %v2796 = vunpack.c.l.b16 %v2756
        %v2797 = vunpack.c.l.b16 %v2757
        %v2798 = vpack.c.b16 %v2783, %v2782
        %v2799 = vpack.c.b16 %v2785, %v2784
        %v2800 = vpack.c.b16 %v2787, %v2786
        %v2801 = vpack.c.b16 %v2789, %v2788
        %v2802 = vpack.c.b16 %v2791, %v2790
        %v2803 = vpack.c.b16 %v2793, %v2792
        %v2804 = vpack.c.b16 %v2795, %v2794
        %v2805 = vpack.c.b16 %v2797, %v2796
        %2814 = vmatprep.subr.bf16.mxu0 0
        %2815 = vmatpush1.bf16.msra.mxu0 %v2798
        %2816 = vmatprep.subr.bf16.mxu0 0
        %2817 = vmatpush1.bf16.msra.mxu0 %v2799
        %2818 = vmatprep.subr.bf16.mxu0 0
        %2819 = vmatpush1.bf16.msra.mxu0 %v2800
        %2820 = vmatprep.subr.bf16.mxu0 0
        %2821 = vmatpush1.bf16.msra.mxu0 %v2801
        %2822 = vmatprep.subr.bf16.mxu0 0
        %2823 = vmatpush1.bf16.msra.mxu0 %v2802
        %2824 = vmatprep.subr.bf16.mxu0 0
        %2825 = vmatpush1.bf16.msra.mxu0 %v2803
        %2826 = vmatprep.subr.bf16.mxu0 0
        %2827 = vmatpush1.bf16.msra.mxu0 %v2804
        %2828 = vmatprep.subr.bf16.mxu0 0
        %2829 = vmatpush1.bf16.msra.mxu0 %v2805
        %2830 = vmatprep.subr.bf16.mxu0 0
        %2831 = vmatpush1.bf16.msra.mxu0 0
        %2832 = vmatprep.subr.bf16.mxu0 0
        %2833 = vmatpush1.bf16.msra.mxu0 0
        %2834 = vmatprep.subr.bf16.mxu0 0
        %2835 = vmatpush1.bf16.msra.mxu0 0
        %2836 = vmatprep.subr.bf16.mxu0 0
        %2837 = vmatpush1.bf16.msra.mxu0 0
        %2838 = vmatprep.subr.bf16.mxu0 0
        %2839 = vmatpush1.bf16.msra.mxu0 0
        %2840 = vmatprep.subr.bf16.mxu0 0
        %2841 = vmatpush1.bf16.msra.mxu0 0
        %2842 = vmatprep.subr.bf16.mxu0 0
        %2843 = vmatpush1.bf16.msra.mxu0 0
        %2844 = vmatprep.subr.bf16.mxu0 0
        %2845 = vmatpush1.bf16.msra.mxu0 0
        %2846 = vmatprep.mubr.bf16.mxu0 0
        %2847 = vmatmul.mubr.bf16.gmra.mrb[0].mxu0 %v2759
        %v2848 = vpop.f32.mrb[0].mxu0
        %v2849 = vadd.f32 %v2764, %v2848
        %v2850 = vpop.f32.mrb[0].mxu0
        %v2851 = vpop.f32.mrb[0].mxu0
        %v2852 = vpop.f32.mrb[0].mxu0
        %2853 = vdwg.mxu0
        %v2854 = vmax.f32 %v2849, 0.0
        %v2855 = vld [vmem:[#allocation26] sm:$0xf]
        %v2856 = vld [vmem:[#allocation26 + $0x4] sm:$0xf]
        %v2857 = vld [vmem:[#allocation26 + $0x8] sm:$0xf]
        %v2858 = vld [vmem:[#allocation26 + $0xc] sm:$0xf]
        %v2859 = vld [vmem:[#allocation26 + $0x10] sm:$0xf]
        %v2860 = vld [vmem:[#allocation26 + $0x14] sm:$0xf]
        %v2861 = vld [vmem:[#allocation26 + $0x18] sm:$0xf]
        %v2862 = vld [vmem:[#allocation26 + $0x1c] sm:$0xf]
        %v2863 = vld [vmem:[#allocation26 + $0x20] sm:$0xf]
        %v2864 = vld [vmem:[#allocation26 + $0x24] sm:$0xf]
        %v2865 = vld [vmem:[#allocation26 + $0x28] sm:$0xf]
        %v2866 = vld [vmem:[#allocation26 + $0x2c] sm:$0xf]
        %v2867 = vld [vmem:[#allocation26 + $0x30] sm:$0xf]
        %v2868 = vld [vmem:[#allocation26 + $0x34] sm:$0xf]
        %v2869 = vld [vmem:[#allocation26 + $0x38] sm:$0xf]
        %v2870 = vld [vmem:[#allocation26 + $0x3c] sm:$0xf]
        %v2871 = vld [vmem:[#allocation27] sm:$0x1]
        %v2872 = vpack.c.bf16 %v2854, %v2854
        %v2874 = vlaneseq
        %v2875 = vshrl.u32 %v2874, 7
        %v2876 = vsub.s32 0, %v2875
        %v2877 = vrot.slane %v2871, %v2876
        %v2895 = vunpack.c.l.b16 %v2855
        %v2896 = vunpack.c.l.b16 %v2856
        %v2897 = vunpack.c.l.b16 %v2857
        %v2898 = vunpack.c.l.b16 %v2858
        %v2899 = vunpack.c.l.b16 %v2859
        %v2900 = vunpack.c.l.b16 %v2860
        %v2901 = vunpack.c.l.b16 %v2861
        %v2902 = vunpack.c.l.b16 %v2862
        %v2903 = vunpack.c.l.b16 %v2863
        %v2904 = vunpack.c.l.b16 %v2864
        %v2905 = vunpack.c.l.b16 %v2865
        %v2906 = vunpack.c.l.b16 %v2866
        %v2907 = vunpack.c.l.b16 %v2867
        %v2908 = vunpack.c.l.b16 %v2868
        %v2909 = vunpack.c.l.b16 %v2869
        %v2910 = vunpack.c.l.b16 %v2870
        %v2911 = vpack.c.b16 %v2896, %v2895
        %v2912 = vpack.c.b16 %v2898, %v2897
        %v2913 = vpack.c.b16 %v2900, %v2899
        %v2914 = vpack.c.b16 %v2902, %v2901
        %v2915 = vpack.c.b16 %v2904, %v2903
        %v2916 = vpack.c.b16 %v2906, %v2905
        %v2917 = vpack.c.b16 %v2908, %v2907
        %v2918 = vpack.c.b16 %v2910, %v2909
        %2927 = vmatprep.subr.bf16.mxu0 0
        %2928 = vmatpush1.bf16.msra.mxu0 %v2911
        %2929 = vmatprep.subr.bf16.mxu0 0
        %2930 = vmatpush1.bf16.msra.mxu0 %v2912
        %2931 = vmatprep.subr.bf16.mxu0 0
        %2932 = vmatpush1.bf16.msra.mxu0 %v2913
        %2933 = vmatprep.subr.bf16.mxu0 0
        %2934 = vmatpush1.bf16.msra.mxu0 %v2914
        %2935 = vmatprep.subr.bf16.mxu0 0
        %2936 = vmatpush1.bf16.msra.mxu0 %v2915
        %2937 = vmatprep.subr.bf16.mxu0 0
        %2938 = vmatpush1.bf16.msra.mxu0 %v2916
        %2939 = vmatprep.subr.bf16.mxu0 0
        %2940 = vmatpush1.bf16.msra.mxu0 %v2917
        %2941 = vmatprep.subr.bf16.mxu0 0
        %2942 = vmatpush1.bf16.msra.mxu0 %v2918
        %2943 = vmatprep.subr.bf16.mxu0 0
        %2944 = vmatpush1.bf16.msra.mxu0 0
        %2945 = vmatprep.subr.bf16.mxu0 0
        %2946 = vmatpush1.bf16.msra.mxu0 0
        %2947 = vmatprep.subr.bf16.mxu0 0
        %2948 = vmatpush1.bf16.msra.mxu0 0
        %2949 = vmatprep.subr.bf16.mxu0 0
        %2950 = vmatpush1.bf16.msra.mxu0 0
        %2951 = vmatprep.subr.bf16.mxu0 0
        %2952 = vmatpush1.bf16.msra.mxu0 0
        %2953 = vmatprep.subr.bf16.mxu0 0
        %2954 = vmatpush1.bf16.msra.mxu0 0
        %2955 = vmatprep.subr.bf16.mxu0 0
        %2956 = vmatpush1.bf16.msra.mxu0 0
        %2957 = vmatprep.subr.bf16.mxu0 0
        %2958 = vmatpush1.bf16.msra.mxu0 0
        %2959 = vmatprep.mubr.bf16.mxu0 0
        %2960 = vmatmul.mubr.bf16.gmra.mrb[0].mxu0 %v2872
        %v2961 = vpop.f32.mrb[0].mxu0
        %v2962 = vadd.f32 %v2877, %v2961
        %v2963 = vpop.f32.mrb[0].mxu0
        %v2964 = vpop.f32.mrb[0].mxu0
        %v2965 = vpop.f32.mrb[0].mxu0
        %2966 = vdwg.mxu0
        %v2967 = vadd.f32 %v2741, %v2962
        %v2968 = vld [vmem:[#allocation35] sm:$0x1]
        %v2969 = vld [vmem:[#allocation36] sm:$0x1]
        %2970 = vadd.xlane.f32.xlu0 %v2967
        %v2971 = vpop.xlane.xlu0 %2970
        %v2972 = vmul.f32 %v2971, 0.03125
        %v2973 = vsub.f32 %v2967, %v2972
        %v2974 = vmul.f32 %v2973, %v1237
        %v2975 = vmul.f32 %v2974, %v2974
        %2976 = vadd.xlane.f32.xlu0 %v2975
        %v2977 = vpop.xlane.xlu0 %2976
        %v2978 = vmul.f32 %v2977, 0.03125
        %v2979 = vadd.f32 %v2978, 1e-05
        %v2980 = vrsqrt.pop %v2979
        %v2981 = vmul.f32 %v2974, %v2980
        %v2983 = vlaneseq
        %v2984 = vshrl.u32 %v2983, 7
        %v2985 = vsub.s32 0, %v2984
        %v2986 = vrot.slane %v2968, %v2985
        %v2988 = vmul.f32 %v2981, %v2986
        %v2990 = vlaneseq
        %v2991 = vshrl.u32 %v2990, 7
        %v2992 = vsub.s32 0, %v2991
        %v2993 = vrot.slane %v2969, %v2992
        %v2995 = vadd.f32 %v2988, %v2993
        %s2996 = scalar_lea.vmem [#allocation12], 64
        %v2997 = vld [vmem:[%s2996] sm:$0xf]
        %v2998 = vld [vmem:[%s2996 + $0x4] sm:$0xf]
        %v2999 = vld [vmem:[%s2996 + $0x8] sm:$0xf]
        %v3000 = vld [vmem:[%s2996 + $0xc] sm:$0xf]
        %v3001 = vld [vmem:[%s2996 + $0x10] sm:$0xf]
        %v3002 = vld [vmem:[%s2996 + $0x14] sm:$0xf]
        %v3003 = vld [vmem:[%s2996 + $0x18] sm:$0xf]
        %v3004 = vld [vmem:[%s2996 + $0x1c] sm:$0xf]
        %v3005 = vld [vmem:[%s2996 + $0x20] sm:$0xf]
        %v3006 = vld [vmem:[%s2996 + $0x24] sm:$0xf]
        %v3007 = vld [vmem:[%s2996 + $0x28] sm:$0xf]
        %v3008 = vld [vmem:[%s2996 + $0x2c] sm:$0xf]
        %v3009 = vld [vmem:[%s2996 + $0x30] sm:$0xf]
        %v3010 = vld [vmem:[%s2996 + $0x34] sm:$0xf]
        %v3011 = vld [vmem:[%s2996 + $0x38] sm:$0xf]
        %v3012 = vld [vmem:[%s2996 + $0x3c] sm:$0xf]
        %s3013 = scalar_lea.vmem %s9, 1
        %v3014 = vld [vmem:[%s3013] sm:$0x1]
        %v3015 = vpack.c.bf16 %v2995, %v2995
        %v3017 = vlaneseq
        %v3018 = vshrl.u32 %v3017, 7
        %v3019 = vsub.s32 0, %v3018
        %v3020 = vrot.slane %v3014, %v3019
        %v3038 = vunpack.c.l.b16 %v2997
        %v3039 = vunpack.c.l.b16 %v2998
        %v3040 = vunpack.c.l.b16 %v2999
        %v3041 = vunpack.c.l.b16 %v3000
        %v3042 = vunpack.c.l.b16 %v3001
        %v3043 = vunpack.c.l.b16 %v3002
        %v3044 = vunpack.c.l.b16 %v3003
        %v3045 = vunpack.c.l.b16 %v3004
        %v3046 = vunpack.c.l.b16 %v3005
        %v3047 = vunpack.c.l.b16 %v3006
        %v3048 = vunpack.c.l.b16 %v3007
        %v3049 = vunpack.c.l.b16 %v3008
        %v3050 = vunpack.c.l.b16 %v3009
        %v3051 = vunpack.c.l.b16 %v3010
        %v3052 = vunpack.c.l.b16 %v3011
        %v3053 = vunpack.c.l.b16 %v3012
        %v3054 = vpack.c.b16 %v3039, %v3038
        %v3055 = vpack.c.b16 %v3041, %v3040
        %v3056 = vpack.c.b16 %v3043, %v3042
        %v3057 = vpack.c.b16 %v3045, %v3044
        %v3058 = vpack.c.b16 %v3047, %v3046
        %v3059 = vpack.c.b16 %v3049, %v3048
        %v3060 = vpack.c.b16 %v3051, %v3050
        %v3061 = vpack.c.b16 %v3053, %v3052
        %3070 = vmatprep.subr.bf16.mxu0 0
        %3071 = vmatpush1.bf16.msra.mxu0 %v3054
        %3072 = vmatprep.subr.bf16.mxu0 0
        %3073 = vmatpush1.bf16.msra.mxu0 %v3055
        %3074 = vmatprep.subr.bf16.mxu0 0
        %3075 = vmatpush1.bf16.msra.mxu0 %v3056
        %3076 = vmatprep.subr.bf16.mxu0 0
        %3077 = vmatpush1.bf16.msra.mxu0 %v3057
        %3078 = vmatprep.subr.bf16.mxu0 0
        %3079 = vmatpush1.bf16.msra.mxu0 %v3058
        %3080 = vmatprep.subr.bf16.mxu0 0
        %3081 = vmatpush1.bf16.msra.mxu0 %v3059
        %3082 = vmatprep.subr.bf16.mxu0 0
        %3083 = vmatpush1.bf16.msra.mxu0 %v3060
        %3084 = vmatprep.subr.bf16.mxu0 0
        %3085 = vmatpush1.bf16.msra.mxu0 %v3061
        %3086 = vmatprep.subr.bf16.mxu0 0
        %3087 = vmatpush1.bf16.msra.mxu0 0
        %3088 = vmatprep.subr.bf16.mxu0 0
        %3089 = vmatpush1.bf16.msra.mxu0 0
        %3090 = vmatprep.subr.bf16.mxu0 0
        %3091 = vmatpush1.bf16.msra.mxu0 0
        %3092 = vmatprep.subr.bf16.mxu0 0
        %3093 = vmatpush1.bf16.msra.mxu0 0
        %3094 = vmatprep.subr.bf16.mxu0 0
        %3095 = vmatpush1.bf16.msra.mxu0 0
        %3096 = vmatprep.subr.bf16.mxu0 0
        %3097 = vmatpush1.bf16.msra.mxu0 0
        %3098 = vmatprep.subr.bf16.mxu0 0
        %3099 = vmatpush1.bf16.msra.mxu0 0
        %3100 = vmatprep.subr.bf16.mxu0 0
        %3101 = vmatpush1.bf16.msra.mxu0 0
        %3102 = vmatprep.mubr.bf16.mxu0 0
        %3103 = vmatmul.mubr.bf16.gmra.mrb[0].mxu0 %v3015
        %v3104 = vpop.f32.mrb[0].mxu0
        %v3105 = vadd.f32 %v3020, %v3104
        %v3106 = vpop.f32.mrb[0].mxu0
        %v3107 = vpop.f32.mrb[0].mxu0
        %v3108 = vpop.f32.mrb[0].mxu0
        %3109 = vdwg.mxu0
        %s3110 = scalar_lea.vmem [#allocation14], 16
        %v3111 = vld [vmem:[%s3110] sm:$0xf]
        %v3112 = vld [vmem:[%s3110 + $0x4] sm:$0xf]
        %v3113 = vld [vmem:[%s3110 + $0x8] sm:$0xf]
        %v3114 = vld [vmem:[%s3110 + $0xc] sm:$0xf]
        %s3115 = scalar_lea.vmem [#allocation15], 1
        %v3116 = vld [vmem:[%s3115] sm:$0x1]
        %v3117 = vpack.c.bf16 %v3105, %v3105
        %3119 = vrot.lane.b32.xlu0 %v3117, 96
        %v3120 = vpop.permute.xlu0 %3119
        %v3122 = vsel %vm1473, %v3117, 0
        %v3125 = vsel %vm1473, %v3120, 0
        %3127 = vmatprep.subr.bf16.mxu0 0
        %3128 = vmatpush1.bf16.xpose.msra.mxu0 %v3125
        %3129 = vmatprep.subr.bf16.mxu0 0
        %3130 = vmatpush1.bf16.xpose.msra.mxu0 0
        %3131 = vmatprep.subr.bf16.mxu0 0
        %3132 = vmatpush1.bf16.xpose.msra.mxu0 0
        %3133 = vmatprep.subr.bf16.mxu0 0
        %3134 = vmatpush1.bf16.xpose.msra.mxu0 0
        %3135 = vmatprep.subr.bf16.mxu0 0
        %3136 = vmatpush1.bf16.xpose.msra.mxu0 0
        %3137 = vmatprep.subr.bf16.mxu0 0
        %3138 = vmatpush1.bf16.xpose.msra.mxu0 0
        %3139 = vmatprep.subr.bf16.mxu0 0
        %3140 = vmatpush1.bf16.xpose.msra.mxu0 0
        %3141 = vmatprep.subr.bf16.mxu0 0
        %3142 = vmatpush1.bf16.xpose.msra.mxu0 0
        %3143 = vmatprep.subr.bf16.mxu0 0
        %3144 = vmatpush1.bf16.xpose.msra.mxu0 0
        %3145 = vmatprep.subr.bf16.mxu0 0
        %3146 = vmatpush1.bf16.xpose.msra.mxu0 0
        %3147 = vmatprep.subr.bf16.mxu0 0
        %3148 = vmatpush1.bf16.xpose.msra.mxu0 0
        %3149 = vmatprep.subr.bf16.mxu0 0
        %3150 = vmatpush1.bf16.xpose.msra.mxu0 0
        %3151 = vmatprep.subr.bf16.mxu0 0
        %3152 = vmatpush1.bf16.xpose.msra.mxu0 0
        %3153 = vmatprep.subr.bf16.mxu0 0
        %3154 = vmatpush1.bf16.xpose.msra.mxu0 0
        %3155 = vmatprep.subr.bf16.mxu0 0
        %3156 = vmatpush1.bf16.xpose.msra.mxu0 0
        %3157 = vmatprep.subr.bf16.mxu0 0
        %3158 = vmatpush1.bf16.xpose.msra.mxu0 0
        %3159 = vmatprep.mubr.bf16.mxu0 0
        %3160 = vmatmul.mubr.bf16.gmra.mrb[0].mxu0 %v3122
        %v3161 = vpop.f32.mrb[0].mxu0
        %v3162 = vadd.f32 %v1232, %v3161
        %v3163 = vpop.f32.mrb[0].mxu0
        %v3164 = vpop.f32.mrb[0].mxu0
        %v3165 = vpop.f32.mrb[0].mxu0
        %3166 = vdwg.mxu0
        %v3167 = vsel %vm1473, %v3162, -inf
        %3168 = vmax.xlane.f32.xlu0 %v3167
        %v3169 = vpop.xlane.xlu0 %3168
        %v3170 = vsub.f32 %v3162, %v3169
        %v3171 = vmul.f32 %v3170, 1.442695
        %v3172 = vpow.pop %v3171
        %v3173 = vsel %vm1473, %v3172, 0.0
        %3174 = vadd.xlane.f32.xlu0 %v3173
        %v3175 = vpop.xlane.xlu0 %3174
        %v3176 = vrcp.pop %v3175
        %v3177 = vmul.f32 %v3172, %v3176
        %v3178 = vpack.c.bf16 %v3177, %v3177
        %3179 = vrot.lane.b32.xlu0 %v3117, 64
        %v3180 = vpop.permute.xlu0 %3179
        %v3182 = vsel %vm1473, %v3178, 0
        %v3185 = vsel %vm1217, %v3180, 0
        %3187 = vmatprep.subr.bf16.mxu0 0
        %3188 = vmatpush1.bf16.msra.mxu0 %v3185
        %3189 = vmatprep.subr.bf16.mxu0 0
        %3190 = vmatpush1.bf16.msra.mxu0 0
        %3191 = vmatprep.subr.bf16.mxu0 0
        %3192 = vmatpush1.bf16.msra.mxu0 0
        %3193 = vmatprep.subr.bf16.mxu0 0
        %3194 = vmatpush1.bf16.msra.mxu0 0
        %3195 = vmatprep.subr.bf16.mxu0 0
        %3196 = vmatpush1.bf16.msra.mxu0 0
        %3197 = vmatprep.subr.bf16.mxu0 0
        %3198 = vmatpush1.bf16.msra.mxu0 0
        %3199 = vmatprep.subr.bf16.mxu0 0
        %3200 = vmatpush1.bf16.msra.mxu0 0
        %3201 = vmatprep.subr.bf16.mxu0 0
        %3202 = vmatpush1.bf16.msra.mxu0 0
        %3203 = vmatprep.subr.bf16.mxu0 0
        %3204 = vmatpush1.bf16.msra.mxu0 0
        %3205 = vmatprep.subr.bf16.mxu0 0
        %3206 = vmatpush1.bf16.msra.mxu0 0
        %3207 = vmatprep.subr.bf16.mxu0 0
        %3208 = vmatpush1.bf16.msra.mxu0 0
        %3209 = vmatprep.subr.bf16.mxu0 0
        %3210 = vmatpush1.bf16.msra.mxu0 0
        %3211 = vmatprep.subr.bf16.mxu0 0
        %3212 = vmatpush1.bf16.msra.mxu0 0
        %3213 = vmatprep.subr.bf16.mxu0 0
        %3214 = vmatpush1.bf16.msra.mxu0 0
        %3215 = vmatprep.subr.bf16.mxu0 0
        %3216 = vmatpush1.bf16.msra.mxu0 0
        %3217 = vmatprep.subr.bf16.mxu0 0
        %3218 = vmatpush1.bf16.msra.mxu0 0
        %3219 = vmatprep.mubr.bf16.mxu0 0
        %3220 = vmatmul.mubr.bf16.gmra.mrb[0].mxu0 %v3182
        %v3221 = vpop.f32.mrb[0].mxu0
        %v3222 = vadd.f32 0.0, %v3221
        %v3223 = vpop.f32.mrb[0].mxu0
        %v3224 = vpop.f32.mrb[0].mxu0
        %v3225 = vpop.f32.mrb[0].mxu0
        %3226 = vdwg.mxu0
        %3227 = vrot.lane.b32.xlu0 %v3117, 120
        %v3228 = vpop.permute.xlu0 %3227
        %3229 = vrot.lane.b32.xlu0 %v3117, 88
        %v3230 = vpop.permute.xlu0 %3229
        %v3232 = vsel %vm1473, %v3228, 0
        %v3235 = vsel %vm1473, %v3230, 0
        %3237 = vmatprep.subr.bf16.mxu0 0
        %3238 = vmatpush1.bf16.xpose.msra.mxu0 %v3235
        %3239 = vmatprep.subr.bf16.mxu0 0
        %3240 = vmatpush1.bf16.xpose.msra.mxu0 0
        %3241 = vmatprep.subr.bf16.mxu0 0
        %3242 = vmatpush1.bf16.xpose.msra.mxu0 0
        %3243 = vmatprep.subr.bf16.mxu0 0
        %3244 = vmatpush1.bf16.xpose.msra.mxu0 0
        %3245 = vmatprep.subr.bf16.mxu0 0
        %3246 = vmatpush1.bf16.xpose.msra.mxu0 0
        %3247 = vmatprep.subr.bf16.mxu0 0
        %3248 = vmatpush1.bf16.xpose.msra.mxu0 0
        %3249 = vmatprep.subr.bf16.mxu0 0
        %3250 = vmatpush1.bf16.xpose.msra.mxu0 0
        %3251 = vmatprep.subr.bf16.mxu0 0
        %3252 = vmatpush1.bf16.xpose.msra.mxu0 0
        %3253 = vmatprep.subr.bf16.mxu0 0
        %3254 = vmatpush1.bf16.xpose.msra.mxu0 0
        %3255 = vmatprep.subr.bf16.mxu0 0
        %3256 = vmatpush1.bf16.xpose.msra.mxu0 0
        %3257 = vmatprep.subr.bf16.mxu0 0
        %3258 = vmatpush1.bf16.xpose.msra.mxu0 0
        %3259 = vmatprep.subr.bf16.mxu0 0
        %3260 = vmatpush1.bf16.xpose.msra.mxu0 0
        %3261 = vmatprep.subr.bf16.mxu0 0
        %3262 = vmatpush1.bf16.xpose.msra.mxu0 0
        %3263 = vmatprep.subr.bf16.mxu0 0
        %3264 = vmatpush1.bf16.xpose.msra.mxu0 0
        %3265 = vmatprep.subr.bf16.mxu0 0
        %3266 = vmatpush1.bf16.xpose.msra.mxu0 0
        %3267 = vmatprep.subr.bf16.mxu0 0
        %3268 = vmatpush1.bf16.xpose.msra.mxu0 0
        %3269 = vmatprep.mubr.bf16.mxu0 0
        %3270 = vmatmul.mubr.bf16.gmra.mrb[0].mxu0 %v3232
        %v3271 = vpop.f32.mrb[0].mxu0
        %v3272 = vadd.f32 %v1232, %v3271
        %v3273 = vpop.f32.mrb[0].mxu0
        %v3274 = vpop.f32.mrb[0].mxu0
        %v3275 = vpop.f32.mrb[0].mxu0
        %3276 = vdwg.mxu0
        %v3277 = vsel %vm1473, %v3272, -inf
        %3278 = vmax.xlane.f32.xlu0 %v3277
        %v3279 = vpop.xlane.xlu0 %3278
        %v3280 = vsub.f32 %v3272, %v3279
        %v3281 = vmul.f32 %v3280, 1.442695
        %v3282 = vpow.pop %v3281
        %v3283 = vsel %vm1473, %v3282, 0.0
        %3284 = vadd.xlane.f32.xlu0 %v3283
        %v3285 = vpop.xlane.xlu0 %3284
        %v3286 = vrcp.pop %v3285
        %v3287 = vmul.f32 %v3282, %v3286
        %v3288 = vpack.c.bf16 %v3287, %v3287
        %3289 = vrot.lane.b32.xlu0 %v3117, 56
        %v3290 = vpop.permute.xlu0 %3289
        %v3292 = vsel %vm1473, %v3288, 0
        %v3295 = vsel %vm1217, %v3290, 0
        %3297 = vmatprep.subr.bf16.mxu0 0
        %3298 = vmatpush1.bf16.msra.mxu0 %v3295
        %3299 = vmatprep.subr.bf16.mxu0 0
        %3300 = vmatpush1.bf16.msra.mxu0 0
        %3301 = vmatprep.subr.bf16.mxu0 0
        %3302 = vmatpush1.bf16.msra.mxu0 0
        %3303 = vmatprep.subr.bf16.mxu0 0
        %3304 = vmatpush1.bf16.msra.mxu0 0
        %3305 = vmatprep.subr.bf16.mxu0 0
        %3306 = vmatpush1.bf16.msra.mxu0 0
        %3307 = vmatprep.subr.bf16.mxu0 0
        %3308 = vmatpush1.bf16.msra.mxu0 0
        %3309 = vmatprep.subr.bf16.mxu0 0
        %3310 = vmatpush1.bf16.msra.mxu0 0
        %3311 = vmatprep.subr.bf16.mxu0 0
        %3312 = vmatpush1.bf16.msra.mxu0 0
        %3313 = vmatprep.subr.bf16.mxu0 0
        %3314 = vmatpush1.bf16.msra.mxu0 0
        %3315 = vmatprep.subr.bf16.mxu0 0
        %3316 = vmatpush1.bf16.msra.mxu0 0
        %3317 = vmatprep.subr.bf16.mxu0 0
        %3318 = vmatpush1.bf16.msra.mxu0 0
        %3319 = vmatprep.subr.bf16.mxu0 0
        %3320 = vmatpush1.bf16.msra.mxu0 0
        %3321 = vmatprep.subr.bf16.mxu0 0
        %3322 = vmatpush1.bf16.msra.mxu0 0
        %3323 = vmatprep.subr.bf16.mxu0 0
        %3324 = vmatpush1.bf16.msra.mxu0 0
        %3325 = vmatprep.subr.bf16.mxu0 0
        %3326 = vmatpush1.bf16.msra.mxu0 0
        %3327 = vmatprep.subr.bf16.mxu0 0
        %3328 = vmatpush1.bf16.msra.mxu0 0
        %3329 = vmatprep.mubr.bf16.mxu0 0
        %3330 = vmatmul.mubr.bf16.gmra.mrb[0].mxu0 %v3292
        %v3331 = vpop.f32.mrb[0].mxu0
        %v3332 = vadd.f32 0.0, %v3331
        %v3333 = vpop.f32.mrb[0].mxu0
        %v3334 = vpop.f32.mrb[0].mxu0
        %v3335 = vpop.f32.mrb[0].mxu0
        %3336 = vdwg.mxu0
        %3337 = vrot.lane.b32.xlu0 %v3117, 112
        %v3338 = vpop.permute.xlu0 %3337
        %3339 = vrot.lane.b32.xlu0 %v3117, 80
        %v3340 = vpop.permute.xlu0 %3339
        %v3342 = vsel %vm1473, %v3338, 0
        %v3345 = vsel %vm1473, %v3340, 0
        %3347 = vmatprep.subr.bf16.mxu0 0
        %3348 = vmatpush1.bf16.xpose.msra.mxu0 %v3345
        %3349 = vmatprep.subr.bf16.mxu0 0
        %3350 = vmatpush1.bf16.xpose.msra.mxu0 0
        %3351 = vmatprep.subr.bf16.mxu0 0
        %3352 = vmatpush1.bf16.xpose.msra.mxu0 0
        %3353 = vmatprep.subr.bf16.mxu0 0
        %3354 = vmatpush1.bf16.xpose.msra.mxu0 0
        %3355 = vmatprep.subr.bf16.mxu0 0
        %3356 = vmatpush1.bf16.xpose.msra.mxu0 0
        %3357 = vmatprep.subr.bf16.mxu0 0
        %3358 = vmatpush1.bf16.xpose.msra.mxu0 0
        %3359 = vmatprep.subr.bf16.mxu0 0
        %3360 = vmatpush1.bf16.xpose.msra.mxu0 0
        %3361 = vmatprep.subr.bf16.mxu0 0
        %3362 = vmatpush1.bf16.xpose.msra.mxu0 0
        %3363 = vmatprep.subr.bf16.mxu0 0
        %3364 = vmatpush1.bf16.xpose.msra.mxu0 0
        %3365 = vmatprep.subr.bf16.mxu0 0
        %3366 = vmatpush1.bf16.xpose.msra.mxu0 0
        %3367 = vmatprep.subr.bf16.mxu0 0
        %3368 = vmatpush1.bf16.xpose.msra.mxu0 0
        %3369 = vmatprep.subr.bf16.mxu0 0
        %3370 = vmatpush1.bf16.xpose.msra.mxu0 0
        %3371 = vmatprep.subr.bf16.mxu0 0
        %3372 = vmatpush1.bf16.xpose.msra.mxu0 0
        %3373 = vmatprep.subr.bf16.mxu0 0
        %3374 = vmatpush1.bf16.xpose.msra.mxu0 0
        %3375 = vmatprep.subr.bf16.mxu0 0
        %3376 = vmatpush1.bf16.xpose.msra.mxu0 0
        %3377 = vmatprep.subr.bf16.mxu0 0
        %3378 = vmatpush1.bf16.xpose.msra.mxu0 0
        %3379 = vmatprep.mubr.bf16.mxu0 0
        %3380 = vmatmul.mubr.bf16.gmra.mrb[0].mxu0 %v3342
        %v3381 = vpop.f32.mrb[0].mxu0
        %v3382 = vadd.f32 %v1232, %v3381
        %v3383 = vpop.f32.mrb[0].mxu0
        %v3384 = vpop.f32.mrb[0].mxu0
        %v3385 = vpop.f32.mrb[0].mxu0
        %3386 = vdwg.mxu0
        %v3387 = vsel %vm1473, %v3382, -inf
        %3388 = vmax.xlane.f32.xlu0 %v3387
        %v3389 = vpop.xlane.xlu0 %3388
        %v3390 = vsub.f32 %v3382, %v3389
        %v3391 = vmul.f32 %v3390, 1.442695
        %v3392 = vpow.pop %v3391
        %v3393 = vsel %vm1473, %v3392, 0.0
        %3394 = vadd.xlane.f32.xlu0 %v3393
        %v3395 = vpop.xlane.xlu0 %3394
        %v3396 = vrcp.pop %v3395
        %v3397 = vmul.f32 %v3392, %v3396
        %v3398 = vpack.c.bf16 %v3397, %v3397
        %3399 = vrot.lane.b32.xlu0 %v3117, 48
        %v3400 = vpop.permute.xlu0 %3399
        %v3402 = vsel %vm1473, %v3398, 0
        %v3405 = vsel %vm1217, %v3400, 0
        %3407 = vmatprep.subr.bf16.mxu0 0
        %3408 = vmatpush1.bf16.msra.mxu0 %v3405
        %3409 = vmatprep.subr.bf16.mxu0 0
        %3410 = vmatpush1.bf16.msra.mxu0 0
        %3411 = vmatprep.subr.bf16.mxu0 0
        %3412 = vmatpush1.bf16.msra.mxu0 0
        %3413 = vmatprep.subr.bf16.mxu0 0
        %3414 = vmatpush1.bf16.msra.mxu0 0
        %3415 = vmatprep.subr.bf16.mxu0 0
        %3416 = vmatpush1.bf16.msra.mxu0 0
        %3417 = vmatprep.subr.bf16.mxu0 0
        %3418 = vmatpush1.bf16.msra.mxu0 0
        %3419 = vmatprep.subr.bf16.mxu0 0
        %3420 = vmatpush1.bf16.msra.mxu0 0
        %3421 = vmatprep.subr.bf16.mxu0 0
        %3422 = vmatpush1.bf16.msra.mxu0 0
        %3423 = vmatprep.subr.bf16.mxu0 0
        %3424 = vmatpush1.bf16.msra.mxu0 0
        %3425 = vmatprep.subr.bf16.mxu0 0
        %3426 = vmatpush1.bf16.msra.mxu0 0
        %3427 = vmatprep.subr.bf16.mxu0 0
        %3428 = vmatpush1.bf16.msra.mxu0 0
        %3429 = vmatprep.subr.bf16.mxu0 0
        %3430 = vmatpush1.bf16.msra.mxu0 0
        %3431 = vmatprep.subr.bf16.mxu0 0
        %3432 = vmatpush1.bf16.msra.mxu0 0
        %3433 = vmatprep.subr.bf16.mxu0 0
        %3434 = vmatpush1.bf16.msra.mxu0 0
        %3435 = vmatprep.subr.bf16.mxu0 0
        %3436 = vmatpush1.bf16.msra.mxu0 0
        %3437 = vmatprep.subr.bf16.mxu0 0
        %3438 = vmatpush1.bf16.msra.mxu0 0
        %3439 = vmatprep.mubr.bf16.mxu0 0
        %3440 = vmatmul.mubr.bf16.gmra.mrb[0].mxu0 %v3402
        %v3441 = vpop.f32.mrb[0].mxu0
        %v3442 = vadd.f32 0.0, %v3441
        %v3443 = vpop.f32.mrb[0].mxu0
        %v3444 = vpop.f32.mrb[0].mxu0
        %v3445 = vpop.f32.mrb[0].mxu0
        %3446 = vdwg.mxu0
        %3447 = vrot.lane.b32.xlu0 %v3117, 104
        %v3448 = vpop.permute.xlu0 %3447
        %3449 = vrot.lane.b32.xlu0 %v3117, 72
        %v3450 = vpop.permute.xlu0 %3449
        %v3452 = vsel %vm1473, %v3448, 0
        %v3455 = vsel %vm1473, %v3450, 0
        %3457 = vmatprep.subr.bf16.mxu0 0
        %3458 = vmatpush1.bf16.xpose.msra.mxu0 %v3455
        %3459 = vmatprep.subr.bf16.mxu0 0
        %3460 = vmatpush1.bf16.xpose.msra.mxu0 0
        %3461 = vmatprep.subr.bf16.mxu0 0
        %3462 = vmatpush1.bf16.xpose.msra.mxu0 0
        %3463 = vmatprep.subr.bf16.mxu0 0
        %3464 = vmatpush1.bf16.xpose.msra.mxu0 0
        %3465 = vmatprep.subr.bf16.mxu0 0
        %3466 = vmatpush1.bf16.xpose.msra.mxu0 0
        %3467 = vmatprep.subr.bf16.mxu0 0
        %3468 = vmatpush1.bf16.xpose.msra.mxu0 0
        %3469 = vmatprep.subr.bf16.mxu0 0
        %3470 = vmatpush1.bf16.xpose.msra.mxu0 0
        %3471 = vmatprep.subr.bf16.mxu0 0
        %3472 = vmatpush1.bf16.xpose.msra.mxu0 0
        %3473 = vmatprep.subr.bf16.mxu0 0
        %3474 = vmatpush1.bf16.xpose.msra.mxu0 0
        %3475 = vmatprep.subr.bf16.mxu0 0
        %3476 = vmatpush1.bf16.xpose.msra.mxu0 0
        %3477 = vmatprep.subr.bf16.mxu0 0
        %3478 = vmatpush1.bf16.xpose.msra.mxu0 0
        %3479 = vmatprep.subr.bf16.mxu0 0
        %3480 = vmatpush1.bf16.xpose.msra.mxu0 0
        %3481 = vmatprep.subr.bf16.mxu0 0
        %3482 = vmatpush1.bf16.xpose.msra.mxu0 0
        %3483 = vmatprep.subr.bf16.mxu0 0
        %3484 = vmatpush1.bf16.xpose.msra.mxu0 0
        %3485 = vmatprep.subr.bf16.mxu0 0
        %3486 = vmatpush1.bf16.xpose.msra.mxu0 0
        %3487 = vmatprep.subr.bf16.mxu0 0
        %3488 = vmatpush1.bf16.xpose.msra.mxu0 0
        %3489 = vmatprep.mubr.bf16.mxu0 0
        %3490 = vmatmul.mubr.bf16.gmra.mrb[0].mxu0 %v3452
        %v3491 = vpop.f32.mrb[0].mxu0
        %v3492 = vadd.f32 %v1232, %v3491
        %v3493 = vpop.f32.mrb[0].mxu0
        %v3494 = vpop.f32.mrb[0].mxu0
        %v3495 = vpop.f32.mrb[0].mxu0
        %3496 = vdwg.mxu0
        %v3497 = vsel %vm1473, %v3492, -inf
        %3498 = vmax.xlane.f32.xlu0 %v3497
        %v3499 = vpop.xlane.xlu0 %3498
        %v3500 = vsub.f32 %v3492, %v3499
        %v3501 = vmul.f32 %v3500, 1.442695
        %v3502 = vpow.pop %v3501
        %v3503 = vsel %vm1473, %v3502, 0.0
        %3504 = vadd.xlane.f32.xlu0 %v3503
        %v3505 = vpop.xlane.xlu0 %3504
        %v3506 = vrcp.pop %v3505
        %v3507 = vmul.f32 %v3502, %v3506
        %v3508 = vpack.c.bf16 %v3507, %v3507
        %3509 = vrot.lane.b32.xlu0 %v3117, 40
        %v3510 = vpop.permute.xlu0 %3509
        %v3512 = vsel %vm1473, %v3508, 0
        %v3515 = vsel %vm1217, %v3510, 0
        %3517 = vmatprep.subr.bf16.mxu0 0
        %3518 = vmatpush1.bf16.msra.mxu0 %v3515
        %3519 = vmatprep.subr.bf16.mxu0 0
        %3520 = vmatpush1.bf16.msra.mxu0 0
        %3521 = vmatprep.subr.bf16.mxu0 0
        %3522 = vmatpush1.bf16.msra.mxu0 0
        %3523 = vmatprep.subr.bf16.mxu0 0
        %3524 = vmatpush1.bf16.msra.mxu0 0
        %3525 = vmatprep.subr.bf16.mxu0 0
        %3526 = vmatpush1.bf16.msra.mxu0 0
        %3527 = vmatprep.subr.bf16.mxu0 0
        %3528 = vmatpush1.bf16.msra.mxu0 0
        %3529 = vmatprep.subr.bf16.mxu0 0
        %3530 = vmatpush1.bf16.msra.mxu0 0
        %3531 = vmatprep.subr.bf16.mxu0 0
        %3532 = vmatpush1.bf16.msra.mxu0 0
        %3533 = vmatprep.subr.bf16.mxu0 0
        %3534 = vmatpush1.bf16.msra.mxu0 0
        %3535 = vmatprep.subr.bf16.mxu0 0
        %3536 = vmatpush1.bf16.msra.mxu0 0
        %3537 = vmatprep.subr.bf16.mxu0 0
        %3538 = vmatpush1.bf16.msra.mxu0 0
        %3539 = vmatprep.subr.bf16.mxu0 0
        %3540 = vmatpush1.bf16.msra.mxu0 0
        %3541 = vmatprep.subr.bf16.mxu0 0
        %3542 = vmatpush1.bf16.msra.mxu0 0
        %3543 = vmatprep.subr.bf16.mxu0 0
        %3544 = vmatpush1.bf16.msra.mxu0 0
        %3545 = vmatprep.subr.bf16.mxu0 0
        %3546 = vmatpush1.bf16.msra.mxu0 0
        %3547 = vmatprep.subr.bf16.mxu0 0
        %3548 = vmatpush1.bf16.msra.mxu0 0
        %3549 = vmatprep.mubr.bf16.mxu0 0
        %3550 = vmatmul.mubr.bf16.gmra.mrb[0].mxu0 %v3512
        %v3551 = vpop.f32.mrb[0].mxu0
        %v3552 = vadd.f32 0.0, %v3551
        %v3553 = vpop.f32.mrb[0].mxu0
        %v3554 = vpop.f32.mrb[0].mxu0
        %v3555 = vpop.f32.mrb[0].mxu0
        %3556 = vdwg.mxu0
        %3558 = vrot.lane.b32.xlu0 %v3332, 8
        %v3559 = vpop.permute.xlu0 %3558
        %3562 = vrot.lane.b32.xlu0 %v3442, 16
        %v3563 = vpop.permute.xlu0 %3562
        %3566 = vrot.lane.b32.xlu0 %v3552, 24
        %v3567 = vpop.permute.xlu0 %3566
        %v3569 = vsel %vm1473, %v3222, %v3559
        %v3570 = vsel %vm1923, %v3569, %v3563
        %v3571 = vsel %vm1925, %v3570, %v3567
        %v3572 = vpack.c.bf16 %v3571, %v3571
        %v3574 = vlaneseq
        %v3575 = vshrl.u32 %v3574, 7
        %v3576 = vsub.s32 0, %v3575
        %v3577 = vrot.slane %v3116, %v3576
        %v3583 = vunpack.c.l.b16 %v3111
        %v3584 = vunpack.c.l.b16 %v3112
        %v3585 = vunpack.c.l.b16 %v3113
        %v3586 = vunpack.c.l.b16 %v3114
        %v3587 = vpack.c.b16 %v3584, %v3583
        %v3588 = vpack.c.b16 %v3586, %v3585
        %v3592 = vsel %vm1946, %v3572, 0
        %3594 = vmatprep.subr.bf16.mxu0 0
        %3595 = vmatpush1.bf16.msra.mxu0 %v3587
        %3596 = vmatprep.subr.bf16.mxu0 0
        %3597 = vmatpush1.bf16.msra.mxu0 %v3588
        %3598 = vmatprep.subr.bf16.mxu0 0
        %3599 = vmatpush1.bf16.msra.mxu0 0
        %3600 = vmatprep.subr.bf16.mxu0 0
        %3601 = vmatpush1.bf16.msra.mxu0 0
        %3602 = vmatprep.subr.bf16.mxu0 0
        %3603 = vmatpush1.bf16.msra.mxu0 0
        %3604 = vmatprep.subr.bf16.mxu0 0
        %3605 = vmatpush1.bf16.msra.mxu0 0
        %3606 = vmatprep.subr.bf16.mxu0 0
        %3607 = vmatpush1.bf16.msra.mxu0 0
        %3608 = vmatprep.subr.bf16.mxu0 0
        %3609 = vmatpush1.bf16.msra.mxu0 0
        %3610 = vmatprep.subr.bf16.mxu0 0
        %3611 = vmatpush1.bf16.msra.mxu0 0
        %3612 = vmatprep.subr.bf16.mxu0 0
        %3613 = vmatpush1.bf16.msra.mxu0 0
        %3614 = vmatprep.subr.bf16.mxu0 0
        %3615 = vmatpush1.bf16.msra.mxu0 0
        %3616 = vmatprep.subr.bf16.mxu0 0
        %3617 = vmatpush1.bf16.msra.mxu0 0
        %3618 = vmatprep.subr.bf16.mxu0 0
        %3619 = vmatpush1.bf16.msra.mxu0 0
        %3620 = vmatprep.subr.bf16.mxu0 0
        %3621 = vmatpush1.bf16.msra.mxu0 0
        %3622 = vmatprep.subr.bf16.mxu0 0
        %3623 = vmatpush1.bf16.msra.mxu0 0
        %3624 = vmatprep.subr.bf16.mxu0 0
        %3625 = vmatpush1.bf16.msra.mxu0 0
        %3626 = vmatprep.mubr.bf16.mxu0 0
        %3627 = vmatmul.mubr.bf16.gmra.mrb[0].mxu0 %v3592
        %v3628 = vpop.f32.mrb[0].mxu0
        %v3629 = vadd.f32 %v3577, %v3628
        %v3630 = vpop.f32.mrb[0].mxu0
        %v3631 = vpop.f32.mrb[0].mxu0
        %v3632 = vpop.f32.mrb[0].mxu0
        %3633 = vdwg.mxu0
        %v3634 = vadd.f32 %v2995, %v3629
        %s3635 = scalar_lea.vmem [#allocation29], 1
        %v3636 = vld [vmem:[%s3635] sm:$0x1]
        %s3637 = scalar_lea.vmem [#allocation30], 1
        %v3638 = vld [vmem:[%s3637] sm:$0x1]
        %3639 = vadd.xlane.f32.xlu0 %v3634
        %v3640 = vpop.xlane.xlu0 %3639
        %v3641 = vmul.f32 %v3640, 0.03125
        %v3642 = vsub.f32 %v3634, %v3641
        %v3643 = vmul.f32 %v3642, %v1237
        %v3644 = vmul.f32 %v3643, %v3643
        %3645 = vadd.xlane.f32.xlu0 %v3644
        %v3646 = vpop.xlane.xlu0 %3645
        %v3647 = vmul.f32 %v3646, 0.03125
        %v3648 = vadd.f32 %v3647, 1e-05
        %v3649 = vrsqrt.pop %v3648
        %v3650 = vmul.f32 %v3643, %v3649
        %v3652 = vlaneseq
        %v3653 = vshrl.u32 %v3652, 7
        %v3654 = vsub.s32 0, %v3653
        %v3655 = vrot.slane %v3636, %v3654
        %v3657 = vmul.f32 %v3650, %v3655
        %v3659 = vlaneseq
        %v3660 = vshrl.u32 %v3659, 7
        %v3661 = vsub.s32 0, %v3660
        %v3662 = vrot.slane %v3638, %v3661
        %v3664 = vadd.f32 %v3657, %v3662
        %s3665 = scalar_lea.vmem %s12, 64
        %v3666 = vld [vmem:[%s3665] sm:$0xf]
        %v3667 = vld [vmem:[%s3665 + $0x4] sm:$0xf]
        %v3668 = vld [vmem:[%s3665 + $0x8] sm:$0xf]
        %v3669 = vld [vmem:[%s3665 + $0xc] sm:$0xf]
        %v3670 = vld [vmem:[%s3665 + $0x10] sm:$0xf]
        %v3671 = vld [vmem:[%s3665 + $0x14] sm:$0xf]
        %v3672 = vld [vmem:[%s3665 + $0x18] sm:$0xf]
        %v3673 = vld [vmem:[%s3665 + $0x1c] sm:$0xf]
        %v3674 = vld [vmem:[%s3665 + $0x20] sm:$0xf]
        %v3675 = vld [vmem:[%s3665 + $0x24] sm:$0xf]
        %v3676 = vld [vmem:[%s3665 + $0x28] sm:$0xf]
        %v3677 = vld [vmem:[%s3665 + $0x2c] sm:$0xf]
        %v3678 = vld [vmem:[%s3665 + $0x30] sm:$0xf]
        %v3679 = vld [vmem:[%s3665 + $0x34] sm:$0xf]
        %v3680 = vld [vmem:[%s3665 + $0x38] sm:$0xf]
        %v3681 = vld [vmem:[%s3665 + $0x3c] sm:$0xf]
        %s3682 = scalar_lea.vmem [#allocation17], 1
        %v3683 = vld [vmem:[%s3682] sm:$0x1]
        %v3684 = vpack.c.bf16 %v3664, %v3664
        %v3686 = vlaneseq
        %v3687 = vshrl.u32 %v3686, 7
        %v3688 = vsub.s32 0, %v3687
        %v3689 = vrot.slane %v3683, %v3688
        %v3707 = vunpack.c.l.b16 %v3666
        %v3708 = vunpack.c.l.b16 %v3667
        %v3709 = vunpack.c.l.b16 %v3668
        %v3710 = vunpack.c.l.b16 %v3669
        %v3711 = vunpack.c.l.b16 %v3670
        %v3712 = vunpack.c.l.b16 %v3671
        %v3713 = vunpack.c.l.b16 %v3672
        %v3714 = vunpack.c.l.b16 %v3673
        %v3715 = vunpack.c.l.b16 %v3674
        %v3716 = vunpack.c.l.b16 %v3675
        %v3717 = vunpack.c.l.b16 %v3676
        %v3718 = vunpack.c.l.b16 %v3677
        %v3719 = vunpack.c.l.b16 %v3678
        %v3720 = vunpack.c.l.b16 %v3679
        %v3721 = vunpack.c.l.b16 %v3680
        %v3722 = vunpack.c.l.b16 %v3681
        %v3723 = vpack.c.b16 %v3708, %v3707
        %v3724 = vpack.c.b16 %v3710, %v3709
        %v3725 = vpack.c.b16 %v3712, %v3711
        %v3726 = vpack.c.b16 %v3714, %v3713
        %v3727 = vpack.c.b16 %v3716, %v3715
        %v3728 = vpack.c.b16 %v3718, %v3717
        %v3729 = vpack.c.b16 %v3720, %v3719
        %v3730 = vpack.c.b16 %v3722, %v3721
        %3739 = vmatprep.subr.bf16.mxu0 0
        %3740 = vmatpush1.bf16.msra.mxu0 %v3723
        %3741 = vmatprep.subr.bf16.mxu0 0
        %3742 = vmatpush1.bf16.msra.mxu0 %v3724
        %3743 = vmatprep.subr.bf16.mxu0 0
        %3744 = vmatpush1.bf16.msra.mxu0 %v3725
        %3745 = vmatprep.subr.bf16.mxu0 0
        %3746 = vmatpush1.bf16.msra.mxu0 %v3726
        %3747 = vmatprep.subr.bf16.mxu0 0
        %3748 = vmatpush1.bf16.msra.mxu0 %v3727
        %3749 = vmatprep.subr.bf16.mxu0 0
        %3750 = vmatpush1.bf16.msra.mxu0 %v3728
        %3751 = vmatprep.subr.bf16.mxu0 0
        %3752 = vmatpush1.bf16.msra.mxu0 %v3729
        %3753 = vmatprep.subr.bf16.mxu0 0
        %3754 = vmatpush1.bf16.msra.mxu0 %v3730
        %3755 = vmatprep.subr.bf16.mxu0 0
        %3756 = vmatpush1.bf16.msra.mxu0 0
        %3757 = vmatprep.subr.bf16.mxu0 0
        %3758 = vmatpush1.bf16.msra.mxu0 0
        %3759 = vmatprep.subr.bf16.mxu0 0
        %3760 = vmatpush1.bf16.msra.mxu0 0
        %3761 = vmatprep.subr.bf16.mxu0 0
        %3762 = vmatpush1.bf16.msra.mxu0 0
        %3763 = vmatprep.subr.bf16.mxu0 0
        %3764 = vmatpush1.bf16.msra.mxu0 0
        %3765 = vmatprep.subr.bf16.mxu0 0
        %3766 = vmatpush1.bf16.msra.mxu0 0
        %3767 = vmatprep.subr.bf16.mxu0 0
        %3768 = vmatpush1.bf16.msra.mxu0 0
        %3769 = vmatprep.subr.bf16.mxu0 0
        %3770 = vmatpush1.bf16.msra.mxu0 0
        %3771 = vmatprep.mubr.bf16.mxu0 0
        %3772 = vmatmul.mubr.bf16.gmra.mrb[0].mxu0 %v3684
        %v3773 = vpop.f32.mrb[0].mxu0
        %v3774 = vadd.f32 %v3689, %v3773
        %v3775 = vpop.f32.mrb[0].mxu0
        %v3776 = vpop.f32.mrb[0].mxu0
        %v3777 = vpop.f32.mrb[0].mxu0
        %3778 = vdwg.mxu0
        %s3779 = scalar_lea.vmem [#allocation18], 16
        %v3780 = vld [vmem:[%s3779] sm:$0xf]
        %v3781 = vld [vmem:[%s3779 + $0x4] sm:$0xf]
        %v3782 = vld [vmem:[%s3779 + $0x8] sm:$0xf]
        %v3783 = vld [vmem:[%s3779 + $0xc] sm:$0xf]
        %s3784 = scalar_lea.vmem %s15, 1
        %v3785 = vld [vmem:[%s3784] sm:$0x1]
        %v3787 = vlaneseq
        %v3788 = vshrl.u32 %v3787, 7
        %v3789 = vsub.s32 0, %v3788
        %v3790 = vrot.slane %v3785, %v3789
        %v3796 = vunpack.c.l.b16 %v3780
        %v3797 = vunpack.c.l.b16 %v3781
        %v3798 = vunpack.c.l.b16 %v3782
        %v3799 = vunpack.c.l.b16 %v3783
        %v3800 = vpack.c.b16 %v3797, %v3796
        %v3801 = vpack.c.b16 %v3799, %v3798
        %3804 = vmatprep.subr.bf16.mxu0 0
        %3805 = vmatpush1.bf16.msra.mxu0 %v3800
        %3806 = vmatprep.subr.bf16.mxu0 0
        %3807 = vmatpush1.bf16.msra.mxu0 %v3801
        %3808 = vmatprep.subr.bf16.mxu0 0
        %3809 = vmatpush1.bf16.msra.mxu0 0
        %3810 = vmatprep.subr.bf16.mxu0 0
        %3811 = vmatpush1.bf16.msra.mxu0 0
        %3812 = vmatprep.subr.bf16.mxu0 0
        %3813 = vmatpush1.bf16.msra.mxu0 0
        %3814 = vmatprep.subr.bf16.mxu0 0
        %3815 = vmatpush1.bf16.msra.mxu0 0
        %3816 = vmatprep.subr.bf16.mxu0 0
        %3817 = vmatpush1.bf16.msra.mxu0 0
        %3818 = vmatprep.subr.bf16.mxu0 0
        %3819 = vmatpush1.bf16.msra.mxu0 0
        %3820 = vmatprep.subr.bf16.mxu0 0
        %3821 = vmatpush1.bf16.msra.mxu0 0
        %3822 = vmatprep.subr.bf16.mxu0 0
        %3823 = vmatpush1.bf16.msra.mxu0 0
        %3824 = vmatprep.subr.bf16.mxu0 0
        %3825 = vmatpush1.bf16.msra.mxu0 0
        %3826 = vmatprep.subr.bf16.mxu0 0
        %3827 = vmatpush1.bf16.msra.mxu0 0
        %3828 = vmatprep.subr.bf16.mxu0 0
        %3829 = vmatpush1.bf16.msra.mxu0 0
        %3830 = vmatprep.subr.bf16.mxu0 0
        %3831 = vmatpush1.bf16.msra.mxu0 0
        %3832 = vmatprep.subr.bf16.mxu0 0
        %3833 = vmatpush1.bf16.msra.mxu0 0
        %3834 = vmatprep.subr.bf16.mxu0 0
        %3835 = vmatpush1.bf16.msra.mxu0 0
        %3836 = vmatprep.mubr.bf16.mxu0 0
        %3837 = vmatmul.mubr.bf16.gmra.mrb[0].mxu0 %v2156
        %v3838 = vpop.f32.mrb[0].mxu0
        %v3839 = vadd.f32 %v3790, %v3838
        %v3840 = vpop.f32.mrb[0].mxu0
        %v3841 = vpop.f32.mrb[0].mxu0
        %v3842 = vadd.f32 %v3790, %v3841
        %v3843 = vpop.f32.mrb[0].mxu0
        %3844 = vdwg.mxu0
        %s3845 = scalar_lea.vmem [#allocation20], 16
        %v3846 = vld [vmem:[%s3845] sm:$0xf]
        %v3847 = vld [vmem:[%s3845 + $0x4] sm:$0xf]
        %v3848 = vld [vmem:[%s3845 + $0x8] sm:$0xf]
        %v3849 = vld [vmem:[%s3845 + $0xc] sm:$0xf]
        %s3850 = scalar_lea.vmem [#allocation21], 1
        %v3851 = vld [vmem:[%s3850] sm:$0x1]
        %v3852 = vpack.c.bf16 %v3774, %v3774
        %v3853 = vpack.c.bf16 %v3842, %v3839
        %v3855 = vsel %vm1473, %v3852, 0
        %v3858 = vsel %vm1473, %v3853, 0
        %3860 = vmatprep.subr.bf16.mxu0 0
        %3861 = vmatpush1.bf16.xpose.msra.mxu0 %v3858
        %3862 = vmatprep.subr.bf16.mxu0 0
        %3863 = vmatpush1.bf16.xpose.msra.mxu0 0
        %3864 = vmatprep.subr.bf16.mxu0 0
        %3865 = vmatpush1.bf16.xpose.msra.mxu0 0
        %3866 = vmatprep.subr.bf16.mxu0 0
        %3867 = vmatpush1.bf16.xpose.msra.mxu0 0
        %3868 = vmatprep.subr.bf16.mxu0 0
        %3869 = vmatpush1.bf16.xpose.msra.mxu0 0
        %3870 = vmatprep.subr.bf16.mxu0 0
        %3871 = vmatpush1.bf16.xpose.msra.mxu0 0
        %3872 = vmatprep.subr.bf16.mxu0 0
        %3873 = vmatpush1.bf16.xpose.msra.mxu0 0
        %3874 = vmatprep.subr.bf16.mxu0 0
        %3875 = vmatpush1.bf16.xpose.msra.mxu0 0
        %3876 = vmatprep.subr.bf16.mxu0 0
        %3877 = vmatpush1.bf16.xpose.msra.mxu0 0
        %3878 = vmatprep.subr.bf16.mxu0 0
        %3879 = vmatpush1.bf16.xpose.msra.mxu0 0
        %3880 = vmatprep.subr.bf16.mxu0 0
        %3881 = vmatpush1.bf16.xpose.msra.mxu0 0
        %3882 = vmatprep.subr.bf16.mxu0 0
        %3883 = vmatpush1.bf16.xpose.msra.mxu0 0
        %3884 = vmatprep.subr.bf16.mxu0 0
        %3885 = vmatpush1.bf16.xpose.msra.mxu0 0
        %3886 = vmatprep.subr.bf16.mxu0 0
        %3887 = vmatpush1.bf16.xpose.msra.mxu0 0
        %3888 = vmatprep.subr.bf16.mxu0 0
        %3889 = vmatpush1.bf16.xpose.msra.mxu0 0
        %3890 = vmatprep.subr.bf16.mxu0 0
        %3891 = vmatpush1.bf16.xpose.msra.mxu0 0
        %3892 = vmatprep.mubr.bf16.mxu0 0
        %3893 = vmatmul.mubr.bf16.gmra.mrb[0].mxu0 %v3855
        %v3894 = vpop.f32.mrb[0].mxu0
        %v3895 = vadd.f32 %v1234, %v3894
        %v3896 = vpop.f32.mrb[0].mxu0
        %v3897 = vpop.f32.mrb[0].mxu0
        %v3898 = vpop.f32.mrb[0].mxu0
        %3899 = vdwg.mxu0
        %v3900 = vsel %vm1923, %v3895, -inf
        %3901 = vmax.xlane.f32.xlu0 %v3900
        %v3902 = vpop.xlane.xlu0 %3901
        %v3903 = vsub.f32 %v3895, %v3902
        %v3904 = vmul.f32 %v3903, 1.442695
        %v3905 = vpow.pop %v3904
        %v3906 = vsel %vm1923, %v3905, 0.0
        %3907 = vadd.xlane.f32.xlu0 %v3906
        %v3908 = vpop.xlane.xlu0 %3907
        %v3909 = vrcp.pop %v3908
        %v3910 = vmul.f32 %v3905, %v3909
        %v3911 = vpack.c.bf16 %v3910, %v3910
        %3913 = vrot.lane.b32.xlu0 %v3853, 96
        %v3914 = vpop.permute.xlu0 %3913
        %v3917 = vsel %vm1923, %v3911, 0
        %3919 = vmatprep.subr.bf16.mxu0 0
        %3920 = vmatpush1.bf16.msra.mxu0 %v3914
        %3921 = vmatprep.subr.bf16.mxu0 0
        %3922 = vmatpush1.bf16.msra.mxu0 0
        %3923 = vmatprep.subr.bf16.mxu0 0
        %3924 = vmatpush1.bf16.msra.mxu0 0
        %3925 = vmatprep.subr.bf16.mxu0 0
        %3926 = vmatpush1.bf16.msra.mxu0 0
        %3927 = vmatprep.subr.bf16.mxu0 0
        %3928 = vmatpush1.bf16.msra.mxu0 0
        %3929 = vmatprep.subr.bf16.mxu0 0
        %3930 = vmatpush1.bf16.msra.mxu0 0
        %3931 = vmatprep.subr.bf16.mxu0 0
        %3932 = vmatpush1.bf16.msra.mxu0 0
        %3933 = vmatprep.subr.bf16.mxu0 0
        %3934 = vmatpush1.bf16.msra.mxu0 0
        %3935 = vmatprep.subr.bf16.mxu0 0
        %3936 = vmatpush1.bf16.msra.mxu0 0
        %3937 = vmatprep.subr.bf16.mxu0 0
        %3938 = vmatpush1.bf16.msra.mxu0 0
        %3939 = vmatprep.subr.bf16.mxu0 0
        %3940 = vmatpush1.bf16.msra.mxu0 0
        %3941 = vmatprep.subr.bf16.mxu0 0
        %3942 = vmatpush1.bf16.msra.mxu0 0
        %3943 = vmatprep.subr.bf16.mxu0 0
        %3944 = vmatpush1.bf16.msra.mxu0 0
        %3945 = vmatprep.subr.bf16.mxu0 0
        %3946 = vmatpush1.bf16.msra.mxu0 0
        %3947 = vmatprep.subr.bf16.mxu0 0
        %3948 = vmatpush1.bf16.msra.mxu0 0
        %3949 = vmatprep.subr.bf16.mxu0 0
        %3950 = vmatpush1.bf16.msra.mxu0 0
        %3951 = vmatprep.mubr.bf16.mxu0 0
        %3952 = vmatmul.mubr.bf16.gmra.mrb[0].mxu0 %v3917
        %v3953 = vpop.f32.mrb[0].mxu0
        %v3954 = vadd.f32 0.0, %v3953
        %v3955 = vpop.f32.mrb[0].mxu0
        %v3956 = vpop.f32.mrb[0].mxu0
        %v3957 = vpop.f32.mrb[0].mxu0
        %3958 = vdwg.mxu0
        %3960 = vrot.lane.b32.xlu0 %v3852, 120
        %v3961 = vpop.permute.xlu0 %3960
        %3962 = vrot.lane.b32.xlu0 %v3853, 120
        %v3963 = vpop.permute.xlu0 %3962
        %v3965 = vsel %vm1473, %v3961, 0
        %v3968 = vsel %vm1473, %v3963, 0
        %3970 = vmatprep.subr.bf16.mxu0 0
        %3971 = vmatpush1.bf16.xpose.msra.mxu0 %v3968
        %3972 = vmatprep.subr.bf16.mxu0 0
        %3973 = vmatpush1.bf16.xpose.msra.mxu0 0
        %3974 = vmatprep.subr.bf16.mxu0 0
        %3975 = vmatpush1.bf16.xpose.msra.mxu0 0
        %3976 = vmatprep.subr.bf16.mxu0 0
        %3977 = vmatpush1.bf16.xpose.msra.mxu0 0
        %3978 = vmatprep.subr.bf16.mxu0 0
        %3979 = vmatpush1.bf16.xpose.msra.mxu0 0
        %3980 = vmatprep.subr.bf16.mxu0 0
        %3981 = vmatpush1.bf16.xpose.msra.mxu0 0
        %3982 = vmatprep.subr.bf16.mxu0 0
        %3983 = vmatpush1.bf16.xpose.msra.mxu0 0
        %3984 = vmatprep.subr.bf16.mxu0 0
        %3985 = vmatpush1.bf16.xpose.msra.mxu0 0
        %3986 = vmatprep.subr.bf16.mxu0 0
        %3987 = vmatpush1.bf16.xpose.msra.mxu0 0
        %3988 = vmatprep.subr.bf16.mxu0 0
        %3989 = vmatpush1.bf16.xpose.msra.mxu0 0
        %3990 = vmatprep.subr.bf16.mxu0 0
        %3991 = vmatpush1.bf16.xpose.msra.mxu0 0
        %3992 = vmatprep.subr.bf16.mxu0 0
        %3993 = vmatpush1.bf16.xpose.msra.mxu0 0
        %3994 = vmatprep.subr.bf16.mxu0 0
        %3995 = vmatpush1.bf16.xpose.msra.mxu0 0
        %3996 = vmatprep.subr.bf16.mxu0 0
        %3997 = vmatpush1.bf16.xpose.msra.mxu0 0
        %3998 = vmatprep.subr.bf16.mxu0 0
        %3999 = vmatpush1.bf16.xpose.msra.mxu0 0
        %4000 = vmatprep.subr.bf16.mxu0 0
        %4001 = vmatpush1.bf16.xpose.msra.mxu0 0
        %4002 = vmatprep.mubr.bf16.mxu0 0
        %4003 = vmatmul.mubr.bf16.gmra.mrb[0].mxu0 %v3965
        %v4004 = vpop.f32.mrb[0].mxu0
        %v4005 = vadd.f32 %v1234, %v4004
        %v4006 = vpop.f32.mrb[0].mxu0
        %v4007 = vpop.f32.mrb[0].mxu0
        %v4008 = vpop.f32.mrb[0].mxu0
        %4009 = vdwg.mxu0
        %v4010 = vsel %vm1923, %v4005, -inf
        %4011 = vmax.xlane.f32.xlu0 %v4010
        %v4012 = vpop.xlane.xlu0 %4011
        %v4013 = vsub.f32 %v4005, %v4012
        %v4014 = vmul.f32 %v4013, 1.442695
        %v4015 = vpow.pop %v4014
        %v4016 = vsel %vm1923, %v4015, 0.0
        %4017 = vadd.xlane.f32.xlu0 %v4016
        %v4018 = vpop.xlane.xlu0 %4017
        %v4019 = vrcp.pop %v4018
        %v4020 = vmul.f32 %v4015, %v4019
        %v4021 = vpack.c.bf16 %v4020, %v4020
        %4022 = vrot.lane.b32.xlu0 %v3853, 88
        %v4023 = vpop.permute.xlu0 %4022
        %v4026 = vsel %vm1923, %v4021, 0
        %4028 = vmatprep.subr.bf16.mxu0 0
        %4029 = vmatpush1.bf16.msra.mxu0 %v4023
        %4030 = vmatprep.subr.bf16.mxu0 0
        %4031 = vmatpush1.bf16.msra.mxu0 0
        %4032 = vmatprep.subr.bf16.mxu0 0
        %4033 = vmatpush1.bf16.msra.mxu0 0
        %4034 = vmatprep.subr.bf16.mxu0 0
        %4035 = vmatpush1.bf16.msra.mxu0 0
        %4036 = vmatprep.subr.bf16.mxu0 0
        %4037 = vmatpush1.bf16.msra.mxu0 0
        %4038 = vmatprep.subr.bf16.mxu0 0
        %4039 = vmatpush1.bf16.msra.mxu0 0
        %4040 = vmatprep.subr.bf16.mxu0 0
        %4041 = vmatpush1.bf16.msra.mxu0 0
        %4042 = vmatprep.subr.bf16.mxu0 0
        %4043 = vmatpush1.bf16.msra.mxu0 0
        %4044 = vmatprep.subr.bf16.mxu0 0
        %4045 = vmatpush1.bf16.msra.mxu0 0
        %4046 = vmatprep.subr.bf16.mxu0 0
        %4047 = vmatpush1.bf16.msra.mxu0 0
        %4048 = vmatprep.subr.bf16.mxu0 0
        %4049 = vmatpush1.bf16.msra.mxu0 0
        %4050 = vmatprep.subr.bf16.mxu0 0
        %4051 = vmatpush1.bf16.msra.mxu0 0
        %4052 = vmatprep.subr.bf16.mxu0 0
        %4053 = vmatpush1.bf16.msra.mxu0 0
        %4054 = vmatprep.subr.bf16.mxu0 0
        %4055 = vmatpush1.bf16.msra.mxu0 0
        %4056 = vmatprep.subr.bf16.mxu0 0
        %4057 = vmatpush1.bf16.msra.mxu0 0
        %4058 = vmatprep.subr.bf16.mxu0 0
        %4059 = vmatpush1.bf16.msra.mxu0 0
        %4060 = vmatprep.mubr.bf16.mxu0 0
        %4061 = vmatmul.mubr.bf16.gmra.mrb[0].mxu0 %v4026
        %v4062 = vpop.f32.mrb[0].mxu0
        %v4063 = vadd.f32 0.0, %v4062
        %v4064 = vpop.f32.mrb[0].mxu0
        %v4065 = vpop.f32.mrb[0].mxu0
        %v4066 = vpop.f32.mrb[0].mxu0
        %4067 = vdwg.mxu0
        %4068 = vrot.lane.b32.xlu0 %v3852, 112
        %v4069 = vpop.permute.xlu0 %4068
        %4070 = vrot.lane.b32.xlu0 %v3853, 112
        %v4071 = vpop.permute.xlu0 %4070
        %v4073 = vsel %vm1473, %v4069, 0
        %v4076 = vsel %vm1473, %v4071, 0
        %4078 = vmatprep.subr.bf16.mxu0 0
        %4079 = vmatpush1.bf16.xpose.msra.mxu0 %v4076
        %4080 = vmatprep.subr.bf16.mxu0 0
        %4081 = vmatpush1.bf16.xpose.msra.mxu0 0
        %4082 = vmatprep.subr.bf16.mxu0 0
        %4083 = vmatpush1.bf16.xpose.msra.mxu0 0
        %4084 = vmatprep.subr.bf16.mxu0 0
        %4085 = vmatpush1.bf16.xpose.msra.mxu0 0
        %4086 = vmatprep.subr.bf16.mxu0 0
        %4087 = vmatpush1.bf16.xpose.msra.mxu0 0
        %4088 = vmatprep.subr.bf16.mxu0 0
        %4089 = vmatpush1.bf16.xpose.msra.mxu0 0
        %4090 = vmatprep.subr.bf16.mxu0 0
        %4091 = vmatpush1.bf16.xpose.msra.mxu0 0
        %4092 = vmatprep.subr.bf16.mxu0 0
        %4093 = vmatpush1.bf16.xpose.msra.mxu0 0
        %4094 = vmatprep.subr.bf16.mxu0 0
        %4095 = vmatpush1.bf16.xpose.msra.mxu0 0
        %4096 = vmatprep.subr.bf16.mxu0 0
        %4097 = vmatpush1.bf16.xpose.msra.mxu0 0
        %4098 = vmatprep.subr.bf16.mxu0 0
        %4099 = vmatpush1.bf16.xpose.msra.mxu0 0
        %4100 = vmatprep.subr.bf16.mxu0 0
        %4101 = vmatpush1.bf16.xpose.msra.mxu0 0
        %4102 = vmatprep.subr.bf16.mxu0 0
        %4103 = vmatpush1.bf16.xpose.msra.mxu0 0
        %4104 = vmatprep.subr.bf16.mxu0 0
        %4105 = vmatpush1.bf16.xpose.msra.mxu0 0
        %4106 = vmatprep.subr.bf16.mxu0 0
        %4107 = vmatpush1.bf16.xpose.msra.mxu0 0
        %4108 = vmatprep.subr.bf16.mxu0 0
        %4109 = vmatpush1.bf16.xpose.msra.mxu0 0
        %4110 = vmatprep.mubr.bf16.mxu0 0
        %4111 = vmatmul.mubr.bf16.gmra.mrb[0].mxu0 %v4073
        %v4112 = vpop.f32.mrb[0].mxu0
        %v4113 = vadd.f32 %v1234, %v4112
        %v4114 = vpop.f32.mrb[0].mxu0
        %v4115 = vpop.f32.mrb[0].mxu0
        %v4116 = vpop.f32.mrb[0].mxu0
        %4117 = vdwg.mxu0
        %v4118 = vsel %vm1923, %v4113, -inf
        %4119 = vmax.xlane.f32.xlu0 %v4118
        %v4120 = vpop.xlane.xlu0 %4119
        %v4121 = vsub.f32 %v4113, %v4120
        %v4122 = vmul.f32 %v4121, 1.442695
        %v4123 = vpow.pop %v4122
        %v4124 = vsel %vm1923, %v4123, 0.0
        %4125 = vadd.xlane.f32.xlu0 %v4124
        %v4126 = vpop.xlane.xlu0 %4125
        %v4127 = vrcp.pop %v4126
        %v4128 = vmul.f32 %v4123, %v4127
        %v4129 = vpack.c.bf16 %v4128, %v4128
        %4130 = vrot.lane.b32.xlu0 %v3853, 80
        %v4131 = vpop.permute.xlu0 %4130
        %v4134 = vsel %vm1923, %v4129, 0
        %4136 = vmatprep.subr.bf16.mxu0 0
        %4137 = vmatpush1.bf16.msra.mxu0 %v4131
        %4138 = vmatprep.subr.bf16.mxu0 0
        %4139 = vmatpush1.bf16.msra.mxu0 0
        %4140 = vmatprep.subr.bf16.mxu0 0
        %4141 = vmatpush1.bf16.msra.mxu0 0
        %4142 = vmatprep.subr.bf16.mxu0 0
        %4143 = vmatpush1.bf16.msra.mxu0 0
        %4144 = vmatprep.subr.bf16.mxu0 0
        %4145 = vmatpush1.bf16.msra.mxu0 0
        %4146 = vmatprep.subr.bf16.mxu0 0
        %4147 = vmatpush1.bf16.msra.mxu0 0
        %4148 = vmatprep.subr.bf16.mxu0 0
        %4149 = vmatpush1.bf16.msra.mxu0 0
        %4150 = vmatprep.subr.bf16.mxu0 0
        %4151 = vmatpush1.bf16.msra.mxu0 0
        %4152 = vmatprep.subr.bf16.mxu0 0
        %4153 = vmatpush1.bf16.msra.mxu0 0
        %4154 = vmatprep.subr.bf16.mxu0 0
        %4155 = vmatpush1.bf16.msra.mxu0 0
        %4156 = vmatprep.subr.bf16.mxu0 0
        %4157 = vmatpush1.bf16.msra.mxu0 0
        %4158 = vmatprep.subr.bf16.mxu0 0
        %4159 = vmatpush1.bf16.msra.mxu0 0
        %4160 = vmatprep.subr.bf16.mxu0 0
        %4161 = vmatpush1.bf16.msra.mxu0 0
        %4162 = vmatprep.subr.bf16.mxu0 0
        %4163 = vmatpush1.bf16.msra.mxu0 0
        %4164 = vmatprep.subr.bf16.mxu0 0
        %4165 = vmatpush1.bf16.msra.mxu0 0
        %4166 = vmatprep.subr.bf16.mxu0 0
        %4167 = vmatpush1.bf16.msra.mxu0 0
        %4168 = vmatprep.mubr.bf16.mxu0 0
        %4169 = vmatmul.mubr.bf16.gmra.mrb[0].mxu0 %v4134
        %v4170 = vpop.f32.mrb[0].mxu0
        %v4171 = vadd.f32 0.0, %v4170
        %v4172 = vpop.f32.mrb[0].mxu0
        %v4173 = vpop.f32.mrb[0].mxu0
        %v4174 = vpop.f32.mrb[0].mxu0
        %4175 = vdwg.mxu0
        %4176 = vrot.lane.b32.xlu0 %v3852, 104
        %v4177 = vpop.permute.xlu0 %4176
        %4178 = vrot.lane.b32.xlu0 %v3853, 104
        %v4179 = vpop.permute.xlu0 %4178
        %v4181 = vsel %vm1473, %v4177, 0
        %v4184 = vsel %vm1473, %v4179, 0
        %4186 = vmatprep.subr.bf16.mxu0 0
        %4187 = vmatpush1.bf16.xpose.msra.mxu0 %v4184
        %4188 = vmatprep.subr.bf16.mxu0 0
        %4189 = vmatpush1.bf16.xpose.msra.mxu0 0
        %4190 = vmatprep.subr.bf16.mxu0 0
        %4191 = vmatpush1.bf16.xpose.msra.mxu0 0
        %4192 = vmatprep.subr.bf16.mxu0 0
        %4193 = vmatpush1.bf16.xpose.msra.mxu0 0
        %4194 = vmatprep.subr.bf16.mxu0 0
        %4195 = vmatpush1.bf16.xpose.msra.mxu0 0
        %4196 = vmatprep.subr.bf16.mxu0 0
        %4197 = vmatpush1.bf16.xpose.msra.mxu0 0
        %4198 = vmatprep.subr.bf16.mxu0 0
        %4199 = vmatpush1.bf16.xpose.msra.mxu0 0
        %4200 = vmatprep.subr.bf16.mxu0 0
        %4201 = vmatpush1.bf16.xpose.msra.mxu0 0
        %4202 = vmatprep.subr.bf16.mxu0 0
        %4203 = vmatpush1.bf16.xpose.msra.mxu0 0
        %4204 = vmatprep.subr.bf16.mxu0 0
        %4205 = vmatpush1.bf16.xpose.msra.mxu0 0
        %4206 = vmatprep.subr.bf16.mxu0 0
        %4207 = vmatpush1.bf16.xpose.msra.mxu0 0
        %4208 = vmatprep.subr.bf16.mxu0 0
        %4209 = vmatpush1.bf16.xpose.msra.mxu0 0
        %4210 = vmatprep.subr.bf16.mxu0 0
        %4211 = vmatpush1.bf16.xpose.msra.mxu0 0
        %4212 = vmatprep.subr.bf16.mxu0 0
        %4213 = vmatpush1.bf16.xpose.msra.mxu0 0
        %4214 = vmatprep.subr.bf16.mxu0 0
        %4215 = vmatpush1.bf16.xpose.msra.mxu0 0
        %4216 = vmatprep.subr.bf16.mxu0 0
        %4217 = vmatpush1.bf16.xpose.msra.mxu0 0
        %4218 = vmatprep.mubr.bf16.mxu0 0
        %4219 = vmatmul.mubr.bf16.gmra.mrb[0].mxu0 %v4181
        %v4220 = vpop.f32.mrb[0].mxu0
        %v4221 = vadd.f32 %v1234, %v4220
        %v4222 = vpop.f32.mrb[0].mxu0
        %v4223 = vpop.f32.mrb[0].mxu0
        %v4224 = vpop.f32.mrb[0].mxu0
        %4225 = vdwg.mxu0
        %v4226 = vsel %vm1923, %v4221, -inf
        %4227 = vmax.xlane.f32.xlu0 %v4226
        %v4228 = vpop.xlane.xlu0 %4227
        %v4229 = vsub.f32 %v4221, %v4228
        %v4230 = vmul.f32 %v4229, 1.442695
        %v4231 = vpow.pop %v4230
        %v4232 = vsel %vm1923, %v4231, 0.0
        %4233 = vadd.xlane.f32.xlu0 %v4232
        %v4234 = vpop.xlane.xlu0 %4233
        %v4235 = vrcp.pop %v4234
        %v4236 = vmul.f32 %v4231, %v4235
        %v4237 = vpack.c.bf16 %v4236, %v4236
        %4238 = vrot.lane.b32.xlu0 %v3853, 72
        %v4239 = vpop.permute.xlu0 %4238
        %v4242 = vsel %vm1923, %v4237, 0
        %4244 = vmatprep.subr.bf16.mxu0 0
        %4245 = vmatpush1.bf16.msra.mxu0 %v4239
        %4246 = vmatprep.subr.bf16.mxu0 0
        %4247 = vmatpush1.bf16.msra.mxu0 0
        %4248 = vmatprep.subr.bf16.mxu0 0
        %4249 = vmatpush1.bf16.msra.mxu0 0
        %4250 = vmatprep.subr.bf16.mxu0 0
        %4251 = vmatpush1.bf16.msra.mxu0 0
        %4252 = vmatprep.subr.bf16.mxu0 0
        %4253 = vmatpush1.bf16.msra.mxu0 0
        %4254 = vmatprep.subr.bf16.mxu0 0
        %4255 = vmatpush1.bf16.msra.mxu0 0
        %4256 = vmatprep.subr.bf16.mxu0 0
        %4257 = vmatpush1.bf16.msra.mxu0 0
        %4258 = vmatprep.subr.bf16.mxu0 0
        %4259 = vmatpush1.bf16.msra.mxu0 0
        %4260 = vmatprep.subr.bf16.mxu0 0
        %4261 = vmatpush1.bf16.msra.mxu0 0
        %4262 = vmatprep.subr.bf16.mxu0 0
        %4263 = vmatpush1.bf16.msra.mxu0 0
        %4264 = vmatprep.subr.bf16.mxu0 0
        %4265 = vmatpush1.bf16.msra.mxu0 0
        %4266 = vmatprep.subr.bf16.mxu0 0
        %4267 = vmatpush1.bf16.msra.mxu0 0
        %4268 = vmatprep.subr.bf16.mxu0 0
        %4269 = vmatpush1.bf16.msra.mxu0 0
        %4270 = vmatprep.subr.bf16.mxu0 0
        %4271 = vmatpush1.bf16.msra.mxu0 0
        %4272 = vmatprep.subr.bf16.mxu0 0
        %4273 = vmatpush1.bf16.msra.mxu0 0
        %4274 = vmatprep.subr.bf16.mxu0 0
        %4275 = vmatpush1.bf16.msra.mxu0 0
        %4276 = vmatprep.mubr.bf16.mxu0 0
        %4277 = vmatmul.mubr.bf16.gmra.mrb[0].mxu0 %v4242
        %v4278 = vpop.f32.mrb[0].mxu0
        %v4279 = vadd.f32 0.0, %v4278
        %v4280 = vpop.f32.mrb[0].mxu0
        %v4281 = vpop.f32.mrb[0].mxu0
        %v4282 = vpop.f32.mrb[0].mxu0
        %4283 = vdwg.mxu0
        %4285 = vrot.lane.b32.xlu0 %v4063, 8
        %v4286 = vpop.permute.xlu0 %4285
        %4289 = vrot.lane.b32.xlu0 %v4171, 16
        %v4290 = vpop.permute.xlu0 %4289
        %4293 = vrot.lane.b32.xlu0 %v4279, 24
        %v4294 = vpop.permute.xlu0 %4293
        %v4296 = vsel %vm1473, %v3954, %v4286
        %v4297 = vsel %vm1923, %v4296, %v4290
        %v4298 = vsel %vm1925, %v4297, %v4294
        %v4299 = vpack.c.bf16 %v4298, %v4298
        %v4301 = vlaneseq
        %v4302 = vshrl.u32 %v4301, 7
        %v4303 = vsub.s32 0, %v4302
        %v4304 = vrot.slane %v3851, %v4303
        %v4310 = vunpack.c.l.b16 %v3846
        %v4311 = vunpack.c.l.b16 %v3847
        %v4312 = vunpack.c.l.b16 %v3848
        %v4313 = vunpack.c.l.b16 %v3849
        %v4314 = vpack.c.b16 %v4311, %v4310
        %v4315 = vpack.c.b16 %v4313, %v4312
        %v4319 = vsel %vm1946, %v4299, 0
        %4321 = vmatprep.subr.bf16.mxu0 0
        %4322 = vmatpush1.bf16.msra.mxu0 %v4314
        %4323 = vmatprep.subr.bf16.mxu0 0
        %4324 = vmatpush1.bf16.msra.mxu0 %v4315
        %4325 = vmatprep.subr.bf16.mxu0 0
        %4326 = vmatpush1.bf16.msra.mxu0 0
        %4327 = vmatprep.subr.bf16.mxu0 0
        %4328 = vmatpush1.bf16.msra.mxu0 0
        %4329 = vmatprep.subr.bf16.mxu0 0
        %4330 = vmatpush1.bf16.msra.mxu0 0
        %4331 = vmatprep.subr.bf16.mxu0 0
        %4332 = vmatpush1.bf16.msra.mxu0 0
        %4333 = vmatprep.subr.bf16.mxu0 0
        %4334 = vmatpush1.bf16.msra.mxu0 0
        %4335 = vmatprep.subr.bf16.mxu0 0
        %4336 = vmatpush1.bf16.msra.mxu0 0
        %4337 = vmatprep.subr.bf16.mxu0 0
        %4338 = vmatpush1.bf16.msra.mxu0 0
        %4339 = vmatprep.subr.bf16.mxu0 0
        %4340 = vmatpush1.bf16.msra.mxu0 0
        %4341 = vmatprep.subr.bf16.mxu0 0
        %4342 = vmatpush1.bf16.msra.mxu0 0
        %4343 = vmatprep.subr.bf16.mxu0 0
        %4344 = vmatpush1.bf16.msra.mxu0 0
        %4345 = vmatprep.subr.bf16.mxu0 0
        %4346 = vmatpush1.bf16.msra.mxu0 0
        %4347 = vmatprep.subr.bf16.mxu0 0
        %4348 = vmatpush1.bf16.msra.mxu0 0
        %4349 = vmatprep.subr.bf16.mxu0 0
        %4350 = vmatpush1.bf16.msra.mxu0 0
        %4351 = vmatprep.subr.bf16.mxu0 0
        %4352 = vmatpush1.bf16.msra.mxu0 0
        %4353 = vmatprep.mubr.bf16.mxu0 0
        %4354 = vmatmul.mubr.bf16.gmra.mrb[0].mxu0 %v4319
        %v4355 = vpop.f32.mrb[0].mxu0
        %v4356 = vadd.f32 %v4304, %v4355
        %v4357 = vpop.f32.mrb[0].mxu0
        %v4358 = vpop.f32.mrb[0].mxu0
        %v4359 = vpop.f32.mrb[0].mxu0
        %4360 = vdwg.mxu0
        %v4361 = vadd.f32 %v3664, %v4356
        %s4362 = scalar_lea.vmem [#allocation32], 1
        %v4363 = vld [vmem:[%s4362] sm:$0x1]
        %s4364 = scalar_lea.vmem [#allocation33], 1
        %v4365 = vld [vmem:[%s4364] sm:$0x1]
        %4366 = vadd.xlane.f32.xlu0 %v4361
        %v4367 = vpop.xlane.xlu0 %4366
        %v4368 = vmul.f32 %v4367, 0.03125
        %v4369 = vsub.f32 %v4361, %v4368
        %v4370 = vmul.f32 %v4369, %v1237
        %v4371 = vmul.f32 %v4370, %v4370
        %4372 = vadd.xlane.f32.xlu0 %v4371
        %v4373 = vpop.xlane.xlu0 %4372
        %v4374 = vmul.f32 %v4373, 0.03125
        %v4375 = vadd.f32 %v4374, 1e-05
        %v4376 = vrsqrt.pop %v4375
        %v4377 = vmul.f32 %v4370, %v4376
        %v4379 = vlaneseq
        %v4380 = vshrl.u32 %v4379, 7
        %v4381 = vsub.s32 0, %v4380
        %v4382 = vrot.slane %v4363, %v4381
        %v4384 = vmul.f32 %v4377, %v4382
        %v4386 = vlaneseq
        %v4387 = vshrl.u32 %v4386, 7
        %v4388 = vsub.s32 0, %v4387
        %v4389 = vrot.slane %v4365, %v4388
        %v4391 = vadd.f32 %v4384, %v4389
        %s4392 = scalar_lea.vmem [#allocation23], 64
        %v4393 = vld [vmem:[%s4392] sm:$0xf]
        %v4394 = vld [vmem:[%s4392 + $0x4] sm:$0xf]
        %v4395 = vld [vmem:[%s4392 + $0x8] sm:$0xf]
        %v4396 = vld [vmem:[%s4392 + $0xc] sm:$0xf]
        %v4397 = vld [vmem:[%s4392 + $0x10] sm:$0xf]
        %v4398 = vld [vmem:[%s4392 + $0x14] sm:$0xf]
        %v4399 = vld [vmem:[%s4392 + $0x18] sm:$0xf]
        %v4400 = vld [vmem:[%s4392 + $0x1c] sm:$0xf]
        %v4401 = vld [vmem:[%s4392 + $0x20] sm:$0xf]
        %v4402 = vld [vmem:[%s4392 + $0x24] sm:$0xf]
        %v4403 = vld [vmem:[%s4392 + $0x28] sm:$0xf]
        %v4404 = vld [vmem:[%s4392 + $0x2c] sm:$0xf]
        %v4405 = vld [vmem:[%s4392 + $0x30] sm:$0xf]
        %v4406 = vld [vmem:[%s4392 + $0x34] sm:$0xf]
        %v4407 = vld [vmem:[%s4392 + $0x38] sm:$0xf]
        %v4408 = vld [vmem:[%s4392 + $0x3c] sm:$0xf]
        %s4409 = scalar_lea.vmem [#allocation24], 1
        %v4410 = vld [vmem:[%s4409] sm:$0x1]
        %v4411 = vpack.c.bf16 %v4391, %v4391
        %v4413 = vlaneseq
        %v4414 = vshrl.u32 %v4413, 7
        %v4415 = vsub.s32 0, %v4414
        %v4416 = vrot.slane %v4410, %v4415
        %v4434 = vunpack.c.l.b16 %v4393
        %v4435 = vunpack.c.l.b16 %v4394
        %v4436 = vunpack.c.l.b16 %v4395
        %v4437 = vunpack.c.l.b16 %v4396
        %v4438 = vunpack.c.l.b16 %v4397
        %v4439 = vunpack.c.l.b16 %v4398
        %v4440 = vunpack.c.l.b16 %v4399
        %v4441 = vunpack.c.l.b16 %v4400
        %v4442 = vunpack.c.l.b16 %v4401
        %v4443 = vunpack.c.l.b16 %v4402
        %v4444 = vunpack.c.l.b16 %v4403
        %v4445 = vunpack.c.l.b16 %v4404
        %v4446 = vunpack.c.l.b16 %v4405
        %v4447 = vunpack.c.l.b16 %v4406
        %v4448 = vunpack.c.l.b16 %v4407
        %v4449 = vunpack.c.l.b16 %v4408
        %v4450 = vpack.c.b16 %v4435, %v4434
        %v4451 = vpack.c.b16 %v4437, %v4436
        %v4452 = vpack.c.b16 %v4439, %v4438
        %v4453 = vpack.c.b16 %v4441, %v4440
        %v4454 = vpack.c.b16 %v4443, %v4442
        %v4455 = vpack.c.b16 %v4445, %v4444
        %v4456 = vpack.c.b16 %v4447, %v4446
        %v4457 = vpack.c.b16 %v4449, %v4448
        %4466 = vmatprep.subr.bf16.mxu0 0
        %4467 = vmatpush1.bf16.msra.mxu0 %v4450
        %4468 = vmatprep.subr.bf16.mxu0 0
        %4469 = vmatpush1.bf16.msra.mxu0 %v4451
        %4470 = vmatprep.subr.bf16.mxu0 0
        %4471 = vmatpush1.bf16.msra.mxu0 %v4452
        %4472 = vmatprep.subr.bf16.mxu0 0
        %4473 = vmatpush1.bf16.msra.mxu0 %v4453
        %4474 = vmatprep.subr.bf16.mxu0 0
        %4475 = vmatpush1.bf16.msra.mxu0 %v4454
        %4476 = vmatprep.subr.bf16.mxu0 0
        %4477 = vmatpush1.bf16.msra.mxu0 %v4455
        %4478 = vmatprep.subr.bf16.mxu0 0
        %4479 = vmatpush1.bf16.msra.mxu0 %v4456
        %4480 = vmatprep.subr.bf16.mxu0 0
        %4481 = vmatpush1.bf16.msra.mxu0 %v4457
        %4482 = vmatprep.subr.bf16.mxu0 0
        %4483 = vmatpush1.bf16.msra.mxu0 0
        %4484 = vmatprep.subr.bf16.mxu0 0
        %4485 = vmatpush1.bf16.msra.mxu0 0
        %4486 = vmatprep.subr.bf16.mxu0 0
        %4487 = vmatpush1.bf16.msra.mxu0 0
        %4488 = vmatprep.subr.bf16.mxu0 0
        %4489 = vmatpush1.bf16.msra.mxu0 0
        %4490 = vmatprep.subr.bf16.mxu0 0
        %4491 = vmatpush1.bf16.msra.mxu0 0
        %4492 = vmatprep.subr.bf16.mxu0 0
        %4493 = vmatpush1.bf16.msra.mxu0 0
        %4494 = vmatprep.subr.bf16.mxu0 0
        %4495 = vmatpush1.bf16.msra.mxu0 0
        %4496 = vmatprep.subr.bf16.mxu0 0
        %4497 = vmatpush1.bf16.msra.mxu0 0
        %4498 = vmatprep.mubr.bf16.mxu0 0
        %4499 = vmatmul.mubr.bf16.gmra.mrb[0].mxu0 %v4411
        %v4500 = vpop.f32.mrb[0].mxu0
        %v4501 = vadd.f32 %v4416, %v4500
        %v4502 = vpop.f32.mrb[0].mxu0
        %v4503 = vpop.f32.mrb[0].mxu0
        %v4504 = vpop.f32.mrb[0].mxu0
        %4505 = vdwg.mxu0
        %v4506 = vmax.f32 %v4501, 0.0
        %s4507 = scalar_lea.vmem [#allocation26], 64
        %v4508 = vld [vmem:[%s4507] sm:$0xf]
        %v4509 = vld [vmem:[%s4507 + $0x4] sm:$0xf]
        %v4510 = vld [vmem:[%s4507 + $0x8] sm:$0xf]
        %v4511 = vld [vmem:[%s4507 + $0xc] sm:$0xf]
        %v4512 = vld [vmem:[%s4507 + $0x10] sm:$0xf]
        %v4513 = vld [vmem:[%s4507 + $0x14] sm:$0xf]
        %v4514 = vld [vmem:[%s4507 + $0x18] sm:$0xf]
        %v4515 = vld [vmem:[%s4507 + $0x1c] sm:$0xf]
        %v4516 = vld [vmem:[%s4507 + $0x20] sm:$0xf]
        %v4517 = vld [vmem:[%s4507 + $0x24] sm:$0xf]
        %v4518 = vld [vmem:[%s4507 + $0x28] sm:$0xf]
        %v4519 = vld [vmem:[%s4507 + $0x2c] sm:$0xf]
        %v4520 = vld [vmem:[%s4507 + $0x30] sm:$0xf]
        %v4521 = vld [vmem:[%s4507 + $0x34] sm:$0xf]
        %v4522 = vld [vmem:[%s4507 + $0x38] sm:$0xf]
        %v4523 = vld [vmem:[%s4507 + $0x3c] sm:$0xf]
        %s4524 = scalar_lea.vmem [#allocation27], 1
        %v4525 = vld [vmem:[%s4524] sm:$0x1]
        %v4526 = vpack.c.bf16 %v4506, %v4506
        %v4528 = vlaneseq
        %v4529 = vshrl.u32 %v4528, 7
        %v4530 = vsub.s32 0, %v4529
        %v4531 = vrot.slane %v4525, %v4530
        %v4549 = vunpack.c.l.b16 %v4508
        %v4550 = vunpack.c.l.b16 %v4509
        %v4551 = vunpack.c.l.b16 %v4510
        %v4552 = vunpack.c.l.b16 %v4511
        %v4553 = vunpack.c.l.b16 %v4512
        %v4554 = vunpack.c.l.b16 %v4513
        %v4555 = vunpack.c.l.b16 %v4514
        %v4556 = vunpack.c.l.b16 %v4515
        %v4557 = vunpack.c.l.b16 %v4516
        %v4558 = vunpack.c.l.b16 %v4517
        %v4559 = vunpack.c.l.b16 %v4518
        %v4560 = vunpack.c.l.b16 %v4519
        %v4561 = vunpack.c.l.b16 %v4520
        %v4562 = vunpack.c.l.b16 %v4521
        %v4563 = vunpack.c.l.b16 %v4522
        %v4564 = vunpack.c.l.b16 %v4523
        %v4565 = vpack.c.b16 %v4550, %v4549
        %v4566 = vpack.c.b16 %v4552, %v4551
        %v4567 = vpack.c.b16 %v4554, %v4553
        %v4568 = vpack.c.b16 %v4556, %v4555
        %v4569 = vpack.c.b16 %v4558, %v4557
        %v4570 = vpack.c.b16 %v4560, %v4559
        %v4571 = vpack.c.b16 %v4562, %v4561
        %v4572 = vpack.c.b16 %v4564, %v4563
        %4581 = vmatprep.subr.bf16.mxu0 0
        %4582 = vmatpush1.bf16.msra.mxu0 %v4565
        %4583 = vmatprep.subr.bf16.mxu0 0
        %4584 = vmatpush1.bf16.msra.mxu0 %v4566
        %4585 = vmatprep.subr.bf16.mxu0 0
        %4586 = vmatpush1.bf16.msra.mxu0 %v4567
        %4587 = vmatprep.subr.bf16.mxu0 0
        %4588 = vmatpush1.bf16.msra.mxu0 %v4568
        %4589 = vmatprep.subr.bf16.mxu0 0
        %4590 = vmatpush1.bf16.msra.mxu0 %v4569
        %4591 = vmatprep.subr.bf16.mxu0 0
        %4592 = vmatpush1.bf16.msra.mxu0 %v4570
        %4593 = vmatprep.subr.bf16.mxu0 0
        %4594 = vmatpush1.bf16.msra.mxu0 %v4571
        %4595 = vmatprep.subr.bf16.mxu0 0
        %4596 = vmatpush1.bf16.msra.mxu0 %v4572
        %4597 = vmatprep.subr.bf16.mxu0 0
        %4598 = vmatpush1.bf16.msra.mxu0 0
        %4599 = vmatprep.subr.bf16.mxu0 0
        %4600 = vmatpush1.bf16.msra.mxu0 0
        %4601 = vmatprep.subr.bf16.mxu0 0
        %4602 = vmatpush1.bf16.msra.mxu0 0
        %4603 = vmatprep.subr.bf16.mxu0 0
        %4604 = vmatpush1.bf16.msra.mxu0 0
        %4605 = vmatprep.subr.bf16.mxu0 0
        %4606 = vmatpush1.bf16.msra.mxu0 0
        %4607 = vmatprep.subr.bf16.mxu0 0
        %4608 = vmatpush1.bf16.msra.mxu0 0
        %4609 = vmatprep.subr.bf16.mxu0 0
        %4610 = vmatpush1.bf16.msra.mxu0 0
        %4611 = vmatprep.subr.bf16.mxu0 0
        %4612 = vmatpush1.bf16.msra.mxu0 0
        %4613 = vmatprep.mubr.bf16.mxu0 0
        %4614 = vmatmul.mubr.bf16.gmra.mrb[0].mxu0 %v4526
        %v4615 = vpop.f32.mrb[0].mxu0
        %v4616 = vadd.f32 %v4531, %v4615
        %v4617 = vpop.f32.mrb[0].mxu0
        %v4618 = vpop.f32.mrb[0].mxu0
        %v4619 = vpop.f32.mrb[0].mxu0
        %4620 = vdwg.mxu0
        %v4621 = vadd.f32 %v4391, %v4616
        %s4622 = scalar_lea.vmem [#allocation35], 1
        %v4623 = vld [vmem:[%s4622] sm:$0x1]
        %s4624 = scalar_lea.vmem [#allocation36], 1
        %v4625 = vld [vmem:[%s4624] sm:$0x1]
        %4626 = vadd.xlane.f32.xlu0 %v4621
        %v4627 = vpop.xlane.xlu0 %4626
        %v4628 = vmul.f32 %v4627, 0.03125
        %v4629 = vsub.f32 %v4621, %v4628
        %v4630 = vmul.f32 %v4629, %v1237
        %v4631 = vmul.f32 %v4630, %v4630
        %4632 = vadd.xlane.f32.xlu0 %v4631
        %v4633 = vpop.xlane.xlu0 %4632
        %v4634 = vmul.f32 %v4633, 0.03125
        %v4635 = vadd.f32 %v4634, 1e-05
        %v4636 = vrsqrt.pop %v4635
        %v4637 = vmul.f32 %v4630, %v4636
        %v4639 = vlaneseq
        %v4640 = vshrl.u32 %v4639, 7
        %v4641 = vsub.s32 0, %v4640
        %v4642 = vrot.slane %v4623, %v4641
        %v4644 = vmul.f32 %v4637, %v4642
        %v4646 = vlaneseq
        %v4647 = vshrl.u32 %v4646, 7
        %v4648 = vsub.s32 0, %v4647
        %v4649 = vrot.slane %v4625, %v4648
        %v4651 = vadd.f32 %v4644, %v4649
        %v4652 = vld [vmem:[#allocation9] sm:$0xf]
        %v4653 = vld [vmem:[#allocation9 + $0x4] sm:$0xf]
        %v4654 = vld [vmem:[#allocation9 + $0x8] sm:$0xf]
        %v4655 = vld [vmem:[#allocation9 + $0xc] sm:$0xf]
        %v4656 = vld [vmem:[#allocation9 + $0x10] sm:$0xf]
        %v4657 = vld [vmem:[#allocation9 + $0x14] sm:$0xf]
        %v4658 = vld [vmem:[#allocation9 + $0x18] sm:$0xf]
        %v4659 = vld [vmem:[#allocation9 + $0x1c] sm:$0xf]
        %v4660 = vld [vmem:[#allocation9 + $0x20] sm:$0xf]
        %v4661 = vld [vmem:[#allocation9 + $0x24] sm:$0xf]
        %v4662 = vld [vmem:[#allocation9 + $0x28] sm:$0xf]
        %v4663 = vld [vmem:[#allocation9 + $0x2c] sm:$0xf]
        %v4664 = vld [vmem:[#allocation9 + $0x30] sm:$0xf]
        %v4665 = vld [vmem:[#allocation9 + $0x34] sm:$0xf]
        %v4666 = vld [vmem:[#allocation9 + $0x38] sm:$0xf]
        %v4667 = vld [vmem:[#allocation9 + $0x3c] sm:$0xf]
        %v4668 = vld [vmem:[#allocation11] sm:$0x1]
        %v4669 = vpack.c.bf16 %v4651, %v4651
        %v4671 = vlaneseq
        %v4672 = vshrl.u32 %v4671, 7
        %v4673 = vsub.s32 0, %v4672
        %v4674 = vrot.slane %v4668, %v4673
        %v4692 = vunpack.c.l.b16 %v4652
        %v4693 = vunpack.c.l.b16 %v4653
        %v4694 = vunpack.c.l.b16 %v4654
        %v4695 = vunpack.c.l.b16 %v4655
        %v4696 = vunpack.c.l.b16 %v4656
        %v4697 = vunpack.c.l.b16 %v4657
        %v4698 = vunpack.c.l.b16 %v4658
        %v4699 = vunpack.c.l.b16 %v4659
        %v4700 = vunpack.c.l.b16 %v4660
        %v4701 = vunpack.c.l.b16 %v4661
        %v4702 = vunpack.c.l.b16 %v4662
        %v4703 = vunpack.c.l.b16 %v4663
        %v4704 = vunpack.c.l.b16 %v4664
        %v4705 = vunpack.c.l.b16 %v4665
        %v4706 = vunpack.c.l.b16 %v4666
        %v4707 = vunpack.c.l.b16 %v4667
        %v4708 = vpack.c.b16 %v4693, %v4692
        %v4709 = vpack.c.b16 %v4695, %v4694
        %v4710 = vpack.c.b16 %v4697, %v4696
        %v4711 = vpack.c.b16 %v4699, %v4698
        %v4712 = vpack.c.b16 %v4701, %v4700
        %v4713 = vpack.c.b16 %v4703, %v4702
        %v4714 = vpack.c.b16 %v4705, %v4704
        %v4715 = vpack.c.b16 %v4707, %v4706
        %4724 = vmatprep.subr.bf16.mxu0 0
        %4725 = vmatpush1.bf16.msra.mxu0 %v4708
        %4726 = vmatprep.subr.bf16.mxu0 0
        %4727 = vmatpush1.bf16.msra.mxu0 %v4709
        %4728 = vmatprep.subr.bf16.mxu0 0
        %4729 = vmatpush1.bf16.msra.mxu0 %v4710
        %4730 = vmatprep.subr.bf16.mxu0 0
        %4731 = vmatpush1.bf16.msra.mxu0 %v4711
        %4732 = vmatprep.subr.bf16.mxu0 0
        %4733 = vmatpush1.bf16.msra.mxu0 %v4712
        %4734 = vmatprep.subr.bf16.mxu0 0
        %4735 = vmatpush1.bf16.msra.mxu0 %v4713
        %4736 = vmatprep.subr.bf16.mxu0 0
        %4737 = vmatpush1.bf16.msra.mxu0 %v4714
        %4738 = vmatprep.subr.bf16.mxu0 0
        %4739 = vmatpush1.bf16.msra.mxu0 %v4715
        %4740 = vmatprep.subr.bf16.mxu0 0
        %4741 = vmatpush1.bf16.msra.mxu0 0
        %4742 = vmatprep.subr.bf16.mxu0 0
        %4743 = vmatpush1.bf16.msra.mxu0 0
        %4744 = vmatprep.subr.bf16.mxu0 0
        %4745 = vmatpush1.bf16.msra.mxu0 0
        %4746 = vmatprep.subr.bf16.mxu0 0
        %4747 = vmatpush1.bf16.msra.mxu0 0
        %4748 = vmatprep.subr.bf16.mxu0 0
        %4749 = vmatpush1.bf16.msra.mxu0 0
        %4750 = vmatprep.subr.bf16.mxu0 0
        %4751 = vmatpush1.bf16.msra.mxu0 0
        %4752 = vmatprep.subr.bf16.mxu0 0
        %4753 = vmatpush1.bf16.msra.mxu0 0
        %4754 = vmatprep.subr.bf16.mxu0 0
        %4755 = vmatpush1.bf16.msra.mxu0 0
        %4756 = vmatprep.mubr.bf16.mxu0 0
        %4757 = vmatmul.mubr.bf16.gmra.mrb[0].mxu0 %v4669
        %v4758 = vpop.f32.mrb[0].mxu0
        %v4759 = vadd.f32 %v4674, %v4758
        %v4760 = vpop.f32.mrb[0].mxu0
        %v4761 = vpop.f32.mrb[0].mxu0
        %v4762 = vpop.f32.mrb[0].mxu0
        %4763 = vdwg.mxu0
        %4764 = vst [vmem:[%s1139] sm:$0xff] %v4759
        %p4765 = scmp.lt.s32.totalorder %s57, 1
        %s4766 = scalar_select %p4765, %s57, 1
        %s4767 = smul.addr %s4766, 8
        %s4768 = scalar_lea.vmem %s28, %s4767
        // Predicated region
        $region217: #{transformer_decoder_forward.1} parent=127 // pred_check
          %p4769 = pneg %p647
        $region218: #{transformer_decoder_forward.1} parent=127 // pred_check_branch
          %4771 = sbr.rel (%p4769) target = $region220
        $region219: #{transformer_decoder_forward.1} parent=127 // pred_region
          _
        $region220: #{transformer_decoder_forward.1} parent=127 // pred_fallthru
          _
      $region128: #{transformer_decoder_forward.1} parent=5 // pred_fallthru
        _
      %p4772 = scmp.le.s32.totalorder 2, %s52
      // Predicated region
      $region221: #{transformer_decoder_forward.1} parent=5 // pred_check
        %p4773 = pneg %p4772
      $region222: #{transformer_decoder_forward.1} parent=5 // pred_check_branch
        %4775 = sbr.rel (%p4773) target = $region224
      $region223: #{transformer_decoder_forward.1} parent=5 // pred_region
        %s4776 = ssub.s32 %s52, 2
        // Predicated region
        $region225: #{transformer_decoder_forward.1} parent=223 // pred_check
          %p4777 = pneg %p653
        $region226: #{transformer_decoder_forward.1} parent=223 // pred_check_branch
          %4779 = sbr.rel (%p4777) target = $region228
        $region227: #{transformer_decoder_forward.1} parent=223 // pred_region
          %p4780 = scmp.lt.s32.totalorder %s58, 1
          %s4781 = scalar_select %p4780, %s58, 1
          %s4782 = smul.addr %s4781, 8
          %s4783 = scalar_lea.vmem %s28, %s4782
        $region228: #{transformer_decoder_forward.1} parent=223 // pred_fallthru
          _
      $region224: #{transformer_decoder_forward.1} parent=5 // pred_fallthru
        _
    $region6: #{transformer_decoder_forward.1} parent=1 // loop_footer
      %s56 = sadd.s32 1, %s52
    $region7: #{transformer_decoder_forward.1} parent=1 // loop_footer_branch
      %51 = sbr.rel target = $region3
    $region8: #{transformer_decoder_forward.1} parent=1 // loop_exit
      _
    %4784 = vsyncpa [#allocation5], 1
    %s4785 = scalar_lea.sflag [#allocation5], 1
    %4786 = vsyncpa %s4785, 1
    %4787 = vsyncpa [#allocation7], 1
    %4788 = vsyncpa [#allocation10], 1
    %4789 = vsyncpa [#allocation13], 1
    %4790 = vsyncpa [#allocation16], 1
    %4791 = vsyncpa [#allocation19], 1
    %4792 = vsyncpa [#allocation22], 1
    %4793 = vsyncpa [#allocation25], 1
    %4794 = vsyncpa [#allocation28], 1
    %4795 = vsyncpa [#allocation31], 1
    %4796 = vsyncpa [#allocation34], 1
    %4797 = vsyncpa [#allocation37], 1

</llo_original>
